<compile_context>
chip_gen: v7x
topology: tpu7x:2x2x1
jax: 0.10.0
libtpu: 0.0.40
codegen_flags: <defaults>
</compile_context>

<pallas_src>
import functools
import math

import jax
import jax.numpy as jnp
from jax.experimental import pallas as pl
from jax.experimental.pallas import tpu as pltpu


# ----------------------------------------------------------------------------
# Pallas kernels
# ----------------------------------------------------------------------------
def _selfonn_apply(x_ref, w_ref, shift_ref, store, *, q, H, W, row_chunk):
    """SelfONN(3x3, pad=1) + (folded-BN shift) + tanh for one padded image.

    x_ref:     (1, H+2, W+2, Cin)  f32, spatially pre-padded activation
    w_ref:     (9, q*Cin, Cout)    bf16, BN scale folded in, tap t = kh*3 + kw
    shift_ref: (1, Cout)           f32
    store(h0, ch, y): callback receiving output rows [h0, h0+ch) as
                      (ch, W, Cout) f32.
    """
    xp = x_ref[0]                                        # (H+2, W+2, Cin) f32
    qcin = w_ref.shape[1]
    cout = w_ref.shape[2]

    # x^1 .. x^q (f32, VPU) folded into one channel slab -> bf16 MXU operand.
    pw = [xp]
    for _ in range(q - 1):
        pw.append(pw[-1] * xp)
    slab = jnp.concatenate(pw, axis=-1).astype(jnp.bfloat16)  # (H+2, W+2, qCin)

    # Only 3 W-shifted copies; the H-tap shift below is a free row slice.
    wflat = [slab[:, dw:dw + W, :].reshape((H + 2) * W, qcin) for dw in range(3)]

    shift = shift_ref[...]                               # (1, Cout) f32

    for h0 in range(0, H, row_chunk):                    # static Python loop
        ch = min(row_chunk, H - h0)
        acc = jnp.zeros((ch * W, cout), jnp.float32)
        for dh in range(3):
            for dw in range(3):
                tile = wflat[dw][(h0 + dh) * W:(h0 + dh + ch) * W]
                acc = acc + jnp.dot(tile, w_ref[dh * 3 + dw],
                                    preferred_element_type=jnp.float32)
        y = jnp.tanh(acc + shift).reshape(ch, W, cout)
        store(h0, ch, y)


def _layer_kernel(x_ref, w_ref, shift_ref, o_ref, *, q, H, W, row_chunk):
    # Padded-carry output: zero the buffer (so the 1-pixel halo is exact zero),
    # then fill the interior chunk by chunk.
    o_ref[...] = jnp.zeros(o_ref.shape, o_ref.dtype)

    def store(h0, ch, y):
        o_ref[0, 1 + h0:1 + h0 + ch, 1:W + 1, :] = y

    _selfonn_apply(x_ref, w_ref, shift_ref, store, q=q, H=H, W=W,
                   row_chunk=row_chunk)


def _final_kernel(x_ref, w_ref, shift_ref, res_ref, o_ref, *, q, H, W,
                  row_chunk):
    # DnCNN residual: out = x - tanh(conv(...)), unpadded output.
    def store(h0, ch, y):
        o_ref[0, h0:h0 + ch, :, :] = res_ref[0, h0:h0 + ch, :, :] - y

    _selfonn_apply(x_ref, w_ref, shift_ref, store, q=q, H=H, W=W,
                   row_chunk=row_chunk)


# ----------------------------------------------------------------------------
# Per-layer pallas_call wrapper
# ----------------------------------------------------------------------------
def _selfonn_layer(x_pad, w, shift, *, q, H, W, residual=None):
    N = x_pad.shape[0]
    cin = x_pad.shape[-1]
    qcin, cout = w.shape[1], w.shape[2]
    assert qcin == q * cin

    # Bound the per-dot M tile so the f32 accumulator stays in the vreg budget.
    row_chunk = max(1, min(H, 512 // max(W, 1)))

    in_specs = [
        pl.BlockSpec((1, H + 2, W + 2, cin), lambda n: (n, 0, 0, 0)),
        pl.BlockSpec((9, qcin, cout), lambda n: (0, 0, 0)),
        pl.BlockSpec((1, cout), lambda n: (0, 0)),
    ]
    args = [x_pad, w, shift]

    if residual is None:
        kernel = functools.partial(_layer_kernel, q=q, H=H, W=W,
                                   row_chunk=row_chunk)
        out_shape = jax.ShapeDtypeStruct((N, H + 2, W + 2, cout), jnp.float32)
        out_spec = pl.BlockSpec((1, H + 2, W + 2, cout), lambda n: (n, 0, 0, 0))
        out_bytes = (H + 2) * (W + 2) * cout * 4
    else:
        in_specs.append(pl.BlockSpec((1, H, W, cout), lambda n: (n, 0, 0, 0)))
        args.append(residual)
        kernel = functools.partial(_final_kernel, q=q, H=H, W=W,
                                   row_chunk=row_chunk)
        out_shape = jax.ShapeDtypeStruct((N, H, W, cout), jnp.float32)
        out_spec = pl.BlockSpec((1, H, W, cout), lambda n: (n, 0, 0, 0))
        out_bytes = 2 * H * W * cout * 4          # residual read + output write

    cost = pl.CostEstimate(
        flops=2 * N * H * W * 9 * qcin * cout,
        transcendentals=N * H * W * cout,
        bytes_accessed=N * ((H + 2) * (W + 2) * cin * 4 + out_bytes)
        + 9 * qcin * cout * 2,
    )

    return pl.pallas_call(
        kernel,
        out_shape=out_shape,
        grid=(N,),
        in_specs=in_specs,
        out_specs=out_spec,
        compiler_params=pltpu.CompilerParams(
            dimension_semantics=("parallel",),
            # Explicit scoped-VMEM budget: above the 16/32 MiB defaults, below
            # v7x's 64 MiB physical VMEM.
            vmem_limit_bytes=48 * 1024 * 1024,
        ),
        cost_estimate=cost,
    )(*args)


# ----------------------------------------------------------------------------
# Model: parameters + forward
# ----------------------------------------------------------------------------
def init_params(key, channels=3, num_of_layers=17, q=3, features=64, eps=1e-5):
    sizes = ([(channels, features)]
             + [(features, features)] * (num_of_layers - 2)
             + [(features, channels)])
    params = []
    for i, (cin, cout) in enumerate(sizes):
        key, sub = jax.random.split(key)
        fan_in = cin * q * 9
        # PyTorch-layout weight (Cout, Cin*q, 3, 3); channel index = p*Cin + ci.
        w_torch = (jax.random.normal(sub, (cout, cin * q, 3, 3), jnp.float32)
                   / math.sqrt(fan_in))

        has_bn = (0 < i < len(sizes) - 1)
        if has_bn:
            gamma = jnp.ones((cout,), jnp.float32)
            beta = jnp.zeros((cout,), jnp.float32)
            mean = jnp.zeros((cout,), jnp.float32)
            var = jnp.ones((cout,), jnp.float32)
            scale = gamma / jnp.sqrt(var + eps)
            shift = beta - mean * scale
        else:
            scale = jnp.ones((cout,), jnp.float32)
            shift = jnp.zeros((cout,), jnp.float32)

        # Fold the BN scale into the conv weights (per output channel).
        w_scaled = w_torch * scale.reshape(-1, 1, 1, 1)
        # Reference weights: PyTorch OIHW layout, bf16 (matches kernel operands).
        w_ref_bf = w_scaled.astype(jnp.bfloat16)
        # Kernel weights: (9 taps, q*Cin, Cout), tap t = kh*3 + kw, bf16.
        w_kern = (jnp.transpose(w_scaled, (2, 3, 1, 0))
                  .reshape(9, cin * q, cout).astype(jnp.bfloat16))

        # Lane-friendlier last layer: pad Cout (=channels) up to a multiple of
        # 8; padded channels have zero weight/shift and are sliced off outside.
        cpad = cout
        if i == len(sizes) - 1:
            cpad = max(8, ((cout + 7) // 8) * 8)
            w_kern = jnp.pad(w_kern, ((0, 0), (0, 0), (0, cpad - cout)))
            shift_k = jnp.pad(shift, (0, cpad - cout))
        else:
            shift_k = shift

        params.append(dict(
            w=w_kern,
            shift=shift_k.reshape(1, cpad).astype(jnp.float32),
            w_ref_bf=w_ref_bf,
            shift_ref=shift.astype(jnp.float32),
        ))
    return params


def self_dncnn_forward(x_nchw, params, *, q):
    """x_nchw: (N, C, H, W) f32 -> (N, C, H, W) f32;  y = x - dncnn(x)."""
    x = jnp.transpose(x_nchw, (0, 2, 3, 1))              # NCHW -> NHWC
    N, H, W, C = x.shape
    # Single cheap pad of the C-channel network input; all later layers consume
    # pre-padded activations written (halo included) by the previous kernel.
    h = jnp.pad(x, ((0, 0), (1, 1), (1, 1), (0, 0)))
    last = len(params) - 1
    for i, p in enumerate(params):
        if i < last:
            h = _selfonn_layer(h, p["w"], p["shift"], q=q, H=H, W=W)
        else:
            cpad = p["w"].shape[-1]
            res = jnp.pad(x, ((0, 0), (0, 0), (0, 0), (0, cpad - C)))
            h = _selfonn_layer(h, p["w"], p["shift"], q=q, H=H, W=W,
                               residual=res)
            h = h[..., :C]
    return jnp.transpose(h, (0, 3, 1, 2))                # NHWC -> NCHW


# ----------------------------------------------------------------------------
# Pure-JAX reference with matched precision (bf16 operands, f32 accumulate)
# ----------------------------------------------------------------------------
def reference_forward(x_nchw, params, *, q):
    h = x_nchw
    for p in params:
        pw = [h]
        for _ in range(q - 1):
            pw.append(pw[-1] * h)
        pw = jnp.concatenate(pw, axis=1).astype(jnp.bfloat16)  # (N, Cin*q, H, W)
        h = jax.lax.conv_general_dilated(
            pw, p["w_ref_bf"], window_strides=(1, 1),
            padding=((1, 1), (1, 1)),
            dimension_numbers=("NCHW", "OIHW", "NCHW"),
            preferred_element_type=jnp.float32)
        h = h + p["shift_ref"].reshape(1, -1, 1, 1)
        h = jnp.tanh(h)
    return x_nchw - h


# ----------------------------------------------------------------------------
if __name__ == "__main__":
    key = jax.random.PRNGKey(0)
    k_x, k_p = jax.random.split(key)

    channels = 3
    num_of_layers = 5        # small demo depth (module default is 17)
    q = 3
    batch, spatial = 2, 16

    x = jax.random.normal(k_x, (batch, channels, spatial, spatial), jnp.float32)
    params = init_params(k_p, channels=channels, num_of_layers=num_of_layers,
                         q=q)

    fwd = jax.jit(functools.partial(self_dncnn_forward, q=q))
    out = jax.block_until_ready(fwd(x, params))

    assert out.shape == x.shape and out.dtype == jnp.float32

    ref = jax.block_until_ready(reference_forward(x, params, q=q))
    # Kernel and reference share bf16 operands / f32 accumulation; remaining
    # differences are summation order + transcendental implementation only.
    max_err = float(jnp.max(jnp.abs(out - ref)))
    assert max_err < 1e-2, f"kernel mismatch vs reference: max_err={max_err}"

    print("KERNEL_OK")
</pallas_src>

<mosaic_0001>
module attributes {stable_mosaic.version = 11 : i64} {
  func.func @_layer_kernel(%arg0: i32, %arg1: memref<1x18x18x3xf32, #tpu.memory_space<vmem>>, %arg2: memref<9x9x64xbf16, #tpu.memory_space<vmem>>, %arg3: memref<1x64xf32, #tpu.memory_space<vmem>>, %arg4: memref<1x18x18x64xf32, #tpu.memory_space<vmem>>) attributes {dimension_semantics = [#tpu.dimension_semantics<parallel>], iteration_bounds = array<i64: 2>, scalar_prefetch = 0 : i64, scratch_operands = 0 : i64, tpu.core_type = #tpu.core_type<tc>, window_params = [{transform_indices = @transform_0, window_bounds = array<i64: 1, 18, 18, 3>}, {pipeline_mode = #tpu.pipeline_mode<synchronous>, transform_indices = @transform_1, window_bounds = array<i64: 9, 9, 64>}, {pipeline_mode = #tpu.pipeline_mode<synchronous>, transform_indices = @transform_2, window_bounds = array<i64: 1, 64>}, {transform_indices = @transform_3, window_bounds = array<i64: 1, 18, 18, 64>}]} {
    %cst = arith.constant 0.000000e+00 : f32
    %0 = vector.broadcast %cst : f32 to vector<1x18x18x64xf32>
    %c0 = arith.constant 0 : index
    %c0_0 = arith.constant 0 : index
    %c0_1 = arith.constant 0 : index
    %c0_2 = arith.constant 0 : index
    %1 = vector.load %arg4[%c0, %c0_0, %c0_1, %c0_2] : memref<1x18x18x64xf32, #tpu.memory_space<vmem>>, vector<1x18x18x64xf32>
    tpu.vector_store %arg4[%c0, %c0_0, %c0_1, %c0_2], %0 {strides = array<i32>} : memref<1x18x18x64xf32, #tpu.memory_space<vmem>>, vector<1x18x18x64xf32>,
    %c0_3 = arith.constant 0 : index
    %c0_4 = arith.constant 0 : index
    %c0_5 = arith.constant 0 : index
    %c0_6 = arith.constant 0 : index
    %2 = vector.load %arg1[%c0_3, %c0_4, %c0_5, %c0_6] : memref<1x18x18x3xf32, #tpu.memory_space<vmem>>, vector<1x18x18x3xf32>
    %3 = vector.shape_cast %2 : vector<1x18x18x3xf32> to vector<18x18x3xf32>
    %4 = arith.mulf %3, %3 : vector<18x18x3xf32>
    %5 = arith.mulf %4, %3 : vector<18x18x3xf32>
    %6 = tpu.concatenate %3, %4, %5 in 2 : vector<18x18x3xf32>, vector<18x18x3xf32>, vector<18x18x3xf32> -> vector<18x18x9xf32>
    %7 = arith.truncf %6 : vector<18x18x9xf32> to vector<18x18x9xbf16>
    %8 = vector.extract_strided_slice %7 {offsets = [0, 0, 0], sizes = [18, 16, 9], strides = [1, 1, 1]} : vector<18x18x9xbf16> to vector<18x16x9xbf16>
    %9 = vector.shape_cast %8 : vector<18x16x9xbf16> to vector<288x9xbf16>
    %10 = vector.extract_strided_slice %7 {offsets = [0, 1, 0], sizes = [18, 16, 9], strides = [1, 1, 1]} : vector<18x18x9xbf16> to vector<18x16x9xbf16>
    %11 = vector.shape_cast %10 : vector<18x16x9xbf16> to vector<288x9xbf16>
    %12 = vector.extract_strided_slice %7 {offsets = [0, 2, 0], sizes = [18, 16, 9], strides = [1, 1, 1]} : vector<18x18x9xbf16> to vector<18x16x9xbf16>
    %13 = vector.shape_cast %12 : vector<18x16x9xbf16> to vector<288x9xbf16>
    %c0_7 = arith.constant 0 : index
    %c0_8 = arith.constant 0 : index
    %14 = vector.load %arg3[%c0_7, %c0_8] : memref<1x64xf32, #tpu.memory_space<vmem>>, vector<1x64xf32>
    %cst_9 = arith.constant 0.000000e+00 : f32
    %15 = vector.broadcast %cst_9 : f32 to vector<256x64xf32>
    %16 = vector.extract_strided_slice %9 {offsets = [0, 0], sizes = [256, 9], strides = [1, 1]} : vector<288x9xbf16> to vector<256x9xbf16>
    %c0_10 = arith.constant 0 : index
    %c0_11 = arith.constant 0 : index
    %c0_12 = arith.constant 0 : index
    %17 = vector.load %arg2[%c0_10, %c0_11, %c0_12] : memref<9x9x64xbf16, #tpu.memory_space<vmem>>, vector<1x9x64xbf16>
    %18 = vector.shape_cast %17 : vector<1x9x64xbf16> to vector<9x64xbf16>
    %cst_13 = arith.constant dense<0.000000e+00> : vector<256x64xf32>
    %19 = tpu.matmul %16, %18, %cst_13 {dimension_numbers = #tpu.dot_dimension_numbers<[1], [0], [0], [1], [0, 0, 1, 1], [], []>} : vector<256x9xbf16>, vector<9x64xbf16>, vector<256x64xf32> -> vector<256x64xf32>
    %20 = arith.addf %15, %19 : vector<256x64xf32>
    %21 = vector.extract_strided_slice %11 {offsets = [0, 0], sizes = [256, 9], strides = [1, 1]} : vector<288x9xbf16> to vector<256x9xbf16>
    %c1 = arith.constant 1 : index
    %c0_14 = arith.constant 0 : index
    %c0_15 = arith.constant 0 : index
    %22 = vector.load %arg2[%c1, %c0_14, %c0_15] : memref<9x9x64xbf16, #tpu.memory_space<vmem>>, vector<1x9x64xbf16>
    %23 = vector.shape_cast %22 : vector<1x9x64xbf16> to vector<9x64xbf16>
    %cst_16 = arith.constant dense<0.000000e+00> : vector<256x64xf32>
    %24 = tpu.matmul %21, %23, %cst_16 {dimension_numbers = #tpu.dot_dimension_numbers<[1], [0], [0], [1], [0, 0, 1, 1], [], []>} : vector<256x9xbf16>, vector<9x64xbf16>, vector<256x64xf32> -> vector<256x64xf32>
    %25 = arith.addf %20, %24 : vector<256x64xf32>
    %26 = vector.extract_strided_slice %13 {offsets = [0, 0], sizes = [256, 9], strides = [1, 1]} : vector<288x9xbf16> to vector<256x9xbf16>
    %c2 = arith.constant 2 : index
    %c0_17 = arith.constant 0 : index
    %c0_18 = arith.constant 0 : index
    %27 = vector.load %arg2[%c2, %c0_17, %c0_18] : memref<9x9x64xbf16, #tpu.memory_space<vmem>>, vector<1x9x64xbf16>
    %28 = vector.shape_cast %27 : vector<1x9x64xbf16> to vector<9x64xbf16>
    %cst_19 = arith.constant dense<0.000000e+00> : vector<256x64xf32>
    %29 = tpu.matmul %26, %28, %cst_19 {dimension_numbers = #tpu.dot_dimension_numbers<[1], [0], [0], [1], [0, 0, 1, 1], [], []>} : vector<256x9xbf16>, vector<9x64xbf16>, vector<256x64xf32> -> vector<256x64xf32>
    %30 = arith.addf %25, %29 : vector<256x64xf32>
    %31 = vector.extract_strided_slice %9 {offsets = [16, 0], sizes = [256, 9], strides = [1, 1]} : vector<288x9xbf16> to vector<256x9xbf16>
    %c3 = arith.constant 3 : index
    %c0_20 = arith.constant 0 : index
    %c0_21 = arith.constant 0 : index
    %32 = vector.load %arg2[%c3, %c0_20, %c0_21] : memref<9x9x64xbf16, #tpu.memory_space<vmem>>, vector<1x9x64xbf16>
    %33 = vector.shape_cast %32 : vector<1x9x64xbf16> to vector<9x64xbf16>
    %cst_22 = arith.constant dense<0.000000e+00> : vector<256x64xf32>
    %34 = tpu.matmul %31, %33, %cst_22 {dimension_numbers = #tpu.dot_dimension_numbers<[1], [0], [0], [1], [0, 0, 1, 1], [], []>} : vector<256x9xbf16>, vector<9x64xbf16>, vector<256x64xf32> -> vector<256x64xf32>
    %35 = arith.addf %30, %34 : vector<256x64xf32>
    %36 = vector.extract_strided_slice %11 {offsets = [16, 0], sizes = [256, 9], strides = [1, 1]} : vector<288x9xbf16> to vector<256x9xbf16>
    %c4 = arith.constant 4 : index
    %c0_23 = arith.constant 0 : index
    %c0_24 = arith.constant 0 : index
    %37 = vector.load %arg2[%c4, %c0_23, %c0_24] : memref<9x9x64xbf16, #tpu.memory_space<vmem>>, vector<1x9x64xbf16>
    %38 = vector.shape_cast %37 : vector<1x9x64xbf16> to vector<9x64xbf16>
    %cst_25 = arith.constant dense<0.000000e+00> : vector<256x64xf32>
    %39 = tpu.matmul %36, %38, %cst_25 {dimension_numbers = #tpu.dot_dimension_numbers<[1], [0], [0], [1], [0, 0, 1, 1], [], []>} : vector<256x9xbf16>, vector<9x64xbf16>, vector<256x64xf32> -> vector<256x64xf32>
    %40 = arith.addf %35, %39 : vector<256x64xf32>
    %41 = vector.extract_strided_slice %13 {offsets = [16, 0], sizes = [256, 9], strides = [1, 1]} : vector<288x9xbf16> to vector<256x9xbf16>
    %c5 = arith.constant 5 : index
    %c0_26 = arith.constant 0 : index
    %c0_27 = arith.constant 0 : index
    %42 = vector.load %arg2[%c5, %c0_26, %c0_27] : memref<9x9x64xbf16, #tpu.memory_space<vmem>>, vector<1x9x64xbf16>
    %43 = vector.shape_cast %42 : vector<1x9x64xbf16> to vector<9x64xbf16>
    %cst_28 = arith.constant dense<0.000000e+00> : vector<256x64xf32>
    %44 = tpu.matmul %41, %43, %cst_28 {dimension_numbers = #tpu.dot_dimension_numbers<[1], [0], [0], [1], [0, 0, 1, 1], [], []>} : vector<256x9xbf16>, vector<9x64xbf16>, vector<256x64xf32> -> vector<256x64xf32>
    %45 = arith.addf %40, %44 : vector<256x64xf32>
    %46 = vector.extract_strided_slice %9 {offsets = [32, 0], sizes = [256, 9], strides = [1, 1]} : vector<288x9xbf16> to vector<256x9xbf16>
    %c6 = arith.constant 6 : index
    %c0_29 = arith.constant 0 : index
    %c0_30 = arith.constant 0 : index
    %47 = vector.load %arg2[%c6, %c0_29, %c0_30] : memref<9x9x64xbf16, #tpu.memory_space<vmem>>, vector<1x9x64xbf16>
    %48 = vector.shape_cast %47 : vector<1x9x64xbf16> to vector<9x64xbf16>
    %cst_31 = arith.constant dense<0.000000e+00> : vector<256x64xf32>
    %49 = tpu.matmul %46, %48, %cst_31 {dimension_numbers = #tpu.dot_dimension_numbers<[1], [0], [0], [1], [0, 0, 1, 1], [], []>} : vector<256x9xbf16>, vector<9x64xbf16>, vector<256x64xf32> -> vector<256x64xf32>
    %50 = arith.addf %45, %49 : vector<256x64xf32>
    %51 = vector.extract_strided_slice %11 {offsets = [32, 0], sizes = [256, 9], strides = [1, 1]} : vector<288x9xbf16> to vector<256x9xbf16>
    %c7 = arith.constant 7 : index
    %c0_32 = arith.constant 0 : index
    %c0_33 = arith.constant 0 : index
    %52 = vector.load %arg2[%c7, %c0_32, %c0_33] : memref<9x9x64xbf16, #tpu.memory_space<vmem>>, vector<1x9x64xbf16>
    %53 = vector.shape_cast %52 : vector<1x9x64xbf16> to vector<9x64xbf16>
    %cst_34 = arith.constant dense<0.000000e+00> : vector<256x64xf32>
    %54 = tpu.matmul %51, %53, %cst_34 {dimension_numbers = #tpu.dot_dimension_numbers<[1], [0], [0], [1], [0, 0, 1, 1], [], []>} : vector<256x9xbf16>, vector<9x64xbf16>, vector<256x64xf32> -> vector<256x64xf32>
    %55 = arith.addf %50, %54 : vector<256x64xf32>
    %56 = vector.extract_strided_slice %13 {offsets = [32, 0], sizes = [256, 9], strides = [1, 1]} : vector<288x9xbf16> to vector<256x9xbf16>
    %c8 = arith.constant 8 : index
    %c0_35 = arith.constant 0 : index
    %c0_36 = arith.constant 0 : index
    %57 = vector.load %arg2[%c8, %c0_35, %c0_36] : memref<9x9x64xbf16, #tpu.memory_space<vmem>>, vector<1x9x64xbf16>
    %58 = vector.shape_cast %57 : vector<1x9x64xbf16> to vector<9x64xbf16>
    %cst_37 = arith.constant dense<0.000000e+00> : vector<256x64xf32>
    %59 = tpu.matmul %56, %58, %cst_37 {dimension_numbers = #tpu.dot_dimension_numbers<[1], [0], [0], [1], [0, 0, 1, 1], [], []>} : vector<256x9xbf16>, vector<9x64xbf16>, vector<256x64xf32> -> vector<256x64xf32>
    %60 = arith.addf %55, %59 : vector<256x64xf32>
    %61 = vector.broadcast %14 : vector<1x64xf32> to vector<256x64xf32>
    %62 = arith.addf %60, %61 : vector<256x64xf32>
    %63 = math.tanh %62 : vector<256x64xf32>
    %64 = vector.shape_cast %63 : vector<256x64xf32> to vector<16x16x64xf32>
    %c0_38 = arith.constant 0 : index
    %c1_39 = arith.constant 1 : index
    %c1_40 = arith.constant 1 : index
    %c0_41 = arith.constant 0 : index
    %65 = vector.load %arg4[%c0_38, %c1_39, %c1_40, %c0_41] : memref<1x18x18x64xf32, #tpu.memory_space<vmem>>, vector<1x16x16x64xf32>
    %66 = vector.shape_cast %65 : vector<1x16x16x64xf32> to vector<16x16x64xf32>
    %67 = vector.shape_cast %64 : vector<16x16x64xf32> to vector<1x16x16x64xf32>
    tpu.vector_store %arg4[%c0_38, %c1_39, %c1_40, %c0_41], %67 {strides = array<i32>} : memref<1x18x18x64xf32, #tpu.memory_space<vmem>>, vector<1x16x16x64xf32>,
    return
  }
  func.func @transform_0(%arg0: i32) -> (i32, i32, i32, i32) {
    %c0_i32 = arith.constant 0 : i32
    %c0_i32_0 = arith.constant 0 : i32
    %c0_i32_1 = arith.constant 0 : i32
    %c0_i32_2 = arith.constant 0 : i32
    return %arg0, %c0_i32, %c0_i32_0, %c0_i32_1 : i32, i32, i32, i32
  }
  func.func @transform_1(%arg0: i32) -> (i32, i32, i32) {
    %c0_i32 = arith.constant 0 : i32
    %c0_i32_0 = arith.constant 0 : i32
    %c0_i32_1 = arith.constant 0 : i32
    %c0_i32_2 = arith.constant 0 : i32
    return %c0_i32, %c0_i32_0, %c0_i32_1 : i32, i32, i32
  }
  func.func @transform_2(%arg0: i32) -> (i32, i32) {
    %c0_i32 = arith.constant 0 : i32
    %c0_i32_0 = arith.constant 0 : i32
    %c0_i32_1 = arith.constant 0 : i32
    return %c0_i32, %c0_i32_0 : i32, i32
  }
  func.func @transform_3(%arg0: i32) -> (i32, i32, i32, i32) {
    %c0_i32 = arith.constant 0 : i32
    %c0_i32_0 = arith.constant 0 : i32
    %c0_i32_1 = arith.constant 0 : i32
    %c0_i32_2 = arith.constant 0 : i32
    return %arg0, %c0_i32, %c0_i32_0, %c0_i32_1 : i32, i32, i32, i32
  }
}

module attributes {stable_mosaic.version = 11 : i64} {
  func.func @_layer_kernel(%arg0: i32, %arg1: memref<1x18x18x64xf32, #tpu.memory_space<vmem>>, %arg2: memref<9x192x64xbf16, #tpu.memory_space<vmem>>, %arg3: memref<1x64xf32, #tpu.memory_space<vmem>>, %arg4: memref<1x18x18x64xf32, #tpu.memory_space<vmem>>) attributes {dimension_semantics = [#tpu.dimension_semantics<parallel>], iteration_bounds = array<i64: 2>, scalar_prefetch = 0 : i64, scratch_operands = 0 : i64, tpu.core_type = #tpu.core_type<tc>, window_params = [{transform_indices = @transform_0, window_bounds = array<i64: 1, 18, 18, 64>}, {pipeline_mode = #tpu.pipeline_mode<synchronous>, transform_indices = @transform_1, window_bounds = array<i64: 9, 192, 64>}, {pipeline_mode = #tpu.pipeline_mode<synchronous>, transform_indices = @transform_2, window_bounds = array<i64: 1, 64>}, {transform_indices = @transform_3, window_bounds = array<i64: 1, 18, 18, 64>}]} {
    %cst = arith.constant 0.000000e+00 : f32
    %0 = vector.broadcast %cst : f32 to vector<1x18x18x64xf32>
    %c0 = arith.constant 0 : index
    %c0_0 = arith.constant 0 : index
    %c0_1 = arith.constant 0 : index
    %c0_2 = arith.constant 0 : index
    %1 = vector.load %arg4[%c0, %c0_0, %c0_1, %c0_2] : memref<1x18x18x64xf32, #tpu.memory_space<vmem>>, vector<1x18x18x64xf32>
    tpu.vector_store %arg4[%c0, %c0_0, %c0_1, %c0_2], %0 {strides = array<i32>} : memref<1x18x18x64xf32, #tpu.memory_space<vmem>>, vector<1x18x18x64xf32>,
    %c0_3 = arith.constant 0 : index
    %c0_4 = arith.constant 0 : index
    %c0_5 = arith.constant 0 : index
    %c0_6 = arith.constant 0 : index
    %2 = vector.load %arg1[%c0_3, %c0_4, %c0_5, %c0_6] : memref<1x18x18x64xf32, #tpu.memory_space<vmem>>, vector<1x18x18x64xf32>
    %3 = vector.shape_cast %2 : vector<1x18x18x64xf32> to vector<18x18x64xf32>
    %4 = arith.mulf %3, %3 : vector<18x18x64xf32>
    %5 = arith.mulf %4, %3 : vector<18x18x64xf32>
    %6 = tpu.concatenate %3, %4, %5 in 2 : vector<18x18x64xf32>, vector<18x18x64xf32>, vector<18x18x64xf32> -> vector<18x18x192xf32>
    %7 = arith.truncf %6 : vector<18x18x192xf32> to vector<18x18x192xbf16>
    %8 = vector.extract_strided_slice %7 {offsets = [0, 0, 0], sizes = [18, 16, 192], strides = [1, 1, 1]} : vector<18x18x192xbf16> to vector<18x16x192xbf16>
    %9 = vector.shape_cast %8 : vector<18x16x192xbf16> to vector<288x192xbf16>
    %10 = vector.extract_strided_slice %7 {offsets = [0, 1, 0], sizes = [18, 16, 192], strides = [1, 1, 1]} : vector<18x18x192xbf16> to vector<18x16x192xbf16>
    %11 = vector.shape_cast %10 : vector<18x16x192xbf16> to vector<288x192xbf16>
    %12 = vector.extract_strided_slice %7 {offsets = [0, 2, 0], sizes = [18, 16, 192], strides = [1, 1, 1]} : vector<18x18x192xbf16> to vector<18x16x192xbf16>
    %13 = vector.shape_cast %12 : vector<18x16x192xbf16> to vector<288x192xbf16>
    %c0_7 = arith.constant 0 : index
    %c0_8 = arith.constant 0 : index
    %14 = vector.load %arg3[%c0_7, %c0_8] : memref<1x64xf32, #tpu.memory_space<vmem>>, vector<1x64xf32>
    %cst_9 = arith.constant 0.000000e+00 : f32
    %15 = vector.broadcast %cst_9 : f32 to vector<256x64xf32>
    %16 = vector.extract_strided_slice %9 {offsets = [0, 0], sizes = [256, 192], strides = [1, 1]} : vector<288x192xbf16> to vector<256x192xbf16>
    %c0_10 = arith.constant 0 : index
    %c0_11 = arith.constant 0 : index
    %c0_12 = arith.constant 0 : index
    %17 = vector.load %arg2[%c0_10, %c0_11, %c0_12] : memref<9x192x64xbf16, #tpu.memory_space<vmem>>, vector<1x192x64xbf16>
    %18 = vector.shape_cast %17 : vector<1x192x64xbf16> to vector<192x64xbf16>
    %cst_13 = arith.constant dense<0.000000e+00> : vector<256x64xf32>
    %19 = tpu.matmul %16, %18, %cst_13 {dimension_numbers = #tpu.dot_dimension_numbers<[1], [0], [0], [1], [0, 0, 1, 1], [], []>} : vector<256x192xbf16>, vector<192x64xbf16>, vector<256x64xf32> -> vector<256x64xf32>
    %20 = arith.addf %15, %19 : vector<256x64xf32>
    %21 = vector.extract_strided_slice %11 {offsets = [0, 0], sizes = [256, 192], strides = [1, 1]} : vector<288x192xbf16> to vector<256x192xbf16>
    %c1 = arith.constant 1 : index
    %c0_14 = arith.constant 0 : index
    %c0_15 = arith.constant 0 : index
    %22 = vector.load %arg2[%c1, %c0_14, %c0_15] : memref<9x192x64xbf16, #tpu.memory_space<vmem>>, vector<1x192x64xbf16>
    %23 = vector.shape_cast %22 : vector<1x192x64xbf16> to vector<192x64xbf16>
    %cst_16 = arith.constant dense<0.000000e+00> : vector<256x64xf32>
    %24 = tpu.matmul %21, %23, %cst_16 {dimension_numbers = #tpu.dot_dimension_numbers<[1], [0], [0], [1], [0, 0, 1, 1], [], []>} : vector<256x192xbf16>, vector<192x64xbf16>, vector<256x64xf32> -> vector<256x64xf32>
    %25 = arith.addf %20, %24 : vector<256x64xf32>
    %26 = vector.extract_strided_slice %13 {offsets = [0, 0], sizes = [256, 192], strides = [1, 1]} : vector<288x192xbf16> to vector<256x192xbf16>
    %c2 = arith.constant 2 : index
    %c0_17 = arith.constant 0 : index
    %c0_18 = arith.constant 0 : index
    %27 = vector.load %arg2[%c2, %c0_17, %c0_18] : memref<9x192x64xbf16, #tpu.memory_space<vmem>>, vector<1x192x64xbf16>
    %28 = vector.shape_cast %27 : vector<1x192x64xbf16> to vector<192x64xbf16>
    %cst_19 = arith.constant dense<0.000000e+00> : vector<256x64xf32>
    %29 = tpu.matmul %26, %28, %cst_19 {dimension_numbers = #tpu.dot_dimension_numbers<[1], [0], [0], [1], [0, 0, 1, 1], [], []>} : vector<256x192xbf16>, vector<192x64xbf16>, vector<256x64xf32> -> vector<256x64xf32>
    %30 = arith.addf %25, %29 : vector<256x64xf32>
    %31 = vector.extract_strided_slice %9 {offsets = [16, 0], sizes = [256, 192], strides = [1, 1]} : vector<288x192xbf16> to vector<256x192xbf16>
    %c3 = arith.constant 3 : index
    %c0_20 = arith.constant 0 : index
    %c0_21 = arith.constant 0 : index
    %32 = vector.load %arg2[%c3, %c0_20, %c0_21] : memref<9x192x64xbf16, #tpu.memory_space<vmem>>, vector<1x192x64xbf16>
    %33 = vector.shape_cast %32 : vector<1x192x64xbf16> to vector<192x64xbf16>
    %cst_22 = arith.constant dense<0.000000e+00> : vector<256x64xf32>
    %34 = tpu.matmul %31, %33, %cst_22 {dimension_numbers = #tpu.dot_dimension_numbers<[1], [0], [0], [1], [0, 0, 1, 1], [], []>} : vector<256x192xbf16>, vector<192x64xbf16>, vector<256x64xf32> -> vector<256x64xf32>
    %35 = arith.addf %30, %34 : vector<256x64xf32>
    %36 = vector.extract_strided_slice %11 {offsets = [16, 0], sizes = [256, 192], strides = [1, 1]} : vector<288x192xbf16> to vector<256x192xbf16>
    %c4 = arith.constant 4 : index
    %c0_23 = arith.constant 0 : index
    %c0_24 = arith.constant 0 : index
    %37 = vector.load %arg2[%c4, %c0_23, %c0_24] : memref<9x192x64xbf16, #tpu.memory_space<vmem>>, vector<1x192x64xbf16>
    %38 = vector.shape_cast %37 : vector<1x192x64xbf16> to vector<192x64xbf16>
    %cst_25 = arith.constant dense<0.000000e+00> : vector<256x64xf32>
    %39 = tpu.matmul %36, %38, %cst_25 {dimension_numbers = #tpu.dot_dimension_numbers<[1], [0], [0], [1], [0, 0, 1, 1], [], []>} : vector<256x192xbf16>, vector<192x64xbf16>, vector<256x64xf32> -> vector<256x64xf32>
    %40 = arith.addf %35, %39 : vector<256x64xf32>
    %41 = vector.extract_strided_slice %13 {offsets = [16, 0], sizes = [256, 192], strides = [1, 1]} : vector<288x192xbf16> to vector<256x192xbf16>
    %c5 = arith.constant 5 : index
    %c0_26 = arith.constant 0 : index
    %c0_27 = arith.constant 0 : index
    %42 = vector.load %arg2[%c5, %c0_26, %c0_27] : memref<9x192x64xbf16, #tpu.memory_space<vmem>>, vector<1x192x64xbf16>
    %43 = vector.shape_cast %42 : vector<1x192x64xbf16> to vector<192x64xbf16>
    %cst_28 = arith.constant dense<0.000000e+00> : vector<256x64xf32>
    %44 = tpu.matmul %41, %43, %cst_28 {dimension_numbers = #tpu.dot_dimension_numbers<[1], [0], [0], [1], [0, 0, 1, 1], [], []>} : vector<256x192xbf16>, vector<192x64xbf16>, vector<256x64xf32> -> vector<256x64xf32>
    %45 = arith.addf %40, %44 : vector<256x64xf32>
    %46 = vector.extract_strided_slice %9 {offsets = [32, 0], sizes = [256, 192], strides = [1, 1]} : vector<288x192xbf16> to vector<256x192xbf16>
    %c6 = arith.constant 6 : index
    %c0_29 = arith.constant 0 : index
    %c0_30 = arith.constant 0 : index
    %47 = vector.load %arg2[%c6, %c0_29, %c0_30] : memref<9x192x64xbf16, #tpu.memory_space<vmem>>, vector<1x192x64xbf16>
    %48 = vector.shape_cast %47 : vector<1x192x64xbf16> to vector<192x64xbf16>
    %cst_31 = arith.constant dense<0.000000e+00> : vector<256x64xf32>
    %49 = tpu.matmul %46, %48, %cst_31 {dimension_numbers = #tpu.dot_dimension_numbers<[1], [0], [0], [1], [0, 0, 1, 1], [], []>} : vector<256x192xbf16>, vector<192x64xbf16>, vector<256x64xf32> -> vector<256x64xf32>
    %50 = arith.addf %45, %49 : vector<256x64xf32>
    %51 = vector.extract_strided_slice %11 {offsets = [32, 0], sizes = [256, 192], strides = [1, 1]} : vector<288x192xbf16> to vector<256x192xbf16>
    %c7 = arith.constant 7 : index
    %c0_32 = arith.constant 0 : index
    %c0_33 = arith.constant 0 : index
    %52 = vector.load %arg2[%c7, %c0_32, %c0_33] : memref<9x192x64xbf16, #tpu.memory_space<vmem>>, vector<1x192x64xbf16>
    %53 = vector.shape_cast %52 : vector<1x192x64xbf16> to vector<192x64xbf16>
    %cst_34 = arith.constant dense<0.000000e+00> : vector<256x64xf32>
    %54 = tpu.matmul %51, %53, %cst_34 {dimension_numbers = #tpu.dot_dimension_numbers<[1], [0], [0], [1], [0, 0, 1, 1], [], []>} : vector<256x192xbf16>, vector<192x64xbf16>, vector<256x64xf32> -> vector<256x64xf32>
    %55 = arith.addf %50, %54 : vector<256x64xf32>
    %56 = vector.extract_strided_slice %13 {offsets = [32, 0], sizes = [256, 192], strides = [1, 1]} : vector<288x192xbf16> to vector<256x192xbf16>
    %c8 = arith.constant 8 : index
    %c0_35 = arith.constant 0 : index
    %c0_36 = arith.constant 0 : index
    %57 = vector.load %arg2[%c8, %c0_35, %c0_36] : memref<9x192x64xbf16, #tpu.memory_space<vmem>>, vector<1x192x64xbf16>
    %58 = vector.shape_cast %57 : vector<1x192x64xbf16> to vector<192x64xbf16>
    %cst_37 = arith.constant dense<0.000000e+00> : vector<256x64xf32>
    %59 = tpu.matmul %56, %58, %cst_37 {dimension_numbers = #tpu.dot_dimension_numbers<[1], [0], [0], [1], [0, 0, 1, 1], [], []>} : vector<256x192xbf16>, vector<192x64xbf16>, vector<256x64xf32> -> vector<256x64xf32>
    %60 = arith.addf %55, %59 : vector<256x64xf32>
    %61 = vector.broadcast %14 : vector<1x64xf32> to vector<256x64xf32>
    %62 = arith.addf %60, %61 : vector<256x64xf32>
    %63 = math.tanh %62 : vector<256x64xf32>
    %64 = vector.shape_cast %63 : vector<256x64xf32> to vector<16x16x64xf32>
    %c0_38 = arith.constant 0 : index
    %c1_39 = arith.constant 1 : index
    %c1_40 = arith.constant 1 : index
    %c0_41 = arith.constant 0 : index
    %65 = vector.load %arg4[%c0_38, %c1_39, %c1_40, %c0_41] : memref<1x18x18x64xf32, #tpu.memory_space<vmem>>, vector<1x16x16x64xf32>
    %66 = vector.shape_cast %65 : vector<1x16x16x64xf32> to vector<16x16x64xf32>
    %67 = vector.shape_cast %64 : vector<16x16x64xf32> to vector<1x16x16x64xf32>
    tpu.vector_store %arg4[%c0_38, %c1_39, %c1_40, %c0_41], %67 {strides = array<i32>} : memref<1x18x18x64xf32, #tpu.memory_space<vmem>>, vector<1x16x16x64xf32>,
    return
  }
  func.func @transform_0(%arg0: i32) -> (i32, i32, i32, i32) {
    %c0_i32 = arith.constant 0 : i32
    %c0_i32_0 = arith.constant 0 : i32
    %c0_i32_1 = arith.constant 0 : i32
    %c0_i32_2 = arith.constant 0 : i32
    return %arg0, %c0_i32, %c0_i32_0, %c0_i32_1 : i32, i32, i32, i32
  }
  func.func @transform_1(%arg0: i32) -> (i32, i32, i32) {
    %c0_i32 = arith.constant 0 : i32
    %c0_i32_0 = arith.constant 0 : i32
    %c0_i32_1 = arith.constant 0 : i32
    %c0_i32_2 = arith.constant 0 : i32
    return %c0_i32, %c0_i32_0, %c0_i32_1 : i32, i32, i32
  }
  func.func @transform_2(%arg0: i32) -> (i32, i32) {
    %c0_i32 = arith.constant 0 : i32
    %c0_i32_0 = arith.constant 0 : i32
    %c0_i32_1 = arith.constant 0 : i32
    return %c0_i32, %c0_i32_0 : i32, i32
  }
  func.func @transform_3(%arg0: i32) -> (i32, i32, i32, i32) {
    %c0_i32 = arith.constant 0 : i32
    %c0_i32_0 = arith.constant 0 : i32
    %c0_i32_1 = arith.constant 0 : i32
    %c0_i32_2 = arith.constant 0 : i32
    return %arg0, %c0_i32, %c0_i32_0, %c0_i32_1 : i32, i32, i32, i32
  }
}

module attributes {stable_mosaic.version = 11 : i64} {
  func.func @_final_kernel(%arg0: i32, %arg1: memref<1x18x18x64xf32, #tpu.memory_space<vmem>>, %arg2: memref<9x192x8xbf16, #tpu.memory_space<vmem>>, %arg3: memref<1x8xf32, #tpu.memory_space<vmem>>, %arg4: memref<1x16x16x8xf32, #tpu.memory_space<vmem>>, %arg5: memref<1x16x16x8xf32, #tpu.memory_space<vmem>>) attributes {dimension_semantics = [#tpu.dimension_semantics<parallel>], iteration_bounds = array<i64: 2>, scalar_prefetch = 0 : i64, scratch_operands = 0 : i64, tpu.core_type = #tpu.core_type<tc>, window_params = [{transform_indices = @transform_0, window_bounds = array<i64: 1, 18, 18, 64>}, {pipeline_mode = #tpu.pipeline_mode<synchronous>, transform_indices = @transform_1, window_bounds = array<i64: 9, 192, 8>}, {pipeline_mode = #tpu.pipeline_mode<synchronous>, transform_indices = @transform_2, window_bounds = array<i64: 1, 8>}, {transform_indices = @transform_3, window_bounds = array<i64: 1, 16, 16, 8>}, {transform_indices = @transform_4, window_bounds = array<i64: 1, 16, 16, 8>}]} {
    %c0 = arith.constant 0 : index
    %c0_0 = arith.constant 0 : index
    %c0_1 = arith.constant 0 : index
    %c0_2 = arith.constant 0 : index
    %0 = vector.load %arg1[%c0, %c0_0, %c0_1, %c0_2] : memref<1x18x18x64xf32, #tpu.memory_space<vmem>>, vector<1x18x18x64xf32>
    %1 = vector.shape_cast %0 : vector<1x18x18x64xf32> to vector<18x18x64xf32>
    %2 = arith.mulf %1, %1 : vector<18x18x64xf32>
    %3 = arith.mulf %2, %1 : vector<18x18x64xf32>
    %4 = tpu.concatenate %1, %2, %3 in 2 : vector<18x18x64xf32>, vector<18x18x64xf32>, vector<18x18x64xf32> -> vector<18x18x192xf32>
    %5 = arith.truncf %4 : vector<18x18x192xf32> to vector<18x18x192xbf16>
    %6 = vector.extract_strided_slice %5 {offsets = [0, 0, 0], sizes = [18, 16, 192], strides = [1, 1, 1]} : vector<18x18x192xbf16> to vector<18x16x192xbf16>
    %7 = vector.shape_cast %6 : vector<18x16x192xbf16> to vector<288x192xbf16>
    %8 = vector.extract_strided_slice %5 {offsets = [0, 1, 0], sizes = [18, 16, 192], strides = [1, 1, 1]} : vector<18x18x192xbf16> to vector<18x16x192xbf16>
    %9 = vector.shape_cast %8 : vector<18x16x192xbf16> to vector<288x192xbf16>
    %10 = vector.extract_strided_slice %5 {offsets = [0, 2, 0], sizes = [18, 16, 192], strides = [1, 1, 1]} : vector<18x18x192xbf16> to vector<18x16x192xbf16>
    %11 = vector.shape_cast %10 : vector<18x16x192xbf16> to vector<288x192xbf16>
    %c0_3 = arith.constant 0 : index
    %c0_4 = arith.constant 0 : index
    %12 = vector.load %arg3[%c0_3, %c0_4] : memref<1x8xf32, #tpu.memory_space<vmem>>, vector<1x8xf32>
    %cst = arith.constant 0.000000e+00 : f32
    %13 = vector.broadcast %cst : f32 to vector<256x8xf32>
    %14 = vector.extract_strided_slice %7 {offsets = [0, 0], sizes = [256, 192], strides = [1, 1]} : vector<288x192xbf16> to vector<256x192xbf16>
    %c0_5 = arith.constant 0 : index
    %c0_6 = arith.constant 0 : index
    %c0_7 = arith.constant 0 : index
    %15 = vector.load %arg2[%c0_5, %c0_6, %c0_7] : memref<9x192x8xbf16, #tpu.memory_space<vmem>>, vector<1x192x8xbf16>
    %16 = vector.shape_cast %15 : vector<1x192x8xbf16> to vector<192x8xbf16>
    %cst_8 = arith.constant dense<0.000000e+00> : vector<256x8xf32>
    %17 = tpu.matmul %14, %16, %cst_8 {dimension_numbers = #tpu.dot_dimension_numbers<[1], [0], [0], [1], [0, 0, 1, 1], [], []>} : vector<256x192xbf16>, vector<192x8xbf16>, vector<256x8xf32> -> vector<256x8xf32>
    %18 = arith.addf %13, %17 : vector<256x8xf32>
    %19 = vector.extract_strided_slice %9 {offsets = [0, 0], sizes = [256, 192], strides = [1, 1]} : vector<288x192xbf16> to vector<256x192xbf16>
    %c1 = arith.constant 1 : index
    %c0_9 = arith.constant 0 : index
    %c0_10 = arith.constant 0 : index
    %20 = vector.load %arg2[%c1, %c0_9, %c0_10] : memref<9x192x8xbf16, #tpu.memory_space<vmem>>, vector<1x192x8xbf16>
    %21 = vector.shape_cast %20 : vector<1x192x8xbf16> to vector<192x8xbf16>
    %cst_11 = arith.constant dense<0.000000e+00> : vector<256x8xf32>
    %22 = tpu.matmul %19, %21, %cst_11 {dimension_numbers = #tpu.dot_dimension_numbers<[1], [0], [0], [1], [0, 0, 1, 1], [], []>} : vector<256x192xbf16>, vector<192x8xbf16>, vector<256x8xf32> -> vector<256x8xf32>
    %23 = arith.addf %18, %22 : vector<256x8xf32>
    %24 = vector.extract_strided_slice %11 {offsets = [0, 0], sizes = [256, 192], strides = [1, 1]} : vector<288x192xbf16> to vector<256x192xbf16>
    %c2 = arith.constant 2 : index
    %c0_12 = arith.constant 0 : index
    %c0_13 = arith.constant 0 : index
    %25 = vector.load %arg2[%c2, %c0_12, %c0_13] : memref<9x192x8xbf16, #tpu.memory_space<vmem>>, vector<1x192x8xbf16>
    %26 = vector.shape_cast %25 : vector<1x192x8xbf16> to vector<192x8xbf16>
    %cst_14 = arith.constant dense<0.000000e+00> : vector<256x8xf32>
    %27 = tpu.matmul %24, %26, %cst_14 {dimension_numbers = #tpu.dot_dimension_numbers<[1], [0], [0], [1], [0, 0, 1, 1], [], []>} : vector<256x192xbf16>, vector<192x8xbf16>, vector<256x8xf32> -> vector<256x8xf32>
    %28 = arith.addf %23, %27 : vector<256x8xf32>
    %29 = vector.extract_strided_slice %7 {offsets = [16, 0], sizes = [256, 192], strides = [1, 1]} : vector<288x192xbf16> to vector<256x192xbf16>
    %c3 = arith.constant 3 : index
    %c0_15 = arith.constant 0 : index
    %c0_16 = arith.constant 0 : index
    %30 = vector.load %arg2[%c3, %c0_15, %c0_16] : memref<9x192x8xbf16, #tpu.memory_space<vmem>>, vector<1x192x8xbf16>
    %31 = vector.shape_cast %30 : vector<1x192x8xbf16> to vector<192x8xbf16>
    %cst_17 = arith.constant dense<0.000000e+00> : vector<256x8xf32>
    %32 = tpu.matmul %29, %31, %cst_17 {dimension_numbers = #tpu.dot_dimension_numbers<[1], [0], [0], [1], [0, 0, 1, 1], [], []>} : vector<256x192xbf16>, vector<192x8xbf16>, vector<256x8xf32> -> vector<256x8xf32>
    %33 = arith.addf %28, %32 : vector<256x8xf32>
    %34 = vector.extract_strided_slice %9 {offsets = [16, 0], sizes = [256, 192], strides = [1, 1]} : vector<288x192xbf16> to vector<256x192xbf16>
    %c4 = arith.constant 4 : index
    %c0_18 = arith.constant 0 : index
    %c0_19 = arith.constant 0 : index
    %35 = vector.load %arg2[%c4, %c0_18, %c0_19] : memref<9x192x8xbf16, #tpu.memory_space<vmem>>, vector<1x192x8xbf16>
    %36 = vector.shape_cast %35 : vector<1x192x8xbf16> to vector<192x8xbf16>
    %cst_20 = arith.constant dense<0.000000e+00> : vector<256x8xf32>
    %37 = tpu.matmul %34, %36, %cst_20 {dimension_numbers = #tpu.dot_dimension_numbers<[1], [0], [0], [1], [0, 0, 1, 1], [], []>} : vector<256x192xbf16>, vector<192x8xbf16>, vector<256x8xf32> -> vector<256x8xf32>
    %38 = arith.addf %33, %37 : vector<256x8xf32>
    %39 = vector.extract_strided_slice %11 {offsets = [16, 0], sizes = [256, 192], strides = [1, 1]} : vector<288x192xbf16> to vector<256x192xbf16>
    %c5 = arith.constant 5 : index
    %c0_21 = arith.constant 0 : index
    %c0_22 = arith.constant 0 : index
    %40 = vector.load %arg2[%c5, %c0_21, %c0_22] : memref<9x192x8xbf16, #tpu.memory_space<vmem>>, vector<1x192x8xbf16>
    %41 = vector.shape_cast %40 : vector<1x192x8xbf16> to vector<192x8xbf16>
    %cst_23 = arith.constant dense<0.000000e+00> : vector<256x8xf32>
    %42 = tpu.matmul %39, %41, %cst_23 {dimension_numbers = #tpu.dot_dimension_numbers<[1], [0], [0], [1], [0, 0, 1, 1], [], []>} : vector<256x192xbf16>, vector<192x8xbf16>, vector<256x8xf32> -> vector<256x8xf32>
    %43 = arith.addf %38, %42 : vector<256x8xf32>
    %44 = vector.extract_strided_slice %7 {offsets = [32, 0], sizes = [256, 192], strides = [1, 1]} : vector<288x192xbf16> to vector<256x192xbf16>
    %c6 = arith.constant 6 : index
    %c0_24 = arith.constant 0 : index
    %c0_25 = arith.constant 0 : index
    %45 = vector.load %arg2[%c6, %c0_24, %c0_25] : memref<9x192x8xbf16, #tpu.memory_space<vmem>>, vector<1x192x8xbf16>
    %46 = vector.shape_cast %45 : vector<1x192x8xbf16> to vector<192x8xbf16>
    %cst_26 = arith.constant dense<0.000000e+00> : vector<256x8xf32>
    %47 = tpu.matmul %44, %46, %cst_26 {dimension_numbers = #tpu.dot_dimension_numbers<[1], [0], [0], [1], [0, 0, 1, 1], [], []>} : vector<256x192xbf16>, vector<192x8xbf16>, vector<256x8xf32> -> vector<256x8xf32>
    %48 = arith.addf %43, %47 : vector<256x8xf32>
    %49 = vector.extract_strided_slice %9 {offsets = [32, 0], sizes = [256, 192], strides = [1, 1]} : vector<288x192xbf16> to vector<256x192xbf16>
    %c7 = arith.constant 7 : index
    %c0_27 = arith.constant 0 : index
    %c0_28 = arith.constant 0 : index
    %50 = vector.load %arg2[%c7, %c0_27, %c0_28] : memref<9x192x8xbf16, #tpu.memory_space<vmem>>, vector<1x192x8xbf16>
    %51 = vector.shape_cast %50 : vector<1x192x8xbf16> to vector<192x8xbf16>
    %cst_29 = arith.constant dense<0.000000e+00> : vector<256x8xf32>
    %52 = tpu.matmul %49, %51, %cst_29 {dimension_numbers = #tpu.dot_dimension_numbers<[1], [0], [0], [1], [0, 0, 1, 1], [], []>} : vector<256x192xbf16>, vector<192x8xbf16>, vector<256x8xf32> -> vector<256x8xf32>
    %53 = arith.addf %48, %52 : vector<256x8xf32>
    %54 = vector.extract_strided_slice %11 {offsets = [32, 0], sizes = [256, 192], strides = [1, 1]} : vector<288x192xbf16> to vector<256x192xbf16>
    %c8 = arith.constant 8 : index
    %c0_30 = arith.constant 0 : index
    %c0_31 = arith.constant 0 : index
    %55 = vector.load %arg2[%c8, %c0_30, %c0_31] : memref<9x192x8xbf16, #tpu.memory_space<vmem>>, vector<1x192x8xbf16>
    %56 = vector.shape_cast %55 : vector<1x192x8xbf16> to vector<192x8xbf16>
    %cst_32 = arith.constant dense<0.000000e+00> : vector<256x8xf32>
    %57 = tpu.matmul %54, %56, %cst_32 {dimension_numbers = #tpu.dot_dimension_numbers<[1], [0], [0], [1], [0, 0, 1, 1], [], []>} : vector<256x192xbf16>, vector<192x8xbf16>, vector<256x8xf32> -> vector<256x8xf32>
    %58 = arith.addf %53, %57 : vector<256x8xf32>
    %59 = vector.broadcast %12 : vector<1x8xf32> to vector<256x8xf32>
    %60 = arith.addf %58, %59 : vector<256x8xf32>
    %61 = math.tanh %60 : vector<256x8xf32>
    %62 = vector.shape_cast %61 : vector<256x8xf32> to vector<16x16x8xf32>
    %c0_33 = arith.constant 0 : index
    %c0_34 = arith.constant 0 : index
    %c0_35 = arith.constant 0 : index
    %c0_36 = arith.constant 0 : index
    %63 = vector.load %arg4[%c0_33, %c0_34, %c0_35, %c0_36] : memref<1x16x16x8xf32, #tpu.memory_space<vmem>>, vector<1x16x16x8xf32>
    %64 = vector.shape_cast %63 : vector<1x16x16x8xf32> to vector<16x16x8xf32>
    %65 = arith.subf %64, %62 : vector<16x16x8xf32>
    %c0_37 = arith.constant 0 : index
    %c0_38 = arith.constant 0 : index
    %c0_39 = arith.constant 0 : index
    %c0_40 = arith.constant 0 : index
    %66 = vector.load %arg5[%c0_37, %c0_38, %c0_39, %c0_40] : memref<1x16x16x8xf32, #tpu.memory_space<vmem>>, vector<1x16x16x8xf32>
    %67 = vector.shape_cast %66 : vector<1x16x16x8xf32> to vector<16x16x8xf32>
    %68 = vector.shape_cast %65 : vector<16x16x8xf32> to vector<1x16x16x8xf32>
    tpu.vector_store %arg5[%c0_37, %c0_38, %c0_39, %c0_40], %68 {strides = array<i32>} : memref<1x16x16x8xf32, #tpu.memory_space<vmem>>, vector<1x16x16x8xf32>,
    return
  }
  func.func @transform_0(%arg0: i32) -> (i32, i32, i32, i32) {
    %c0_i32 = arith.constant 0 : i32
    %c0_i32_0 = arith.constant 0 : i32
    %c0_i32_1 = arith.constant 0 : i32
    %c0_i32_2 = arith.constant 0 : i32
    return %arg0, %c0_i32, %c0_i32_0, %c0_i32_1 : i32, i32, i32, i32
  }
  func.func @transform_1(%arg0: i32) -> (i32, i32, i32) {
    %c0_i32 = arith.constant 0 : i32
    %c0_i32_0 = arith.constant 0 : i32
    %c0_i32_1 = arith.constant 0 : i32
    %c0_i32_2 = arith.constant 0 : i32
    return %c0_i32, %c0_i32_0, %c0_i32_1 : i32, i32, i32
  }
  func.func @transform_2(%arg0: i32) -> (i32, i32) {
    %c0_i32 = arith.constant 0 : i32
    %c0_i32_0 = arith.constant 0 : i32
    %c0_i32_1 = arith.constant 0 : i32
    return %c0_i32, %c0_i32_0 : i32, i32
  }
  func.func @transform_3(%arg0: i32) -> (i32, i32, i32, i32) {
    %c0_i32 = arith.constant 0 : i32
    %c0_i32_0 = arith.constant 0 : i32
    %c0_i32_1 = arith.constant 0 : i32
    %c0_i32_2 = arith.constant 0 : i32
    return %arg0, %c0_i32, %c0_i32_0, %c0_i32_1 : i32, i32, i32, i32
  }
  func.func @transform_4(%arg0: i32) -> (i32, i32, i32, i32) {
    %c0_i32 = arith.constant 0 : i32
    %c0_i32_0 = arith.constant 0 : i32
    %c0_i32_1 = arith.constant 0 : i32
    %c0_i32_2 = arith.constant 0 : i32
    return %arg0, %c0_i32, %c0_i32_0, %c0_i32_1 : i32, i32, i32, i32
  }
}

</mosaic_0001>

<llo_original>
// kernel: self_dncnn_forward.5
$region0: #{self_dncnn_forward.5}
  #allocation0 [shape = 'u32[]', space=smem, size = 0x4, offset = 0x4, fixed_abs, tag = 'smem constant byte address 0x4 - core index']
  #allocation1 [shape = 'u32[144,128]{1,0:T(1,128)}', space=vmem, size = 0x12000, scoped, tag = 'internal scratch']
  %s0 = inlined_call_operand.vmem [shape: f32[2,18,18,3], index: 0, kind: input, shape index: {}]
  %s1 = inlined_call_operand.vmem [shape: bf16[9,9,64], index: 1, kind: input, shape index: {}]
  %s2 = inlined_call_operand.vmem [shape: f32[1,64], index: 2, kind: input, shape index: {}]
  %s3 = inlined_call_operand.vmem [shape: f32[2,18,18,64], index: 3, kind: output, shape index: {}]
  %s4 = sld [smem:[#allocation0]]
  $region45: #{self_dncnn_forward.5} parent=0
    _
  %s6 = ssub.s32 1, %s4
  %s7 = scalar_select 0, %s6, %s4
  loop: start=0, step=1, limit=4
  $region2: #{self_dncnn_forward.5} parent=0 // loop_pre_header
    _
  $region3: #{self_dncnn_forward.5} parent=0 // loop_header
    %s9 = sphi 0, %s13
    %p10 = scmp.ge.s32.totalorder %s9, 4
    %s19 = sphi 0, %s21
    %s22 = sphi 0, %s19
    %s23 = sphi 0, %s22
    %s39 = sphi 0, %s23
    %s43 = sphi 0, %s43
    %s45 = sphi 0, %s43
    %s46 = sphi 0, %s45
    %s60 = sphi 0, %s46
    %s64 = sphi 0, %s64
    %s66 = sphi 0, %s64
    %s67 = sphi 0, %s66
    %s81 = sphi 0, %s67
    %s87 = sphi 0, %s89
    %s90 = sphi 0, %s87
    %s91 = sphi 0, %s90
    %s107 = sphi 0, %s91
  $region4: #{self_dncnn_forward.5} parent=0 // loop_header_branch
    %12 = sbr.rel (%p10) target = $region8
  $region5: #{self_dncnn_forward.5} parent=0 // loop_body
    %s14 = ssub.s32 %s9, 1
    %s15 = ssub.s32 %s9, 2
    %s16 = sadd.s32 %s9, 1
    %s17 = ssub.s32 %s9, %s16
    %p18 = scmp.eq.s32.totalorder %s17, 0
    %s20 = sadd.s32 %s19, 1
    %s21 = scalar_select %p18, %s19, %s20
    %p24 = pneg %p18
    %p25 = scmp.eq.s32.totalorder %s9, 1
    %p26 = por %p24, %p25
    %p27 = scmp.ne.s32.totalorder %s19, %s22
    %p28 = scmp.eq.s32.totalorder %s9, 0
    %p29 = por %p27, %p28
    %p30 = scmp.ne.s32.totalorder %s19, %s22
    %p31 = scmp.eq.s32.totalorder %s14, 1
    %p32 = por %p30, %p31
    %p33 = scmp.ne.s32.totalorder %s22, %s23
    %p34 = scmp.eq.s32.totalorder %s14, 0
    %p35 = por %p33, %p34
    %p36 = scmp.ne.s32.totalorder %s22, %s23
    %p37 = scmp.eq.s32.totalorder %s15, 1
    %p38 = por %p36, %p37
    %p40 = scmp.ne.s32.totalorder %s23, %s39
    %p41 = scmp.eq.s32.totalorder %s15, 0
    %p42 = por %p40, %p41
    %s44 = sadd.s32 %s43, 1
    %p47 = scmp.eq.s32.totalorder %s9, 1
    %p48 = scmp.ne.s32.totalorder %s43, %s45
    %p49 = scmp.eq.s32.totalorder %s9, 0
    %p50 = por %p48, %p49
    %p51 = scmp.ne.s32.totalorder %s43, %s45
    %p52 = scmp.eq.s32.totalorder %s14, 1
    %p53 = por %p51, %p52
    %p54 = scmp.ne.s32.totalorder %s45, %s46
    %p55 = scmp.eq.s32.totalorder %s14, 0
    %p56 = por %p54, %p55
    %p57 = scmp.ne.s32.totalorder %s45, %s46
    %p58 = scmp.eq.s32.totalorder %s15, 1
    %p59 = por %p57, %p58
    %p61 = scmp.ne.s32.totalorder %s46, %s60
    %p62 = scmp.eq.s32.totalorder %s15, 0
    %p63 = por %p61, %p62
    %s65 = sadd.s32 %s64, 1
    %p68 = scmp.eq.s32.totalorder %s9, 1
    %p69 = scmp.ne.s32.totalorder %s64, %s66
    %p70 = scmp.eq.s32.totalorder %s9, 0
    %p71 = por %p69, %p70
    %p72 = scmp.ne.s32.totalorder %s64, %s66
    %p73 = scmp.eq.s32.totalorder %s14, 1
    %p74 = por %p72, %p73
    %p75 = scmp.ne.s32.totalorder %s66, %s67
    %p76 = scmp.eq.s32.totalorder %s14, 0
    %p77 = por %p75, %p76
    %p78 = scmp.ne.s32.totalorder %s66, %s67
    %p79 = scmp.eq.s32.totalorder %s15, 1
    %p80 = por %p78, %p79
    %p82 = scmp.ne.s32.totalorder %s67, %s81
    %p83 = scmp.eq.s32.totalorder %s15, 0
    %p84 = por %p82, %p83
    %s85 = ssub.s32 %s9, %s16
    %p86 = scmp.eq.s32.totalorder %s85, 0
    %s88 = sadd.s32 %s87, 1
    %s89 = scalar_select %p86, %s87, %s88
    %p92 = pneg %p86
    %p93 = scmp.eq.s32.totalorder %s9, 1
    %p94 = por %p92, %p93
    %p95 = scmp.ne.s32.totalorder %s87, %s90
    %p96 = scmp.eq.s32.totalorder %s9, 0
    %p97 = por %p95, %p96
    %p98 = scmp.ne.s32.totalorder %s87, %s90
    %p99 = scmp.eq.s32.totalorder %s14, 1
    %p100 = por %p98, %p99
    %p101 = scmp.ne.s32.totalorder %s90, %s91
    %p102 = scmp.eq.s32.totalorder %s14, 0
    %p103 = por %p101, %p102
    %p104 = scmp.ne.s32.totalorder %s90, %s91
    %p105 = scmp.eq.s32.totalorder %s15, 1
    %p106 = por %p104, %p105
    %p108 = scmp.ne.s32.totalorder %s91, %s107
    %p109 = scmp.eq.s32.totalorder %s15, 0
    %p110 = por %p108, %p109
    %p111 = scmp.le.s32.totalorder 1, %s9
    %p112 = scmp.lt.s32.totalorder %s9, 3
    %p113 = pnand %p111, %p112
    %p114 = pneg %p113
    // Predicated region
    $region9: #{self_dncnn_forward.5} parent=5 // pred_check
      _
    $region10: #{self_dncnn_forward.5} parent=5 // pred_check_branch
      %116 = sbr.rel (%p113) target = $region12
    $region11: #{self_dncnn_forward.5} parent=5 // pred_region
      %s117 = ssub.s32 %s9, 1
      // Predicated region
      $region13: #{self_dncnn_forward.5} parent=11 // pred_check
        %p118 = pneg %p56
      $region14: #{self_dncnn_forward.5} parent=11 // pred_check_branch
        %120 = sbr.rel (%p118) target = $region16
      $region15: #{self_dncnn_forward.5} parent=11 // pred_region
        _
      $region16: #{self_dncnn_forward.5} parent=11 // pred_fallthru
        _
      // Predicated region
      $region17: #{self_dncnn_forward.5} parent=11 // pred_check
        %p121 = pneg %p77
      $region18: #{self_dncnn_forward.5} parent=11 // pred_check_branch
        %123 = sbr.rel (%p121) target = $region20
      $region19: #{self_dncnn_forward.5} parent=11 // pred_region
        _
      $region20: #{self_dncnn_forward.5} parent=11 // pred_fallthru
        _
    $region12: #{self_dncnn_forward.5} parent=5 // pred_fallthru
      _
    %p124 = scmp.lt.s32.totalorder %s9, 2
    // Predicated region
    $region21: #{self_dncnn_forward.5} parent=5 // pred_check
      %p125 = pneg %p124
    $region22: #{self_dncnn_forward.5} parent=5 // pred_check_branch
      %127 = sbr.rel (%p125) target = $region24
    $region23: #{self_dncnn_forward.5} parent=5 // pred_region
      // Predicated region
      $region25: #{self_dncnn_forward.5} parent=23 // pred_check
        %p128 = pneg %p29
      $region26: #{self_dncnn_forward.5} parent=23 // pred_check_branch
        %130 = sbr.rel (%p128) target = $region28
      $region27: #{self_dncnn_forward.5} parent=23 // pred_region
        %p131 = scmp.lt.s32.totalorder %s9, 1
        %s132 = scalar_select %p131, %s9, 1
        %s133 = smul.addr %s132, 54
        %s134 = smul.addr %s133, 8
        %s135 = scalar_lea.vmem %s0, %s134
      $region28: #{self_dncnn_forward.5} parent=23 // pred_fallthru
        _
    $region24: #{self_dncnn_forward.5} parent=5 // pred_fallthru
      _
    %p136 = scmp.le.s32.totalorder 1, %s9
    %p137 = scmp.lt.s32.totalorder %s9, 3
    %p138 = pnand %p136, %p137
    %p139 = pneg %p138
    // Predicated region
    $region29: #{self_dncnn_forward.5} parent=5 // pred_check
      _
    $region30: #{self_dncnn_forward.5} parent=5 // pred_check_branch
      %141 = sbr.rel (%p138) target = $region32
    $region31: #{self_dncnn_forward.5} parent=5 // pred_region
      %s142 = ssub.s32 %s9, 1
      %p143 = scmp.lt.s32.totalorder %s14, 1
      %s144 = scalar_select %p143, %s14, 1
      %s145 = smul.addr %s144, 54
      %s146 = smul.addr %s145, 8
      %s147 = scalar_lea.vmem %s0, %s146
      %p148 = pneg %p35
      %p149 = pneg %p32
      %p150 = pneg %p56
      %p151 = pneg %p53
      %p152 = pneg %p77
      %p153 = pneg %p74
      %p154 = pneg %p103
      %p155 = pneg %p100
      %p156 = scmp.lt.s32.totalorder %s14, 1
      %s157 = scalar_select %p156, %s14, 1
      %s158 = smul.addr %s157, 54
      %s159 = smul.addr %s158, 8
      %s160 = scalar_lea.vmem %s3, %s159
      %p161 = scmp.lt.s32.totalorder %s14, 1
      %s162 = scalar_select %p161, %s14, 1
      %s163 = smul.addr %s162, 54
      %s164 = smul.addr %s163, 8
      %s165 = scalar_lea.vmem %s0, %s164
      %p166 = scmp.lt.s32.totalorder %s14, 1
      %s167 = scalar_select %p166, %s14, 1
      %s168 = smul.addr %s167, 54
      %s169 = smul.addr %s168, 8
      %s170 = scalar_lea.vmem %s3, %s169
      %vm172 = vcmask 523264
      %173 = vst.msk [vmem:[%s170] sm:$0xff] %vm172, 0.0
      %174 = vst.msk [vmem:[%s170 + $0x8] sm:$0xff] %vm172, 0.0
      %vm175 = vcmask 517120
      %176 = vst.msk [vmem:[%s170 + $0x10] sm:$0x3] %vm175, 0.0
      %177 = vst.msk [vmem:[%s170 + $0x18] sm:$0xff] %vm172, 0.0
      %178 = vst.msk [vmem:[%s170 + $0x20] sm:$0xff] %vm172, 0.0
      %179 = vst.msk [vmem:[%s170 + $0x28] sm:$0x3] %vm175, 0.0
      %180 = vst.msk [vmem:[%s170 + $0x30] sm:$0xff] %vm172, 0.0
      %181 = vst.msk [vmem:[%s170 + $0x38] sm:$0xff] %vm172, 0.0
      %182 = vst.msk [vmem:[%s170 + $0x40] sm:$0x3] %vm175, 0.0
      %183 = vst.msk [vmem:[%s170 + $0x48] sm:$0xff] %vm172, 0.0
      %184 = vst.msk [vmem:[%s170 + $0x50] sm:$0xff] %vm172, 0.0
      %185 = vst.msk [vmem:[%s170 + $0x58] sm:$0x3] %vm175, 0.0
      %186 = vst.msk [vmem:[%s170 + $0x60] sm:$0xff] %vm172, 0.0
      %187 = vst.msk [vmem:[%s170 + $0x68] sm:$0xff] %vm172, 0.0
      %188 = vst.msk [vmem:[%s170 + $0x70] sm:$0x3] %vm175, 0.0
      %189 = vst.msk [vmem:[%s170 + $0x78] sm:$0xff] %vm172, 0.0
      %190 = vst.msk [vmem:[%s170 + $0x80] sm:$0xff] %vm172, 0.0
      %191 = vst.msk [vmem:[%s170 + $0x88] sm:$0x3] %vm175, 0.0
      %192 = vst.msk [vmem:[%s170 + $0x90] sm:$0xff] %vm172, 0.0
      %193 = vst.msk [vmem:[%s170 + $0x98] sm:$0xff] %vm172, 0.0
      %194 = vst.msk [vmem:[%s170 + $0xa0] sm:$0x3] %vm175, 0.0
      %195 = vst.msk [vmem:[%s170 + $0xa8] sm:$0xff] %vm172, 0.0
      %196 = vst.msk [vmem:[%s170 + $0xb0] sm:$0xff] %vm172, 0.0
      %197 = vst.msk [vmem:[%s170 + $0xb8] sm:$0x3] %vm175, 0.0
      %198 = vst.msk [vmem:[%s170 + $0xc0] sm:$0xff] %vm172, 0.0
      %199 = vst.msk [vmem:[%s170 + $0xc8] sm:$0xff] %vm172, 0.0
      %200 = vst.msk [vmem:[%s170 + $0xd0] sm:$0x3] %vm175, 0.0
      %201 = vst.msk [vmem:[%s170 + $0xd8] sm:$0xff] %vm172, 0.0
      %202 = vst.msk [vmem:[%s170 + $0xe0] sm:$0xff] %vm172, 0.0
      %203 = vst.msk [vmem:[%s170 + $0xe8] sm:$0x3] %vm175, 0.0
      %204 = vst.msk [vmem:[%s170 + $0xf0] sm:$0xff] %vm172, 0.0
      %205 = vst.msk [vmem:[%s170 + $0xf8] sm:$0xff] %vm172, 0.0
      %206 = vst.msk [vmem:[%s170 + $0x100] sm:$0x3] %vm175, 0.0
      %207 = vst.msk [vmem:[%s170 + $0x108] sm:$0xff] %vm172, 0.0
      %208 = vst.msk [vmem:[%s170 + $0x110] sm:$0xff] %vm172, 0.0
      %209 = vst.msk [vmem:[%s170 + $0x118] sm:$0x3] %vm175, 0.0
      %210 = vst.msk [vmem:[%s170 + $0x120] sm:$0xff] %vm172, 0.0
      %211 = vst.msk [vmem:[%s170 + $0x128] sm:$0xff] %vm172, 0.0
      %212 = vst.msk [vmem:[%s170 + $0x130] sm:$0x3] %vm175, 0.0
      %213 = vst.msk [vmem:[%s170 + $0x138] sm:$0xff] %vm172, 0.0
      %214 = vst.msk [vmem:[%s170 + $0x140] sm:$0xff] %vm172, 0.0
      %215 = vst.msk [vmem:[%s170 + $0x148] sm:$0x3] %vm175, 0.0
      %216 = vst.msk [vmem:[%s170 + $0x150] sm:$0xff] %vm172, 0.0
      %217 = vst.msk [vmem:[%s170 + $0x158] sm:$0xff] %vm172, 0.0
      %218 = vst.msk [vmem:[%s170 + $0x160] sm:$0x3] %vm175, 0.0
      %219 = vst.msk [vmem:[%s170 + $0x168] sm:$0xff] %vm172, 0.0
      %220 = vst.msk [vmem:[%s170 + $0x170] sm:$0xff] %vm172, 0.0
      %221 = vst.msk [vmem:[%s170 + $0x178] sm:$0x3] %vm175, 0.0
      %222 = vst.msk [vmem:[%s170 + $0x180] sm:$0xff] %vm172, 0.0
      %223 = vst.msk [vmem:[%s170 + $0x188] sm:$0xff] %vm172, 0.0
      %224 = vst.msk [vmem:[%s170 + $0x190] sm:$0x3] %vm175, 0.0
      %225 = vst.msk [vmem:[%s170 + $0x198] sm:$0xff] %vm172, 0.0
      %226 = vst.msk [vmem:[%s170 + $0x1a0] sm:$0xff] %vm172, 0.0
      %227 = vst.msk [vmem:[%s170 + $0x1a8] sm:$0x3] %vm175, 0.0
      %v228 = vld [vmem:[%s165] sm:$0xff]
      %v229 = vld [vmem:[%s165 + $0x8] sm:$0xff]
      %v230 = vld [vmem:[%s165 + $0x10] sm:$0x3]
      %v231 = vld [vmem:[%s165 + $0x18] sm:$0xff]
      %v232 = vld [vmem:[%s165 + $0x20] sm:$0xff]
      %v233 = vld [vmem:[%s165 + $0x28] sm:$0x3]
      %v234 = vld [vmem:[%s165 + $0x30] sm:$0xff]
      %v235 = vld [vmem:[%s165 + $0x38] sm:$0xff]
      %v236 = vld [vmem:[%s165 + $0x40] sm:$0x3]
      %v237 = vld [vmem:[%s165 + $0x48] sm:$0xff]
      %v238 = vld [vmem:[%s165 + $0x50] sm:$0xff]
      %v239 = vld [vmem:[%s165 + $0x58] sm:$0x3]
      %v240 = vld [vmem:[%s165 + $0x60] sm:$0xff]
      %v241 = vld [vmem:[%s165 + $0x68] sm:$0xff]
      %v242 = vld [vmem:[%s165 + $0x70] sm:$0x3]
      %v243 = vld [vmem:[%s165 + $0x78] sm:$0xff]
      %v244 = vld [vmem:[%s165 + $0x80] sm:$0xff]
      %v245 = vld [vmem:[%s165 + $0x88] sm:$0x3]
      %v246 = vld [vmem:[%s165 + $0x90] sm:$0xff]
      %v247 = vld [vmem:[%s165 + $0x98] sm:$0xff]
      %v248 = vld [vmem:[%s165 + $0xa0] sm:$0x3]
      %v249 = vld [vmem:[%s165 + $0xa8] sm:$0xff]
      %v250 = vld [vmem:[%s165 + $0xb0] sm:$0xff]
      %v251 = vld [vmem:[%s165 + $0xb8] sm:$0x3]
      %v252 = vld [vmem:[%s165 + $0xc0] sm:$0xff]
      %v253 = vld [vmem:[%s165 + $0xc8] sm:$0xff]
      %v254 = vld [vmem:[%s165 + $0xd0] sm:$0x3]
      %v255 = vld [vmem:[%s165 + $0xd8] sm:$0xff]
      %v256 = vld [vmem:[%s165 + $0xe0] sm:$0xff]
      %v257 = vld [vmem:[%s165 + $0xe8] sm:$0x3]
      %v258 = vld [vmem:[%s165 + $0xf0] sm:$0xff]
      %v259 = vld [vmem:[%s165 + $0xf8] sm:$0xff]
      %v260 = vld [vmem:[%s165 + $0x100] sm:$0x3]
      %v261 = vld [vmem:[%s165 + $0x108] sm:$0xff]
      %v262 = vld [vmem:[%s165 + $0x110] sm:$0xff]
      %v263 = vld [vmem:[%s165 + $0x118] sm:$0x3]
      %v264 = vld [vmem:[%s165 + $0x120] sm:$0xff]
      %v265 = vld [vmem:[%s165 + $0x128] sm:$0xff]
      %v266 = vld [vmem:[%s165 + $0x130] sm:$0x3]
      %v267 = vld [vmem:[%s165 + $0x138] sm:$0xff]
      %v268 = vld [vmem:[%s165 + $0x140] sm:$0xff]
      %v269 = vld [vmem:[%s165 + $0x148] sm:$0x3]
      %v270 = vld [vmem:[%s165 + $0x150] sm:$0xff]
      %v271 = vld [vmem:[%s165 + $0x158] sm:$0xff]
      %v272 = vld [vmem:[%s165 + $0x160] sm:$0x3]
      %v273 = vld [vmem:[%s165 + $0x168] sm:$0xff]
      %v274 = vld [vmem:[%s165 + $0x170] sm:$0xff]
      %v275 = vld [vmem:[%s165 + $0x178] sm:$0x3]
      %v276 = vld [vmem:[%s165 + $0x180] sm:$0xff]
      %v277 = vld [vmem:[%s165 + $0x188] sm:$0xff]
      %v278 = vld [vmem:[%s165 + $0x190] sm:$0x3]
      %v279 = vld [vmem:[%s165 + $0x198] sm:$0xff]
      %v280 = vld [vmem:[%s165 + $0x1a0] sm:$0xff]
      %v281 = vld [vmem:[%s165 + $0x1a8] sm:$0x3]
      %v282 = vmul.f32 %v228, %v228
      %v283 = vmul.f32 %v229, %v229
      %v284 = vmul.f32 %v230, %v230
      %v285 = vmul.f32 %v231, %v231
      %v286 = vmul.f32 %v232, %v232
      %v287 = vmul.f32 %v233, %v233
      %v288 = vmul.f32 %v234, %v234
      %v289 = vmul.f32 %v235, %v235
      %v290 = vmul.f32 %v236, %v236
      %v291 = vmul.f32 %v237, %v237
      %v292 = vmul.f32 %v238, %v238
      %v293 = vmul.f32 %v239, %v239
      %v294 = vmul.f32 %v240, %v240
      %v295 = vmul.f32 %v241, %v241
      %v296 = vmul.f32 %v242, %v242
      %v297 = vmul.f32 %v243, %v243
      %v298 = vmul.f32 %v244, %v244
      %v299 = vmul.f32 %v245, %v245
      %v300 = vmul.f32 %v246, %v246
      %v301 = vmul.f32 %v247, %v247
      %v302 = vmul.f32 %v248, %v248
      %v303 = vmul.f32 %v249, %v249
      %v304 = vmul.f32 %v250, %v250
      %v305 = vmul.f32 %v251, %v251
      %v306 = vmul.f32 %v252, %v252
      %v307 = vmul.f32 %v253, %v253
      %v308 = vmul.f32 %v254, %v254
      %v309 = vmul.f32 %v255, %v255
      %v310 = vmul.f32 %v256, %v256
      %v311 = vmul.f32 %v257, %v257
      %v312 = vmul.f32 %v258, %v258
      %v313 = vmul.f32 %v259, %v259
      %v314 = vmul.f32 %v260, %v260
      %v315 = vmul.f32 %v261, %v261
      %v316 = vmul.f32 %v262, %v262
      %v317 = vmul.f32 %v263, %v263
      %v318 = vmul.f32 %v264, %v264
      %v319 = vmul.f32 %v265, %v265
      %v320 = vmul.f32 %v266, %v266
      %v321 = vmul.f32 %v267, %v267
      %v322 = vmul.f32 %v268, %v268
      %v323 = vmul.f32 %v269, %v269
      %v324 = vmul.f32 %v270, %v270
      %v325 = vmul.f32 %v271, %v271
      %v326 = vmul.f32 %v272, %v272
      %v327 = vmul.f32 %v273, %v273
      %v328 = vmul.f32 %v274, %v274
      %v329 = vmul.f32 %v275, %v275
      %v330 = vmul.f32 %v276, %v276
      %v331 = vmul.f32 %v277, %v277
      %v332 = vmul.f32 %v278, %v278
      %v333 = vmul.f32 %v279, %v279
      %v334 = vmul.f32 %v280, %v280
      %v335 = vmul.f32 %v281, %v281
      %v336 = vmul.f32 %v282, %v228
      %v337 = vmul.f32 %v283, %v229
      %v338 = vmul.f32 %v284, %v230
      %v339 = vmul.f32 %v285, %v231
      %v340 = vmul.f32 %v286, %v232
      %v341 = vmul.f32 %v287, %v233
      %v342 = vmul.f32 %v288, %v234
      %v343 = vmul.f32 %v289, %v235
      %v344 = vmul.f32 %v290, %v236
      %v345 = vmul.f32 %v291, %v237
      %v346 = vmul.f32 %v292, %v238
      %v347 = vmul.f32 %v293, %v239
      %v348 = vmul.f32 %v294, %v240
      %v349 = vmul.f32 %v295, %v241
      %v350 = vmul.f32 %v296, %v242
      %v351 = vmul.f32 %v297, %v243
      %v352 = vmul.f32 %v298, %v244
      %v353 = vmul.f32 %v299, %v245
      %v354 = vmul.f32 %v300, %v246
      %v355 = vmul.f32 %v301, %v247
      %v356 = vmul.f32 %v302, %v248
      %v357 = vmul.f32 %v303, %v249
      %v358 = vmul.f32 %v304, %v250
      %v359 = vmul.f32 %v305, %v251
      %v360 = vmul.f32 %v306, %v252
      %v361 = vmul.f32 %v307, %v253
      %v362 = vmul.f32 %v308, %v254
      %v363 = vmul.f32 %v309, %v255
      %v364 = vmul.f32 %v310, %v256
      %v365 = vmul.f32 %v311, %v257
      %v366 = vmul.f32 %v312, %v258
      %v367 = vmul.f32 %v313, %v259
      %v368 = vmul.f32 %v314, %v260
      %v369 = vmul.f32 %v315, %v261
      %v370 = vmul.f32 %v316, %v262
      %v371 = vmul.f32 %v317, %v263
      %v372 = vmul.f32 %v318, %v264
      %v373 = vmul.f32 %v319, %v265
      %v374 = vmul.f32 %v320, %v266
      %v375 = vmul.f32 %v321, %v267
      %v376 = vmul.f32 %v322, %v268
      %v377 = vmul.f32 %v323, %v269
      %v378 = vmul.f32 %v324, %v270
      %v379 = vmul.f32 %v325, %v271
      %v380 = vmul.f32 %v326, %v272
      %v381 = vmul.f32 %v327, %v273
      %v382 = vmul.f32 %v328, %v274
      %v383 = vmul.f32 %v329, %v275
      %v384 = vmul.f32 %v330, %v276
      %v385 = vmul.f32 %v331, %v277
      %v386 = vmul.f32 %v332, %v278
      %v387 = vmul.f32 %v333, %v279
      %v388 = vmul.f32 %v334, %v280
      %v389 = vmul.f32 %v335, %v281
      %444 = vrot.lane.b32.xlu0 %v282, 3
      %v445 = vpop.permute.xlu0 %444
      %446 = vrot.lane.b32.xlu0 %v283, 3
      %v447 = vpop.permute.xlu0 %446
      %448 = vrot.lane.b32.xlu0 %v284, 3
      %v449 = vpop.permute.xlu0 %448
      %450 = vrot.lane.b32.xlu0 %v285, 3
      %v451 = vpop.permute.xlu0 %450
      %452 = vrot.lane.b32.xlu0 %v286, 3
      %v453 = vpop.permute.xlu0 %452
      %454 = vrot.lane.b32.xlu0 %v287, 3
      %v455 = vpop.permute.xlu0 %454
      %456 = vrot.lane.b32.xlu0 %v288, 3
      %v457 = vpop.permute.xlu0 %456
      %458 = vrot.lane.b32.xlu0 %v289, 3
      %v459 = vpop.permute.xlu0 %458
      %460 = vrot.lane.b32.xlu0 %v290, 3
      %v461 = vpop.permute.xlu0 %460
      %462 = vrot.lane.b32.xlu0 %v291, 3
      %v463 = vpop.permute.xlu0 %462
      %464 = vrot.lane.b32.xlu0 %v292, 3
      %v465 = vpop.permute.xlu0 %464
      %466 = vrot.lane.b32.xlu0 %v293, 3
      %v467 = vpop.permute.xlu0 %466
      %468 = vrot.lane.b32.xlu0 %v294, 3
      %v469 = vpop.permute.xlu0 %468
      %470 = vrot.lane.b32.xlu0 %v295, 3
      %v471 = vpop.permute.xlu0 %470
      %472 = vrot.lane.b32.xlu0 %v296, 3
      %v473 = vpop.permute.xlu0 %472
      %474 = vrot.lane.b32.xlu0 %v297, 3
      %v475 = vpop.permute.xlu0 %474
      %476 = vrot.lane.b32.xlu0 %v298, 3
      %v477 = vpop.permute.xlu0 %476
      %478 = vrot.lane.b32.xlu0 %v299, 3
      %v479 = vpop.permute.xlu0 %478
      %480 = vrot.lane.b32.xlu0 %v300, 3
      %v481 = vpop.permute.xlu0 %480
      %482 = vrot.lane.b32.xlu0 %v301, 3
      %v483 = vpop.permute.xlu0 %482
      %484 = vrot.lane.b32.xlu0 %v302, 3
      %v485 = vpop.permute.xlu0 %484
      %486 = vrot.lane.b32.xlu0 %v303, 3
      %v487 = vpop.permute.xlu0 %486
      %488 = vrot.lane.b32.xlu0 %v304, 3
      %v489 = vpop.permute.xlu0 %488
      %490 = vrot.lane.b32.xlu0 %v305, 3
      %v491 = vpop.permute.xlu0 %490
      %492 = vrot.lane.b32.xlu0 %v306, 3
      %v493 = vpop.permute.xlu0 %492
      %494 = vrot.lane.b32.xlu0 %v307, 3
      %v495 = vpop.permute.xlu0 %494
      %496 = vrot.lane.b32.xlu0 %v308, 3
      %v497 = vpop.permute.xlu0 %496
      %498 = vrot.lane.b32.xlu0 %v309, 3
      %v499 = vpop.permute.xlu0 %498
      %500 = vrot.lane.b32.xlu0 %v310, 3
      %v501 = vpop.permute.xlu0 %500
      %502 = vrot.lane.b32.xlu0 %v311, 3
      %v503 = vpop.permute.xlu0 %502
      %504 = vrot.lane.b32.xlu0 %v312, 3
      %v505 = vpop.permute.xlu0 %504
      %506 = vrot.lane.b32.xlu0 %v313, 3
      %v507 = vpop.permute.xlu0 %506
      %508 = vrot.lane.b32.xlu0 %v314, 3
      %v509 = vpop.permute.xlu0 %508
      %510 = vrot.lane.b32.xlu0 %v315, 3
      %v511 = vpop.permute.xlu0 %510
      %512 = vrot.lane.b32.xlu0 %v316, 3
      %v513 = vpop.permute.xlu0 %512
      %514 = vrot.lane.b32.xlu0 %v317, 3
      %v515 = vpop.permute.xlu0 %514
      %516 = vrot.lane.b32.xlu0 %v318, 3
      %v517 = vpop.permute.xlu0 %516
      %518 = vrot.lane.b32.xlu0 %v319, 3
      %v519 = vpop.permute.xlu0 %518
      %520 = vrot.lane.b32.xlu0 %v320, 3
      %v521 = vpop.permute.xlu0 %520
      %522 = vrot.lane.b32.xlu0 %v321, 3
      %v523 = vpop.permute.xlu0 %522
      %524 = vrot.lane.b32.xlu0 %v322, 3
      %v525 = vpop.permute.xlu0 %524
      %526 = vrot.lane.b32.xlu0 %v323, 3
      %v527 = vpop.permute.xlu0 %526
      %528 = vrot.lane.b32.xlu0 %v324, 3
      %v529 = vpop.permute.xlu0 %528
      %530 = vrot.lane.b32.xlu0 %v325, 3
      %v531 = vpop.permute.xlu0 %530
      %532 = vrot.lane.b32.xlu0 %v326, 3
      %v533 = vpop.permute.xlu0 %532
      %534 = vrot.lane.b32.xlu0 %v327, 3
      %v535 = vpop.permute.xlu0 %534
      %536 = vrot.lane.b32.xlu0 %v328, 3
      %v537 = vpop.permute.xlu0 %536
      %538 = vrot.lane.b32.xlu0 %v329, 3
      %v539 = vpop.permute.xlu0 %538
      %540 = vrot.lane.b32.xlu0 %v330, 3
      %v541 = vpop.permute.xlu0 %540
      %542 = vrot.lane.b32.xlu0 %v331, 3
      %v543 = vpop.permute.xlu0 %542
      %544 = vrot.lane.b32.xlu0 %v332, 3
      %v545 = vpop.permute.xlu0 %544
      %546 = vrot.lane.b32.xlu0 %v333, 3
      %v547 = vpop.permute.xlu0 %546
      %548 = vrot.lane.b32.xlu0 %v334, 3
      %v549 = vpop.permute.xlu0 %548
      %550 = vrot.lane.b32.xlu0 %v335, 3
      %v551 = vpop.permute.xlu0 %550
      %660 = vrot.lane.b32.xlu0 %v336, 6
      %v661 = vpop.permute.xlu0 %660
      %662 = vrot.lane.b32.xlu0 %v337, 6
      %v663 = vpop.permute.xlu0 %662
      %664 = vrot.lane.b32.xlu0 %v338, 6
      %v665 = vpop.permute.xlu0 %664
      %666 = vrot.lane.b32.xlu0 %v339, 6
      %v667 = vpop.permute.xlu0 %666
      %668 = vrot.lane.b32.xlu0 %v340, 6
      %v669 = vpop.permute.xlu0 %668
      %670 = vrot.lane.b32.xlu0 %v341, 6
      %v671 = vpop.permute.xlu0 %670
      %672 = vrot.lane.b32.xlu0 %v342, 6
      %v673 = vpop.permute.xlu0 %672
      %674 = vrot.lane.b32.xlu0 %v343, 6
      %v675 = vpop.permute.xlu0 %674
      %676 = vrot.lane.b32.xlu0 %v344, 6
      %v677 = vpop.permute.xlu0 %676
      %678 = vrot.lane.b32.xlu0 %v345, 6
      %v679 = vpop.permute.xlu0 %678
      %680 = vrot.lane.b32.xlu0 %v346, 6
      %v681 = vpop.permute.xlu0 %680
      %682 = vrot.lane.b32.xlu0 %v347, 6
      %v683 = vpop.permute.xlu0 %682
      %684 = vrot.lane.b32.xlu0 %v348, 6
      %v685 = vpop.permute.xlu0 %684
      %686 = vrot.lane.b32.xlu0 %v349, 6
      %v687 = vpop.permute.xlu0 %686
      %688 = vrot.lane.b32.xlu0 %v350, 6
      %v689 = vpop.permute.xlu0 %688
      %690 = vrot.lane.b32.xlu0 %v351, 6
      %v691 = vpop.permute.xlu0 %690
      %692 = vrot.lane.b32.xlu0 %v352, 6
      %v693 = vpop.permute.xlu0 %692
      %694 = vrot.lane.b32.xlu0 %v353, 6
      %v695 = vpop.permute.xlu0 %694
      %696 = vrot.lane.b32.xlu0 %v354, 6
      %v697 = vpop.permute.xlu0 %696
      %698 = vrot.lane.b32.xlu0 %v355, 6
      %v699 = vpop.permute.xlu0 %698
      %700 = vrot.lane.b32.xlu0 %v356, 6
      %v701 = vpop.permute.xlu0 %700
      %702 = vrot.lane.b32.xlu0 %v357, 6
      %v703 = vpop.permute.xlu0 %702
      %704 = vrot.lane.b32.xlu0 %v358, 6
      %v705 = vpop.permute.xlu0 %704
      %706 = vrot.lane.b32.xlu0 %v359, 6
      %v707 = vpop.permute.xlu0 %706
      %708 = vrot.lane.b32.xlu0 %v360, 6
      %v709 = vpop.permute.xlu0 %708
      %710 = vrot.lane.b32.xlu0 %v361, 6
      %v711 = vpop.permute.xlu0 %710
      %712 = vrot.lane.b32.xlu0 %v362, 6
      %v713 = vpop.permute.xlu0 %712
      %714 = vrot.lane.b32.xlu0 %v363, 6
      %v715 = vpop.permute.xlu0 %714
      %716 = vrot.lane.b32.xlu0 %v364, 6
      %v717 = vpop.permute.xlu0 %716
      %718 = vrot.lane.b32.xlu0 %v365, 6
      %v719 = vpop.permute.xlu0 %718
      %720 = vrot.lane.b32.xlu0 %v366, 6
      %v721 = vpop.permute.xlu0 %720
      %722 = vrot.lane.b32.xlu0 %v367, 6
      %v723 = vpop.permute.xlu0 %722
      %724 = vrot.lane.b32.xlu0 %v368, 6
      %v725 = vpop.permute.xlu0 %724
      %726 = vrot.lane.b32.xlu0 %v369, 6
      %v727 = vpop.permute.xlu0 %726
      %728 = vrot.lane.b32.xlu0 %v370, 6
      %v729 = vpop.permute.xlu0 %728
      %730 = vrot.lane.b32.xlu0 %v371, 6
      %v731 = vpop.permute.xlu0 %730
      %732 = vrot.lane.b32.xlu0 %v372, 6
      %v733 = vpop.permute.xlu0 %732
      %734 = vrot.lane.b32.xlu0 %v373, 6
      %v735 = vpop.permute.xlu0 %734
      %736 = vrot.lane.b32.xlu0 %v374, 6
      %v737 = vpop.permute.xlu0 %736
      %738 = vrot.lane.b32.xlu0 %v375, 6
      %v739 = vpop.permute.xlu0 %738
      %740 = vrot.lane.b32.xlu0 %v376, 6
      %v741 = vpop.permute.xlu0 %740
      %742 = vrot.lane.b32.xlu0 %v377, 6
      %v743 = vpop.permute.xlu0 %742
      %744 = vrot.lane.b32.xlu0 %v378, 6
      %v745 = vpop.permute.xlu0 %744
      %746 = vrot.lane.b32.xlu0 %v379, 6
      %v747 = vpop.permute.xlu0 %746
      %748 = vrot.lane.b32.xlu0 %v380, 6
      %v749 = vpop.permute.xlu0 %748
      %750 = vrot.lane.b32.xlu0 %v381, 6
      %v751 = vpop.permute.xlu0 %750
      %752 = vrot.lane.b32.xlu0 %v382, 6
      %v753 = vpop.permute.xlu0 %752
      %754 = vrot.lane.b32.xlu0 %v383, 6
      %v755 = vpop.permute.xlu0 %754
      %756 = vrot.lane.b32.xlu0 %v384, 6
      %v757 = vpop.permute.xlu0 %756
      %758 = vrot.lane.b32.xlu0 %v385, 6
      %v759 = vpop.permute.xlu0 %758
      %760 = vrot.lane.b32.xlu0 %v386, 6
      %v761 = vpop.permute.xlu0 %760
      %762 = vrot.lane.b32.xlu0 %v387, 6
      %v763 = vpop.permute.xlu0 %762
      %764 = vrot.lane.b32.xlu0 %v388, 6
      %v765 = vpop.permute.xlu0 %764
      %766 = vrot.lane.b32.xlu0 %v389, 6
      %v767 = vpop.permute.xlu0 %766
      %vm822 = vcmask 23552
      %v823 = vsel %vm822, %v228, %v445
      %v824 = vsel %vm822, %v229, %v447
      %v825 = vsel %vm822, %v230, %v449
      %v826 = vsel %vm822, %v231, %v451
      %v827 = vsel %vm822, %v232, %v453
      %v828 = vsel %vm822, %v233, %v455
      %v829 = vsel %vm822, %v234, %v457
      %v830 = vsel %vm822, %v235, %v459
      %v831 = vsel %vm822, %v236, %v461
      %v832 = vsel %vm822, %v237, %v463
      %v833 = vsel %vm822, %v238, %v465
      %v834 = vsel %vm822, %v239, %v467
      %v835 = vsel %vm822, %v240, %v469
      %v836 = vsel %vm822, %v241, %v471
      %v837 = vsel %vm822, %v242, %v473
      %v838 = vsel %vm822, %v243, %v475
      %v839 = vsel %vm822, %v244, %v477
      %v840 = vsel %vm822, %v245, %v479
      %v841 = vsel %vm822, %v246, %v481
      %v842 = vsel %vm822, %v247, %v483
      %v843 = vsel %vm822, %v248, %v485
      %v844 = vsel %vm822, %v249, %v487
      %v845 = vsel %vm822, %v250, %v489
      %v846 = vsel %vm822, %v251, %v491
      %v847 = vsel %vm822, %v252, %v493
      %v848 = vsel %vm822, %v253, %v495
      %v849 = vsel %vm822, %v254, %v497
      %v850 = vsel %vm822, %v255, %v499
      %v851 = vsel %vm822, %v256, %v501
      %v852 = vsel %vm822, %v257, %v503
      %v853 = vsel %vm822, %v258, %v505
      %v854 = vsel %vm822, %v259, %v507
      %v855 = vsel %vm822, %v260, %v509
      %v856 = vsel %vm822, %v261, %v511
      %v857 = vsel %vm822, %v262, %v513
      %v858 = vsel %vm822, %v263, %v515
      %v859 = vsel %vm822, %v264, %v517
      %v860 = vsel %vm822, %v265, %v519
      %v861 = vsel %vm822, %v266, %v521
      %v862 = vsel %vm822, %v267, %v523
      %v863 = vsel %vm822, %v268, %v525
      %v864 = vsel %vm822, %v269, %v527
      %v865 = vsel %vm822, %v270, %v529
      %v866 = vsel %vm822, %v271, %v531
      %v867 = vsel %vm822, %v272, %v533
      %v868 = vsel %vm822, %v273, %v535
      %v869 = vsel %vm822, %v274, %v537
      %v870 = vsel %vm822, %v275, %v539
      %v871 = vsel %vm822, %v276, %v541
      %v872 = vsel %vm822, %v277, %v543
      %v873 = vsel %vm822, %v278, %v545
      %v874 = vsel %vm822, %v279, %v547
      %v875 = vsel %vm822, %v280, %v549
      %v876 = vsel %vm822, %v281, %v551
      %vm877 = vcmask 48128
      %v878 = vsel %vm877, %v823, %v661
      %v879 = vsel %vm877, %v824, %v663
      %v880 = vsel %vm877, %v825, %v665
      %v881 = vsel %vm877, %v826, %v667
      %v882 = vsel %vm877, %v827, %v669
      %v883 = vsel %vm877, %v828, %v671
      %v884 = vsel %vm877, %v829, %v673
      %v885 = vsel %vm877, %v830, %v675
      %v886 = vsel %vm877, %v831, %v677
      %v887 = vsel %vm877, %v832, %v679
      %v888 = vsel %vm877, %v833, %v681
      %v889 = vsel %vm877, %v834, %v683
      %v890 = vsel %vm877, %v835, %v685
      %v891 = vsel %vm877, %v836, %v687
      %v892 = vsel %vm877, %v837, %v689
      %v893 = vsel %vm877, %v838, %v691
      %v894 = vsel %vm877, %v839, %v693
      %v895 = vsel %vm877, %v840, %v695
      %v896 = vsel %vm877, %v841, %v697
      %v897 = vsel %vm877, %v842, %v699
      %v898 = vsel %vm877, %v843, %v701
      %v899 = vsel %vm877, %v844, %v703
      %v900 = vsel %vm877, %v845, %v705
      %v901 = vsel %vm877, %v846, %v707
      %v902 = vsel %vm877, %v847, %v709
      %v903 = vsel %vm877, %v848, %v711
      %v904 = vsel %vm877, %v849, %v713
      %v905 = vsel %vm877, %v850, %v715
      %v906 = vsel %vm877, %v851, %v717
      %v907 = vsel %vm877, %v852, %v719
      %v908 = vsel %vm877, %v853, %v721
      %v909 = vsel %vm877, %v854, %v723
      %v910 = vsel %vm877, %v855, %v725
      %v911 = vsel %vm877, %v856, %v727
      %v912 = vsel %vm877, %v857, %v729
      %v913 = vsel %vm877, %v858, %v731
      %v914 = vsel %vm877, %v859, %v733
      %v915 = vsel %vm877, %v860, %v735
      %v916 = vsel %vm877, %v861, %v737
      %v917 = vsel %vm877, %v862, %v739
      %v918 = vsel %vm877, %v863, %v741
      %v919 = vsel %vm877, %v864, %v743
      %v920 = vsel %vm877, %v865, %v745
      %v921 = vsel %vm877, %v866, %v747
      %v922 = vsel %vm877, %v867, %v749
      %v923 = vsel %vm877, %v868, %v751
      %v924 = vsel %vm877, %v869, %v753
      %v925 = vsel %vm877, %v870, %v755
      %v926 = vsel %vm877, %v871, %v757
      %v927 = vsel %vm877, %v872, %v759
      %v928 = vsel %vm877, %v873, %v761
      %v929 = vsel %vm877, %v874, %v763
      %v930 = vsel %vm877, %v875, %v765
      %v931 = vsel %vm877, %v876, %v767
      %v932 = vpack.c.bf16 %v879, %v878
      %v933 = vpack.c.bf16 %v880, %v880
      %v934 = vpack.c.bf16 %v882, %v881
      %v935 = vpack.c.bf16 %v883, %v883
      %v936 = vpack.c.bf16 %v885, %v884
      %v937 = vpack.c.bf16 %v886, %v886
      %v938 = vpack.c.bf16 %v888, %v887
      %v939 = vpack.c.bf16 %v889, %v889
      %v940 = vpack.c.bf16 %v891, %v890
      %v941 = vpack.c.bf16 %v892, %v892
      %v942 = vpack.c.bf16 %v894, %v893
      %v943 = vpack.c.bf16 %v895, %v895
      %v944 = vpack.c.bf16 %v897, %v896
      %v945 = vpack.c.bf16 %v898, %v898
      %v946 = vpack.c.bf16 %v900, %v899
      %v947 = vpack.c.bf16 %v901, %v901
      %v948 = vpack.c.bf16 %v903, %v902
      %v949 = vpack.c.bf16 %v904, %v904
      %v950 = vpack.c.bf16 %v906, %v905
      %v951 = vpack.c.bf16 %v907, %v907
      %v952 = vpack.c.bf16 %v909, %v908
      %v953 = vpack.c.bf16 %v910, %v910
      %v954 = vpack.c.bf16 %v912, %v911
      %v955 = vpack.c.bf16 %v913, %v913
      %v956 = vpack.c.bf16 %v915, %v914
      %v957 = vpack.c.bf16 %v916, %v916
      %v958 = vpack.c.bf16 %v918, %v917
      %v959 = vpack.c.bf16 %v919, %v919
      %v960 = vpack.c.bf16 %v921, %v920
      %v961 = vpack.c.bf16 %v922, %v922
      %v962 = vpack.c.bf16 %v924, %v923
      %v963 = vpack.c.bf16 %v925, %v925
      %v964 = vpack.c.bf16 %v927, %v926
      %v965 = vpack.c.bf16 %v928, %v928
      %v966 = vpack.c.bf16 %v930, %v929
      %v967 = vpack.c.bf16 %v931, %v931
      %vm968 = vsmask.f32 7424
      %v970 = vshrl.u32 %v932, 16
      %v972 = vshll.u32 %v932, 16
      %v974 = vrot.slane %v972, 1
      %v975 = vor.u32 %v970, %v974
      %v977 = vshll.u32 %v933, 16
      %v979 = vrot.slane %v977, 1
      %v980 = vsel %vm968, %v975, %v979
      %v982 = vshrl.u32 %v934, 16
      %v984 = vshll.u32 %v934, 16
      %v986 = vrot.slane %v984, 1
      %v987 = vor.u32 %v982, %v986
      %v989 = vshll.u32 %v935, 16
      %v991 = vrot.slane %v989, 1
      %v992 = vsel %vm968, %v987, %v991
      %v994 = vshrl.u32 %v936, 16
      %v996 = vshll.u32 %v936, 16
      %v998 = vrot.slane %v996, 1
      %v999 = vor.u32 %v994, %v998
      %v1001 = vshll.u32 %v937, 16
      %v1003 = vrot.slane %v1001, 1
      %v1004 = vsel %vm968, %v999, %v1003
      %v1006 = vshrl.u32 %v938, 16
      %v1008 = vshll.u32 %v938, 16
      %v1010 = vrot.slane %v1008, 1
      %v1011 = vor.u32 %v1006, %v1010
      %v1013 = vshll.u32 %v939, 16
      %v1015 = vrot.slane %v1013, 1
      %v1016 = vsel %vm968, %v1011, %v1015
      %v1018 = vshrl.u32 %v940, 16
      %v1020 = vshll.u32 %v940, 16
      %v1022 = vrot.slane %v1020, 1
      %v1023 = vor.u32 %v1018, %v1022
      %v1025 = vshll.u32 %v941, 16
      %v1027 = vrot.slane %v1025, 1
      %v1028 = vsel %vm968, %v1023, %v1027
      %v1030 = vshrl.u32 %v942, 16
      %v1032 = vshll.u32 %v942, 16
      %v1034 = vrot.slane %v1032, 1
      %v1035 = vor.u32 %v1030, %v1034
      %v1037 = vshll.u32 %v943, 16
      %v1039 = vrot.slane %v1037, 1
      %v1040 = vsel %vm968, %v1035, %v1039
      %v1042 = vshrl.u32 %v944, 16
      %v1044 = vshll.u32 %v944, 16
      %v1046 = vrot.slane %v1044, 1
      %v1047 = vor.u32 %v1042, %v1046
      %v1049 = vshll.u32 %v945, 16
      %v1051 = vrot.slane %v1049, 1
      %v1052 = vsel %vm968, %v1047, %v1051
      %v1054 = vshrl.u32 %v946, 16
      %v1056 = vshll.u32 %v946, 16
      %v1058 = vrot.slane %v1056, 1
      %v1059 = vor.u32 %v1054, %v1058
      %v1061 = vshll.u32 %v947, 16
      %v1063 = vrot.slane %v1061, 1
      %v1064 = vsel %vm968, %v1059, %v1063
      %v1066 = vshrl.u32 %v948, 16
      %v1068 = vshll.u32 %v948, 16
      %v1070 = vrot.slane %v1068, 1
      %v1071 = vor.u32 %v1066, %v1070
      %v1073 = vshll.u32 %v949, 16
      %v1075 = vrot.slane %v1073, 1
      %v1076 = vsel %vm968, %v1071, %v1075
      %v1078 = vshrl.u32 %v950, 16
      %v1080 = vshll.u32 %v950, 16
      %v1082 = vrot.slane %v1080, 1
      %v1083 = vor.u32 %v1078, %v1082
      %v1085 = vshll.u32 %v951, 16
      %v1087 = vrot.slane %v1085, 1
      %v1088 = vsel %vm968, %v1083, %v1087
      %v1090 = vshrl.u32 %v952, 16
      %v1092 = vshll.u32 %v952, 16
      %v1094 = vrot.slane %v1092, 1
      %v1095 = vor.u32 %v1090, %v1094
      %v1097 = vshll.u32 %v953, 16
      %v1099 = vrot.slane %v1097, 1
      %v1100 = vsel %vm968, %v1095, %v1099
      %v1102 = vshrl.u32 %v954, 16
      %v1104 = vshll.u32 %v954, 16
      %v1106 = vrot.slane %v1104, 1
      %v1107 = vor.u32 %v1102, %v1106
      %v1109 = vshll.u32 %v955, 16
      %v1111 = vrot.slane %v1109, 1
      %v1112 = vsel %vm968, %v1107, %v1111
      %v1114 = vshrl.u32 %v956, 16
      %v1116 = vshll.u32 %v956, 16
      %v1118 = vrot.slane %v1116, 1
      %v1119 = vor.u32 %v1114, %v1118
      %v1121 = vshll.u32 %v957, 16
      %v1123 = vrot.slane %v1121, 1
      %v1124 = vsel %vm968, %v1119, %v1123
      %v1126 = vshrl.u32 %v958, 16
      %v1128 = vshll.u32 %v958, 16
      %v1130 = vrot.slane %v1128, 1
      %v1131 = vor.u32 %v1126, %v1130
      %v1133 = vshll.u32 %v959, 16
      %v1135 = vrot.slane %v1133, 1
      %v1136 = vsel %vm968, %v1131, %v1135
      %v1138 = vshrl.u32 %v960, 16
      %v1140 = vshll.u32 %v960, 16
      %v1142 = vrot.slane %v1140, 1
      %v1143 = vor.u32 %v1138, %v1142
      %v1145 = vshll.u32 %v961, 16
      %v1147 = vrot.slane %v1145, 1
      %v1148 = vsel %vm968, %v1143, %v1147
      %v1150 = vshrl.u32 %v962, 16
      %v1152 = vshll.u32 %v962, 16
      %v1154 = vrot.slane %v1152, 1
      %v1155 = vor.u32 %v1150, %v1154
      %v1157 = vshll.u32 %v963, 16
      %v1159 = vrot.slane %v1157, 1
      %v1160 = vsel %vm968, %v1155, %v1159
      %v1162 = vshrl.u32 %v964, 16
      %v1164 = vshll.u32 %v964, 16
      %v1166 = vrot.slane %v1164, 1
      %v1167 = vor.u32 %v1162, %v1166
      %v1169 = vshll.u32 %v965, 16
      %v1171 = vrot.slane %v1169, 1
      %v1172 = vsel %vm968, %v1167, %v1171
      %v1174 = vshrl.u32 %v966, 16
      %v1176 = vshll.u32 %v966, 16
      %v1178 = vrot.slane %v1176, 1
      %v1179 = vor.u32 %v1174, %v1178
      %v1181 = vshll.u32 %v967, 16
      %v1183 = vrot.slane %v1181, 1
      %v1184 = vsel %vm968, %v1179, %v1183
      %vm1221 = vcmask 1046528
      %v1222 = vrot.slane %v932, 1
      %v1223 = vrot.slane %v933, 1
      %v1224 = vsel %vm1221, %v1222, %v1223
      %v1225 = vrot.slane %v934, 1
      %v1226 = vrot.slane %v935, 1
      %v1227 = vsel %vm1221, %v1225, %v1226
      %v1228 = vrot.slane %v936, 1
      %v1229 = vrot.slane %v937, 1
      %v1230 = vsel %vm1221, %v1228, %v1229
      %v1231 = vrot.slane %v938, 1
      %v1232 = vrot.slane %v939, 1
      %v1233 = vsel %vm1221, %v1231, %v1232
      %v1234 = vrot.slane %v940, 1
      %v1235 = vrot.slane %v941, 1
      %v1236 = vsel %vm1221, %v1234, %v1235
      %v1237 = vrot.slane %v942, 1
      %v1238 = vrot.slane %v943, 1
      %v1239 = vsel %vm1221, %v1237, %v1238
      %v1240 = vrot.slane %v944, 1
      %v1241 = vrot.slane %v945, 1
      %v1242 = vsel %vm1221, %v1240, %v1241
      %v1243 = vrot.slane %v946, 1
      %v1244 = vrot.slane %v947, 1
      %v1245 = vsel %vm1221, %v1243, %v1244
      %v1246 = vrot.slane %v948, 1
      %v1247 = vrot.slane %v949, 1
      %v1248 = vsel %vm1221, %v1246, %v1247
      %v1249 = vrot.slane %v950, 1
      %v1250 = vrot.slane %v951, 1
      %v1251 = vsel %vm1221, %v1249, %v1250
      %v1252 = vrot.slane %v952, 1
      %v1253 = vrot.slane %v953, 1
      %v1254 = vsel %vm1221, %v1252, %v1253
      %v1255 = vrot.slane %v954, 1
      %v1256 = vrot.slane %v955, 1
      %v1257 = vsel %vm1221, %v1255, %v1256
      %v1258 = vrot.slane %v956, 1
      %v1259 = vrot.slane %v957, 1
      %v1260 = vsel %vm1221, %v1258, %v1259
      %v1261 = vrot.slane %v958, 1
      %v1262 = vrot.slane %v959, 1
      %v1263 = vsel %vm1221, %v1261, %v1262
      %v1264 = vrot.slane %v960, 1
      %v1265 = vrot.slane %v961, 1
      %v1266 = vsel %vm1221, %v1264, %v1265
      %v1267 = vrot.slane %v962, 1
      %v1268 = vrot.slane %v963, 1
      %v1269 = vsel %vm1221, %v1267, %v1268
      %v1270 = vrot.slane %v964, 1
      %v1271 = vrot.slane %v965, 1
      %v1272 = vsel %vm1221, %v1270, %v1271
      %v1273 = vrot.slane %v966, 1
      %v1274 = vrot.slane %v967, 1
      %v1275 = vsel %vm1221, %v1273, %v1274
      %v1276 = vld [vmem:[%s2] sm:$0x1]
      %v1277 = vld [vmem:[%s1] sm:$0xf]
      %v1278 = vld [vmem:[%s1 + $0x4] sm:$0x1]
      %s1279 = scalar_lea.vmem %s1, 8
      %v1280 = vld [vmem:[%s1279] sm:$0xf]
      %v1281 = vld [vmem:[%s1279 + $0x4] sm:$0x1]
      %v1284 = vunpack.c.l.b16 %v1280
      %v1285 = vunpack.c.l.b16 %v1281
      %v1286 = vpack.c.b16 %v1285, %v1284
      %vm1287 = vcmask 72704
      %v1289 = vsel %vm1287, %v980, 0
      %v1292 = vsel %vm1287, %v992, 0
      %v1295 = vsel %vm1287, %v1004, 0
      %v1298 = vsel %vm1287, %v1016, 0
      %v1301 = vsel %vm1287, %v1028, 0
      %v1304 = vsel %vm1287, %v1040, 0
      %v1307 = vsel %vm1287, %v1052, 0
      %v1310 = vsel %vm1287, %v1064, 0
      %v1313 = vsel %vm1287, %v1076, 0
      %v1316 = vsel %vm1287, %v1088, 0
      %v1319 = vsel %vm1287, %v1100, 0
      %v1322 = vsel %vm1287, %v1112, 0
      %v1325 = vsel %vm1287, %v1124, 0
      %v1328 = vsel %vm1287, %v1136, 0
      %v1331 = vsel %vm1287, %v1148, 0
      %v1334 = vsel %vm1287, %v1160, 0
      %vm1336 = vcmask 1043456
      %vm1337 = vcmask 1044480
      %v1338 = vsel %vm1336, 4294967295, 65535
      %v1339 = vsel %vm1337, %v1338, 0
      %v1341 = vand.u32 %v1286, %v1339
      %1343 = vmatprep.subr.bf16.mxu0 0
      %1344 = vmatpush1.bf16.msra.mxu0 %v1341
      %1345 = vmatprep.subr.bf16.mxu0 0
      %1346 = vmatpush1.bf16.msra.mxu0 0
      %1347 = vmatprep.subr.bf16.mxu0 0
      %1348 = vmatpush1.bf16.msra.mxu0 0
      %1349 = vmatprep.subr.bf16.mxu0 0
      %1350 = vmatpush1.bf16.msra.mxu0 0
      %1351 = vmatprep.subr.bf16.mxu0 0
      %1352 = vmatpush1.bf16.msra.mxu0 0
      %1353 = vmatprep.subr.bf16.mxu0 0
      %1354 = vmatpush1.bf16.msra.mxu0 0
      %1355 = vmatprep.subr.bf16.mxu0 0
      %1356 = vmatpush1.bf16.msra.mxu0 0
      %1357 = vmatprep.subr.bf16.mxu0 0
      %1358 = vmatpush1.bf16.msra.mxu0 0
      %1359 = vmatprep.subr.bf16.mxu0 0
      %1360 = vmatpush1.bf16.msra.mxu0 0
      %1361 = vmatprep.subr.bf16.mxu0 0
      %1362 = vmatpush1.bf16.msra.mxu0 0
      %1363 = vmatprep.subr.bf16.mxu0 0
      %1364 = vmatpush1.bf16.msra.mxu0 0
      %1365 = vmatprep.subr.bf16.mxu0 0
      %1366 = vmatpush1.bf16.msra.mxu0 0
      %1367 = vmatprep.subr.bf16.mxu0 0
      %1368 = vmatpush1.bf16.msra.mxu0 0
      %1369 = vmatprep.subr.bf16.mxu0 0
      %1370 = vmatpush1.bf16.msra.mxu0 0
      %1371 = vmatprep.subr.bf16.mxu0 0
      %1372 = vmatpush1.bf16.msra.mxu0 0
      %1373 = vmatprep.subr.bf16.mxu0 0
      %1374 = vmatpush1.bf16.msra.mxu0 0
      %1375 = vmatprep.mubr.bf16.mxu0 0
      %1376 = vmatmul.mubr.bf16.gmra.mrb[0].mxu0 %v1289
      %v1377 = vpop.f32.mrb[0].mxu0
      %v1378 = vadd.f32 0.0, %v1377
      %v1379 = vpop.f32.mrb[0].mxu0
      %v1380 = vpop.f32.mrb[0].mxu0
      %v1381 = vadd.f32 0.0, %v1380
      %v1382 = vpop.f32.mrb[0].mxu0
      %1383 = vmatprep.mubr.bf16.mxu0 0
      %1384 = vmatmul.mubr.bf16.gmra.mrb[0].mxu0 %v1292
      %v1385 = vpop.f32.mrb[0].mxu0
      %v1386 = vadd.f32 0.0, %v1385
      %v1387 = vpop.f32.mrb[0].mxu0
      %v1388 = vpop.f32.mrb[0].mxu0
      %v1389 = vadd.f32 0.0, %v1388
      %v1390 = vpop.f32.mrb[0].mxu0
      %1391 = vmatprep.mubr.bf16.mxu0 0
      %1392 = vmatmul.mubr.bf16.gmra.mrb[0].mxu0 %v1295
      %v1393 = vpop.f32.mrb[0].mxu0
      %v1394 = vadd.f32 0.0, %v1393
      %v1395 = vpop.f32.mrb[0].mxu0
      %v1396 = vpop.f32.mrb[0].mxu0
      %v1397 = vadd.f32 0.0, %v1396
      %v1398 = vpop.f32.mrb[0].mxu0
      %1399 = vmatprep.mubr.bf16.mxu0 0
      %1400 = vmatmul.mubr.bf16.gmra.mrb[0].mxu0 %v1298
      %v1401 = vpop.f32.mrb[0].mxu0
      %v1402 = vadd.f32 0.0, %v1401
      %v1403 = vpop.f32.mrb[0].mxu0
      %v1404 = vpop.f32.mrb[0].mxu0
      %v1405 = vadd.f32 0.0, %v1404
      %v1406 = vpop.f32.mrb[0].mxu0
      %1407 = vmatprep.mubr.bf16.mxu0 0
      %1408 = vmatmul.mubr.bf16.gmra.mrb[0].mxu0 %v1301
      %v1409 = vpop.f32.mrb[0].mxu0
      %v1410 = vadd.f32 0.0, %v1409
      %v1411 = vpop.f32.mrb[0].mxu0
      %v1412 = vpop.f32.mrb[0].mxu0
      %v1413 = vadd.f32 0.0, %v1412
      %v1414 = vpop.f32.mrb[0].mxu0
      %1415 = vmatprep.mubr.bf16.mxu0 0
      %1416 = vmatmul.mubr.bf16.gmra.mrb[0].mxu0 %v1304
      %v1417 = vpop.f32.mrb[0].mxu0
      %v1418 = vadd.f32 0.0, %v1417
      %v1419 = vpop.f32.mrb[0].mxu0
      %v1420 = vpop.f32.mrb[0].mxu0
      %v1421 = vadd.f32 0.0, %v1420
      %v1422 = vpop.f32.mrb[0].mxu0
      %1423 = vmatprep.mubr.bf16.mxu0 0
      %1424 = vmatmul.mubr.bf16.gmra.mrb[0].mxu0 %v1307
      %v1425 = vpop.f32.mrb[0].mxu0
      %v1426 = vadd.f32 0.0, %v1425
      %v1427 = vpop.f32.mrb[0].mxu0
      %v1428 = vpop.f32.mrb[0].mxu0
      %v1429 = vadd.f32 0.0, %v1428
      %v1430 = vpop.f32.mrb[0].mxu0
      %1431 = vmatprep.mubr.bf16.mxu0 0
      %1432 = vmatmul.mubr.bf16.gmra.mrb[0].mxu0 %v1310
      %v1433 = vpop.f32.mrb[0].mxu0
      %v1434 = vadd.f32 0.0, %v1433
      %v1435 = vpop.f32.mrb[0].mxu0
      %v1436 = vpop.f32.mrb[0].mxu0
      %v1437 = vadd.f32 0.0, %v1436
      %v1438 = vpop.f32.mrb[0].mxu0
      %1439 = vmatprep.mubr.bf16.mxu0 0
      %1440 = vmatmul.mubr.bf16.gmra.mrb[0].mxu0 %v1313
      %v1441 = vpop.f32.mrb[0].mxu0
      %v1442 = vadd.f32 0.0, %v1441
      %v1443 = vpop.f32.mrb[0].mxu0
      %v1444 = vpop.f32.mrb[0].mxu0
      %v1445 = vadd.f32 0.0, %v1444
      %v1446 = vpop.f32.mrb[0].mxu0
      %1447 = vmatprep.mubr.bf16.mxu0 0
      %1448 = vmatmul.mubr.bf16.gmra.mrb[0].mxu0 %v1316
      %v1449 = vpop.f32.mrb[0].mxu0
      %v1450 = vadd.f32 0.0, %v1449
      %v1451 = vpop.f32.mrb[0].mxu0
      %v1452 = vpop.f32.mrb[0].mxu0
      %v1453 = vadd.f32 0.0, %v1452
      %v1454 = vpop.f32.mrb[0].mxu0
      %1455 = vmatprep.mubr.bf16.mxu0 0
      %1456 = vmatmul.mubr.bf16.gmra.mrb[0].mxu0 %v1319
      %v1457 = vpop.f32.mrb[0].mxu0
      %v1458 = vadd.f32 0.0, %v1457
      %v1459 = vpop.f32.mrb[0].mxu0
      %v1460 = vpop.f32.mrb[0].mxu0
      %v1461 = vadd.f32 0.0, %v1460
      %v1462 = vpop.f32.mrb[0].mxu0
      %1463 = vmatprep.mubr.bf16.mxu0 0
      %1464 = vmatmul.mubr.bf16.gmra.mrb[0].mxu0 %v1322
      %v1465 = vpop.f32.mrb[0].mxu0
      %v1466 = vadd.f32 0.0, %v1465
      %v1467 = vpop.f32.mrb[0].mxu0
      %v1468 = vpop.f32.mrb[0].mxu0
      %v1469 = vadd.f32 0.0, %v1468
      %v1470 = vpop.f32.mrb[0].mxu0
      %1471 = vmatprep.mubr.bf16.mxu0 0
      %1472 = vmatmul.mubr.bf16.gmra.mrb[0].mxu0 %v1325
      %v1473 = vpop.f32.mrb[0].mxu0
      %v1474 = vadd.f32 0.0, %v1473
      %v1475 = vpop.f32.mrb[0].mxu0
      %v1476 = vpop.f32.mrb[0].mxu0
      %v1477 = vadd.f32 0.0, %v1476
      %v1478 = vpop.f32.mrb[0].mxu0
      %1479 = vmatprep.mubr.bf16.mxu0 0
      %1480 = vmatmul.mubr.bf16.gmra.mrb[0].mxu0 %v1328
      %v1481 = vpop.f32.mrb[0].mxu0
      %v1482 = vadd.f32 0.0, %v1481
      %v1483 = vpop.f32.mrb[0].mxu0
      %v1484 = vpop.f32.mrb[0].mxu0
      %v1485 = vadd.f32 0.0, %v1484
      %v1486 = vpop.f32.mrb[0].mxu0
      %1487 = vmatprep.mubr.bf16.mxu0 0
      %1488 = vmatmul.mubr.bf16.gmra.mrb[0].mxu0 %v1331
      %v1489 = vpop.f32.mrb[0].mxu0
      %v1490 = vadd.f32 0.0, %v1489
      %v1491 = vpop.f32.mrb[0].mxu0
      %v1492 = vpop.f32.mrb[0].mxu0
      %v1493 = vadd.f32 0.0, %v1492
      %v1494 = vpop.f32.mrb[0].mxu0
      %1495 = vmatprep.mubr.bf16.mxu0 0
      %1496 = vmatmul.mubr.bf16.gmra.mrb[0].mxu0 %v1334
      %v1497 = vpop.f32.mrb[0].mxu0
      %v1498 = vadd.f32 0.0, %v1497
      %v1499 = vpop.f32.mrb[0].mxu0
      %v1500 = vpop.f32.mrb[0].mxu0
      %v1501 = vadd.f32 0.0, %v1500
      %v1502 = vpop.f32.mrb[0].mxu0
      %1503 = vdwg.mxu0
      %v1506 = vunpack.c.l.b16 %v1277
      %v1507 = vunpack.c.l.b16 %v1278
      %v1508 = vpack.c.b16 %v1507, %v1506
      %v1509 = vsel %vm1287, %v932, 0
      %v1511 = vsel %vm1287, %v934, 0
      %v1513 = vsel %vm1287, %v936, 0
      %v1515 = vsel %vm1287, %v938, 0
      %v1517 = vsel %vm1287, %v940, 0
      %v1519 = vsel %vm1287, %v942, 0
      %v1521 = vsel %vm1287, %v944, 0
      %v1523 = vsel %vm1287, %v946, 0
      %v1525 = vsel %vm1287, %v948, 0
      %v1527 = vsel %vm1287, %v950, 0
      %v1529 = vsel %vm1287, %v952, 0
      %v1531 = vsel %vm1287, %v954, 0
      %v1533 = vsel %vm1287, %v956, 0
      %v1535 = vsel %vm1287, %v958, 0
      %v1537 = vsel %vm1287, %v960, 0
      %v1539 = vsel %vm1287, %v962, 0
      %v1542 = vand.u32 %v1508, %v1339
      %1544 = vmatprep.subr.bf16.mxu0 0
      %1545 = vmatpush1.bf16.msra.mxu0 %v1542
      %1546 = vmatprep.subr.bf16.mxu0 0
      %1547 = vmatpush1.bf16.msra.mxu0 0
      %1548 = vmatprep.subr.bf16.mxu0 0
      %1549 = vmatpush1.bf16.msra.mxu0 0
      %1550 = vmatprep.subr.bf16.mxu0 0
      %1551 = vmatpush1.bf16.msra.mxu0 0
      %1552 = vmatprep.subr.bf16.mxu0 0
      %1553 = vmatpush1.bf16.msra.mxu0 0
      %1554 = vmatprep.subr.bf16.mxu0 0
      %1555 = vmatpush1.bf16.msra.mxu0 0
      %1556 = vmatprep.subr.bf16.mxu0 0
      %1557 = vmatpush1.bf16.msra.mxu0 0
      %1558 = vmatprep.subr.bf16.mxu0 0
      %1559 = vmatpush1.bf16.msra.mxu0 0
      %1560 = vmatprep.subr.bf16.mxu0 0
      %1561 = vmatpush1.bf16.msra.mxu0 0
      %1562 = vmatprep.subr.bf16.mxu0 0
      %1563 = vmatpush1.bf16.msra.mxu0 0
      %1564 = vmatprep.subr.bf16.mxu0 0
      %1565 = vmatpush1.bf16.msra.mxu0 0
      %1566 = vmatprep.subr.bf16.mxu0 0
      %1567 = vmatpush1.bf16.msra.mxu0 0
      %1568 = vmatprep.subr.bf16.mxu0 0
      %1569 = vmatpush1.bf16.msra.mxu0 0
      %1570 = vmatprep.subr.bf16.mxu0 0
      %1571 = vmatpush1.bf16.msra.mxu0 0
      %1572 = vmatprep.subr.bf16.mxu0 0
      %1573 = vmatpush1.bf16.msra.mxu0 0
      %1574 = vmatprep.subr.bf16.mxu0 0
      %1575 = vmatpush1.bf16.msra.mxu0 0
      %1576 = vmatprep.mubr.bf16.mxu0 0
      %1577 = vmatmul.mubr.bf16.gmra.mrb[0].mxu0 %v1509
      %v1578 = vpop.f32.mrb[0].mxu0
      %v1579 = vadd.f32 %v1378, %v1578
      %v1580 = vpop.f32.mrb[0].mxu0
      %v1581 = vpop.f32.mrb[0].mxu0
      %v1582 = vadd.f32 %v1381, %v1581
      %v1583 = vpop.f32.mrb[0].mxu0
      %1584 = vmatprep.mubr.bf16.mxu0 0
      %1585 = vmatmul.mubr.bf16.gmra.mrb[0].mxu0 %v1511
      %v1586 = vpop.f32.mrb[0].mxu0
      %v1587 = vadd.f32 %v1386, %v1586
      %v1588 = vpop.f32.mrb[0].mxu0
      %v1589 = vpop.f32.mrb[0].mxu0
      %v1590 = vadd.f32 %v1389, %v1589
      %v1591 = vpop.f32.mrb[0].mxu0
      %1592 = vmatprep.mubr.bf16.mxu0 0
      %1593 = vmatmul.mubr.bf16.gmra.mrb[0].mxu0 %v1513
      %v1594 = vpop.f32.mrb[0].mxu0
      %v1595 = vadd.f32 %v1394, %v1594
      %v1596 = vpop.f32.mrb[0].mxu0
      %v1597 = vpop.f32.mrb[0].mxu0
      %v1598 = vadd.f32 %v1397, %v1597
      %v1599 = vpop.f32.mrb[0].mxu0
      %1600 = vmatprep.mubr.bf16.mxu0 0
      %1601 = vmatmul.mubr.bf16.gmra.mrb[0].mxu0 %v1515
      %v1602 = vpop.f32.mrb[0].mxu0
      %v1603 = vadd.f32 %v1402, %v1602
      %v1604 = vpop.f32.mrb[0].mxu0
      %v1605 = vpop.f32.mrb[0].mxu0
      %v1606 = vadd.f32 %v1405, %v1605
      %v1607 = vpop.f32.mrb[0].mxu0
      %1608 = vmatprep.mubr.bf16.mxu0 0
      %1609 = vmatmul.mubr.bf16.gmra.mrb[0].mxu0 %v1517
      %v1610 = vpop.f32.mrb[0].mxu0
      %v1611 = vadd.f32 %v1410, %v1610
      %v1612 = vpop.f32.mrb[0].mxu0
      %v1613 = vpop.f32.mrb[0].mxu0
      %v1614 = vadd.f32 %v1413, %v1613
      %v1615 = vpop.f32.mrb[0].mxu0
      %1616 = vmatprep.mubr.bf16.mxu0 0
      %1617 = vmatmul.mubr.bf16.gmra.mrb[0].mxu0 %v1519
      %v1618 = vpop.f32.mrb[0].mxu0
      %v1619 = vadd.f32 %v1418, %v1618
      %v1620 = vpop.f32.mrb[0].mxu0
      %v1621 = vpop.f32.mrb[0].mxu0
      %v1622 = vadd.f32 %v1421, %v1621
      %v1623 = vpop.f32.mrb[0].mxu0
      %1624 = vmatprep.mubr.bf16.mxu0 0
      %1625 = vmatmul.mubr.bf16.gmra.mrb[0].mxu0 %v1521
      %v1626 = vpop.f32.mrb[0].mxu0
      %v1627 = vadd.f32 %v1426, %v1626
      %v1628 = vpop.f32.mrb[0].mxu0
      %v1629 = vpop.f32.mrb[0].mxu0
      %v1630 = vadd.f32 %v1429, %v1629
      %v1631 = vpop.f32.mrb[0].mxu0
      %1632 = vmatprep.mubr.bf16.mxu0 0
      %1633 = vmatmul.mubr.bf16.gmra.mrb[0].mxu0 %v1523
      %v1634 = vpop.f32.mrb[0].mxu0
      %v1635 = vadd.f32 %v1434, %v1634
      %v1636 = vpop.f32.mrb[0].mxu0
      %v1637 = vpop.f32.mrb[0].mxu0
      %v1638 = vadd.f32 %v1437, %v1637
      %v1639 = vpop.f32.mrb[0].mxu0
      %1640 = vmatprep.mubr.bf16.mxu0 0
      %1641 = vmatmul.mubr.bf16.gmra.mrb[0].mxu0 %v1525
      %v1642 = vpop.f32.mrb[0].mxu0
      %v1643 = vadd.f32 %v1442, %v1642
      %v1644 = vpop.f32.mrb[0].mxu0
      %v1645 = vpop.f32.mrb[0].mxu0
      %v1646 = vadd.f32 %v1445, %v1645
      %v1647 = vpop.f32.mrb[0].mxu0
      %1648 = vmatprep.mubr.bf16.mxu0 0
      %1649 = vmatmul.mubr.bf16.gmra.mrb[0].mxu0 %v1527
      %v1650 = vpop.f32.mrb[0].mxu0
      %v1651 = vadd.f32 %v1450, %v1650
      %v1652 = vpop.f32.mrb[0].mxu0
      %v1653 = vpop.f32.mrb[0].mxu0
      %v1654 = vadd.f32 %v1453, %v1653
      %v1655 = vpop.f32.mrb[0].mxu0
      %1656 = vmatprep.mubr.bf16.mxu0 0
      %1657 = vmatmul.mubr.bf16.gmra.mrb[0].mxu0 %v1529
      %v1658 = vpop.f32.mrb[0].mxu0
      %v1659 = vadd.f32 %v1458, %v1658
      %v1660 = vpop.f32.mrb[0].mxu0
      %v1661 = vpop.f32.mrb[0].mxu0
      %v1662 = vadd.f32 %v1461, %v1661
      %v1663 = vpop.f32.mrb[0].mxu0
      %1664 = vmatprep.mubr.bf16.mxu0 0
      %1665 = vmatmul.mubr.bf16.gmra.mrb[0].mxu0 %v1531
      %v1666 = vpop.f32.mrb[0].mxu0
      %v1667 = vadd.f32 %v1466, %v1666
      %v1668 = vpop.f32.mrb[0].mxu0
      %v1669 = vpop.f32.mrb[0].mxu0
      %v1670 = vadd.f32 %v1469, %v1669
      %v1671 = vpop.f32.mrb[0].mxu0
      %1672 = vmatprep.mubr.bf16.mxu0 0
      %1673 = vmatmul.mubr.bf16.gmra.mrb[0].mxu0 %v1533
      %v1674 = vpop.f32.mrb[0].mxu0
      %v1675 = vadd.f32 %v1474, %v1674
      %v1676 = vpop.f32.mrb[0].mxu0
      %v1677 = vpop.f32.mrb[0].mxu0
      %v1678 = vadd.f32 %v1477, %v1677
      %v1679 = vpop.f32.mrb[0].mxu0
      %1680 = vmatprep.mubr.bf16.mxu0 0
      %1681 = vmatmul.mubr.bf16.gmra.mrb[0].mxu0 %v1535
      %v1682 = vpop.f32.mrb[0].mxu0
      %v1683 = vadd.f32 %v1482, %v1682
      %v1684 = vpop.f32.mrb[0].mxu0
      %v1685 = vpop.f32.mrb[0].mxu0
      %v1686 = vadd.f32 %v1485, %v1685
      %v1687 = vpop.f32.mrb[0].mxu0
      %1688 = vmatprep.mubr.bf16.mxu0 0
      %1689 = vmatmul.mubr.bf16.gmra.mrb[0].mxu0 %v1537
      %v1690 = vpop.f32.mrb[0].mxu0
      %v1691 = vadd.f32 %v1490, %v1690
      %v1692 = vpop.f32.mrb[0].mxu0
      %v1693 = vpop.f32.mrb[0].mxu0
      %v1694 = vadd.f32 %v1493, %v1693
      %v1695 = vpop.f32.mrb[0].mxu0
      %1696 = vmatprep.mubr.bf16.mxu0 0
      %1697 = vmatmul.mubr.bf16.gmra.mrb[0].mxu0 %v1539
      %v1698 = vpop.f32.mrb[0].mxu0
      %v1699 = vadd.f32 %v1498, %v1698
      %v1700 = vpop.f32.mrb[0].mxu0
      %v1701 = vpop.f32.mrb[0].mxu0
      %v1702 = vadd.f32 %v1501, %v1701
      %v1703 = vpop.f32.mrb[0].mxu0
      %1704 = vdwg.mxu0
      %s1705 = scalar_lea.vmem %s1, 16
      %v1706 = vld [vmem:[%s1705] sm:$0xf]
      %v1707 = vld [vmem:[%s1705 + $0x4] sm:$0x1]
      %v1710 = vunpack.c.l.b16 %v1706
      %v1711 = vunpack.c.l.b16 %v1707
      %v1712 = vpack.c.b16 %v1711, %v1710
      %v1714 = vsel %vm1287, %v1224, 0
      %v1717 = vsel %vm1287, %v1227, 0
      %v1720 = vsel %vm1287, %v1230, 0
      %v1723 = vsel %vm1287, %v1233, 0
      %v1726 = vsel %vm1287, %v1236, 0
      %v1729 = vsel %vm1287, %v1239, 0
      %v1732 = vsel %vm1287, %v1242, 0
      %v1735 = vsel %vm1287, %v1245, 0
      %v1738 = vsel %vm1287, %v1248, 0
      %v1741 = vsel %vm1287, %v1251, 0
      %v1744 = vsel %vm1287, %v1254, 0
      %v1747 = vsel %vm1287, %v1257, 0
      %v1750 = vsel %vm1287, %v1260, 0
      %v1753 = vsel %vm1287, %v1263, 0
      %v1756 = vsel %vm1287, %v1266, 0
      %v1759 = vsel %vm1287, %v1269, 0
      %v1762 = vand.u32 %v1712, %v1339
      %1764 = vmatprep.subr.bf16.mxu0 0
      %1765 = vmatpush1.bf16.msra.mxu0 %v1762
      %1766 = vmatprep.subr.bf16.mxu0 0
      %1767 = vmatpush1.bf16.msra.mxu0 0
      %1768 = vmatprep.subr.bf16.mxu0 0
      %1769 = vmatpush1.bf16.msra.mxu0 0
      %1770 = vmatprep.subr.bf16.mxu0 0
      %1771 = vmatpush1.bf16.msra.mxu0 0
      %1772 = vmatprep.subr.bf16.mxu0 0
      %1773 = vmatpush1.bf16.msra.mxu0 0
      %1774 = vmatprep.subr.bf16.mxu0 0
      %1775 = vmatpush1.bf16.msra.mxu0 0
      %1776 = vmatprep.subr.bf16.mxu0 0
      %1777 = vmatpush1.bf16.msra.mxu0 0
      %1778 = vmatprep.subr.bf16.mxu0 0
      %1779 = vmatpush1.bf16.msra.mxu0 0
      %1780 = vmatprep.subr.bf16.mxu0 0
      %1781 = vmatpush1.bf16.msra.mxu0 0
      %1782 = vmatprep.subr.bf16.mxu0 0
      %1783 = vmatpush1.bf16.msra.mxu0 0
      %1784 = vmatprep.subr.bf16.mxu0 0
      %1785 = vmatpush1.bf16.msra.mxu0 0
      %1786 = vmatprep.subr.bf16.mxu0 0
      %1787 = vmatpush1.bf16.msra.mxu0 0
      %1788 = vmatprep.subr.bf16.mxu0 0
      %1789 = vmatpush1.bf16.msra.mxu0 0
      %1790 = vmatprep.subr.bf16.mxu0 0
      %1791 = vmatpush1.bf16.msra.mxu0 0
      %1792 = vmatprep.subr.bf16.mxu0 0
      %1793 = vmatpush1.bf16.msra.mxu0 0
      %1794 = vmatprep.subr.bf16.mxu0 0
      %1795 = vmatpush1.bf16.msra.mxu0 0
      %1796 = vmatprep.mubr.bf16.mxu0 0
      %1797 = vmatmul.mubr.bf16.gmra.mrb[0].mxu0 %v1714
      %v1798 = vpop.f32.mrb[0].mxu0
      %v1799 = vadd.f32 0.0, %v1798
      %v1800 = vpop.f32.mrb[0].mxu0
      %v1801 = vpop.f32.mrb[0].mxu0
      %v1802 = vadd.f32 0.0, %v1801
      %v1803 = vpop.f32.mrb[0].mxu0
      %1804 = vmatprep.mubr.bf16.mxu0 0
      %1805 = vmatmul.mubr.bf16.gmra.mrb[0].mxu0 %v1717
      %v1806 = vpop.f32.mrb[0].mxu0
      %v1807 = vadd.f32 0.0, %v1806
      %v1808 = vpop.f32.mrb[0].mxu0
      %v1809 = vpop.f32.mrb[0].mxu0
      %v1810 = vadd.f32 0.0, %v1809
      %v1811 = vpop.f32.mrb[0].mxu0
      %1812 = vmatprep.mubr.bf16.mxu0 0
      %1813 = vmatmul.mubr.bf16.gmra.mrb[0].mxu0 %v1720
      %v1814 = vpop.f32.mrb[0].mxu0
      %v1815 = vadd.f32 0.0, %v1814
      %v1816 = vpop.f32.mrb[0].mxu0
      %v1817 = vpop.f32.mrb[0].mxu0
      %v1818 = vadd.f32 0.0, %v1817
      %v1819 = vpop.f32.mrb[0].mxu0
      %1820 = vmatprep.mubr.bf16.mxu0 0
      %1821 = vmatmul.mubr.bf16.gmra.mrb[0].mxu0 %v1723
      %v1822 = vpop.f32.mrb[0].mxu0
      %v1823 = vadd.f32 0.0, %v1822
      %v1824 = vpop.f32.mrb[0].mxu0
      %v1825 = vpop.f32.mrb[0].mxu0
      %v1826 = vadd.f32 0.0, %v1825
      %v1827 = vpop.f32.mrb[0].mxu0
      %1828 = vmatprep.mubr.bf16.mxu0 0
      %1829 = vmatmul.mubr.bf16.gmra.mrb[0].mxu0 %v1726
      %v1830 = vpop.f32.mrb[0].mxu0
      %v1831 = vadd.f32 0.0, %v1830
      %v1832 = vpop.f32.mrb[0].mxu0
      %v1833 = vpop.f32.mrb[0].mxu0
      %v1834 = vadd.f32 0.0, %v1833
      %v1835 = vpop.f32.mrb[0].mxu0
      %1836 = vmatprep.mubr.bf16.mxu0 0
      %1837 = vmatmul.mubr.bf16.gmra.mrb[0].mxu0 %v1729
      %v1838 = vpop.f32.mrb[0].mxu0
      %v1839 = vadd.f32 0.0, %v1838
      %v1840 = vpop.f32.mrb[0].mxu0
      %v1841 = vpop.f32.mrb[0].mxu0
      %v1842 = vadd.f32 0.0, %v1841
      %v1843 = vpop.f32.mrb[0].mxu0
      %1844 = vmatprep.mubr.bf16.mxu0 0
      %1845 = vmatmul.mubr.bf16.gmra.mrb[0].mxu0 %v1732
      %v1846 = vpop.f32.mrb[0].mxu0
      %v1847 = vadd.f32 0.0, %v1846
      %v1848 = vpop.f32.mrb[0].mxu0
      %v1849 = vpop.f32.mrb[0].mxu0
      %v1850 = vadd.f32 0.0, %v1849
      %v1851 = vpop.f32.mrb[0].mxu0
      %1852 = vmatprep.mubr.bf16.mxu0 0
      %1853 = vmatmul.mubr.bf16.gmra.mrb[0].mxu0 %v1735
      %v1854 = vpop.f32.mrb[0].mxu0
      %v1855 = vadd.f32 0.0, %v1854
      %v1856 = vpop.f32.mrb[0].mxu0
      %v1857 = vpop.f32.mrb[0].mxu0
      %v1858 = vadd.f32 0.0, %v1857
      %v1859 = vpop.f32.mrb[0].mxu0
      %1860 = vmatprep.mubr.bf16.mxu0 0
      %1861 = vmatmul.mubr.bf16.gmra.mrb[0].mxu0 %v1738
      %v1862 = vpop.f32.mrb[0].mxu0
      %v1863 = vadd.f32 0.0, %v1862
      %v1864 = vpop.f32.mrb[0].mxu0
      %v1865 = vpop.f32.mrb[0].mxu0
      %v1866 = vadd.f32 0.0, %v1865
      %v1867 = vpop.f32.mrb[0].mxu0
      %1868 = vmatprep.mubr.bf16.mxu0 0
      %1869 = vmatmul.mubr.bf16.gmra.mrb[0].mxu0 %v1741
      %v1870 = vpop.f32.mrb[0].mxu0
      %v1871 = vadd.f32 0.0, %v1870
      %v1872 = vpop.f32.mrb[0].mxu0
      %v1873 = vpop.f32.mrb[0].mxu0
      %v1874 = vadd.f32 0.0, %v1873
      %v1875 = vpop.f32.mrb[0].mxu0
      %1876 = vmatprep.mubr.bf16.mxu0 0
      %1877 = vmatmul.mubr.bf16.gmra.mrb[0].mxu0 %v1744
      %v1878 = vpop.f32.mrb[0].mxu0
      %v1879 = vadd.f32 0.0, %v1878
      %v1880 = vpop.f32.mrb[0].mxu0
      %v1881 = vpop.f32.mrb[0].mxu0
      %v1882 = vadd.f32 0.0, %v1881
      %v1883 = vpop.f32.mrb[0].mxu0
      %1884 = vmatprep.mubr.bf16.mxu0 0
      %1885 = vmatmul.mubr.bf16.gmra.mrb[0].mxu0 %v1747
      %v1886 = vpop.f32.mrb[0].mxu0
      %v1887 = vadd.f32 0.0, %v1886
      %v1888 = vpop.f32.mrb[0].mxu0
      %v1889 = vpop.f32.mrb[0].mxu0
      %v1890 = vadd.f32 0.0, %v1889
      %v1891 = vpop.f32.mrb[0].mxu0
      %1892 = vmatprep.mubr.bf16.mxu0 0
      %1893 = vmatmul.mubr.bf16.gmra.mrb[0].mxu0 %v1750
      %v1894 = vpop.f32.mrb[0].mxu0
      %v1895 = vadd.f32 0.0, %v1894
      %v1896 = vpop.f32.mrb[0].mxu0
      %v1897 = vpop.f32.mrb[0].mxu0
      %v1898 = vadd.f32 0.0, %v1897
      %v1899 = vpop.f32.mrb[0].mxu0
      %1900 = vmatprep.mubr.bf16.mxu0 0
      %1901 = vmatmul.mubr.bf16.gmra.mrb[0].mxu0 %v1753
      %v1902 = vpop.f32.mrb[0].mxu0
      %v1903 = vadd.f32 0.0, %v1902
      %v1904 = vpop.f32.mrb[0].mxu0
      %v1905 = vpop.f32.mrb[0].mxu0
      %v1906 = vadd.f32 0.0, %v1905
      %v1907 = vpop.f32.mrb[0].mxu0
      %1908 = vmatprep.mubr.bf16.mxu0 0
      %1909 = vmatmul.mubr.bf16.gmra.mrb[0].mxu0 %v1756
      %v1910 = vpop.f32.mrb[0].mxu0
      %v1911 = vadd.f32 0.0, %v1910
      %v1912 = vpop.f32.mrb[0].mxu0
      %v1913 = vpop.f32.mrb[0].mxu0
      %v1914 = vadd.f32 0.0, %v1913
      %v1915 = vpop.f32.mrb[0].mxu0
      %1916 = vmatprep.mubr.bf16.mxu0 0
      %1917 = vmatmul.mubr.bf16.gmra.mrb[0].mxu0 %v1759
      %v1918 = vpop.f32.mrb[0].mxu0
      %v1919 = vadd.f32 0.0, %v1918
      %v1920 = vpop.f32.mrb[0].mxu0
      %v1921 = vpop.f32.mrb[0].mxu0
      %v1922 = vadd.f32 0.0, %v1921
      %v1923 = vpop.f32.mrb[0].mxu0
      %1924 = vdwg.mxu0
      %v1925 = vadd.f32 %v1579, %v1799
      %v1926 = vadd.f32 %v1582, %v1802
      %v1927 = vadd.f32 %v1587, %v1807
      %v1928 = vadd.f32 %v1590, %v1810
      %v1929 = vadd.f32 %v1595, %v1815
      %v1930 = vadd.f32 %v1598, %v1818
      %v1931 = vadd.f32 %v1603, %v1823
      %v1932 = vadd.f32 %v1606, %v1826
      %v1933 = vadd.f32 %v1611, %v1831
      %v1934 = vadd.f32 %v1614, %v1834
      %v1935 = vadd.f32 %v1619, %v1839
      %v1936 = vadd.f32 %v1622, %v1842
      %v1937 = vadd.f32 %v1627, %v1847
      %v1938 = vadd.f32 %v1630, %v1850
      %v1939 = vadd.f32 %v1635, %v1855
      %v1940 = vadd.f32 %v1638, %v1858
      %v1941 = vadd.f32 %v1643, %v1863
      %v1942 = vadd.f32 %v1646, %v1866
      %v1943 = vadd.f32 %v1651, %v1871
      %v1944 = vadd.f32 %v1654, %v1874
      %v1945 = vadd.f32 %v1659, %v1879
      %v1946 = vadd.f32 %v1662, %v1882
      %v1947 = vadd.f32 %v1667, %v1887
      %v1948 = vadd.f32 %v1670, %v1890
      %v1949 = vadd.f32 %v1675, %v1895
      %v1950 = vadd.f32 %v1678, %v1898
      %v1951 = vadd.f32 %v1683, %v1903
      %v1952 = vadd.f32 %v1686, %v1906
      %v1953 = vadd.f32 %v1691, %v1911
      %v1954 = vadd.f32 %v1694, %v1914
      %v1955 = vadd.f32 %v1699, %v1919
      %v1956 = vadd.f32 %v1702, %v1922
      %s1957 = scalar_lea.vmem %s1, 24
      %v1958 = vld [vmem:[%s1957] sm:$0xf]
      %v1959 = vld [vmem:[%s1957 + $0x4] sm:$0x1]
      %v1962 = vunpack.c.l.b16 %v1958
      %v1963 = vunpack.c.l.b16 %v1959
      %v1964 = vpack.c.b16 %v1963, %v1962
      %v1965 = vsel %vm1287, %v964, 0
      %v1968 = vand.u32 %v1964, %v1339
      %1970 = vmatprep.subr.bf16.mxu0 0
      %1971 = vmatpush1.bf16.msra.mxu0 %v1968
      %1972 = vmatprep.subr.bf16.mxu0 0
      %1973 = vmatpush1.bf16.msra.mxu0 0
      %1974 = vmatprep.subr.bf16.mxu0 0
      %1975 = vmatpush1.bf16.msra.mxu0 0
      %1976 = vmatprep.subr.bf16.mxu0 0
      %1977 = vmatpush1.bf16.msra.mxu0 0
      %1978 = vmatprep.subr.bf16.mxu0 0
      %1979 = vmatpush1.bf16.msra.mxu0 0
      %1980 = vmatprep.subr.bf16.mxu0 0
      %1981 = vmatpush1.bf16.msra.mxu0 0
      %1982 = vmatprep.subr.bf16.mxu0 0
      %1983 = vmatpush1.bf16.msra.mxu0 0
      %1984 = vmatprep.subr.bf16.mxu0 0
      %1985 = vmatpush1.bf16.msra.mxu0 0
      %1986 = vmatprep.subr.bf16.mxu0 0
      %1987 = vmatpush1.bf16.msra.mxu0 0
      %1988 = vmatprep.subr.bf16.mxu0 0
      %1989 = vmatpush1.bf16.msra.mxu0 0
      %1990 = vmatprep.subr.bf16.mxu0 0
      %1991 = vmatpush1.bf16.msra.mxu0 0
      %1992 = vmatprep.subr.bf16.mxu0 0
      %1993 = vmatpush1.bf16.msra.mxu0 0
      %1994 = vmatprep.subr.bf16.mxu0 0
      %1995 = vmatpush1.bf16.msra.mxu0 0
      %1996 = vmatprep.subr.bf16.mxu0 0
      %1997 = vmatpush1.bf16.msra.mxu0 0
      %1998 = vmatprep.subr.bf16.mxu0 0
      %1999 = vmatpush1.bf16.msra.mxu0 0
      %2000 = vmatprep.subr.bf16.mxu0 0
      %2001 = vmatpush1.bf16.msra.mxu0 0
      %2002 = vmatprep.mubr.bf16.mxu0 0
      %2003 = vmatmul.mubr.bf16.gmra.mrb[0].mxu0 %v1511
      %v2004 = vpop.f32.mrb[0].mxu0
      %v2005 = vadd.f32 0.0, %v2004
      %v2006 = vpop.f32.mrb[0].mxu0
      %v2007 = vpop.f32.mrb[0].mxu0
      %v2008 = vadd.f32 0.0, %v2007
      %v2009 = vpop.f32.mrb[0].mxu0
      %2010 = vmatprep.mubr.bf16.mxu0 0
      %2011 = vmatmul.mubr.bf16.gmra.mrb[0].mxu0 %v1513
      %v2012 = vpop.f32.mrb[0].mxu0
      %v2013 = vadd.f32 0.0, %v2012
      %v2014 = vpop.f32.mrb[0].mxu0
      %v2015 = vpop.f32.mrb[0].mxu0
      %v2016 = vadd.f32 0.0, %v2015
      %v2017 = vpop.f32.mrb[0].mxu0
      %2018 = vmatprep.mubr.bf16.mxu0 0
      %2019 = vmatmul.mubr.bf16.gmra.mrb[0].mxu0 %v1515
      %v2020 = vpop.f32.mrb[0].mxu0
      %v2021 = vadd.f32 0.0, %v2020
      %v2022 = vpop.f32.mrb[0].mxu0
      %v2023 = vpop.f32.mrb[0].mxu0
      %v2024 = vadd.f32 0.0, %v2023
      %v2025 = vpop.f32.mrb[0].mxu0
      %2026 = vmatprep.mubr.bf16.mxu0 0
      %2027 = vmatmul.mubr.bf16.gmra.mrb[0].mxu0 %v1517
      %v2028 = vpop.f32.mrb[0].mxu0
      %v2029 = vadd.f32 0.0, %v2028
      %v2030 = vpop.f32.mrb[0].mxu0
      %v2031 = vpop.f32.mrb[0].mxu0
      %v2032 = vadd.f32 0.0, %v2031
      %v2033 = vpop.f32.mrb[0].mxu0
      %2034 = vmatprep.mubr.bf16.mxu0 0
      %2035 = vmatmul.mubr.bf16.gmra.mrb[0].mxu0 %v1519
      %v2036 = vpop.f32.mrb[0].mxu0
      %v2037 = vadd.f32 0.0, %v2036
      %v2038 = vpop.f32.mrb[0].mxu0
      %v2039 = vpop.f32.mrb[0].mxu0
      %v2040 = vadd.f32 0.0, %v2039
      %v2041 = vpop.f32.mrb[0].mxu0
      %2042 = vmatprep.mubr.bf16.mxu0 0
      %2043 = vmatmul.mubr.bf16.gmra.mrb[0].mxu0 %v1521
      %v2044 = vpop.f32.mrb[0].mxu0
      %v2045 = vadd.f32 0.0, %v2044
      %v2046 = vpop.f32.mrb[0].mxu0
      %v2047 = vpop.f32.mrb[0].mxu0
      %v2048 = vadd.f32 0.0, %v2047
      %v2049 = vpop.f32.mrb[0].mxu0
      %2050 = vmatprep.mubr.bf16.mxu0 0
      %2051 = vmatmul.mubr.bf16.gmra.mrb[0].mxu0 %v1523
      %v2052 = vpop.f32.mrb[0].mxu0
      %v2053 = vadd.f32 0.0, %v2052
      %v2054 = vpop.f32.mrb[0].mxu0
      %v2055 = vpop.f32.mrb[0].mxu0
      %v2056 = vadd.f32 0.0, %v2055
      %v2057 = vpop.f32.mrb[0].mxu0
      %2058 = vmatprep.mubr.bf16.mxu0 0
      %2059 = vmatmul.mubr.bf16.gmra.mrb[0].mxu0 %v1525
      %v2060 = vpop.f32.mrb[0].mxu0
      %v2061 = vadd.f32 0.0, %v2060
      %v2062 = vpop.f32.mrb[0].mxu0
      %v2063 = vpop.f32.mrb[0].mxu0
      %v2064 = vadd.f32 0.0, %v2063
      %v2065 = vpop.f32.mrb[0].mxu0
      %2066 = vmatprep.mubr.bf16.mxu0 0
      %2067 = vmatmul.mubr.bf16.gmra.mrb[0].mxu0 %v1527
      %v2068 = vpop.f32.mrb[0].mxu0
      %v2069 = vadd.f32 0.0, %v2068
      %v2070 = vpop.f32.mrb[0].mxu0
      %v2071 = vpop.f32.mrb[0].mxu0
      %v2072 = vadd.f32 0.0, %v2071
      %v2073 = vpop.f32.mrb[0].mxu0
      %2074 = vmatprep.mubr.bf16.mxu0 0
      %2075 = vmatmul.mubr.bf16.gmra.mrb[0].mxu0 %v1529
      %v2076 = vpop.f32.mrb[0].mxu0
      %v2077 = vadd.f32 0.0, %v2076
      %v2078 = vpop.f32.mrb[0].mxu0
      %v2079 = vpop.f32.mrb[0].mxu0
      %v2080 = vadd.f32 0.0, %v2079
      %v2081 = vpop.f32.mrb[0].mxu0
      %2082 = vmatprep.mubr.bf16.mxu0 0
      %2083 = vmatmul.mubr.bf16.gmra.mrb[0].mxu0 %v1531
      %v2084 = vpop.f32.mrb[0].mxu0
      %v2085 = vadd.f32 0.0, %v2084
      %v2086 = vpop.f32.mrb[0].mxu0
      %v2087 = vpop.f32.mrb[0].mxu0
      %v2088 = vadd.f32 0.0, %v2087
      %v2089 = vpop.f32.mrb[0].mxu0
      %2090 = vmatprep.mubr.bf16.mxu0 0
      %2091 = vmatmul.mubr.bf16.gmra.mrb[0].mxu0 %v1533
      %v2092 = vpop.f32.mrb[0].mxu0
      %v2093 = vadd.f32 0.0, %v2092
      %v2094 = vpop.f32.mrb[0].mxu0
      %v2095 = vpop.f32.mrb[0].mxu0
      %v2096 = vadd.f32 0.0, %v2095
      %v2097 = vpop.f32.mrb[0].mxu0
      %2098 = vmatprep.mubr.bf16.mxu0 0
      %2099 = vmatmul.mubr.bf16.gmra.mrb[0].mxu0 %v1535
      %v2100 = vpop.f32.mrb[0].mxu0
      %v2101 = vadd.f32 0.0, %v2100
      %v2102 = vpop.f32.mrb[0].mxu0
      %v2103 = vpop.f32.mrb[0].mxu0
      %v2104 = vadd.f32 0.0, %v2103
      %v2105 = vpop.f32.mrb[0].mxu0
      %2106 = vmatprep.mubr.bf16.mxu0 0
      %2107 = vmatmul.mubr.bf16.gmra.mrb[0].mxu0 %v1537
      %v2108 = vpop.f32.mrb[0].mxu0
      %v2109 = vadd.f32 0.0, %v2108
      %v2110 = vpop.f32.mrb[0].mxu0
      %v2111 = vpop.f32.mrb[0].mxu0
      %v2112 = vadd.f32 0.0, %v2111
      %v2113 = vpop.f32.mrb[0].mxu0
      %2114 = vmatprep.mubr.bf16.mxu0 0
      %2115 = vmatmul.mubr.bf16.gmra.mrb[0].mxu0 %v1539
      %v2116 = vpop.f32.mrb[0].mxu0
      %v2117 = vadd.f32 0.0, %v2116
      %v2118 = vpop.f32.mrb[0].mxu0
      %v2119 = vpop.f32.mrb[0].mxu0
      %v2120 = vadd.f32 0.0, %v2119
      %v2121 = vpop.f32.mrb[0].mxu0
      %2122 = vmatprep.mubr.bf16.mxu0 0
      %2123 = vmatmul.mubr.bf16.gmra.mrb[0].mxu0 %v1965
      %v2124 = vpop.f32.mrb[0].mxu0
      %v2125 = vadd.f32 0.0, %v2124
      %v2126 = vpop.f32.mrb[0].mxu0
      %v2127 = vpop.f32.mrb[0].mxu0
      %v2128 = vadd.f32 0.0, %v2127
      %v2129 = vpop.f32.mrb[0].mxu0
      %2130 = vdwg.mxu0
      %v2131 = vadd.f32 %v1925, %v2005
      %v2132 = vadd.f32 %v1926, %v2008
      %v2133 = vadd.f32 %v1927, %v2013
      %v2134 = vadd.f32 %v1928, %v2016
      %v2135 = vadd.f32 %v1929, %v2021
      %v2136 = vadd.f32 %v1930, %v2024
      %v2137 = vadd.f32 %v1931, %v2029
      %v2138 = vadd.f32 %v1932, %v2032
      %v2139 = vadd.f32 %v1933, %v2037
      %v2140 = vadd.f32 %v1934, %v2040
      %v2141 = vadd.f32 %v1935, %v2045
      %v2142 = vadd.f32 %v1936, %v2048
      %v2143 = vadd.f32 %v1937, %v2053
      %v2144 = vadd.f32 %v1938, %v2056
      %v2145 = vadd.f32 %v1939, %v2061
      %v2146 = vadd.f32 %v1940, %v2064
      %v2147 = vadd.f32 %v1941, %v2069
      %v2148 = vadd.f32 %v1942, %v2072
      %v2149 = vadd.f32 %v1943, %v2077
      %v2150 = vadd.f32 %v1944, %v2080
      %v2151 = vadd.f32 %v1945, %v2085
      %v2152 = vadd.f32 %v1946, %v2088
      %v2153 = vadd.f32 %v1947, %v2093
      %v2154 = vadd.f32 %v1948, %v2096
      %v2155 = vadd.f32 %v1949, %v2101
      %v2156 = vadd.f32 %v1950, %v2104
      %v2157 = vadd.f32 %v1951, %v2109
      %v2158 = vadd.f32 %v1952, %v2112
      %v2159 = vadd.f32 %v1953, %v2117
      %v2160 = vadd.f32 %v1954, %v2120
      %v2161 = vadd.f32 %v1955, %v2125
      %v2162 = vadd.f32 %v1956, %v2128
      %s2163 = scalar_lea.vmem %s1, 32
      %v2164 = vld [vmem:[%s2163] sm:$0xf]
      %v2165 = vld [vmem:[%s2163 + $0x4] sm:$0x1]
      %v2168 = vunpack.c.l.b16 %v2164
      %v2169 = vunpack.c.l.b16 %v2165
      %v2170 = vpack.c.b16 %v2169, %v2168
      %v2172 = vsel %vm1287, %v1172, 0
      %v2175 = vand.u32 %v2170, %v1339
      %2177 = vmatprep.subr.bf16.mxu0 0
      %2178 = vmatpush1.bf16.msra.mxu0 %v2175
      %2179 = vmatprep.subr.bf16.mxu0 0
      %2180 = vmatpush1.bf16.msra.mxu0 0
      %2181 = vmatprep.subr.bf16.mxu0 0
      %2182 = vmatpush1.bf16.msra.mxu0 0
      %2183 = vmatprep.subr.bf16.mxu0 0
      %2184 = vmatpush1.bf16.msra.mxu0 0
      %2185 = vmatprep.subr.bf16.mxu0 0
      %2186 = vmatpush1.bf16.msra.mxu0 0
      %2187 = vmatprep.subr.bf16.mxu0 0
      %2188 = vmatpush1.bf16.msra.mxu0 0
      %2189 = vmatprep.subr.bf16.mxu0 0
      %2190 = vmatpush1.bf16.msra.mxu0 0
      %2191 = vmatprep.subr.bf16.mxu0 0
      %2192 = vmatpush1.bf16.msra.mxu0 0
      %2193 = vmatprep.subr.bf16.mxu0 0
      %2194 = vmatpush1.bf16.msra.mxu0 0
      %2195 = vmatprep.subr.bf16.mxu0 0
      %2196 = vmatpush1.bf16.msra.mxu0 0
      %2197 = vmatprep.subr.bf16.mxu0 0
      %2198 = vmatpush1.bf16.msra.mxu0 0
      %2199 = vmatprep.subr.bf16.mxu0 0
      %2200 = vmatpush1.bf16.msra.mxu0 0
      %2201 = vmatprep.subr.bf16.mxu0 0
      %2202 = vmatpush1.bf16.msra.mxu0 0
      %2203 = vmatprep.subr.bf16.mxu0 0
      %2204 = vmatpush1.bf16.msra.mxu0 0
      %2205 = vmatprep.subr.bf16.mxu0 0
      %2206 = vmatpush1.bf16.msra.mxu0 0
      %2207 = vmatprep.subr.bf16.mxu0 0
      %2208 = vmatpush1.bf16.msra.mxu0 0
      %2209 = vmatprep.mubr.bf16.mxu0 0
      %2210 = vmatmul.mubr.bf16.gmra.mrb[0].mxu0 %v1292
      %v2211 = vpop.f32.mrb[0].mxu0
      %v2212 = vadd.f32 0.0, %v2211
      %v2213 = vpop.f32.mrb[0].mxu0
      %v2214 = vpop.f32.mrb[0].mxu0
      %v2215 = vadd.f32 0.0, %v2214
      %v2216 = vpop.f32.mrb[0].mxu0
      %2217 = vmatprep.mubr.bf16.mxu0 0
      %2218 = vmatmul.mubr.bf16.gmra.mrb[0].mxu0 %v1295
      %v2219 = vpop.f32.mrb[0].mxu0
      %v2220 = vadd.f32 0.0, %v2219
      %v2221 = vpop.f32.mrb[0].mxu0
      %v2222 = vpop.f32.mrb[0].mxu0
      %v2223 = vadd.f32 0.0, %v2222
      %v2224 = vpop.f32.mrb[0].mxu0
      %2225 = vmatprep.mubr.bf16.mxu0 0
      %2226 = vmatmul.mubr.bf16.gmra.mrb[0].mxu0 %v1298
      %v2227 = vpop.f32.mrb[0].mxu0
      %v2228 = vadd.f32 0.0, %v2227
      %v2229 = vpop.f32.mrb[0].mxu0
      %v2230 = vpop.f32.mrb[0].mxu0
      %v2231 = vadd.f32 0.0, %v2230
      %v2232 = vpop.f32.mrb[0].mxu0
      %2233 = vmatprep.mubr.bf16.mxu0 0
      %2234 = vmatmul.mubr.bf16.gmra.mrb[0].mxu0 %v1301
      %v2235 = vpop.f32.mrb[0].mxu0
      %v2236 = vadd.f32 0.0, %v2235
      %v2237 = vpop.f32.mrb[0].mxu0
      %v2238 = vpop.f32.mrb[0].mxu0
      %v2239 = vadd.f32 0.0, %v2238
      %v2240 = vpop.f32.mrb[0].mxu0
      %2241 = vmatprep.mubr.bf16.mxu0 0
      %2242 = vmatmul.mubr.bf16.gmra.mrb[0].mxu0 %v1304
      %v2243 = vpop.f32.mrb[0].mxu0
      %v2244 = vadd.f32 0.0, %v2243
      %v2245 = vpop.f32.mrb[0].mxu0
      %v2246 = vpop.f32.mrb[0].mxu0
      %v2247 = vadd.f32 0.0, %v2246
      %v2248 = vpop.f32.mrb[0].mxu0
      %2249 = vmatprep.mubr.bf16.mxu0 0
      %2250 = vmatmul.mubr.bf16.gmra.mrb[0].mxu0 %v1307
      %v2251 = vpop.f32.mrb[0].mxu0
      %v2252 = vadd.f32 0.0, %v2251
      %v2253 = vpop.f32.mrb[0].mxu0
      %v2254 = vpop.f32.mrb[0].mxu0
      %v2255 = vadd.f32 0.0, %v2254
      %v2256 = vpop.f32.mrb[0].mxu0
      %2257 = vmatprep.mubr.bf16.mxu0 0
      %2258 = vmatmul.mubr.bf16.gmra.mrb[0].mxu0 %v1310
      %v2259 = vpop.f32.mrb[0].mxu0
      %v2260 = vadd.f32 0.0, %v2259
      %v2261 = vpop.f32.mrb[0].mxu0
      %v2262 = vpop.f32.mrb[0].mxu0
      %v2263 = vadd.f32 0.0, %v2262
      %v2264 = vpop.f32.mrb[0].mxu0
      %2265 = vmatprep.mubr.bf16.mxu0 0
      %2266 = vmatmul.mubr.bf16.gmra.mrb[0].mxu0 %v1313
      %v2267 = vpop.f32.mrb[0].mxu0
      %v2268 = vadd.f32 0.0, %v2267
      %v2269 = vpop.f32.mrb[0].mxu0
      %v2270 = vpop.f32.mrb[0].mxu0
      %v2271 = vadd.f32 0.0, %v2270
      %v2272 = vpop.f32.mrb[0].mxu0
      %2273 = vmatprep.mubr.bf16.mxu0 0
      %2274 = vmatmul.mubr.bf16.gmra.mrb[0].mxu0 %v1316
      %v2275 = vpop.f32.mrb[0].mxu0
      %v2276 = vadd.f32 0.0, %v2275
      %v2277 = vpop.f32.mrb[0].mxu0
      %v2278 = vpop.f32.mrb[0].mxu0
      %v2279 = vadd.f32 0.0, %v2278
      %v2280 = vpop.f32.mrb[0].mxu0
      %2281 = vmatprep.mubr.bf16.mxu0 0
      %2282 = vmatmul.mubr.bf16.gmra.mrb[0].mxu0 %v1319
      %v2283 = vpop.f32.mrb[0].mxu0
      %v2284 = vadd.f32 0.0, %v2283
      %v2285 = vpop.f32.mrb[0].mxu0
      %v2286 = vpop.f32.mrb[0].mxu0
      %v2287 = vadd.f32 0.0, %v2286
      %v2288 = vpop.f32.mrb[0].mxu0
      %2289 = vmatprep.mubr.bf16.mxu0 0
      %2290 = vmatmul.mubr.bf16.gmra.mrb[0].mxu0 %v1322
      %v2291 = vpop.f32.mrb[0].mxu0
      %v2292 = vadd.f32 0.0, %v2291
      %v2293 = vpop.f32.mrb[0].mxu0
      %v2294 = vpop.f32.mrb[0].mxu0
      %v2295 = vadd.f32 0.0, %v2294
      %v2296 = vpop.f32.mrb[0].mxu0
      %2297 = vmatprep.mubr.bf16.mxu0 0
      %2298 = vmatmul.mubr.bf16.gmra.mrb[0].mxu0 %v1325
      %v2299 = vpop.f32.mrb[0].mxu0
      %v2300 = vadd.f32 0.0, %v2299
      %v2301 = vpop.f32.mrb[0].mxu0
      %v2302 = vpop.f32.mrb[0].mxu0
      %v2303 = vadd.f32 0.0, %v2302
      %v2304 = vpop.f32.mrb[0].mxu0
      %2305 = vmatprep.mubr.bf16.mxu0 0
      %2306 = vmatmul.mubr.bf16.gmra.mrb[0].mxu0 %v1328
      %v2307 = vpop.f32.mrb[0].mxu0
      %v2308 = vadd.f32 0.0, %v2307
      %v2309 = vpop.f32.mrb[0].mxu0
      %v2310 = vpop.f32.mrb[0].mxu0
      %v2311 = vadd.f32 0.0, %v2310
      %v2312 = vpop.f32.mrb[0].mxu0
      %2313 = vmatprep.mubr.bf16.mxu0 0
      %2314 = vmatmul.mubr.bf16.gmra.mrb[0].mxu0 %v1331
      %v2315 = vpop.f32.mrb[0].mxu0
      %v2316 = vadd.f32 0.0, %v2315
      %v2317 = vpop.f32.mrb[0].mxu0
      %v2318 = vpop.f32.mrb[0].mxu0
      %v2319 = vadd.f32 0.0, %v2318
      %v2320 = vpop.f32.mrb[0].mxu0
      %2321 = vmatprep.mubr.bf16.mxu0 0
      %2322 = vmatmul.mubr.bf16.gmra.mrb[0].mxu0 %v1334
      %v2323 = vpop.f32.mrb[0].mxu0
      %v2324 = vadd.f32 0.0, %v2323
      %v2325 = vpop.f32.mrb[0].mxu0
      %v2326 = vpop.f32.mrb[0].mxu0
      %v2327 = vadd.f32 0.0, %v2326
      %v2328 = vpop.f32.mrb[0].mxu0
      %2329 = vmatprep.mubr.bf16.mxu0 0
      %2330 = vmatmul.mubr.bf16.gmra.mrb[0].mxu0 %v2172
      %v2331 = vpop.f32.mrb[0].mxu0
      %v2332 = vadd.f32 0.0, %v2331
      %v2333 = vpop.f32.mrb[0].mxu0
      %v2334 = vpop.f32.mrb[0].mxu0
      %v2335 = vadd.f32 0.0, %v2334
      %v2336 = vpop.f32.mrb[0].mxu0
      %2337 = vdwg.mxu0
      %v2338 = vadd.f32 %v2131, %v2212
      %v2339 = vadd.f32 %v2132, %v2215
      %v2340 = vadd.f32 %v2133, %v2220
      %v2341 = vadd.f32 %v2134, %v2223
      %v2342 = vadd.f32 %v2135, %v2228
      %v2343 = vadd.f32 %v2136, %v2231
      %v2344 = vadd.f32 %v2137, %v2236
      %v2345 = vadd.f32 %v2138, %v2239
      %v2346 = vadd.f32 %v2139, %v2244
      %v2347 = vadd.f32 %v2140, %v2247
      %v2348 = vadd.f32 %v2141, %v2252
      %v2349 = vadd.f32 %v2142, %v2255
      %v2350 = vadd.f32 %v2143, %v2260
      %v2351 = vadd.f32 %v2144, %v2263
      %v2352 = vadd.f32 %v2145, %v2268
      %v2353 = vadd.f32 %v2146, %v2271
      %v2354 = vadd.f32 %v2147, %v2276
      %v2355 = vadd.f32 %v2148, %v2279
      %v2356 = vadd.f32 %v2149, %v2284
      %v2357 = vadd.f32 %v2150, %v2287
      %v2358 = vadd.f32 %v2151, %v2292
      %v2359 = vadd.f32 %v2152, %v2295
      %v2360 = vadd.f32 %v2153, %v2300
      %v2361 = vadd.f32 %v2154, %v2303
      %v2362 = vadd.f32 %v2155, %v2308
      %v2363 = vadd.f32 %v2156, %v2311
      %v2364 = vadd.f32 %v2157, %v2316
      %v2365 = vadd.f32 %v2158, %v2319
      %v2366 = vadd.f32 %v2159, %v2324
      %v2367 = vadd.f32 %v2160, %v2327
      %v2368 = vadd.f32 %v2161, %v2332
      %v2369 = vadd.f32 %v2162, %v2335
      %s2370 = scalar_lea.vmem %s1, 40
      %v2371 = vld [vmem:[%s2370] sm:$0xf]
      %v2372 = vld [vmem:[%s2370 + $0x4] sm:$0x1]
      %v2375 = vunpack.c.l.b16 %v2371
      %v2376 = vunpack.c.l.b16 %v2372
      %v2377 = vpack.c.b16 %v2376, %v2375
      %v2379 = vsel %vm1287, %v1272, 0
      %v2382 = vand.u32 %v2377, %v1339
      %2384 = vmatprep.subr.bf16.mxu0 0
      %2385 = vmatpush1.bf16.msra.mxu0 %v2382
      %2386 = vmatprep.subr.bf16.mxu0 0
      %2387 = vmatpush1.bf16.msra.mxu0 0
      %2388 = vmatprep.subr.bf16.mxu0 0
      %2389 = vmatpush1.bf16.msra.mxu0 0
      %2390 = vmatprep.subr.bf16.mxu0 0
      %2391 = vmatpush1.bf16.msra.mxu0 0
      %2392 = vmatprep.subr.bf16.mxu0 0
      %2393 = vmatpush1.bf16.msra.mxu0 0
      %2394 = vmatprep.subr.bf16.mxu0 0
      %2395 = vmatpush1.bf16.msra.mxu0 0
      %2396 = vmatprep.subr.bf16.mxu0 0
      %2397 = vmatpush1.bf16.msra.mxu0 0
      %2398 = vmatprep.subr.bf16.mxu0 0
      %2399 = vmatpush1.bf16.msra.mxu0 0
      %2400 = vmatprep.subr.bf16.mxu0 0
      %2401 = vmatpush1.bf16.msra.mxu0 0
      %2402 = vmatprep.subr.bf16.mxu0 0
      %2403 = vmatpush1.bf16.msra.mxu0 0
      %2404 = vmatprep.subr.bf16.mxu0 0
      %2405 = vmatpush1.bf16.msra.mxu0 0
      %2406 = vmatprep.subr.bf16.mxu0 0
      %2407 = vmatpush1.bf16.msra.mxu0 0
      %2408 = vmatprep.subr.bf16.mxu0 0
      %2409 = vmatpush1.bf16.msra.mxu0 0
      %2410 = vmatprep.subr.bf16.mxu0 0
      %2411 = vmatpush1.bf16.msra.mxu0 0
      %2412 = vmatprep.subr.bf16.mxu0 0
      %2413 = vmatpush1.bf16.msra.mxu0 0
      %2414 = vmatprep.subr.bf16.mxu0 0
      %2415 = vmatpush1.bf16.msra.mxu0 0
      %2416 = vmatprep.mubr.bf16.mxu0 0
      %2417 = vmatmul.mubr.bf16.gmra.mrb[0].mxu0 %v1717
      %v2418 = vpop.f32.mrb[0].mxu0
      %v2419 = vadd.f32 0.0, %v2418
      %v2420 = vpop.f32.mrb[0].mxu0
      %v2421 = vpop.f32.mrb[0].mxu0
      %v2422 = vadd.f32 0.0, %v2421
      %v2423 = vpop.f32.mrb[0].mxu0
      %2424 = vmatprep.mubr.bf16.mxu0 0
      %2425 = vmatmul.mubr.bf16.gmra.mrb[0].mxu0 %v1720
      %v2426 = vpop.f32.mrb[0].mxu0
      %v2427 = vadd.f32 0.0, %v2426
      %v2428 = vpop.f32.mrb[0].mxu0
      %v2429 = vpop.f32.mrb[0].mxu0
      %v2430 = vadd.f32 0.0, %v2429
      %v2431 = vpop.f32.mrb[0].mxu0
      %2432 = vmatprep.mubr.bf16.mxu0 0
      %2433 = vmatmul.mubr.bf16.gmra.mrb[0].mxu0 %v1723
      %v2434 = vpop.f32.mrb[0].mxu0
      %v2435 = vadd.f32 0.0, %v2434
      %v2436 = vpop.f32.mrb[0].mxu0
      %v2437 = vpop.f32.mrb[0].mxu0
      %v2438 = vadd.f32 0.0, %v2437
      %v2439 = vpop.f32.mrb[0].mxu0
      %2440 = vmatprep.mubr.bf16.mxu0 0
      %2441 = vmatmul.mubr.bf16.gmra.mrb[0].mxu0 %v1726
      %v2442 = vpop.f32.mrb[0].mxu0
      %v2443 = vadd.f32 0.0, %v2442
      %v2444 = vpop.f32.mrb[0].mxu0
      %v2445 = vpop.f32.mrb[0].mxu0
      %v2446 = vadd.f32 0.0, %v2445
      %v2447 = vpop.f32.mrb[0].mxu0
      %2448 = vmatprep.mubr.bf16.mxu0 0
      %2449 = vmatmul.mubr.bf16.gmra.mrb[0].mxu0 %v1729
      %v2450 = vpop.f32.mrb[0].mxu0
      %v2451 = vadd.f32 0.0, %v2450
      %v2452 = vpop.f32.mrb[0].mxu0
      %v2453 = vpop.f32.mrb[0].mxu0
      %v2454 = vadd.f32 0.0, %v2453
      %v2455 = vpop.f32.mrb[0].mxu0
      %2456 = vmatprep.mubr.bf16.mxu0 0
      %2457 = vmatmul.mubr.bf16.gmra.mrb[0].mxu0 %v1732
      %v2458 = vpop.f32.mrb[0].mxu0
      %v2459 = vadd.f32 0.0, %v2458
      %v2460 = vpop.f32.mrb[0].mxu0
      %v2461 = vpop.f32.mrb[0].mxu0
      %v2462 = vadd.f32 0.0, %v2461
      %v2463 = vpop.f32.mrb[0].mxu0
      %2464 = vmatprep.mubr.bf16.mxu0 0
      %2465 = vmatmul.mubr.bf16.gmra.mrb[0].mxu0 %v1735
      %v2466 = vpop.f32.mrb[0].mxu0
      %v2467 = vadd.f32 0.0, %v2466
      %v2468 = vpop.f32.mrb[0].mxu0
      %v2469 = vpop.f32.mrb[0].mxu0
      %v2470 = vadd.f32 0.0, %v2469
      %v2471 = vpop.f32.mrb[0].mxu0
      %2472 = vmatprep.mubr.bf16.mxu0 0
      %2473 = vmatmul.mubr.bf16.gmra.mrb[0].mxu0 %v1738
      %v2474 = vpop.f32.mrb[0].mxu0
      %v2475 = vadd.f32 0.0, %v2474
      %v2476 = vpop.f32.mrb[0].mxu0
      %v2477 = vpop.f32.mrb[0].mxu0
      %v2478 = vadd.f32 0.0, %v2477
      %v2479 = vpop.f32.mrb[0].mxu0
      %2480 = vmatprep.mubr.bf16.mxu0 0
      %2481 = vmatmul.mubr.bf16.gmra.mrb[0].mxu0 %v1741
      %v2482 = vpop.f32.mrb[0].mxu0
      %v2483 = vadd.f32 0.0, %v2482
      %v2484 = vpop.f32.mrb[0].mxu0
      %v2485 = vpop.f32.mrb[0].mxu0
      %v2486 = vadd.f32 0.0, %v2485
      %v2487 = vpop.f32.mrb[0].mxu0
      %2488 = vmatprep.mubr.bf16.mxu0 0
      %2489 = vmatmul.mubr.bf16.gmra.mrb[0].mxu0 %v1744
      %v2490 = vpop.f32.mrb[0].mxu0
      %v2491 = vadd.f32 0.0, %v2490
      %v2492 = vpop.f32.mrb[0].mxu0
      %v2493 = vpop.f32.mrb[0].mxu0
      %v2494 = vadd.f32 0.0, %v2493
      %v2495 = vpop.f32.mrb[0].mxu0
      %2496 = vmatprep.mubr.bf16.mxu0 0
      %2497 = vmatmul.mubr.bf16.gmra.mrb[0].mxu0 %v1747
      %v2498 = vpop.f32.mrb[0].mxu0
      %v2499 = vadd.f32 0.0, %v2498
      %v2500 = vpop.f32.mrb[0].mxu0
      %v2501 = vpop.f32.mrb[0].mxu0
      %v2502 = vadd.f32 0.0, %v2501
      %v2503 = vpop.f32.mrb[0].mxu0
      %2504 = vmatprep.mubr.bf16.mxu0 0
      %2505 = vmatmul.mubr.bf16.gmra.mrb[0].mxu0 %v1750
      %v2506 = vpop.f32.mrb[0].mxu0
      %v2507 = vadd.f32 0.0, %v2506
      %v2508 = vpop.f32.mrb[0].mxu0
      %v2509 = vpop.f32.mrb[0].mxu0
      %v2510 = vadd.f32 0.0, %v2509
      %v2511 = vpop.f32.mrb[0].mxu0
      %2512 = vmatprep.mubr.bf16.mxu0 0
      %2513 = vmatmul.mubr.bf16.gmra.mrb[0].mxu0 %v1753
      %v2514 = vpop.f32.mrb[0].mxu0
      %v2515 = vadd.f32 0.0, %v2514
      %v2516 = vpop.f32.mrb[0].mxu0
      %v2517 = vpop.f32.mrb[0].mxu0
      %v2518 = vadd.f32 0.0, %v2517
      %v2519 = vpop.f32.mrb[0].mxu0
      %2520 = vmatprep.mubr.bf16.mxu0 0
      %2521 = vmatmul.mubr.bf16.gmra.mrb[0].mxu0 %v1756
      %v2522 = vpop.f32.mrb[0].mxu0
      %v2523 = vadd.f32 0.0, %v2522
      %v2524 = vpop.f32.mrb[0].mxu0
      %v2525 = vpop.f32.mrb[0].mxu0
      %v2526 = vadd.f32 0.0, %v2525
      %v2527 = vpop.f32.mrb[0].mxu0
      %2528 = vmatprep.mubr.bf16.mxu0 0
      %2529 = vmatmul.mubr.bf16.gmra.mrb[0].mxu0 %v1759
      %v2530 = vpop.f32.mrb[0].mxu0
      %v2531 = vadd.f32 0.0, %v2530
      %v2532 = vpop.f32.mrb[0].mxu0
      %v2533 = vpop.f32.mrb[0].mxu0
      %v2534 = vadd.f32 0.0, %v2533
      %v2535 = vpop.f32.mrb[0].mxu0
      %2536 = vmatprep.mubr.bf16.mxu0 0
      %2537 = vmatmul.mubr.bf16.gmra.mrb[0].mxu0 %v2379
      %v2538 = vpop.f32.mrb[0].mxu0
      %v2539 = vadd.f32 0.0, %v2538
      %v2540 = vpop.f32.mrb[0].mxu0
      %v2541 = vpop.f32.mrb[0].mxu0
      %v2542 = vadd.f32 0.0, %v2541
      %v2543 = vpop.f32.mrb[0].mxu0
      %2544 = vdwg.mxu0
      %v2545 = vadd.f32 %v2338, %v2419
      %v2546 = vadd.f32 %v2339, %v2422
      %v2547 = vadd.f32 %v2340, %v2427
      %v2548 = vadd.f32 %v2341, %v2430
      %v2549 = vadd.f32 %v2342, %v2435
      %v2550 = vadd.f32 %v2343, %v2438
      %v2551 = vadd.f32 %v2344, %v2443
      %v2552 = vadd.f32 %v2345, %v2446
      %v2553 = vadd.f32 %v2346, %v2451
      %v2554 = vadd.f32 %v2347, %v2454
      %v2555 = vadd.f32 %v2348, %v2459
      %v2556 = vadd.f32 %v2349, %v2462
      %v2557 = vadd.f32 %v2350, %v2467
      %v2558 = vadd.f32 %v2351, %v2470
      %v2559 = vadd.f32 %v2352, %v2475
      %v2560 = vadd.f32 %v2353, %v2478
      %v2561 = vadd.f32 %v2354, %v2483
      %v2562 = vadd.f32 %v2355, %v2486
      %v2563 = vadd.f32 %v2356, %v2491
      %v2564 = vadd.f32 %v2357, %v2494
      %v2565 = vadd.f32 %v2358, %v2499
      %v2566 = vadd.f32 %v2359, %v2502
      %v2567 = vadd.f32 %v2360, %v2507
      %v2568 = vadd.f32 %v2361, %v2510
      %v2569 = vadd.f32 %v2362, %v2515
      %v2570 = vadd.f32 %v2363, %v2518
      %v2571 = vadd.f32 %v2364, %v2523
      %v2572 = vadd.f32 %v2365, %v2526
      %v2573 = vadd.f32 %v2366, %v2531
      %v2574 = vadd.f32 %v2367, %v2534
      %v2575 = vadd.f32 %v2368, %v2539
      %v2576 = vadd.f32 %v2369, %v2542
      %s2577 = scalar_lea.vmem %s1, 48
      %v2578 = vld [vmem:[%s2577] sm:$0xf]
      %v2579 = vld [vmem:[%s2577 + $0x4] sm:$0x1]
      %v2582 = vunpack.c.l.b16 %v2578
      %v2583 = vunpack.c.l.b16 %v2579
      %v2584 = vpack.c.b16 %v2583, %v2582
      %v2585 = vsel %vm1287, %v966, 0
      %v2588 = vand.u32 %v2584, %v1339
      %2590 = vmatprep.subr.bf16.mxu0 0
      %2591 = vmatpush1.bf16.msra.mxu0 %v2588
      %2592 = vmatprep.subr.bf16.mxu0 0
      %2593 = vmatpush1.bf16.msra.mxu0 0
      %2594 = vmatprep.subr.bf16.mxu0 0
      %2595 = vmatpush1.bf16.msra.mxu0 0
      %2596 = vmatprep.subr.bf16.mxu0 0
      %2597 = vmatpush1.bf16.msra.mxu0 0
      %2598 = vmatprep.subr.bf16.mxu0 0
      %2599 = vmatpush1.bf16.msra.mxu0 0
      %2600 = vmatprep.subr.bf16.mxu0 0
      %2601 = vmatpush1.bf16.msra.mxu0 0
      %2602 = vmatprep.subr.bf16.mxu0 0
      %2603 = vmatpush1.bf16.msra.mxu0 0
      %2604 = vmatprep.subr.bf16.mxu0 0
      %2605 = vmatpush1.bf16.msra.mxu0 0
      %2606 = vmatprep.subr.bf16.mxu0 0
      %2607 = vmatpush1.bf16.msra.mxu0 0
      %2608 = vmatprep.subr.bf16.mxu0 0
      %2609 = vmatpush1.bf16.msra.mxu0 0
      %2610 = vmatprep.subr.bf16.mxu0 0
      %2611 = vmatpush1.bf16.msra.mxu0 0
      %2612 = vmatprep.subr.bf16.mxu0 0
      %2613 = vmatpush1.bf16.msra.mxu0 0
      %2614 = vmatprep.subr.bf16.mxu0 0
      %2615 = vmatpush1.bf16.msra.mxu0 0
      %2616 = vmatprep.subr.bf16.mxu0 0
      %2617 = vmatpush1.bf16.msra.mxu0 0
      %2618 = vmatprep.subr.bf16.mxu0 0
      %2619 = vmatpush1.bf16.msra.mxu0 0
      %2620 = vmatprep.subr.bf16.mxu0 0
      %2621 = vmatpush1.bf16.msra.mxu0 0
      %2622 = vmatprep.mubr.bf16.mxu0 0
      %2623 = vmatmul.mubr.bf16.gmra.mrb[0].mxu0 %v1513
      %v2624 = vpop.f32.mrb[0].mxu0
      %v2625 = vadd.f32 0.0, %v2624
      %v2626 = vpop.f32.mrb[0].mxu0
      %v2627 = vpop.f32.mrb[0].mxu0
      %v2628 = vadd.f32 0.0, %v2627
      %v2629 = vpop.f32.mrb[0].mxu0
      %2630 = vmatprep.mubr.bf16.mxu0 0
      %2631 = vmatmul.mubr.bf16.gmra.mrb[0].mxu0 %v1515
      %v2632 = vpop.f32.mrb[0].mxu0
      %v2633 = vadd.f32 0.0, %v2632
      %v2634 = vpop.f32.mrb[0].mxu0
      %v2635 = vpop.f32.mrb[0].mxu0
      %v2636 = vadd.f32 0.0, %v2635
      %v2637 = vpop.f32.mrb[0].mxu0
      %2638 = vmatprep.mubr.bf16.mxu0 0
      %2639 = vmatmul.mubr.bf16.gmra.mrb[0].mxu0 %v1517
      %v2640 = vpop.f32.mrb[0].mxu0
      %v2641 = vadd.f32 0.0, %v2640
      %v2642 = vpop.f32.mrb[0].mxu0
      %v2643 = vpop.f32.mrb[0].mxu0
      %v2644 = vadd.f32 0.0, %v2643
      %v2645 = vpop.f32.mrb[0].mxu0
      %2646 = vmatprep.mubr.bf16.mxu0 0
      %2647 = vmatmul.mubr.bf16.gmra.mrb[0].mxu0 %v1519
      %v2648 = vpop.f32.mrb[0].mxu0
      %v2649 = vadd.f32 0.0, %v2648
      %v2650 = vpop.f32.mrb[0].mxu0
      %v2651 = vpop.f32.mrb[0].mxu0
      %v2652 = vadd.f32 0.0, %v2651
      %v2653 = vpop.f32.mrb[0].mxu0
      %2654 = vmatprep.mubr.bf16.mxu0 0
      %2655 = vmatmul.mubr.bf16.gmra.mrb[0].mxu0 %v1521
      %v2656 = vpop.f32.mrb[0].mxu0
      %v2657 = vadd.f32 0.0, %v2656
      %v2658 = vpop.f32.mrb[0].mxu0
      %v2659 = vpop.f32.mrb[0].mxu0
      %v2660 = vadd.f32 0.0, %v2659
      %v2661 = vpop.f32.mrb[0].mxu0
      %2662 = vmatprep.mubr.bf16.mxu0 0
      %2663 = vmatmul.mubr.bf16.gmra.mrb[0].mxu0 %v1523
      %v2664 = vpop.f32.mrb[0].mxu0
      %v2665 = vadd.f32 0.0, %v2664
      %v2666 = vpop.f32.mrb[0].mxu0
      %v2667 = vpop.f32.mrb[0].mxu0
      %v2668 = vadd.f32 0.0, %v2667
      %v2669 = vpop.f32.mrb[0].mxu0
      %2670 = vmatprep.mubr.bf16.mxu0 0
      %2671 = vmatmul.mubr.bf16.gmra.mrb[0].mxu0 %v1525
      %v2672 = vpop.f32.mrb[0].mxu0
      %v2673 = vadd.f32 0.0, %v2672
      %v2674 = vpop.f32.mrb[0].mxu0
      %v2675 = vpop.f32.mrb[0].mxu0
      %v2676 = vadd.f32 0.0, %v2675
      %v2677 = vpop.f32.mrb[0].mxu0
      %2678 = vmatprep.mubr.bf16.mxu0 0
      %2679 = vmatmul.mubr.bf16.gmra.mrb[0].mxu0 %v1527
      %v2680 = vpop.f32.mrb[0].mxu0
      %v2681 = vadd.f32 0.0, %v2680
      %v2682 = vpop.f32.mrb[0].mxu0
      %v2683 = vpop.f32.mrb[0].mxu0
      %v2684 = vadd.f32 0.0, %v2683
      %v2685 = vpop.f32.mrb[0].mxu0
      %2686 = vmatprep.mubr.bf16.mxu0 0
      %2687 = vmatmul.mubr.bf16.gmra.mrb[0].mxu0 %v1529
      %v2688 = vpop.f32.mrb[0].mxu0
      %v2689 = vadd.f32 0.0, %v2688
      %v2690 = vpop.f32.mrb[0].mxu0
      %v2691 = vpop.f32.mrb[0].mxu0
      %v2692 = vadd.f32 0.0, %v2691
      %v2693 = vpop.f32.mrb[0].mxu0
      %2694 = vmatprep.mubr.bf16.mxu0 0
      %2695 = vmatmul.mubr.bf16.gmra.mrb[0].mxu0 %v1531
      %v2696 = vpop.f32.mrb[0].mxu0
      %v2697 = vadd.f32 0.0, %v2696
      %v2698 = vpop.f32.mrb[0].mxu0
      %v2699 = vpop.f32.mrb[0].mxu0
      %v2700 = vadd.f32 0.0, %v2699
      %v2701 = vpop.f32.mrb[0].mxu0
      %2702 = vmatprep.mubr.bf16.mxu0 0
      %2703 = vmatmul.mubr.bf16.gmra.mrb[0].mxu0 %v1533
      %v2704 = vpop.f32.mrb[0].mxu0
      %v2705 = vadd.f32 0.0, %v2704
      %v2706 = vpop.f32.mrb[0].mxu0
      %v2707 = vpop.f32.mrb[0].mxu0
      %v2708 = vadd.f32 0.0, %v2707
      %v2709 = vpop.f32.mrb[0].mxu0
      %2710 = vmatprep.mubr.bf16.mxu0 0
      %2711 = vmatmul.mubr.bf16.gmra.mrb[0].mxu0 %v1535
      %v2712 = vpop.f32.mrb[0].mxu0
      %v2713 = vadd.f32 0.0, %v2712
      %v2714 = vpop.f32.mrb[0].mxu0
      %v2715 = vpop.f32.mrb[0].mxu0
      %v2716 = vadd.f32 0.0, %v2715
      %v2717 = vpop.f32.mrb[0].mxu0
      %2718 = vmatprep.mubr.bf16.mxu0 0
      %2719 = vmatmul.mubr.bf16.gmra.mrb[0].mxu0 %v1537
      %v2720 = vpop.f32.mrb[0].mxu0
      %v2721 = vadd.f32 0.0, %v2720
      %v2722 = vpop.f32.mrb[0].mxu0
      %v2723 = vpop.f32.mrb[0].mxu0
      %v2724 = vadd.f32 0.0, %v2723
      %v2725 = vpop.f32.mrb[0].mxu0
      %2726 = vmatprep.mubr.bf16.mxu0 0
      %2727 = vmatmul.mubr.bf16.gmra.mrb[0].mxu0 %v1539
      %v2728 = vpop.f32.mrb[0].mxu0
      %v2729 = vadd.f32 0.0, %v2728
      %v2730 = vpop.f32.mrb[0].mxu0
      %v2731 = vpop.f32.mrb[0].mxu0
      %v2732 = vadd.f32 0.0, %v2731
      %v2733 = vpop.f32.mrb[0].mxu0
      %2734 = vmatprep.mubr.bf16.mxu0 0
      %2735 = vmatmul.mubr.bf16.gmra.mrb[0].mxu0 %v1965
      %v2736 = vpop.f32.mrb[0].mxu0
      %v2737 = vadd.f32 0.0, %v2736
      %v2738 = vpop.f32.mrb[0].mxu0
      %v2739 = vpop.f32.mrb[0].mxu0
      %v2740 = vadd.f32 0.0, %v2739
      %v2741 = vpop.f32.mrb[0].mxu0
      %2742 = vmatprep.mubr.bf16.mxu0 0
      %2743 = vmatmul.mubr.bf16.gmra.mrb[0].mxu0 %v2585
      %v2744 = vpop.f32.mrb[0].mxu0
      %v2745 = vadd.f32 0.0, %v2744
      %v2746 = vpop.f32.mrb[0].mxu0
      %v2747 = vpop.f32.mrb[0].mxu0
      %v2748 = vadd.f32 0.0, %v2747
      %v2749 = vpop.f32.mrb[0].mxu0
      %2750 = vdwg.mxu0
      %v2751 = vadd.f32 %v2545, %v2625
      %v2752 = vadd.f32 %v2546, %v2628
      %v2753 = vadd.f32 %v2547, %v2633
      %v2754 = vadd.f32 %v2548, %v2636
      %v2755 = vadd.f32 %v2549, %v2641
      %v2756 = vadd.f32 %v2550, %v2644
      %v2757 = vadd.f32 %v2551, %v2649
      %v2758 = vadd.f32 %v2552, %v2652
      %v2759 = vadd.f32 %v2553, %v2657
      %v2760 = vadd.f32 %v2554, %v2660
      %v2761 = vadd.f32 %v2555, %v2665
      %v2762 = vadd.f32 %v2556, %v2668
      %v2763 = vadd.f32 %v2557, %v2673
      %v2764 = vadd.f32 %v2558, %v2676
      %v2765 = vadd.f32 %v2559, %v2681
      %v2766 = vadd.f32 %v2560, %v2684
      %v2767 = vadd.f32 %v2561, %v2689
      %v2768 = vadd.f32 %v2562, %v2692
      %v2769 = vadd.f32 %v2563, %v2697
      %v2770 = vadd.f32 %v2564, %v2700
      %v2771 = vadd.f32 %v2565, %v2705
      %v2772 = vadd.f32 %v2566, %v2708
      %v2773 = vadd.f32 %v2567, %v2713
      %v2774 = vadd.f32 %v2568, %v2716
      %v2775 = vadd.f32 %v2569, %v2721
      %v2776 = vadd.f32 %v2570, %v2724
      %v2777 = vadd.f32 %v2571, %v2729
      %v2778 = vadd.f32 %v2572, %v2732
      %v2779 = vadd.f32 %v2573, %v2737
      %v2780 = vadd.f32 %v2574, %v2740
      %v2781 = vadd.f32 %v2575, %v2745
      %v2782 = vadd.f32 %v2576, %v2748
      %s2783 = scalar_lea.vmem %s1, 56
      %v2784 = vld [vmem:[%s2783] sm:$0xf]
      %v2785 = vld [vmem:[%s2783 + $0x4] sm:$0x1]
      %v2788 = vunpack.c.l.b16 %v2784
      %v2789 = vunpack.c.l.b16 %v2785
      %v2790 = vpack.c.b16 %v2789, %v2788
      %v2792 = vsel %vm1287, %v1184, 0
      %v2795 = vand.u32 %v2790, %v1339
      %2797 = vmatprep.subr.bf16.mxu0 0
      %2798 = vmatpush1.bf16.msra.mxu0 %v2795
      %2799 = vmatprep.subr.bf16.mxu0 0
      %2800 = vmatpush1.bf16.msra.mxu0 0
      %2801 = vmatprep.subr.bf16.mxu0 0
      %2802 = vmatpush1.bf16.msra.mxu0 0
      %2803 = vmatprep.subr.bf16.mxu0 0
      %2804 = vmatpush1.bf16.msra.mxu0 0
      %2805 = vmatprep.subr.bf16.mxu0 0
      %2806 = vmatpush1.bf16.msra.mxu0 0
      %2807 = vmatprep.subr.bf16.mxu0 0
      %2808 = vmatpush1.bf16.msra.mxu0 0
      %2809 = vmatprep.subr.bf16.mxu0 0
      %2810 = vmatpush1.bf16.msra.mxu0 0
      %2811 = vmatprep.subr.bf16.mxu0 0
      %2812 = vmatpush1.bf16.msra.mxu0 0
      %2813 = vmatprep.subr.bf16.mxu0 0
      %2814 = vmatpush1.bf16.msra.mxu0 0
      %2815 = vmatprep.subr.bf16.mxu0 0
      %2816 = vmatpush1.bf16.msra.mxu0 0
      %2817 = vmatprep.subr.bf16.mxu0 0
      %2818 = vmatpush1.bf16.msra.mxu0 0
      %2819 = vmatprep.subr.bf16.mxu0 0
      %2820 = vmatpush1.bf16.msra.mxu0 0
      %2821 = vmatprep.subr.bf16.mxu0 0
      %2822 = vmatpush1.bf16.msra.mxu0 0
      %2823 = vmatprep.subr.bf16.mxu0 0
      %2824 = vmatpush1.bf16.msra.mxu0 0
      %2825 = vmatprep.subr.bf16.mxu0 0
      %2826 = vmatpush1.bf16.msra.mxu0 0
      %2827 = vmatprep.subr.bf16.mxu0 0
      %2828 = vmatpush1.bf16.msra.mxu0 0
      %2829 = vmatprep.mubr.bf16.mxu0 0
      %2830 = vmatmul.mubr.bf16.gmra.mrb[0].mxu0 %v1295
      %v2831 = vpop.f32.mrb[0].mxu0
      %v2832 = vadd.f32 0.0, %v2831
      %v2833 = vpop.f32.mrb[0].mxu0
      %v2834 = vpop.f32.mrb[0].mxu0
      %v2835 = vadd.f32 0.0, %v2834
      %v2836 = vpop.f32.mrb[0].mxu0
      %2837 = vmatprep.mubr.bf16.mxu0 0
      %2838 = vmatmul.mubr.bf16.gmra.mrb[0].mxu0 %v1298
      %v2839 = vpop.f32.mrb[0].mxu0
      %v2840 = vadd.f32 0.0, %v2839
      %v2841 = vpop.f32.mrb[0].mxu0
      %v2842 = vpop.f32.mrb[0].mxu0
      %v2843 = vadd.f32 0.0, %v2842
      %v2844 = vpop.f32.mrb[0].mxu0
      %2845 = vmatprep.mubr.bf16.mxu0 0
      %2846 = vmatmul.mubr.bf16.gmra.mrb[0].mxu0 %v1301
      %v2847 = vpop.f32.mrb[0].mxu0
      %v2848 = vadd.f32 0.0, %v2847
      %v2849 = vpop.f32.mrb[0].mxu0
      %v2850 = vpop.f32.mrb[0].mxu0
      %v2851 = vadd.f32 0.0, %v2850
      %v2852 = vpop.f32.mrb[0].mxu0
      %2853 = vmatprep.mubr.bf16.mxu0 0
      %2854 = vmatmul.mubr.bf16.gmra.mrb[0].mxu0 %v1304
      %v2855 = vpop.f32.mrb[0].mxu0
      %v2856 = vadd.f32 0.0, %v2855
      %v2857 = vpop.f32.mrb[0].mxu0
      %v2858 = vpop.f32.mrb[0].mxu0
      %v2859 = vadd.f32 0.0, %v2858
      %v2860 = vpop.f32.mrb[0].mxu0
      %2861 = vmatprep.mubr.bf16.mxu0 0
      %2862 = vmatmul.mubr.bf16.gmra.mrb[0].mxu0 %v1307
      %v2863 = vpop.f32.mrb[0].mxu0
      %v2864 = vadd.f32 0.0, %v2863
      %v2865 = vpop.f32.mrb[0].mxu0
      %v2866 = vpop.f32.mrb[0].mxu0
      %v2867 = vadd.f32 0.0, %v2866
      %v2868 = vpop.f32.mrb[0].mxu0
      %2869 = vmatprep.mubr.bf16.mxu0 0
      %2870 = vmatmul.mubr.bf16.gmra.mrb[0].mxu0 %v1310
      %v2871 = vpop.f32.mrb[0].mxu0
      %v2872 = vadd.f32 0.0, %v2871
      %v2873 = vpop.f32.mrb[0].mxu0
      %v2874 = vpop.f32.mrb[0].mxu0
      %v2875 = vadd.f32 0.0, %v2874
      %v2876 = vpop.f32.mrb[0].mxu0
      %2877 = vmatprep.mubr.bf16.mxu0 0
      %2878 = vmatmul.mubr.bf16.gmra.mrb[0].mxu0 %v1313
      %v2879 = vpop.f32.mrb[0].mxu0
      %v2880 = vadd.f32 0.0, %v2879
      %v2881 = vpop.f32.mrb[0].mxu0
      %v2882 = vpop.f32.mrb[0].mxu0
      %v2883 = vadd.f32 0.0, %v2882
      %v2884 = vpop.f32.mrb[0].mxu0
      %2885 = vmatprep.mubr.bf16.mxu0 0
      %2886 = vmatmul.mubr.bf16.gmra.mrb[0].mxu0 %v1316
      %v2887 = vpop.f32.mrb[0].mxu0
      %v2888 = vadd.f32 0.0, %v2887
      %v2889 = vpop.f32.mrb[0].mxu0
      %v2890 = vpop.f32.mrb[0].mxu0
      %v2891 = vadd.f32 0.0, %v2890
      %v2892 = vpop.f32.mrb[0].mxu0
      %2893 = vmatprep.mubr.bf16.mxu0 0
      %2894 = vmatmul.mubr.bf16.gmra.mrb[0].mxu0 %v1319
      %v2895 = vpop.f32.mrb[0].mxu0
      %v2896 = vadd.f32 0.0, %v2895
      %v2897 = vpop.f32.mrb[0].mxu0
      %v2898 = vpop.f32.mrb[0].mxu0
      %v2899 = vadd.f32 0.0, %v2898
      %v2900 = vpop.f32.mrb[0].mxu0
      %2901 = vmatprep.mubr.bf16.mxu0 0
      %2902 = vmatmul.mubr.bf16.gmra.mrb[0].mxu0 %v1322
      %v2903 = vpop.f32.mrb[0].mxu0
      %v2904 = vadd.f32 0.0, %v2903
      %v2905 = vpop.f32.mrb[0].mxu0
      %v2906 = vpop.f32.mrb[0].mxu0
      %v2907 = vadd.f32 0.0, %v2906
      %v2908 = vpop.f32.mrb[0].mxu0
      %2909 = vmatprep.mubr.bf16.mxu0 0
      %2910 = vmatmul.mubr.bf16.gmra.mrb[0].mxu0 %v1325
      %v2911 = vpop.f32.mrb[0].mxu0
      %v2912 = vadd.f32 0.0, %v2911
      %v2913 = vpop.f32.mrb[0].mxu0
      %v2914 = vpop.f32.mrb[0].mxu0
      %v2915 = vadd.f32 0.0, %v2914
      %v2916 = vpop.f32.mrb[0].mxu0
      %2917 = vmatprep.mubr.bf16.mxu0 0
      %2918 = vmatmul.mubr.bf16.gmra.mrb[0].mxu0 %v1328
      %v2919 = vpop.f32.mrb[0].mxu0
      %v2920 = vadd.f32 0.0, %v2919
      %v2921 = vpop.f32.mrb[0].mxu0
      %v2922 = vpop.f32.mrb[0].mxu0
      %v2923 = vadd.f32 0.0, %v2922
      %v2924 = vpop.f32.mrb[0].mxu0
      %2925 = vmatprep.mubr.bf16.mxu0 0
      %2926 = vmatmul.mubr.bf16.gmra.mrb[0].mxu0 %v1331
      %v2927 = vpop.f32.mrb[0].mxu0
      %v2928 = vadd.f32 0.0, %v2927
      %v2929 = vpop.f32.mrb[0].mxu0
      %v2930 = vpop.f32.mrb[0].mxu0
      %v2931 = vadd.f32 0.0, %v2930
      %v2932 = vpop.f32.mrb[0].mxu0
      %2933 = vmatprep.mubr.bf16.mxu0 0
      %2934 = vmatmul.mubr.bf16.gmra.mrb[0].mxu0 %v1334
      %v2935 = vpop.f32.mrb[0].mxu0
      %v2936 = vadd.f32 0.0, %v2935
      %v2937 = vpop.f32.mrb[0].mxu0
      %v2938 = vpop.f32.mrb[0].mxu0
      %v2939 = vadd.f32 0.0, %v2938
      %v2940 = vpop.f32.mrb[0].mxu0
      %2941 = vmatprep.mubr.bf16.mxu0 0
      %2942 = vmatmul.mubr.bf16.gmra.mrb[0].mxu0 %v2172
      %v2943 = vpop.f32.mrb[0].mxu0
      %v2944 = vadd.f32 0.0, %v2943
      %v2945 = vpop.f32.mrb[0].mxu0
      %v2946 = vpop.f32.mrb[0].mxu0
      %v2947 = vadd.f32 0.0, %v2946
      %v2948 = vpop.f32.mrb[0].mxu0
      %2949 = vmatprep.mubr.bf16.mxu0 0
      %2950 = vmatmul.mubr.bf16.gmra.mrb[0].mxu0 %v2792
      %v2951 = vpop.f32.mrb[0].mxu0
      %v2952 = vadd.f32 0.0, %v2951
      %v2953 = vpop.f32.mrb[0].mxu0
      %v2954 = vpop.f32.mrb[0].mxu0
      %v2955 = vadd.f32 0.0, %v2954
      %v2956 = vpop.f32.mrb[0].mxu0
      %2957 = vdwg.mxu0
      %v2958 = vadd.f32 %v2751, %v2832
      %v2959 = vadd.f32 %v2752, %v2835
      %v2960 = vadd.f32 %v2753, %v2840
      %v2961 = vadd.f32 %v2754, %v2843
      %v2962 = vadd.f32 %v2755, %v2848
      %v2963 = vadd.f32 %v2756, %v2851
      %v2964 = vadd.f32 %v2757, %v2856
      %v2965 = vadd.f32 %v2758, %v2859
      %v2966 = vadd.f32 %v2759, %v2864
      %v2967 = vadd.f32 %v2760, %v2867
      %v2968 = vadd.f32 %v2761, %v2872
      %v2969 = vadd.f32 %v2762, %v2875
      %v2970 = vadd.f32 %v2763, %v2880
      %v2971 = vadd.f32 %v2764, %v2883
      %v2972 = vadd.f32 %v2765, %v2888
      %v2973 = vadd.f32 %v2766, %v2891
      %v2974 = vadd.f32 %v2767, %v2896
      %v2975 = vadd.f32 %v2768, %v2899
      %v2976 = vadd.f32 %v2769, %v2904
      %v2977 = vadd.f32 %v2770, %v2907
      %v2978 = vadd.f32 %v2771, %v2912
      %v2979 = vadd.f32 %v2772, %v2915
      %v2980 = vadd.f32 %v2773, %v2920
      %v2981 = vadd.f32 %v2774, %v2923
      %v2982 = vadd.f32 %v2775, %v2928
      %v2983 = vadd.f32 %v2776, %v2931
      %v2984 = vadd.f32 %v2777, %v2936
      %v2985 = vadd.f32 %v2778, %v2939
      %v2986 = vadd.f32 %v2779, %v2944
      %v2987 = vadd.f32 %v2780, %v2947
      %v2988 = vadd.f32 %v2781, %v2952
      %v2989 = vadd.f32 %v2782, %v2955
      %s2990 = scalar_lea.vmem %s1, 64
      %v2991 = vld [vmem:[%s2990] sm:$0xf]
      %v2992 = vld [vmem:[%s2990 + $0x4] sm:$0x1]
      %v2995 = vunpack.c.l.b16 %v2991
      %v2996 = vunpack.c.l.b16 %v2992
      %v2997 = vpack.c.b16 %v2996, %v2995
      %v2999 = vsel %vm1287, %v1275, 0
      %v3002 = vand.u32 %v2997, %v1339
      %3004 = vmatprep.subr.bf16.mxu0 0
      %3005 = vmatpush1.bf16.msra.mxu0 %v3002
      %3006 = vmatprep.subr.bf16.mxu0 0
      %3007 = vmatpush1.bf16.msra.mxu0 0
      %3008 = vmatprep.subr.bf16.mxu0 0
      %3009 = vmatpush1.bf16.msra.mxu0 0
      %3010 = vmatprep.subr.bf16.mxu0 0
      %3011 = vmatpush1.bf16.msra.mxu0 0
      %3012 = vmatprep.subr.bf16.mxu0 0
      %3013 = vmatpush1.bf16.msra.mxu0 0
      %3014 = vmatprep.subr.bf16.mxu0 0
      %3015 = vmatpush1.bf16.msra.mxu0 0
      %3016 = vmatprep.subr.bf16.mxu0 0
      %3017 = vmatpush1.bf16.msra.mxu0 0
      %3018 = vmatprep.subr.bf16.mxu0 0
      %3019 = vmatpush1.bf16.msra.mxu0 0
      %3020 = vmatprep.subr.bf16.mxu0 0
      %3021 = vmatpush1.bf16.msra.mxu0 0
      %3022 = vmatprep.subr.bf16.mxu0 0
      %3023 = vmatpush1.bf16.msra.mxu0 0
      %3024 = vmatprep.subr.bf16.mxu0 0
      %3025 = vmatpush1.bf16.msra.mxu0 0
      %3026 = vmatprep.subr.bf16.mxu0 0
      %3027 = vmatpush1.bf16.msra.mxu0 0
      %3028 = vmatprep.subr.bf16.mxu0 0
      %3029 = vmatpush1.bf16.msra.mxu0 0
      %3030 = vmatprep.subr.bf16.mxu0 0
      %3031 = vmatpush1.bf16.msra.mxu0 0
      %3032 = vmatprep.subr.bf16.mxu0 0
      %3033 = vmatpush1.bf16.msra.mxu0 0
      %3034 = vmatprep.subr.bf16.mxu0 0
      %3035 = vmatpush1.bf16.msra.mxu0 0
      %3036 = vmatprep.mubr.bf16.mxu0 0
      %3037 = vmatmul.mubr.bf16.gmra.mrb[0].mxu0 %v1720
      %v3038 = vpop.f32.mrb[0].mxu0
      %v3039 = vadd.f32 0.0, %v3038
      %v3040 = vpop.f32.mrb[0].mxu0
      %v3041 = vpop.f32.mrb[0].mxu0
      %v3042 = vadd.f32 0.0, %v3041
      %v3043 = vpop.f32.mrb[0].mxu0
      %3044 = vmatprep.mubr.bf16.mxu0 0
      %3045 = vmatmul.mubr.bf16.gmra.mrb[0].mxu0 %v1723
      %v3046 = vpop.f32.mrb[0].mxu0
      %v3047 = vadd.f32 0.0, %v3046
      %v3048 = vpop.f32.mrb[0].mxu0
      %v3049 = vpop.f32.mrb[0].mxu0
      %v3050 = vadd.f32 0.0, %v3049
      %v3051 = vpop.f32.mrb[0].mxu0
      %3052 = vmatprep.mubr.bf16.mxu0 0
      %3053 = vmatmul.mubr.bf16.gmra.mrb[0].mxu0 %v1726
      %v3054 = vpop.f32.mrb[0].mxu0
      %v3055 = vadd.f32 0.0, %v3054
      %v3056 = vpop.f32.mrb[0].mxu0
      %v3057 = vpop.f32.mrb[0].mxu0
      %v3058 = vadd.f32 0.0, %v3057
      %v3059 = vpop.f32.mrb[0].mxu0
      %3060 = vmatprep.mubr.bf16.mxu0 0
      %3061 = vmatmul.mubr.bf16.gmra.mrb[0].mxu0 %v1729
      %v3062 = vpop.f32.mrb[0].mxu0
      %v3063 = vadd.f32 0.0, %v3062
      %v3064 = vpop.f32.mrb[0].mxu0
      %v3065 = vpop.f32.mrb[0].mxu0
      %v3066 = vadd.f32 0.0, %v3065
      %v3067 = vpop.f32.mrb[0].mxu0
      %3068 = vmatprep.mubr.bf16.mxu0 0
      %3069 = vmatmul.mubr.bf16.gmra.mrb[0].mxu0 %v1732
      %v3070 = vpop.f32.mrb[0].mxu0
      %v3071 = vadd.f32 0.0, %v3070
      %v3072 = vpop.f32.mrb[0].mxu0
      %v3073 = vpop.f32.mrb[0].mxu0
      %v3074 = vadd.f32 0.0, %v3073
      %v3075 = vpop.f32.mrb[0].mxu0
      %3076 = vmatprep.mubr.bf16.mxu0 0
      %3077 = vmatmul.mubr.bf16.gmra.mrb[0].mxu0 %v1735
      %v3078 = vpop.f32.mrb[0].mxu0
      %v3079 = vadd.f32 0.0, %v3078
      %v3080 = vpop.f32.mrb[0].mxu0
      %v3081 = vpop.f32.mrb[0].mxu0
      %v3082 = vadd.f32 0.0, %v3081
      %v3083 = vpop.f32.mrb[0].mxu0
      %3084 = vmatprep.mubr.bf16.mxu0 0
      %3085 = vmatmul.mubr.bf16.gmra.mrb[0].mxu0 %v1738
      %v3086 = vpop.f32.mrb[0].mxu0
      %v3087 = vadd.f32 0.0, %v3086
      %v3088 = vpop.f32.mrb[0].mxu0
      %v3089 = vpop.f32.mrb[0].mxu0
      %v3090 = vadd.f32 0.0, %v3089
      %v3091 = vpop.f32.mrb[0].mxu0
      %3092 = vmatprep.mubr.bf16.mxu0 0
      %3093 = vmatmul.mubr.bf16.gmra.mrb[0].mxu0 %v1741
      %v3094 = vpop.f32.mrb[0].mxu0
      %v3095 = vadd.f32 0.0, %v3094
      %v3096 = vpop.f32.mrb[0].mxu0
      %v3097 = vpop.f32.mrb[0].mxu0
      %v3098 = vadd.f32 0.0, %v3097
      %v3099 = vpop.f32.mrb[0].mxu0
      %3100 = vmatprep.mubr.bf16.mxu0 0
      %3101 = vmatmul.mubr.bf16.gmra.mrb[0].mxu0 %v1744
      %v3102 = vpop.f32.mrb[0].mxu0
      %v3103 = vadd.f32 0.0, %v3102
      %v3104 = vpop.f32.mrb[0].mxu0
      %v3105 = vpop.f32.mrb[0].mxu0
      %v3106 = vadd.f32 0.0, %v3105
      %v3107 = vpop.f32.mrb[0].mxu0
      %3108 = vmatprep.mubr.bf16.mxu0 0
      %3109 = vmatmul.mubr.bf16.gmra.mrb[0].mxu0 %v1747
      %v3110 = vpop.f32.mrb[0].mxu0
      %v3111 = vadd.f32 0.0, %v3110
      %v3112 = vpop.f32.mrb[0].mxu0
      %v3113 = vpop.f32.mrb[0].mxu0
      %v3114 = vadd.f32 0.0, %v3113
      %v3115 = vpop.f32.mrb[0].mxu0
      %3116 = vmatprep.mubr.bf16.mxu0 0
      %3117 = vmatmul.mubr.bf16.gmra.mrb[0].mxu0 %v1750
      %v3118 = vpop.f32.mrb[0].mxu0
      %v3119 = vadd.f32 0.0, %v3118
      %v3120 = vpop.f32.mrb[0].mxu0
      %v3121 = vpop.f32.mrb[0].mxu0
      %v3122 = vadd.f32 0.0, %v3121
      %v3123 = vpop.f32.mrb[0].mxu0
      %3124 = vmatprep.mubr.bf16.mxu0 0
      %3125 = vmatmul.mubr.bf16.gmra.mrb[0].mxu0 %v1753
      %v3126 = vpop.f32.mrb[0].mxu0
      %v3127 = vadd.f32 0.0, %v3126
      %v3128 = vpop.f32.mrb[0].mxu0
      %v3129 = vpop.f32.mrb[0].mxu0
      %v3130 = vadd.f32 0.0, %v3129
      %v3131 = vpop.f32.mrb[0].mxu0
      %3132 = vmatprep.mubr.bf16.mxu0 0
      %3133 = vmatmul.mubr.bf16.gmra.mrb[0].mxu0 %v1756
      %v3134 = vpop.f32.mrb[0].mxu0
      %v3135 = vadd.f32 0.0, %v3134
      %v3136 = vpop.f32.mrb[0].mxu0
      %v3137 = vpop.f32.mrb[0].mxu0
      %v3138 = vadd.f32 0.0, %v3137
      %v3139 = vpop.f32.mrb[0].mxu0
      %3140 = vmatprep.mubr.bf16.mxu0 0
      %3141 = vmatmul.mubr.bf16.gmra.mrb[0].mxu0 %v1759
      %v3142 = vpop.f32.mrb[0].mxu0
      %v3143 = vadd.f32 0.0, %v3142
      %v3144 = vpop.f32.mrb[0].mxu0
      %v3145 = vpop.f32.mrb[0].mxu0
      %v3146 = vadd.f32 0.0, %v3145
      %v3147 = vpop.f32.mrb[0].mxu0
      %3148 = vmatprep.mubr.bf16.mxu0 0
      %3149 = vmatmul.mubr.bf16.gmra.mrb[0].mxu0 %v2379
      %v3150 = vpop.f32.mrb[0].mxu0
      %v3151 = vadd.f32 0.0, %v3150
      %v3152 = vpop.f32.mrb[0].mxu0
      %v3153 = vpop.f32.mrb[0].mxu0
      %v3154 = vadd.f32 0.0, %v3153
      %v3155 = vpop.f32.mrb[0].mxu0
      %3156 = vmatprep.mubr.bf16.mxu0 0
      %3157 = vmatmul.mubr.bf16.gmra.mrb[0].mxu0 %v2999
      %v3158 = vpop.f32.mrb[0].mxu0
      %v3159 = vadd.f32 0.0, %v3158
      %v3160 = vpop.f32.mrb[0].mxu0
      %v3161 = vpop.f32.mrb[0].mxu0
      %v3162 = vadd.f32 0.0, %v3161
      %v3163 = vpop.f32.mrb[0].mxu0
      %3164 = vdwg.mxu0
      %v3165 = vadd.f32 %v2958, %v3039
      %v3166 = vadd.f32 %v2959, %v3042
      %v3167 = vadd.f32 %v2960, %v3047
      %v3168 = vadd.f32 %v2961, %v3050
      %v3169 = vadd.f32 %v2962, %v3055
      %v3170 = vadd.f32 %v2963, %v3058
      %v3171 = vadd.f32 %v2964, %v3063
      %v3172 = vadd.f32 %v2965, %v3066
      %v3173 = vadd.f32 %v2966, %v3071
      %v3174 = vadd.f32 %v2967, %v3074
      %v3175 = vadd.f32 %v2968, %v3079
      %v3176 = vadd.f32 %v2969, %v3082
      %v3177 = vadd.f32 %v2970, %v3087
      %v3178 = vadd.f32 %v2971, %v3090
      %v3179 = vadd.f32 %v2972, %v3095
      %v3180 = vadd.f32 %v2973, %v3098
      %v3181 = vadd.f32 %v2974, %v3103
      %v3182 = vadd.f32 %v2975, %v3106
      %v3183 = vadd.f32 %v2976, %v3111
      %v3184 = vadd.f32 %v2977, %v3114
      %v3185 = vadd.f32 %v2978, %v3119
      %v3186 = vadd.f32 %v2979, %v3122
      %v3187 = vadd.f32 %v2980, %v3127
      %v3188 = vadd.f32 %v2981, %v3130
      %v3189 = vadd.f32 %v2982, %v3135
      %v3190 = vadd.f32 %v2983, %v3138
      %v3191 = vadd.f32 %v2984, %v3143
      %v3192 = vadd.f32 %v2985, %v3146
      %v3193 = vadd.f32 %v2986, %v3151
      %v3194 = vadd.f32 %v2987, %v3154
      %v3195 = vadd.f32 %v2988, %v3159
      %v3196 = vadd.f32 %v2989, %v3162
      %v3198 = vlaneseq
      %v3199 = vshrl.u32 %v3198, 7
      %v3200 = vsub.s32 0, %v3199
      %v3201 = vrot.slane %v1276, %v3200
      %v3203 = vadd.f32 %v3165, %v3201
      %v3204 = vadd.f32 %v3166, %v3201
      %v3205 = vadd.f32 %v3167, %v3201
      %v3206 = vadd.f32 %v3168, %v3201
      %v3207 = vadd.f32 %v3169, %v3201
      %v3208 = vadd.f32 %v3170, %v3201
      %v3209 = vadd.f32 %v3171, %v3201
      %v3210 = vadd.f32 %v3172, %v3201
      %v3211 = vadd.f32 %v3173, %v3201
      %v3212 = vadd.f32 %v3174, %v3201
      %v3213 = vadd.f32 %v3175, %v3201
      %v3214 = vadd.f32 %v3176, %v3201
      %v3215 = vadd.f32 %v3177, %v3201
      %v3216 = vadd.f32 %v3178, %v3201
      %v3217 = vadd.f32 %v3179, %v3201
      %v3218 = vadd.f32 %v3180, %v3201
      %v3219 = vadd.f32 %v3181, %v3201
      %v3220 = vadd.f32 %v3182, %v3201
      %v3221 = vadd.f32 %v3183, %v3201
      %v3222 = vadd.f32 %v3184, %v3201
      %v3223 = vadd.f32 %v3185, %v3201
      %v3224 = vadd.f32 %v3186, %v3201
      %v3225 = vadd.f32 %v3187, %v3201
      %v3226 = vadd.f32 %v3188, %v3201
      %v3227 = vadd.f32 %v3189, %v3201
      %v3228 = vadd.f32 %v3190, %v3201
      %v3229 = vadd.f32 %v3191, %v3201
      %v3230 = vadd.f32 %v3192, %v3201
      %v3231 = vadd.f32 %v3193, %v3201
      %v3232 = vadd.f32 %v3194, %v3201
      %v3233 = vadd.f32 %v3195, %v3201
      %v3234 = vadd.f32 %v3196, %v3201
      %v3235 = vtanh.pop %v3203
      %v3236 = vtanh.pop %v3204
      %v3237 = vtanh.pop %v3205
      %v3238 = vtanh.pop %v3206
      %v3239 = vtanh.pop %v3207
      %v3240 = vtanh.pop %v3208
      %v3241 = vtanh.pop %v3209
      %v3242 = vtanh.pop %v3210
      %v3243 = vtanh.pop %v3211
      %v3244 = vtanh.pop %v3212
      %v3245 = vtanh.pop %v3213
      %v3246 = vtanh.pop %v3214
      %v3247 = vtanh.pop %v3215
      %v3248 = vtanh.pop %v3216
      %v3249 = vtanh.pop %v3217
      %v3250 = vtanh.pop %v3218
      %v3251 = vtanh.pop %v3219
      %v3252 = vtanh.pop %v3220
      %v3253 = vtanh.pop %v3221
      %v3254 = vtanh.pop %v3222
      %v3255 = vtanh.pop %v3223
      %v3256 = vtanh.pop %v3224
      %v3257 = vtanh.pop %v3225
      %v3258 = vtanh.pop %v3226
      %v3259 = vtanh.pop %v3227
      %v3260 = vtanh.pop %v3228
      %v3261 = vtanh.pop %v3229
      %v3262 = vtanh.pop %v3230
      %v3263 = vtanh.pop %v3231
      %v3264 = vtanh.pop %v3232
      %v3265 = vtanh.pop %v3233
      %v3266 = vtanh.pop %v3234
      %s3267 = scalar_lea.vmem %s170, 24
      %3268 = vst.msk [vmem:[%s3267 + $0x1] sm:$0xff] %vm172, %v3235
      %3269 = vst.msk [vmem:[%s3267 + $0x9] sm:$0xff] %vm172, %v3236
      %3270 = vst.msk [vmem:[%s3267 + $0x19] sm:$0xff] %vm172, %v3237
      %3271 = vst.msk [vmem:[%s3267 + $0x21] sm:$0xff] %vm172, %v3238
      %3272 = vst.msk [vmem:[%s3267 + $0x31] sm:$0xff] %vm172, %v3239
      %3273 = vst.msk [vmem:[%s3267 + $0x39] sm:$0xff] %vm172, %v3240
      %3274 = vst.msk [vmem:[%s3267 + $0x49] sm:$0xff] %vm172, %v3241
      %3275 = vst.msk [vmem:[%s3267 + $0x51] sm:$0xff] %vm172, %v3242
      %3276 = vst.msk [vmem:[%s3267 + $0x61] sm:$0xff] %vm172, %v3243
      %3277 = vst.msk [vmem:[%s3267 + $0x69] sm:$0xff] %vm172, %v3244
      %3278 = vst.msk [vmem:[%s3267 + $0x79] sm:$0xff] %vm172, %v3245
      %3279 = vst.msk [vmem:[%s3267 + $0x81] sm:$0xff] %vm172, %v3246
      %3280 = vst.msk [vmem:[%s3267 + $0x91] sm:$0xff] %vm172, %v3247
      %3281 = vst.msk [vmem:[%s3267 + $0x99] sm:$0xff] %vm172, %v3248
      %3282 = vst.msk [vmem:[%s3267 + $0xa9] sm:$0xff] %vm172, %v3249
      %3283 = vst.msk [vmem:[%s3267 + $0xb1] sm:$0xff] %vm172, %v3250
      %3284 = vst.msk [vmem:[%s3267 + $0xc1] sm:$0xff] %vm172, %v3251
      %3285 = vst.msk [vmem:[%s3267 + $0xc9] sm:$0xff] %vm172, %v3252
      %3286 = vst.msk [vmem:[%s3267 + $0xd9] sm:$0xff] %vm172, %v3253
      %3287 = vst.msk [vmem:[%s3267 + $0xe1] sm:$0xff] %vm172, %v3254
      %3288 = vst.msk [vmem:[%s3267 + $0xf1] sm:$0xff] %vm172, %v3255
      %3289 = vst.msk [vmem:[%s3267 + $0xf9] sm:$0xff] %vm172, %v3256
      %3290 = vst.msk [vmem:[%s3267 + $0x109] sm:$0xff] %vm172, %v3257
      %3291 = vst.msk [vmem:[%s3267 + $0x111] sm:$0xff] %vm172, %v3258
      %3292 = vst.msk [vmem:[%s3267 + $0x121] sm:$0xff] %vm172, %v3259
      %3293 = vst.msk [vmem:[%s3267 + $0x129] sm:$0xff] %vm172, %v3260
      %3294 = vst.msk [vmem:[%s3267 + $0x139] sm:$0xff] %vm172, %v3261
      %3295 = vst.msk [vmem:[%s3267 + $0x141] sm:$0xff] %vm172, %v3262
      %3296 = vst.msk [vmem:[%s3267 + $0x151] sm:$0xff] %vm172, %v3263
      %3297 = vst.msk [vmem:[%s3267 + $0x159] sm:$0xff] %vm172, %v3264
      %3298 = vst.msk [vmem:[%s3267 + $0x169] sm:$0xff] %vm172, %v3265
      %3299 = vst.msk [vmem:[%s3267 + $0x171] sm:$0xff] %vm172, %v3266
      %p3300 = scmp.lt.s32.totalorder %s14, 1
      %s3301 = scalar_select %p3300, %s14, 1
      %s3302 = smul.addr %s3301, 54
      %s3303 = smul.addr %s3302, 8
      %s3304 = scalar_lea.vmem %s3, %s3303
      // Predicated region
      $region33: #{self_dncnn_forward.5} parent=31 // pred_check
        %p3305 = pneg %p100
      $region34: #{self_dncnn_forward.5} parent=31 // pred_check_branch
        %3307 = sbr.rel (%p3305) target = $region36
      $region35: #{self_dncnn_forward.5} parent=31 // pred_region
        _
      $region36: #{self_dncnn_forward.5} parent=31 // pred_fallthru
        _
    $region32: #{self_dncnn_forward.5} parent=5 // pred_fallthru
      _
    %p3308 = scmp.le.s32.totalorder 2, %s9
    // Predicated region
    $region37: #{self_dncnn_forward.5} parent=5 // pred_check
      %p3309 = pneg %p3308
    $region38: #{self_dncnn_forward.5} parent=5 // pred_check_branch
      %3311 = sbr.rel (%p3309) target = $region40
    $region39: #{self_dncnn_forward.5} parent=5 // pred_region
      %s3312 = ssub.s32 %s9, 2
      // Predicated region
      $region41: #{self_dncnn_forward.5} parent=39 // pred_check
        %p3313 = pneg %p106
      $region42: #{self_dncnn_forward.5} parent=39 // pred_check_branch
        %3315 = sbr.rel (%p3313) target = $region44
      $region43: #{self_dncnn_forward.5} parent=39 // pred_region
        %p3316 = scmp.lt.s32.totalorder %s15, 1
        %s3317 = scalar_select %p3316, %s15, 1
        %s3318 = smul.addr %s3317, 54
        %s3319 = smul.addr %s3318, 8
        %s3320 = scalar_lea.vmem %s3, %s3319
      $region44: #{self_dncnn_forward.5} parent=39 // pred_fallthru
        _
    $region40: #{self_dncnn_forward.5} parent=5 // pred_fallthru
      _
  $region6: #{self_dncnn_forward.5} parent=0 // loop_footer
    %s13 = sadd.s32 1, %s9
  $region7: #{self_dncnn_forward.5} parent=0 // loop_footer_branch
    %8 = sbr.rel target = $region3
  $region8: #{self_dncnn_forward.5} parent=0 // loop_exit
    _

// kernel: self_dncnn_forward.6
$region0: #{self_dncnn_forward.6}
  #allocation0 [shape = 'u32[]', space=smem, size = 0x4, offset = 0x4, fixed_abs, tag = 'smem constant byte address 0x4 - core index']
  #allocation1 [shape = 'u32[144,128]{1,0:T(1,128)}', space=vmem, size = 0x12000, scoped, tag = 'internal scratch']
  %s0 = inlined_call_operand.vmem [shape: f32[2,18,18,64], index: 0, kind: input, shape index: {}]
  %s1 = inlined_call_operand.vmem [shape: bf16[9,192,64], index: 1, kind: input, shape index: {}]
  %s2 = inlined_call_operand.vmem [shape: f32[1,64], index: 2, kind: input, shape index: {}]
  %s3 = inlined_call_operand.vmem [shape: f32[2,18,18,64], index: 3, kind: output, shape index: {}]
  %s4 = sld [smem:[#allocation0]]
  $region45: #{self_dncnn_forward.6} parent=0
    _
  %s6 = ssub.s32 1, %s4
  %s7 = scalar_select 0, %s6, %s4
  loop: start=0, step=1, limit=4
  $region2: #{self_dncnn_forward.6} parent=0 // loop_pre_header
    _
  $region3: #{self_dncnn_forward.6} parent=0 // loop_header
    %s9 = sphi 0, %s13
    %p10 = scmp.ge.s32.totalorder %s9, 4
    %s19 = sphi 0, %s21
    %s22 = sphi 0, %s19
    %s23 = sphi 0, %s22
    %s39 = sphi 0, %s23
    %s43 = sphi 0, %s43
    %s45 = sphi 0, %s43
    %s46 = sphi 0, %s45
    %s60 = sphi 0, %s46
    %s64 = sphi 0, %s64
    %s66 = sphi 0, %s64
    %s67 = sphi 0, %s66
    %s81 = sphi 0, %s67
    %s87 = sphi 0, %s89
    %s90 = sphi 0, %s87
    %s91 = sphi 0, %s90
    %s107 = sphi 0, %s91
  $region4: #{self_dncnn_forward.6} parent=0 // loop_header_branch
    %12 = sbr.rel (%p10) target = $region8
  $region5: #{self_dncnn_forward.6} parent=0 // loop_body
    %s14 = ssub.s32 %s9, 1
    %s15 = ssub.s32 %s9, 2
    %s16 = sadd.s32 %s9, 1
    %s17 = ssub.s32 %s9, %s16
    %p18 = scmp.eq.s32.totalorder %s17, 0
    %s20 = sadd.s32 %s19, 1
    %s21 = scalar_select %p18, %s19, %s20
    %p24 = pneg %p18
    %p25 = scmp.eq.s32.totalorder %s9, 1
    %p26 = por %p24, %p25
    %p27 = scmp.ne.s32.totalorder %s19, %s22
    %p28 = scmp.eq.s32.totalorder %s9, 0
    %p29 = por %p27, %p28
    %p30 = scmp.ne.s32.totalorder %s19, %s22
    %p31 = scmp.eq.s32.totalorder %s14, 1
    %p32 = por %p30, %p31
    %p33 = scmp.ne.s32.totalorder %s22, %s23
    %p34 = scmp.eq.s32.totalorder %s14, 0
    %p35 = por %p33, %p34
    %p36 = scmp.ne.s32.totalorder %s22, %s23
    %p37 = scmp.eq.s32.totalorder %s15, 1
    %p38 = por %p36, %p37
    %p40 = scmp.ne.s32.totalorder %s23, %s39
    %p41 = scmp.eq.s32.totalorder %s15, 0
    %p42 = por %p40, %p41
    %s44 = sadd.s32 %s43, 1
    %p47 = scmp.eq.s32.totalorder %s9, 1
    %p48 = scmp.ne.s32.totalorder %s43, %s45
    %p49 = scmp.eq.s32.totalorder %s9, 0
    %p50 = por %p48, %p49
    %p51 = scmp.ne.s32.totalorder %s43, %s45
    %p52 = scmp.eq.s32.totalorder %s14, 1
    %p53 = por %p51, %p52
    %p54 = scmp.ne.s32.totalorder %s45, %s46
    %p55 = scmp.eq.s32.totalorder %s14, 0
    %p56 = por %p54, %p55
    %p57 = scmp.ne.s32.totalorder %s45, %s46
    %p58 = scmp.eq.s32.totalorder %s15, 1
    %p59 = por %p57, %p58
    %p61 = scmp.ne.s32.totalorder %s46, %s60
    %p62 = scmp.eq.s32.totalorder %s15, 0
    %p63 = por %p61, %p62
    %s65 = sadd.s32 %s64, 1
    %p68 = scmp.eq.s32.totalorder %s9, 1
    %p69 = scmp.ne.s32.totalorder %s64, %s66
    %p70 = scmp.eq.s32.totalorder %s9, 0
    %p71 = por %p69, %p70
    %p72 = scmp.ne.s32.totalorder %s64, %s66
    %p73 = scmp.eq.s32.totalorder %s14, 1
    %p74 = por %p72, %p73
    %p75 = scmp.ne.s32.totalorder %s66, %s67
    %p76 = scmp.eq.s32.totalorder %s14, 0
    %p77 = por %p75, %p76
    %p78 = scmp.ne.s32.totalorder %s66, %s67
    %p79 = scmp.eq.s32.totalorder %s15, 1
    %p80 = por %p78, %p79
    %p82 = scmp.ne.s32.totalorder %s67, %s81
    %p83 = scmp.eq.s32.totalorder %s15, 0
    %p84 = por %p82, %p83
    %s85 = ssub.s32 %s9, %s16
    %p86 = scmp.eq.s32.totalorder %s85, 0
    %s88 = sadd.s32 %s87, 1
    %s89 = scalar_select %p86, %s87, %s88
    %p92 = pneg %p86
    %p93 = scmp.eq.s32.totalorder %s9, 1
    %p94 = por %p92, %p93
    %p95 = scmp.ne.s32.totalorder %s87, %s90
    %p96 = scmp.eq.s32.totalorder %s9, 0
    %p97 = por %p95, %p96
    %p98 = scmp.ne.s32.totalorder %s87, %s90
    %p99 = scmp.eq.s32.totalorder %s14, 1
    %p100 = por %p98, %p99
    %p101 = scmp.ne.s32.totalorder %s90, %s91
    %p102 = scmp.eq.s32.totalorder %s14, 0
    %p103 = por %p101, %p102
    %p104 = scmp.ne.s32.totalorder %s90, %s91
    %p105 = scmp.eq.s32.totalorder %s15, 1
    %p106 = por %p104, %p105
    %p108 = scmp.ne.s32.totalorder %s91, %s107
    %p109 = scmp.eq.s32.totalorder %s15, 0
    %p110 = por %p108, %p109
    %p111 = scmp.le.s32.totalorder 1, %s9
    %p112 = scmp.lt.s32.totalorder %s9, 3
    %p113 = pnand %p111, %p112
    %p114 = pneg %p113
    // Predicated region
    $region9: #{self_dncnn_forward.6} parent=5 // pred_check
      _
    $region10: #{self_dncnn_forward.6} parent=5 // pred_check_branch
      %116 = sbr.rel (%p113) target = $region12
    $region11: #{self_dncnn_forward.6} parent=5 // pred_region
      %s117 = ssub.s32 %s9, 1
      // Predicated region
      $region13: #{self_dncnn_forward.6} parent=11 // pred_check
        %p118 = pneg %p56
      $region14: #{self_dncnn_forward.6} parent=11 // pred_check_branch
        %120 = sbr.rel (%p118) target = $region16
      $region15: #{self_dncnn_forward.6} parent=11 // pred_region
        _
      $region16: #{self_dncnn_forward.6} parent=11 // pred_fallthru
        _
      // Predicated region
      $region17: #{self_dncnn_forward.6} parent=11 // pred_check
        %p121 = pneg %p77
      $region18: #{self_dncnn_forward.6} parent=11 // pred_check_branch
        %123 = sbr.rel (%p121) target = $region20
      $region19: #{self_dncnn_forward.6} parent=11 // pred_region
        _
      $region20: #{self_dncnn_forward.6} parent=11 // pred_fallthru
        _
    $region12: #{self_dncnn_forward.6} parent=5 // pred_fallthru
      _
    %p124 = scmp.lt.s32.totalorder %s9, 2
    // Predicated region
    $region21: #{self_dncnn_forward.6} parent=5 // pred_check
      %p125 = pneg %p124
    $region22: #{self_dncnn_forward.6} parent=5 // pred_check_branch
      %127 = sbr.rel (%p125) target = $region24
    $region23: #{self_dncnn_forward.6} parent=5 // pred_region
      // Predicated region
      $region25: #{self_dncnn_forward.6} parent=23 // pred_check
        %p128 = pneg %p29
      $region26: #{self_dncnn_forward.6} parent=23 // pred_check_branch
        %130 = sbr.rel (%p128) target = $region28
      $region27: #{self_dncnn_forward.6} parent=23 // pred_region
        %p131 = scmp.lt.s32.totalorder %s9, 1
        %s132 = scalar_select %p131, %s9, 1
        %s133 = smul.addr %s132, 54
        %s134 = smul.addr %s133, 8
        %s135 = scalar_lea.vmem %s0, %s134
      $region28: #{self_dncnn_forward.6} parent=23 // pred_fallthru
        _
    $region24: #{self_dncnn_forward.6} parent=5 // pred_fallthru
      _
    %p136 = scmp.le.s32.totalorder 1, %s9
    %p137 = scmp.lt.s32.totalorder %s9, 3
    %p138 = pnand %p136, %p137
    %p139 = pneg %p138
    // Predicated region
    $region29: #{self_dncnn_forward.6} parent=5 // pred_check
      _
    $region30: #{self_dncnn_forward.6} parent=5 // pred_check_branch
      %141 = sbr.rel (%p138) target = $region32
    $region31: #{self_dncnn_forward.6} parent=5 // pred_region
      %s142 = ssub.s32 %s9, 1
      %p143 = scmp.lt.s32.totalorder %s14, 1
      %s144 = scalar_select %p143, %s14, 1
      %s145 = smul.addr %s144, 54
      %s146 = smul.addr %s145, 8
      %s147 = scalar_lea.vmem %s0, %s146
      %p148 = pneg %p35
      %p149 = pneg %p32
      %p150 = pneg %p56
      %p151 = pneg %p53
      %p152 = pneg %p77
      %p153 = pneg %p74
      %p154 = pneg %p103
      %p155 = pneg %p100
      %p156 = scmp.lt.s32.totalorder %s14, 1
      %s157 = scalar_select %p156, %s14, 1
      %s158 = smul.addr %s157, 54
      %s159 = smul.addr %s158, 8
      %s160 = scalar_lea.vmem %s3, %s159
      %p161 = scmp.lt.s32.totalorder %s14, 1
      %s162 = scalar_select %p161, %s14, 1
      %s163 = smul.addr %s162, 54
      %s164 = smul.addr %s163, 8
      %s165 = scalar_lea.vmem %s0, %s164
      %p166 = scmp.lt.s32.totalorder %s14, 1
      %s167 = scalar_select %p166, %s14, 1
      %s168 = smul.addr %s167, 54
      %s169 = smul.addr %s168, 8
      %s170 = scalar_lea.vmem %s3, %s169
      %vm172 = vcmask 523264
      %173 = vst.msk [vmem:[%s170] sm:$0xff] %vm172, 0.0
      %174 = vst.msk [vmem:[%s170 + $0x8] sm:$0xff] %vm172, 0.0
      %vm175 = vcmask 517120
      %176 = vst.msk [vmem:[%s170 + $0x10] sm:$0x3] %vm175, 0.0
      %177 = vst.msk [vmem:[%s170 + $0x18] sm:$0xff] %vm172, 0.0
      %178 = vst.msk [vmem:[%s170 + $0x20] sm:$0xff] %vm172, 0.0
      %179 = vst.msk [vmem:[%s170 + $0x28] sm:$0x3] %vm175, 0.0
      %180 = vst.msk [vmem:[%s170 + $0x30] sm:$0xff] %vm172, 0.0
      %181 = vst.msk [vmem:[%s170 + $0x38] sm:$0xff] %vm172, 0.0
      %182 = vst.msk [vmem:[%s170 + $0x40] sm:$0x3] %vm175, 0.0
      %183 = vst.msk [vmem:[%s170 + $0x48] sm:$0xff] %vm172, 0.0
      %184 = vst.msk [vmem:[%s170 + $0x50] sm:$0xff] %vm172, 0.0
      %185 = vst.msk [vmem:[%s170 + $0x58] sm:$0x3] %vm175, 0.0
      %186 = vst.msk [vmem:[%s170 + $0x60] sm:$0xff] %vm172, 0.0
      %187 = vst.msk [vmem:[%s170 + $0x68] sm:$0xff] %vm172, 0.0
      %188 = vst.msk [vmem:[%s170 + $0x70] sm:$0x3] %vm175, 0.0
      %189 = vst.msk [vmem:[%s170 + $0x78] sm:$0xff] %vm172, 0.0
      %190 = vst.msk [vmem:[%s170 + $0x80] sm:$0xff] %vm172, 0.0
      %191 = vst.msk [vmem:[%s170 + $0x88] sm:$0x3] %vm175, 0.0
      %192 = vst.msk [vmem:[%s170 + $0x90] sm:$0xff] %vm172, 0.0
      %193 = vst.msk [vmem:[%s170 + $0x98] sm:$0xff] %vm172, 0.0
      %194 = vst.msk [vmem:[%s170 + $0xa0] sm:$0x3] %vm175, 0.0
      %195 = vst.msk [vmem:[%s170 + $0xa8] sm:$0xff] %vm172, 0.0
      %196 = vst.msk [vmem:[%s170 + $0xb0] sm:$0xff] %vm172, 0.0
      %197 = vst.msk [vmem:[%s170 + $0xb8] sm:$0x3] %vm175, 0.0
      %198 = vst.msk [vmem:[%s170 + $0xc0] sm:$0xff] %vm172, 0.0
      %199 = vst.msk [vmem:[%s170 + $0xc8] sm:$0xff] %vm172, 0.0
      %200 = vst.msk [vmem:[%s170 + $0xd0] sm:$0x3] %vm175, 0.0
      %201 = vst.msk [vmem:[%s170 + $0xd8] sm:$0xff] %vm172, 0.0
      %202 = vst.msk [vmem:[%s170 + $0xe0] sm:$0xff] %vm172, 0.0
      %203 = vst.msk [vmem:[%s170 + $0xe8] sm:$0x3] %vm175, 0.0
      %204 = vst.msk [vmem:[%s170 + $0xf0] sm:$0xff] %vm172, 0.0
      %205 = vst.msk [vmem:[%s170 + $0xf8] sm:$0xff] %vm172, 0.0
      %206 = vst.msk [vmem:[%s170 + $0x100] sm:$0x3] %vm175, 0.0
      %207 = vst.msk [vmem:[%s170 + $0x108] sm:$0xff] %vm172, 0.0
      %208 = vst.msk [vmem:[%s170 + $0x110] sm:$0xff] %vm172, 0.0
      %209 = vst.msk [vmem:[%s170 + $0x118] sm:$0x3] %vm175, 0.0
      %210 = vst.msk [vmem:[%s170 + $0x120] sm:$0xff] %vm172, 0.0
      %211 = vst.msk [vmem:[%s170 + $0x128] sm:$0xff] %vm172, 0.0
      %212 = vst.msk [vmem:[%s170 + $0x130] sm:$0x3] %vm175, 0.0
      %213 = vst.msk [vmem:[%s170 + $0x138] sm:$0xff] %vm172, 0.0
      %214 = vst.msk [vmem:[%s170 + $0x140] sm:$0xff] %vm172, 0.0
      %215 = vst.msk [vmem:[%s170 + $0x148] sm:$0x3] %vm175, 0.0
      %216 = vst.msk [vmem:[%s170 + $0x150] sm:$0xff] %vm172, 0.0
      %217 = vst.msk [vmem:[%s170 + $0x158] sm:$0xff] %vm172, 0.0
      %218 = vst.msk [vmem:[%s170 + $0x160] sm:$0x3] %vm175, 0.0
      %219 = vst.msk [vmem:[%s170 + $0x168] sm:$0xff] %vm172, 0.0
      %220 = vst.msk [vmem:[%s170 + $0x170] sm:$0xff] %vm172, 0.0
      %221 = vst.msk [vmem:[%s170 + $0x178] sm:$0x3] %vm175, 0.0
      %222 = vst.msk [vmem:[%s170 + $0x180] sm:$0xff] %vm172, 0.0
      %223 = vst.msk [vmem:[%s170 + $0x188] sm:$0xff] %vm172, 0.0
      %224 = vst.msk [vmem:[%s170 + $0x190] sm:$0x3] %vm175, 0.0
      %225 = vst.msk [vmem:[%s170 + $0x198] sm:$0xff] %vm172, 0.0
      %226 = vst.msk [vmem:[%s170 + $0x1a0] sm:$0xff] %vm172, 0.0
      %227 = vst.msk [vmem:[%s170 + $0x1a8] sm:$0x3] %vm175, 0.0
      %v228 = vld [vmem:[%s165] sm:$0xff]
      %v229 = vld [vmem:[%s165 + $0x8] sm:$0xff]
      %v230 = vld [vmem:[%s165 + $0x10] sm:$0x3]
      %v231 = vld [vmem:[%s165 + $0x18] sm:$0xff]
      %v232 = vld [vmem:[%s165 + $0x20] sm:$0xff]
      %v233 = vld [vmem:[%s165 + $0x28] sm:$0x3]
      %v234 = vld [vmem:[%s165 + $0x30] sm:$0xff]
      %v235 = vld [vmem:[%s165 + $0x38] sm:$0xff]
      %v236 = vld [vmem:[%s165 + $0x40] sm:$0x3]
      %v237 = vld [vmem:[%s165 + $0x48] sm:$0xff]
      %v238 = vld [vmem:[%s165 + $0x50] sm:$0xff]
      %v239 = vld [vmem:[%s165 + $0x58] sm:$0x3]
      %v240 = vld [vmem:[%s165 + $0x60] sm:$0xff]
      %v241 = vld [vmem:[%s165 + $0x68] sm:$0xff]
      %v242 = vld [vmem:[%s165 + $0x70] sm:$0x3]
      %v243 = vld [vmem:[%s165 + $0x78] sm:$0xff]
      %v244 = vld [vmem:[%s165 + $0x80] sm:$0xff]
      %v245 = vld [vmem:[%s165 + $0x88] sm:$0x3]
      %v246 = vld [vmem:[%s165 + $0x90] sm:$0xff]
      %v247 = vld [vmem:[%s165 + $0x98] sm:$0xff]
      %v248 = vld [vmem:[%s165 + $0xa0] sm:$0x3]
      %v249 = vld [vmem:[%s165 + $0xa8] sm:$0xff]
      %v250 = vld [vmem:[%s165 + $0xb0] sm:$0xff]
      %v251 = vld [vmem:[%s165 + $0xb8] sm:$0x3]
      %v252 = vld [vmem:[%s165 + $0xc0] sm:$0xff]
      %v253 = vld [vmem:[%s165 + $0xc8] sm:$0xff]
      %v254 = vld [vmem:[%s165 + $0xd0] sm:$0x3]
      %v255 = vld [vmem:[%s165 + $0xd8] sm:$0xff]
      %v256 = vld [vmem:[%s165 + $0xe0] sm:$0xff]
      %v257 = vld [vmem:[%s165 + $0xe8] sm:$0x3]
      %v258 = vld [vmem:[%s165 + $0xf0] sm:$0xff]
      %v259 = vld [vmem:[%s165 + $0xf8] sm:$0xff]
      %v260 = vld [vmem:[%s165 + $0x100] sm:$0x3]
      %v261 = vld [vmem:[%s165 + $0x108] sm:$0xff]
      %v262 = vld [vmem:[%s165 + $0x110] sm:$0xff]
      %v263 = vld [vmem:[%s165 + $0x118] sm:$0x3]
      %v264 = vld [vmem:[%s165 + $0x120] sm:$0xff]
      %v265 = vld [vmem:[%s165 + $0x128] sm:$0xff]
      %v266 = vld [vmem:[%s165 + $0x130] sm:$0x3]
      %v267 = vld [vmem:[%s165 + $0x138] sm:$0xff]
      %v268 = vld [vmem:[%s165 + $0x140] sm:$0xff]
      %v269 = vld [vmem:[%s165 + $0x148] sm:$0x3]
      %v270 = vld [vmem:[%s165 + $0x150] sm:$0xff]
      %v271 = vld [vmem:[%s165 + $0x158] sm:$0xff]
      %v272 = vld [vmem:[%s165 + $0x160] sm:$0x3]
      %v273 = vld [vmem:[%s165 + $0x168] sm:$0xff]
      %v274 = vld [vmem:[%s165 + $0x170] sm:$0xff]
      %v275 = vld [vmem:[%s165 + $0x178] sm:$0x3]
      %v276 = vld [vmem:[%s165 + $0x180] sm:$0xff]
      %v277 = vld [vmem:[%s165 + $0x188] sm:$0xff]
      %v278 = vld [vmem:[%s165 + $0x190] sm:$0x3]
      %v279 = vld [vmem:[%s165 + $0x198] sm:$0xff]
      %v280 = vld [vmem:[%s165 + $0x1a0] sm:$0xff]
      %v281 = vld [vmem:[%s165 + $0x1a8] sm:$0x3]
      %v282 = vmul.f32 %v228, %v228
      %v283 = vmul.f32 %v229, %v229
      %v284 = vmul.f32 %v230, %v230
      %v285 = vmul.f32 %v231, %v231
      %v286 = vmul.f32 %v232, %v232
      %v287 = vmul.f32 %v233, %v233
      %v288 = vmul.f32 %v234, %v234
      %v289 = vmul.f32 %v235, %v235
      %v290 = vmul.f32 %v236, %v236
      %v291 = vmul.f32 %v237, %v237
      %v292 = vmul.f32 %v238, %v238
      %v293 = vmul.f32 %v239, %v239
      %v294 = vmul.f32 %v240, %v240
      %v295 = vmul.f32 %v241, %v241
      %v296 = vmul.f32 %v242, %v242
      %v297 = vmul.f32 %v243, %v243
      %v298 = vmul.f32 %v244, %v244
      %v299 = vmul.f32 %v245, %v245
      %v300 = vmul.f32 %v246, %v246
      %v301 = vmul.f32 %v247, %v247
      %v302 = vmul.f32 %v248, %v248
      %v303 = vmul.f32 %v249, %v249
      %v304 = vmul.f32 %v250, %v250
      %v305 = vmul.f32 %v251, %v251
      %v306 = vmul.f32 %v252, %v252
      %v307 = vmul.f32 %v253, %v253
      %v308 = vmul.f32 %v254, %v254
      %v309 = vmul.f32 %v255, %v255
      %v310 = vmul.f32 %v256, %v256
      %v311 = vmul.f32 %v257, %v257
      %v312 = vmul.f32 %v258, %v258
      %v313 = vmul.f32 %v259, %v259
      %v314 = vmul.f32 %v260, %v260
      %v315 = vmul.f32 %v261, %v261
      %v316 = vmul.f32 %v262, %v262
      %v317 = vmul.f32 %v263, %v263
      %v318 = vmul.f32 %v264, %v264
      %v319 = vmul.f32 %v265, %v265
      %v320 = vmul.f32 %v266, %v266
      %v321 = vmul.f32 %v267, %v267
      %v322 = vmul.f32 %v268, %v268
      %v323 = vmul.f32 %v269, %v269
      %v324 = vmul.f32 %v270, %v270
      %v325 = vmul.f32 %v271, %v271
      %v326 = vmul.f32 %v272, %v272
      %v327 = vmul.f32 %v273, %v273
      %v328 = vmul.f32 %v274, %v274
      %v329 = vmul.f32 %v275, %v275
      %v330 = vmul.f32 %v276, %v276
      %v331 = vmul.f32 %v277, %v277
      %v332 = vmul.f32 %v278, %v278
      %v333 = vmul.f32 %v279, %v279
      %v334 = vmul.f32 %v280, %v280
      %v335 = vmul.f32 %v281, %v281
      %v336 = vmul.f32 %v282, %v228
      %v337 = vmul.f32 %v283, %v229
      %v338 = vmul.f32 %v284, %v230
      %v339 = vmul.f32 %v285, %v231
      %v340 = vmul.f32 %v286, %v232
      %v341 = vmul.f32 %v287, %v233
      %v342 = vmul.f32 %v288, %v234
      %v343 = vmul.f32 %v289, %v235
      %v344 = vmul.f32 %v290, %v236
      %v345 = vmul.f32 %v291, %v237
      %v346 = vmul.f32 %v292, %v238
      %v347 = vmul.f32 %v293, %v239
      %v348 = vmul.f32 %v294, %v240
      %v349 = vmul.f32 %v295, %v241
      %v350 = vmul.f32 %v296, %v242
      %v351 = vmul.f32 %v297, %v243
      %v352 = vmul.f32 %v298, %v244
      %v353 = vmul.f32 %v299, %v245
      %v354 = vmul.f32 %v300, %v246
      %v355 = vmul.f32 %v301, %v247
      %v356 = vmul.f32 %v302, %v248
      %v357 = vmul.f32 %v303, %v249
      %v358 = vmul.f32 %v304, %v250
      %v359 = vmul.f32 %v305, %v251
      %v360 = vmul.f32 %v306, %v252
      %v361 = vmul.f32 %v307, %v253
      %v362 = vmul.f32 %v308, %v254
      %v363 = vmul.f32 %v309, %v255
      %v364 = vmul.f32 %v310, %v256
      %v365 = vmul.f32 %v311, %v257
      %v366 = vmul.f32 %v312, %v258
      %v367 = vmul.f32 %v313, %v259
      %v368 = vmul.f32 %v314, %v260
      %v369 = vmul.f32 %v315, %v261
      %v370 = vmul.f32 %v316, %v262
      %v371 = vmul.f32 %v317, %v263
      %v372 = vmul.f32 %v318, %v264
      %v373 = vmul.f32 %v319, %v265
      %v374 = vmul.f32 %v320, %v266
      %v375 = vmul.f32 %v321, %v267
      %v376 = vmul.f32 %v322, %v268
      %v377 = vmul.f32 %v323, %v269
      %v378 = vmul.f32 %v324, %v270
      %v379 = vmul.f32 %v325, %v271
      %v380 = vmul.f32 %v326, %v272
      %v381 = vmul.f32 %v327, %v273
      %v382 = vmul.f32 %v328, %v274
      %v383 = vmul.f32 %v329, %v275
      %v384 = vmul.f32 %v330, %v276
      %v385 = vmul.f32 %v331, %v277
      %v386 = vmul.f32 %v332, %v278
      %v387 = vmul.f32 %v333, %v279
      %v388 = vmul.f32 %v334, %v280
      %v389 = vmul.f32 %v335, %v281
      %444 = vrot.lane.b32.xlu0 %v282, 64
      %v445 = vpop.permute.xlu0 %444
      %446 = vrot.lane.b32.xlu0 %v283, 64
      %v447 = vpop.permute.xlu0 %446
      %448 = vrot.lane.b32.xlu0 %v284, 64
      %v449 = vpop.permute.xlu0 %448
      %450 = vrot.lane.b32.xlu0 %v285, 64
      %v451 = vpop.permute.xlu0 %450
      %452 = vrot.lane.b32.xlu0 %v286, 64
      %v453 = vpop.permute.xlu0 %452
      %454 = vrot.lane.b32.xlu0 %v287, 64
      %v455 = vpop.permute.xlu0 %454
      %456 = vrot.lane.b32.xlu0 %v288, 64
      %v457 = vpop.permute.xlu0 %456
      %458 = vrot.lane.b32.xlu0 %v289, 64
      %v459 = vpop.permute.xlu0 %458
      %460 = vrot.lane.b32.xlu0 %v290, 64
      %v461 = vpop.permute.xlu0 %460
      %462 = vrot.lane.b32.xlu0 %v291, 64
      %v463 = vpop.permute.xlu0 %462
      %464 = vrot.lane.b32.xlu0 %v292, 64
      %v465 = vpop.permute.xlu0 %464
      %466 = vrot.lane.b32.xlu0 %v293, 64
      %v467 = vpop.permute.xlu0 %466
      %468 = vrot.lane.b32.xlu0 %v294, 64
      %v469 = vpop.permute.xlu0 %468
      %470 = vrot.lane.b32.xlu0 %v295, 64
      %v471 = vpop.permute.xlu0 %470
      %472 = vrot.lane.b32.xlu0 %v296, 64
      %v473 = vpop.permute.xlu0 %472
      %474 = vrot.lane.b32.xlu0 %v297, 64
      %v475 = vpop.permute.xlu0 %474
      %476 = vrot.lane.b32.xlu0 %v298, 64
      %v477 = vpop.permute.xlu0 %476
      %478 = vrot.lane.b32.xlu0 %v299, 64
      %v479 = vpop.permute.xlu0 %478
      %480 = vrot.lane.b32.xlu0 %v300, 64
      %v481 = vpop.permute.xlu0 %480
      %482 = vrot.lane.b32.xlu0 %v301, 64
      %v483 = vpop.permute.xlu0 %482
      %484 = vrot.lane.b32.xlu0 %v302, 64
      %v485 = vpop.permute.xlu0 %484
      %486 = vrot.lane.b32.xlu0 %v303, 64
      %v487 = vpop.permute.xlu0 %486
      %488 = vrot.lane.b32.xlu0 %v304, 64
      %v489 = vpop.permute.xlu0 %488
      %490 = vrot.lane.b32.xlu0 %v305, 64
      %v491 = vpop.permute.xlu0 %490
      %492 = vrot.lane.b32.xlu0 %v306, 64
      %v493 = vpop.permute.xlu0 %492
      %494 = vrot.lane.b32.xlu0 %v307, 64
      %v495 = vpop.permute.xlu0 %494
      %496 = vrot.lane.b32.xlu0 %v308, 64
      %v497 = vpop.permute.xlu0 %496
      %498 = vrot.lane.b32.xlu0 %v309, 64
      %v499 = vpop.permute.xlu0 %498
      %500 = vrot.lane.b32.xlu0 %v310, 64
      %v501 = vpop.permute.xlu0 %500
      %502 = vrot.lane.b32.xlu0 %v311, 64
      %v503 = vpop.permute.xlu0 %502
      %504 = vrot.lane.b32.xlu0 %v312, 64
      %v505 = vpop.permute.xlu0 %504
      %506 = vrot.lane.b32.xlu0 %v313, 64
      %v507 = vpop.permute.xlu0 %506
      %508 = vrot.lane.b32.xlu0 %v314, 64
      %v509 = vpop.permute.xlu0 %508
      %510 = vrot.lane.b32.xlu0 %v315, 64
      %v511 = vpop.permute.xlu0 %510
      %512 = vrot.lane.b32.xlu0 %v316, 64
      %v513 = vpop.permute.xlu0 %512
      %514 = vrot.lane.b32.xlu0 %v317, 64
      %v515 = vpop.permute.xlu0 %514
      %516 = vrot.lane.b32.xlu0 %v318, 64
      %v517 = vpop.permute.xlu0 %516
      %518 = vrot.lane.b32.xlu0 %v319, 64
      %v519 = vpop.permute.xlu0 %518
      %520 = vrot.lane.b32.xlu0 %v320, 64
      %v521 = vpop.permute.xlu0 %520
      %522 = vrot.lane.b32.xlu0 %v321, 64
      %v523 = vpop.permute.xlu0 %522
      %524 = vrot.lane.b32.xlu0 %v322, 64
      %v525 = vpop.permute.xlu0 %524
      %526 = vrot.lane.b32.xlu0 %v323, 64
      %v527 = vpop.permute.xlu0 %526
      %528 = vrot.lane.b32.xlu0 %v324, 64
      %v529 = vpop.permute.xlu0 %528
      %530 = vrot.lane.b32.xlu0 %v325, 64
      %v531 = vpop.permute.xlu0 %530
      %532 = vrot.lane.b32.xlu0 %v326, 64
      %v533 = vpop.permute.xlu0 %532
      %534 = vrot.lane.b32.xlu0 %v327, 64
      %v535 = vpop.permute.xlu0 %534
      %536 = vrot.lane.b32.xlu0 %v328, 64
      %v537 = vpop.permute.xlu0 %536
      %538 = vrot.lane.b32.xlu0 %v329, 64
      %v539 = vpop.permute.xlu0 %538
      %540 = vrot.lane.b32.xlu0 %v330, 64
      %v541 = vpop.permute.xlu0 %540
      %542 = vrot.lane.b32.xlu0 %v331, 64
      %v543 = vpop.permute.xlu0 %542
      %544 = vrot.lane.b32.xlu0 %v332, 64
      %v545 = vpop.permute.xlu0 %544
      %546 = vrot.lane.b32.xlu0 %v333, 64
      %v547 = vpop.permute.xlu0 %546
      %548 = vrot.lane.b32.xlu0 %v334, 64
      %v549 = vpop.permute.xlu0 %548
      %550 = vrot.lane.b32.xlu0 %v335, 64
      %v551 = vpop.permute.xlu0 %550
      %v606 = vsel %vm172, %v228, %v445
      %v607 = vsel %vm172, %v229, %v447
      %v608 = vsel %vm172, %v230, %v449
      %v609 = vsel %vm172, %v231, %v451
      %v610 = vsel %vm172, %v232, %v453
      %v611 = vsel %vm172, %v233, %v455
      %v612 = vsel %vm172, %v234, %v457
      %v613 = vsel %vm172, %v235, %v459
      %v614 = vsel %vm172, %v236, %v461
      %v615 = vsel %vm172, %v237, %v463
      %v616 = vsel %vm172, %v238, %v465
      %v617 = vsel %vm172, %v239, %v467
      %v618 = vsel %vm172, %v240, %v469
      %v619 = vsel %vm172, %v241, %v471
      %v620 = vsel %vm172, %v242, %v473
      %v621 = vsel %vm172, %v243, %v475
      %v622 = vsel %vm172, %v244, %v477
      %v623 = vsel %vm172, %v245, %v479
      %v624 = vsel %vm172, %v246, %v481
      %v625 = vsel %vm172, %v247, %v483
      %v626 = vsel %vm172, %v248, %v485
      %v627 = vsel %vm172, %v249, %v487
      %v628 = vsel %vm172, %v250, %v489
      %v629 = vsel %vm172, %v251, %v491
      %v630 = vsel %vm172, %v252, %v493
      %v631 = vsel %vm172, %v253, %v495
      %v632 = vsel %vm172, %v254, %v497
      %v633 = vsel %vm172, %v255, %v499
      %v634 = vsel %vm172, %v256, %v501
      %v635 = vsel %vm172, %v257, %v503
      %v636 = vsel %vm172, %v258, %v505
      %v637 = vsel %vm172, %v259, %v507
      %v638 = vsel %vm172, %v260, %v509
      %v639 = vsel %vm172, %v261, %v511
      %v640 = vsel %vm172, %v262, %v513
      %v641 = vsel %vm172, %v263, %v515
      %v642 = vsel %vm172, %v264, %v517
      %v643 = vsel %vm172, %v265, %v519
      %v644 = vsel %vm172, %v266, %v521
      %v645 = vsel %vm172, %v267, %v523
      %v646 = vsel %vm172, %v268, %v525
      %v647 = vsel %vm172, %v269, %v527
      %v648 = vsel %vm172, %v270, %v529
      %v649 = vsel %vm172, %v271, %v531
      %v650 = vsel %vm172, %v272, %v533
      %v651 = vsel %vm172, %v273, %v535
      %v652 = vsel %vm172, %v274, %v537
      %v653 = vsel %vm172, %v275, %v539
      %v654 = vsel %vm172, %v276, %v541
      %v655 = vsel %vm172, %v277, %v543
      %v656 = vsel %vm172, %v278, %v545
      %v657 = vsel %vm172, %v279, %v547
      %v658 = vsel %vm172, %v280, %v549
      %v659 = vsel %vm172, %v281, %v551
      %v660 = vpack.c.bf16 %v607, %v606
      %v661 = vpack.c.bf16 %v337, %v336
      %v662 = vpack.c.bf16 %v608, %v608
      %v663 = vpack.c.bf16 %v338, %v338
      %v664 = vpack.c.bf16 %v610, %v609
      %v665 = vpack.c.bf16 %v340, %v339
      %v666 = vpack.c.bf16 %v611, %v611
      %v667 = vpack.c.bf16 %v341, %v341
      %v668 = vpack.c.bf16 %v613, %v612
      %v669 = vpack.c.bf16 %v343, %v342
      %v670 = vpack.c.bf16 %v614, %v614
      %v671 = vpack.c.bf16 %v344, %v344
      %v672 = vpack.c.bf16 %v616, %v615
      %v673 = vpack.c.bf16 %v346, %v345
      %v674 = vpack.c.bf16 %v617, %v617
      %v675 = vpack.c.bf16 %v347, %v347
      %v676 = vpack.c.bf16 %v619, %v618
      %v677 = vpack.c.bf16 %v349, %v348
      %v678 = vpack.c.bf16 %v620, %v620
      %v679 = vpack.c.bf16 %v350, %v350
      %v680 = vpack.c.bf16 %v622, %v621
      %v681 = vpack.c.bf16 %v352, %v351
      %v682 = vpack.c.bf16 %v623, %v623
      %v683 = vpack.c.bf16 %v353, %v353
      %v684 = vpack.c.bf16 %v625, %v624
      %v685 = vpack.c.bf16 %v355, %v354
      %v686 = vpack.c.bf16 %v626, %v626
      %v687 = vpack.c.bf16 %v356, %v356
      %v688 = vpack.c.bf16 %v628, %v627
      %v689 = vpack.c.bf16 %v358, %v357
      %v690 = vpack.c.bf16 %v629, %v629
      %v691 = vpack.c.bf16 %v359, %v359
      %v692 = vpack.c.bf16 %v631, %v630
      %v693 = vpack.c.bf16 %v361, %v360
      %v694 = vpack.c.bf16 %v632, %v632
      %v695 = vpack.c.bf16 %v362, %v362
      %v696 = vpack.c.bf16 %v634, %v633
      %v697 = vpack.c.bf16 %v364, %v363
      %v698 = vpack.c.bf16 %v635, %v635
      %v699 = vpack.c.bf16 %v365, %v365
      %v700 = vpack.c.bf16 %v637, %v636
      %v701 = vpack.c.bf16 %v367, %v366
      %v702 = vpack.c.bf16 %v638, %v638
      %v703 = vpack.c.bf16 %v368, %v368
      %v704 = vpack.c.bf16 %v640, %v639
      %v705 = vpack.c.bf16 %v370, %v369
      %v706 = vpack.c.bf16 %v641, %v641
      %v707 = vpack.c.bf16 %v371, %v371
      %v708 = vpack.c.bf16 %v643, %v642
      %v709 = vpack.c.bf16 %v373, %v372
      %v710 = vpack.c.bf16 %v644, %v644
      %v711 = vpack.c.bf16 %v374, %v374
      %v712 = vpack.c.bf16 %v646, %v645
      %v713 = vpack.c.bf16 %v376, %v375
      %v714 = vpack.c.bf16 %v647, %v647
      %v715 = vpack.c.bf16 %v377, %v377
      %v716 = vpack.c.bf16 %v649, %v648
      %v717 = vpack.c.bf16 %v379, %v378
      %v718 = vpack.c.bf16 %v650, %v650
      %v719 = vpack.c.bf16 %v380, %v380
      %v720 = vpack.c.bf16 %v652, %v651
      %v721 = vpack.c.bf16 %v382, %v381
      %v722 = vpack.c.bf16 %v653, %v653
      %v723 = vpack.c.bf16 %v383, %v383
      %v724 = vpack.c.bf16 %v655, %v654
      %v725 = vpack.c.bf16 %v385, %v384
      %v726 = vpack.c.bf16 %v656, %v656
      %v727 = vpack.c.bf16 %v386, %v386
      %v728 = vpack.c.bf16 %v658, %v657
      %v729 = vpack.c.bf16 %v388, %v387
      %v730 = vpack.c.bf16 %v659, %v659
      %v731 = vpack.c.bf16 %v389, %v389
      %vm732 = vsmask.f32 7424
      %v734 = vshrl.u32 %v660, 16
      %v736 = vshll.u32 %v660, 16
      %v738 = vrot.slane %v736, 1
      %v739 = vor.u32 %v734, %v738
      %v741 = vshll.u32 %v662, 16
      %v743 = vrot.slane %v741, 1
      %v744 = vsel %vm732, %v739, %v743
      %v746 = vshrl.u32 %v661, 16
      %v748 = vshll.u32 %v661, 16
      %v750 = vrot.slane %v748, 1
      %v751 = vor.u32 %v746, %v750
      %v753 = vshll.u32 %v663, 16
      %v755 = vrot.slane %v753, 1
      %v756 = vsel %vm732, %v751, %v755
      %v758 = vshrl.u32 %v664, 16
      %v760 = vshll.u32 %v664, 16
      %v762 = vrot.slane %v760, 1
      %v763 = vor.u32 %v758, %v762
      %v765 = vshll.u32 %v666, 16
      %v767 = vrot.slane %v765, 1
      %v768 = vsel %vm732, %v763, %v767
      %v770 = vshrl.u32 %v665, 16
      %v772 = vshll.u32 %v665, 16
      %v774 = vrot.slane %v772, 1
      %v775 = vor.u32 %v770, %v774
      %v777 = vshll.u32 %v667, 16
      %v779 = vrot.slane %v777, 1
      %v780 = vsel %vm732, %v775, %v779
      %v782 = vshrl.u32 %v668, 16
      %v784 = vshll.u32 %v668, 16
      %v786 = vrot.slane %v784, 1
      %v787 = vor.u32 %v782, %v786
      %v789 = vshll.u32 %v670, 16
      %v791 = vrot.slane %v789, 1
      %v792 = vsel %vm732, %v787, %v791
      %v794 = vshrl.u32 %v669, 16
      %v796 = vshll.u32 %v669, 16
      %v798 = vrot.slane %v796, 1
      %v799 = vor.u32 %v794, %v798
      %v801 = vshll.u32 %v671, 16
      %v803 = vrot.slane %v801, 1
      %v804 = vsel %vm732, %v799, %v803
      %v806 = vshrl.u32 %v672, 16
      %v808 = vshll.u32 %v672, 16
      %v810 = vrot.slane %v808, 1
      %v811 = vor.u32 %v806, %v810
      %v813 = vshll.u32 %v674, 16
      %v815 = vrot.slane %v813, 1
      %v816 = vsel %vm732, %v811, %v815
      %v818 = vshrl.u32 %v673, 16
      %v820 = vshll.u32 %v673, 16
      %v822 = vrot.slane %v820, 1
      %v823 = vor.u32 %v818, %v822
      %v825 = vshll.u32 %v675, 16
      %v827 = vrot.slane %v825, 1
      %v828 = vsel %vm732, %v823, %v827
      %v830 = vshrl.u32 %v676, 16
      %v832 = vshll.u32 %v676, 16
      %v834 = vrot.slane %v832, 1
      %v835 = vor.u32 %v830, %v834
      %v837 = vshll.u32 %v678, 16
      %v839 = vrot.slane %v837, 1
      %v840 = vsel %vm732, %v835, %v839
      %v842 = vshrl.u32 %v677, 16
      %v844 = vshll.u32 %v677, 16
      %v846 = vrot.slane %v844, 1
      %v847 = vor.u32 %v842, %v846
      %v849 = vshll.u32 %v679, 16
      %v851 = vrot.slane %v849, 1
      %v852 = vsel %vm732, %v847, %v851
      %v854 = vshrl.u32 %v680, 16
      %v856 = vshll.u32 %v680, 16
      %v858 = vrot.slane %v856, 1
      %v859 = vor.u32 %v854, %v858
      %v861 = vshll.u32 %v682, 16
      %v863 = vrot.slane %v861, 1
      %v864 = vsel %vm732, %v859, %v863
      %v866 = vshrl.u32 %v681, 16
      %v868 = vshll.u32 %v681, 16
      %v870 = vrot.slane %v868, 1
      %v871 = vor.u32 %v866, %v870
      %v873 = vshll.u32 %v683, 16
      %v875 = vrot.slane %v873, 1
      %v876 = vsel %vm732, %v871, %v875
      %v878 = vshrl.u32 %v684, 16
      %v880 = vshll.u32 %v684, 16
      %v882 = vrot.slane %v880, 1
      %v883 = vor.u32 %v878, %v882
      %v885 = vshll.u32 %v686, 16
      %v887 = vrot.slane %v885, 1
      %v888 = vsel %vm732, %v883, %v887
      %v890 = vshrl.u32 %v685, 16
      %v892 = vshll.u32 %v685, 16
      %v894 = vrot.slane %v892, 1
      %v895 = vor.u32 %v890, %v894
      %v897 = vshll.u32 %v687, 16
      %v899 = vrot.slane %v897, 1
      %v900 = vsel %vm732, %v895, %v899
      %v902 = vshrl.u32 %v688, 16
      %v904 = vshll.u32 %v688, 16
      %v906 = vrot.slane %v904, 1
      %v907 = vor.u32 %v902, %v906
      %v909 = vshll.u32 %v690, 16
      %v911 = vrot.slane %v909, 1
      %v912 = vsel %vm732, %v907, %v911
      %v914 = vshrl.u32 %v689, 16
      %v916 = vshll.u32 %v689, 16
      %v918 = vrot.slane %v916, 1
      %v919 = vor.u32 %v914, %v918
      %v921 = vshll.u32 %v691, 16
      %v923 = vrot.slane %v921, 1
      %v924 = vsel %vm732, %v919, %v923
      %v926 = vshrl.u32 %v692, 16
      %v928 = vshll.u32 %v692, 16
      %v930 = vrot.slane %v928, 1
      %v931 = vor.u32 %v926, %v930
      %v933 = vshll.u32 %v694, 16
      %v935 = vrot.slane %v933, 1
      %v936 = vsel %vm732, %v931, %v935
      %v938 = vshrl.u32 %v693, 16
      %v940 = vshll.u32 %v693, 16
      %v942 = vrot.slane %v940, 1
      %v943 = vor.u32 %v938, %v942
      %v945 = vshll.u32 %v695, 16
      %v947 = vrot.slane %v945, 1
      %v948 = vsel %vm732, %v943, %v947
      %v950 = vshrl.u32 %v696, 16
      %v952 = vshll.u32 %v696, 16
      %v954 = vrot.slane %v952, 1
      %v955 = vor.u32 %v950, %v954
      %v957 = vshll.u32 %v698, 16
      %v959 = vrot.slane %v957, 1
      %v960 = vsel %vm732, %v955, %v959
      %v962 = vshrl.u32 %v697, 16
      %v964 = vshll.u32 %v697, 16
      %v966 = vrot.slane %v964, 1
      %v967 = vor.u32 %v962, %v966
      %v969 = vshll.u32 %v699, 16
      %v971 = vrot.slane %v969, 1
      %v972 = vsel %vm732, %v967, %v971
      %v974 = vshrl.u32 %v700, 16
      %v976 = vshll.u32 %v700, 16
      %v978 = vrot.slane %v976, 1
      %v979 = vor.u32 %v974, %v978
      %v981 = vshll.u32 %v702, 16
      %v983 = vrot.slane %v981, 1
      %v984 = vsel %vm732, %v979, %v983
      %v986 = vshrl.u32 %v701, 16
      %v988 = vshll.u32 %v701, 16
      %v990 = vrot.slane %v988, 1
      %v991 = vor.u32 %v986, %v990
      %v993 = vshll.u32 %v703, 16
      %v995 = vrot.slane %v993, 1
      %v996 = vsel %vm732, %v991, %v995
      %v998 = vshrl.u32 %v704, 16
      %v1000 = vshll.u32 %v704, 16
      %v1002 = vrot.slane %v1000, 1
      %v1003 = vor.u32 %v998, %v1002
      %v1005 = vshll.u32 %v706, 16
      %v1007 = vrot.slane %v1005, 1
      %v1008 = vsel %vm732, %v1003, %v1007
      %v1010 = vshrl.u32 %v705, 16
      %v1012 = vshll.u32 %v705, 16
      %v1014 = vrot.slane %v1012, 1
      %v1015 = vor.u32 %v1010, %v1014
      %v1017 = vshll.u32 %v707, 16
      %v1019 = vrot.slane %v1017, 1
      %v1020 = vsel %vm732, %v1015, %v1019
      %v1022 = vshrl.u32 %v708, 16
      %v1024 = vshll.u32 %v708, 16
      %v1026 = vrot.slane %v1024, 1
      %v1027 = vor.u32 %v1022, %v1026
      %v1029 = vshll.u32 %v710, 16
      %v1031 = vrot.slane %v1029, 1
      %v1032 = vsel %vm732, %v1027, %v1031
      %v1034 = vshrl.u32 %v709, 16
      %v1036 = vshll.u32 %v709, 16
      %v1038 = vrot.slane %v1036, 1
      %v1039 = vor.u32 %v1034, %v1038
      %v1041 = vshll.u32 %v711, 16
      %v1043 = vrot.slane %v1041, 1
      %v1044 = vsel %vm732, %v1039, %v1043
      %v1046 = vshrl.u32 %v712, 16
      %v1048 = vshll.u32 %v712, 16
      %v1050 = vrot.slane %v1048, 1
      %v1051 = vor.u32 %v1046, %v1050
      %v1053 = vshll.u32 %v714, 16
      %v1055 = vrot.slane %v1053, 1
      %v1056 = vsel %vm732, %v1051, %v1055
      %v1058 = vshrl.u32 %v713, 16
      %v1060 = vshll.u32 %v713, 16
      %v1062 = vrot.slane %v1060, 1
      %v1063 = vor.u32 %v1058, %v1062
      %v1065 = vshll.u32 %v715, 16
      %v1067 = vrot.slane %v1065, 1
      %v1068 = vsel %vm732, %v1063, %v1067
      %v1070 = vshrl.u32 %v716, 16
      %v1072 = vshll.u32 %v716, 16
      %v1074 = vrot.slane %v1072, 1
      %v1075 = vor.u32 %v1070, %v1074
      %v1077 = vshll.u32 %v718, 16
      %v1079 = vrot.slane %v1077, 1
      %v1080 = vsel %vm732, %v1075, %v1079
      %v1082 = vshrl.u32 %v717, 16
      %v1084 = vshll.u32 %v717, 16
      %v1086 = vrot.slane %v1084, 1
      %v1087 = vor.u32 %v1082, %v1086
      %v1089 = vshll.u32 %v719, 16
      %v1091 = vrot.slane %v1089, 1
      %v1092 = vsel %vm732, %v1087, %v1091
      %v1094 = vshrl.u32 %v720, 16
      %v1096 = vshll.u32 %v720, 16
      %v1098 = vrot.slane %v1096, 1
      %v1099 = vor.u32 %v1094, %v1098
      %v1101 = vshll.u32 %v722, 16
      %v1103 = vrot.slane %v1101, 1
      %v1104 = vsel %vm732, %v1099, %v1103
      %v1106 = vshrl.u32 %v721, 16
      %v1108 = vshll.u32 %v721, 16
      %v1110 = vrot.slane %v1108, 1
      %v1111 = vor.u32 %v1106, %v1110
      %v1113 = vshll.u32 %v723, 16
      %v1115 = vrot.slane %v1113, 1
      %v1116 = vsel %vm732, %v1111, %v1115
      %v1118 = vshrl.u32 %v724, 16
      %v1120 = vshll.u32 %v724, 16
      %v1122 = vrot.slane %v1120, 1
      %v1123 = vor.u32 %v1118, %v1122
      %v1125 = vshll.u32 %v726, 16
      %v1127 = vrot.slane %v1125, 1
      %v1128 = vsel %vm732, %v1123, %v1127
      %v1130 = vshrl.u32 %v725, 16
      %v1132 = vshll.u32 %v725, 16
      %v1134 = vrot.slane %v1132, 1
      %v1135 = vor.u32 %v1130, %v1134
      %v1137 = vshll.u32 %v727, 16
      %v1139 = vrot.slane %v1137, 1
      %v1140 = vsel %vm732, %v1135, %v1139
      %v1142 = vshrl.u32 %v728, 16
      %v1144 = vshll.u32 %v728, 16
      %v1146 = vrot.slane %v1144, 1
      %v1147 = vor.u32 %v1142, %v1146
      %v1149 = vshll.u32 %v730, 16
      %v1151 = vrot.slane %v1149, 1
      %v1152 = vsel %vm732, %v1147, %v1151
      %v1154 = vshrl.u32 %v729, 16
      %v1156 = vshll.u32 %v729, 16
      %v1158 = vrot.slane %v1156, 1
      %v1159 = vor.u32 %v1154, %v1158
      %v1161 = vshll.u32 %v731, 16
      %v1163 = vrot.slane %v1161, 1
      %v1164 = vsel %vm732, %v1159, %v1163
      %vm1255 = vcmask 1046528
      %v1256 = vrot.slane %v660, 1
      %v1257 = vrot.slane %v662, 1
      %v1258 = vsel %vm1255, %v1256, %v1257
      %v1259 = vrot.slane %v661, 1
      %v1260 = vrot.slane %v663, 1
      %v1261 = vsel %vm1255, %v1259, %v1260
      %v1262 = vrot.slane %v664, 1
      %v1263 = vrot.slane %v666, 1
      %v1264 = vsel %vm1255, %v1262, %v1263
      %v1265 = vrot.slane %v665, 1
      %v1266 = vrot.slane %v667, 1
      %v1267 = vsel %vm1255, %v1265, %v1266
      %v1268 = vrot.slane %v668, 1
      %v1269 = vrot.slane %v670, 1
      %v1270 = vsel %vm1255, %v1268, %v1269
      %v1271 = vrot.slane %v669, 1
      %v1272 = vrot.slane %v671, 1
      %v1273 = vsel %vm1255, %v1271, %v1272
      %v1274 = vrot.slane %v672, 1
      %v1275 = vrot.slane %v674, 1
      %v1276 = vsel %vm1255, %v1274, %v1275
      %v1277 = vrot.slane %v673, 1
      %v1278 = vrot.slane %v675, 1
      %v1279 = vsel %vm1255, %v1277, %v1278
      %v1280 = vrot.slane %v676, 1
      %v1281 = vrot.slane %v678, 1
      %v1282 = vsel %vm1255, %v1280, %v1281
      %v1283 = vrot.slane %v677, 1
      %v1284 = vrot.slane %v679, 1
      %v1285 = vsel %vm1255, %v1283, %v1284
      %v1286 = vrot.slane %v680, 1
      %v1287 = vrot.slane %v682, 1
      %v1288 = vsel %vm1255, %v1286, %v1287
      %v1289 = vrot.slane %v681, 1
      %v1290 = vrot.slane %v683, 1
      %v1291 = vsel %vm1255, %v1289, %v1290
      %v1292 = vrot.slane %v684, 1
      %v1293 = vrot.slane %v686, 1
      %v1294 = vsel %vm1255, %v1292, %v1293
      %v1295 = vrot.slane %v685, 1
      %v1296 = vrot.slane %v687, 1
      %v1297 = vsel %vm1255, %v1295, %v1296
      %v1298 = vrot.slane %v688, 1
      %v1299 = vrot.slane %v690, 1
      %v1300 = vsel %vm1255, %v1298, %v1299
      %v1301 = vrot.slane %v689, 1
      %v1302 = vrot.slane %v691, 1
      %v1303 = vsel %vm1255, %v1301, %v1302
      %v1304 = vrot.slane %v692, 1
      %v1305 = vrot.slane %v694, 1
      %v1306 = vsel %vm1255, %v1304, %v1305
      %v1307 = vrot.slane %v693, 1
      %v1308 = vrot.slane %v695, 1
      %v1309 = vsel %vm1255, %v1307, %v1308
      %v1310 = vrot.slane %v696, 1
      %v1311 = vrot.slane %v698, 1
      %v1312 = vsel %vm1255, %v1310, %v1311
      %v1313 = vrot.slane %v697, 1
      %v1314 = vrot.slane %v699, 1
      %v1315 = vsel %vm1255, %v1313, %v1314
      %v1316 = vrot.slane %v700, 1
      %v1317 = vrot.slane %v702, 1
      %v1318 = vsel %vm1255, %v1316, %v1317
      %v1319 = vrot.slane %v701, 1
      %v1320 = vrot.slane %v703, 1
      %v1321 = vsel %vm1255, %v1319, %v1320
      %v1322 = vrot.slane %v704, 1
      %v1323 = vrot.slane %v706, 1
      %v1324 = vsel %vm1255, %v1322, %v1323
      %v1325 = vrot.slane %v705, 1
      %v1326 = vrot.slane %v707, 1
      %v1327 = vsel %vm1255, %v1325, %v1326
      %v1328 = vrot.slane %v708, 1
      %v1329 = vrot.slane %v710, 1
      %v1330 = vsel %vm1255, %v1328, %v1329
      %v1331 = vrot.slane %v709, 1
      %v1332 = vrot.slane %v711, 1
      %v1333 = vsel %vm1255, %v1331, %v1332
      %v1334 = vrot.slane %v712, 1
      %v1335 = vrot.slane %v714, 1
      %v1336 = vsel %vm1255, %v1334, %v1335
      %v1337 = vrot.slane %v713, 1
      %v1338 = vrot.slane %v715, 1
      %v1339 = vsel %vm1255, %v1337, %v1338
      %v1340 = vrot.slane %v716, 1
      %v1341 = vrot.slane %v718, 1
      %v1342 = vsel %vm1255, %v1340, %v1341
      %v1343 = vrot.slane %v717, 1
      %v1344 = vrot.slane %v719, 1
      %v1345 = vsel %vm1255, %v1343, %v1344
      %v1346 = vrot.slane %v720, 1
      %v1347 = vrot.slane %v722, 1
      %v1348 = vsel %vm1255, %v1346, %v1347
      %v1349 = vrot.slane %v721, 1
      %v1350 = vrot.slane %v723, 1
      %v1351 = vsel %vm1255, %v1349, %v1350
      %v1352 = vrot.slane %v724, 1
      %v1353 = vrot.slane %v726, 1
      %v1354 = vsel %vm1255, %v1352, %v1353
      %v1355 = vrot.slane %v725, 1
      %v1356 = vrot.slane %v727, 1
      %v1357 = vsel %vm1255, %v1355, %v1356
      %v1358 = vrot.slane %v728, 1
      %v1359 = vrot.slane %v730, 1
      %v1360 = vsel %vm1255, %v1358, %v1359
      %v1361 = vrot.slane %v729, 1
      %v1362 = vrot.slane %v731, 1
      %v1363 = vsel %vm1255, %v1361, %v1362
      %v1382 = vld [vmem:[%s2] sm:$0x1]
      %v1383 = vld [vmem:[%s1] sm:$0xf]
      %v1384 = vld [vmem:[%s1 + $0x4] sm:$0xf]
      %v1385 = vld [vmem:[%s1 + $0x8] sm:$0xf]
      %v1386 = vld [vmem:[%s1 + $0xc] sm:$0xf]
      %v1387 = vld [vmem:[%s1 + $0x10] sm:$0xf]
      %v1388 = vld [vmem:[%s1 + $0x14] sm:$0xf]
      %v1389 = vld [vmem:[%s1 + $0x18] sm:$0xf]
      %v1390 = vld [vmem:[%s1 + $0x1c] sm:$0xf]
      %v1391 = vld [vmem:[%s1 + $0x20] sm:$0xf]
      %v1392 = vld [vmem:[%s1 + $0x24] sm:$0xf]
      %v1393 = vld [vmem:[%s1 + $0x28] sm:$0xf]
      %v1394 = vld [vmem:[%s1 + $0x2c] sm:$0xf]
      %v1395 = vld [vmem:[%s1 + $0x30] sm:$0xf]
      %v1396 = vld [vmem:[%s1 + $0x34] sm:$0xf]
      %v1397 = vld [vmem:[%s1 + $0x38] sm:$0xf]
      %v1398 = vld [vmem:[%s1 + $0x3c] sm:$0xf]
      %v1399 = vld [vmem:[%s1 + $0x40] sm:$0xf]
      %v1400 = vld [vmem:[%s1 + $0x44] sm:$0xf]
      %v1401 = vld [vmem:[%s1 + $0x48] sm:$0xf]
      %v1402 = vld [vmem:[%s1 + $0x4c] sm:$0xf]
      %v1403 = vld [vmem:[%s1 + $0x50] sm:$0xf]
      %v1404 = vld [vmem:[%s1 + $0x54] sm:$0xf]
      %v1405 = vld [vmem:[%s1 + $0x58] sm:$0xf]
      %v1406 = vld [vmem:[%s1 + $0x5c] sm:$0xf]
      %s1407 = scalar_lea.vmem %s1, 96
      %v1408 = vld [vmem:[%s1407] sm:$0xf]
      %v1409 = vld [vmem:[%s1407 + $0x4] sm:$0xf]
      %v1410 = vld [vmem:[%s1407 + $0x8] sm:$0xf]
      %v1411 = vld [vmem:[%s1407 + $0xc] sm:$0xf]
      %v1412 = vld [vmem:[%s1407 + $0x10] sm:$0xf]
      %v1413 = vld [vmem:[%s1407 + $0x14] sm:$0xf]
      %v1414 = vld [vmem:[%s1407 + $0x18] sm:$0xf]
      %v1415 = vld [vmem:[%s1407 + $0x1c] sm:$0xf]
      %v1416 = vld [vmem:[%s1407 + $0x20] sm:$0xf]
      %v1417 = vld [vmem:[%s1407 + $0x24] sm:$0xf]
      %v1418 = vld [vmem:[%s1407 + $0x28] sm:$0xf]
      %v1419 = vld [vmem:[%s1407 + $0x2c] sm:$0xf]
      %v1420 = vld [vmem:[%s1407 + $0x30] sm:$0xf]
      %v1421 = vld [vmem:[%s1407 + $0x34] sm:$0xf]
      %v1422 = vld [vmem:[%s1407 + $0x38] sm:$0xf]
      %v1423 = vld [vmem:[%s1407 + $0x3c] sm:$0xf]
      %v1424 = vld [vmem:[%s1407 + $0x40] sm:$0xf]
      %v1425 = vld [vmem:[%s1407 + $0x44] sm:$0xf]
      %v1426 = vld [vmem:[%s1407 + $0x48] sm:$0xf]
      %v1427 = vld [vmem:[%s1407 + $0x4c] sm:$0xf]
      %v1428 = vld [vmem:[%s1407 + $0x50] sm:$0xf]
      %v1429 = vld [vmem:[%s1407 + $0x54] sm:$0xf]
      %v1430 = vld [vmem:[%s1407 + $0x58] sm:$0xf]
      %v1431 = vld [vmem:[%s1407 + $0x5c] sm:$0xf]
      %v1456 = vunpack.c.l.b16 %v1408
      %v1457 = vunpack.c.l.b16 %v1409
      %v1458 = vunpack.c.l.b16 %v1410
      %v1459 = vunpack.c.l.b16 %v1411
      %v1460 = vunpack.c.l.b16 %v1412
      %v1461 = vunpack.c.l.b16 %v1413
      %v1462 = vunpack.c.l.b16 %v1414
      %v1463 = vunpack.c.l.b16 %v1415
      %v1464 = vunpack.c.l.b16 %v1416
      %v1465 = vunpack.c.l.b16 %v1417
      %v1466 = vunpack.c.l.b16 %v1418
      %v1467 = vunpack.c.l.b16 %v1419
      %v1468 = vunpack.c.l.b16 %v1420
      %v1469 = vunpack.c.l.b16 %v1421
      %v1470 = vunpack.c.l.b16 %v1422
      %v1471 = vunpack.c.l.b16 %v1423
      %v1472 = vunpack.c.l.b16 %v1424
      %v1473 = vunpack.c.l.b16 %v1425
      %v1474 = vunpack.c.l.b16 %v1426
      %v1475 = vunpack.c.l.b16 %v1427
      %v1476 = vunpack.c.l.b16 %v1428
      %v1477 = vunpack.c.l.b16 %v1429
      %v1478 = vunpack.c.l.b16 %v1430
      %v1479 = vunpack.c.l.b16 %v1431
      %v1480 = vpack.c.b16 %v1457, %v1456
      %v1481 = vpack.c.b16 %v1459, %v1458
      %v1482 = vpack.c.b16 %v1461, %v1460
      %v1483 = vpack.c.b16 %v1463, %v1462
      %v1484 = vpack.c.b16 %v1465, %v1464
      %v1485 = vpack.c.b16 %v1467, %v1466
      %v1486 = vpack.c.b16 %v1469, %v1468
      %v1487 = vpack.c.b16 %v1471, %v1470
      %v1488 = vpack.c.b16 %v1473, %v1472
      %v1489 = vpack.c.b16 %v1475, %v1474
      %v1490 = vpack.c.b16 %v1477, %v1476
      %v1491 = vpack.c.b16 %v1479, %v1478
      %v1505 = vsel %vm172, %v756, 0
      %v1508 = vsel %vm172, %v780, 0
      %v1511 = vsel %vm172, %v804, 0
      %v1514 = vsel %vm172, %v828, 0
      %v1517 = vsel %vm172, %v852, 0
      %v1520 = vsel %vm172, %v876, 0
      %v1523 = vsel %vm172, %v900, 0
      %v1526 = vsel %vm172, %v924, 0
      %v1529 = vsel %vm172, %v948, 0
      %v1532 = vsel %vm172, %v972, 0
      %v1535 = vsel %vm172, %v996, 0
      %v1538 = vsel %vm172, %v1020, 0
      %v1541 = vsel %vm172, %v1044, 0
      %v1544 = vsel %vm172, %v1068, 0
      %v1547 = vsel %vm172, %v1092, 0
      %v1550 = vsel %vm172, %v1116, 0
      %1552 = vmatprep.subr.bf16.mxu0 0
      %1553 = vmatpush1.bf16.msra.mxu0 %v1480
      %1554 = vmatprep.subr.bf16.mxu0 0
      %1555 = vmatpush1.bf16.msra.mxu0 %v1481
      %1556 = vmatprep.subr.bf16.mxu0 0
      %1557 = vmatpush1.bf16.msra.mxu0 %v1482
      %1558 = vmatprep.subr.bf16.mxu0 0
      %1559 = vmatpush1.bf16.msra.mxu0 %v1483
      %1560 = vmatprep.subr.bf16.mxu0 0
      %1561 = vmatpush1.bf16.msra.mxu0 %v1484
      %1562 = vmatprep.subr.bf16.mxu0 0
      %1563 = vmatpush1.bf16.msra.mxu0 %v1485
      %1564 = vmatprep.subr.bf16.mxu0 0
      %1565 = vmatpush1.bf16.msra.mxu0 %v1486
      %1566 = vmatprep.subr.bf16.mxu0 0
      %1567 = vmatpush1.bf16.msra.mxu0 %v1487
      %1568 = vmatprep.subr.bf16.mxu0 0
      %1569 = vmatpush1.bf16.msra.mxu0 %v1488
      %1570 = vmatprep.subr.bf16.mxu0 0
      %1571 = vmatpush1.bf16.msra.mxu0 %v1489
      %1572 = vmatprep.subr.bf16.mxu0 0
      %1573 = vmatpush1.bf16.msra.mxu0 %v1490
      %1574 = vmatprep.subr.bf16.mxu0 0
      %1575 = vmatpush1.bf16.msra.mxu0 %v1491
      %1576 = vmatprep.subr.bf16.mxu0 0
      %1577 = vmatpush1.bf16.msra.mxu0 0
      %1578 = vmatprep.subr.bf16.mxu0 0
      %1579 = vmatpush1.bf16.msra.mxu0 0
      %1580 = vmatprep.subr.bf16.mxu0 0
      %1581 = vmatpush1.bf16.msra.mxu0 0
      %1582 = vmatprep.subr.bf16.mxu0 0
      %1583 = vmatpush1.bf16.msra.mxu0 0
      %1584 = vmatprep.mubr.bf16.mxu0 %v1505
      %1585 = vmatmul.mubr.bf16.gmra.mrb[0].mxu0 %v744
      %v1586 = vpop.f32.mrb[0].mxu0
      %v1587 = vadd.f32 0.0, %v1586
      %v1588 = vpop.f32.mrb[0].mxu0
      %v1589 = vpop.f32.mrb[0].mxu0
      %v1590 = vadd.f32 0.0, %v1589
      %v1591 = vpop.f32.mrb[0].mxu0
      %1592 = vmatprep.mubr.bf16.mxu0 %v1508
      %1593 = vmatmul.mubr.bf16.gmra.mrb[0].mxu0 %v768
      %v1594 = vpop.f32.mrb[0].mxu0
      %v1595 = vadd.f32 0.0, %v1594
      %v1596 = vpop.f32.mrb[0].mxu0
      %v1597 = vpop.f32.mrb[0].mxu0
      %v1598 = vadd.f32 0.0, %v1597
      %v1599 = vpop.f32.mrb[0].mxu0
      %1600 = vmatprep.mubr.bf16.mxu0 %v1511
      %1601 = vmatmul.mubr.bf16.gmra.mrb[0].mxu0 %v792
      %v1602 = vpop.f32.mrb[0].mxu0
      %v1603 = vadd.f32 0.0, %v1602
      %v1604 = vpop.f32.mrb[0].mxu0
      %v1605 = vpop.f32.mrb[0].mxu0
      %v1606 = vadd.f32 0.0, %v1605
      %v1607 = vpop.f32.mrb[0].mxu0
      %1608 = vmatprep.mubr.bf16.mxu0 %v1514
      %1609 = vmatmul.mubr.bf16.gmra.mrb[0].mxu0 %v816
      %v1610 = vpop.f32.mrb[0].mxu0
      %v1611 = vadd.f32 0.0, %v1610
      %v1612 = vpop.f32.mrb[0].mxu0
      %v1613 = vpop.f32.mrb[0].mxu0
      %v1614 = vadd.f32 0.0, %v1613
      %v1615 = vpop.f32.mrb[0].mxu0
      %1616 = vmatprep.mubr.bf16.mxu0 %v1517
      %1617 = vmatmul.mubr.bf16.gmra.mrb[0].mxu0 %v840
      %v1618 = vpop.f32.mrb[0].mxu0
      %v1619 = vadd.f32 0.0, %v1618
      %v1620 = vpop.f32.mrb[0].mxu0
      %v1621 = vpop.f32.mrb[0].mxu0
      %v1622 = vadd.f32 0.0, %v1621
      %v1623 = vpop.f32.mrb[0].mxu0
      %1624 = vmatprep.mubr.bf16.mxu0 %v1520
      %1625 = vmatmul.mubr.bf16.gmra.mrb[0].mxu0 %v864
      %v1626 = vpop.f32.mrb[0].mxu0
      %v1627 = vadd.f32 0.0, %v1626
      %v1628 = vpop.f32.mrb[0].mxu0
      %v1629 = vpop.f32.mrb[0].mxu0
      %v1630 = vadd.f32 0.0, %v1629
      %v1631 = vpop.f32.mrb[0].mxu0
      %1632 = vmatprep.mubr.bf16.mxu0 %v1523
      %1633 = vmatmul.mubr.bf16.gmra.mrb[0].mxu0 %v888
      %v1634 = vpop.f32.mrb[0].mxu0
      %v1635 = vadd.f32 0.0, %v1634
      %v1636 = vpop.f32.mrb[0].mxu0
      %v1637 = vpop.f32.mrb[0].mxu0
      %v1638 = vadd.f32 0.0, %v1637
      %v1639 = vpop.f32.mrb[0].mxu0
      %1640 = vmatprep.mubr.bf16.mxu0 %v1526
      %1641 = vmatmul.mubr.bf16.gmra.mrb[0].mxu0 %v912
      %v1642 = vpop.f32.mrb[0].mxu0
      %v1643 = vadd.f32 0.0, %v1642
      %v1644 = vpop.f32.mrb[0].mxu0
      %v1645 = vpop.f32.mrb[0].mxu0
      %v1646 = vadd.f32 0.0, %v1645
      %v1647 = vpop.f32.mrb[0].mxu0
      %1648 = vmatprep.mubr.bf16.mxu0 %v1529
      %1649 = vmatmul.mubr.bf16.gmra.mrb[0].mxu0 %v936
      %v1650 = vpop.f32.mrb[0].mxu0
      %v1651 = vadd.f32 0.0, %v1650
      %v1652 = vpop.f32.mrb[0].mxu0
      %v1653 = vpop.f32.mrb[0].mxu0
      %v1654 = vadd.f32 0.0, %v1653
      %v1655 = vpop.f32.mrb[0].mxu0
      %1656 = vmatprep.mubr.bf16.mxu0 %v1532
      %1657 = vmatmul.mubr.bf16.gmra.mrb[0].mxu0 %v960
      %v1658 = vpop.f32.mrb[0].mxu0
      %v1659 = vadd.f32 0.0, %v1658
      %v1660 = vpop.f32.mrb[0].mxu0
      %v1661 = vpop.f32.mrb[0].mxu0
      %v1662 = vadd.f32 0.0, %v1661
      %v1663 = vpop.f32.mrb[0].mxu0
      %1664 = vmatprep.mubr.bf16.mxu0 %v1535
      %1665 = vmatmul.mubr.bf16.gmra.mrb[0].mxu0 %v984
      %v1666 = vpop.f32.mrb[0].mxu0
      %v1667 = vadd.f32 0.0, %v1666
      %v1668 = vpop.f32.mrb[0].mxu0
      %v1669 = vpop.f32.mrb[0].mxu0
      %v1670 = vadd.f32 0.0, %v1669
      %v1671 = vpop.f32.mrb[0].mxu0
      %1672 = vmatprep.mubr.bf16.mxu0 %v1538
      %1673 = vmatmul.mubr.bf16.gmra.mrb[0].mxu0 %v1008
      %v1674 = vpop.f32.mrb[0].mxu0
      %v1675 = vadd.f32 0.0, %v1674
      %v1676 = vpop.f32.mrb[0].mxu0
      %v1677 = vpop.f32.mrb[0].mxu0
      %v1678 = vadd.f32 0.0, %v1677
      %v1679 = vpop.f32.mrb[0].mxu0
      %1680 = vmatprep.mubr.bf16.mxu0 %v1541
      %1681 = vmatmul.mubr.bf16.gmra.mrb[0].mxu0 %v1032
      %v1682 = vpop.f32.mrb[0].mxu0
      %v1683 = vadd.f32 0.0, %v1682
      %v1684 = vpop.f32.mrb[0].mxu0
      %v1685 = vpop.f32.mrb[0].mxu0
      %v1686 = vadd.f32 0.0, %v1685
      %v1687 = vpop.f32.mrb[0].mxu0
      %1688 = vmatprep.mubr.bf16.mxu0 %v1544
      %1689 = vmatmul.mubr.bf16.gmra.mrb[0].mxu0 %v1056
      %v1690 = vpop.f32.mrb[0].mxu0
      %v1691 = vadd.f32 0.0, %v1690
      %v1692 = vpop.f32.mrb[0].mxu0
      %v1693 = vpop.f32.mrb[0].mxu0
      %v1694 = vadd.f32 0.0, %v1693
      %v1695 = vpop.f32.mrb[0].mxu0
      %1696 = vmatprep.mubr.bf16.mxu0 %v1547
      %1697 = vmatmul.mubr.bf16.gmra.mrb[0].mxu0 %v1080
      %v1698 = vpop.f32.mrb[0].mxu0
      %v1699 = vadd.f32 0.0, %v1698
      %v1700 = vpop.f32.mrb[0].mxu0
      %v1701 = vpop.f32.mrb[0].mxu0
      %v1702 = vadd.f32 0.0, %v1701
      %v1703 = vpop.f32.mrb[0].mxu0
      %1704 = vmatprep.mubr.bf16.mxu0 %v1550
      %1705 = vmatmul.mubr.bf16.gmra.mrb[0].mxu0 %v1104
      %v1706 = vpop.f32.mrb[0].mxu0
      %v1707 = vadd.f32 0.0, %v1706
      %v1708 = vpop.f32.mrb[0].mxu0
      %v1709 = vpop.f32.mrb[0].mxu0
      %v1710 = vadd.f32 0.0, %v1709
      %v1711 = vpop.f32.mrb[0].mxu0
      %1712 = vdwg.mxu0
      %v1737 = vunpack.c.l.b16 %v1383
      %v1738 = vunpack.c.l.b16 %v1384
      %v1739 = vunpack.c.l.b16 %v1385
      %v1740 = vunpack.c.l.b16 %v1386
      %v1741 = vunpack.c.l.b16 %v1387
      %v1742 = vunpack.c.l.b16 %v1388
      %v1743 = vunpack.c.l.b16 %v1389
      %v1744 = vunpack.c.l.b16 %v1390
      %v1745 = vunpack.c.l.b16 %v1391
      %v1746 = vunpack.c.l.b16 %v1392
      %v1747 = vunpack.c.l.b16 %v1393
      %v1748 = vunpack.c.l.b16 %v1394
      %v1749 = vunpack.c.l.b16 %v1395
      %v1750 = vunpack.c.l.b16 %v1396
      %v1751 = vunpack.c.l.b16 %v1397
      %v1752 = vunpack.c.l.b16 %v1398
      %v1753 = vunpack.c.l.b16 %v1399
      %v1754 = vunpack.c.l.b16 %v1400
      %v1755 = vunpack.c.l.b16 %v1401
      %v1756 = vunpack.c.l.b16 %v1402
      %v1757 = vunpack.c.l.b16 %v1403
      %v1758 = vunpack.c.l.b16 %v1404
      %v1759 = vunpack.c.l.b16 %v1405
      %v1760 = vunpack.c.l.b16 %v1406
      %v1761 = vpack.c.b16 %v1738, %v1737
      %v1762 = vpack.c.b16 %v1740, %v1739
      %v1763 = vpack.c.b16 %v1742, %v1741
      %v1764 = vpack.c.b16 %v1744, %v1743
      %v1765 = vpack.c.b16 %v1746, %v1745
      %v1766 = vpack.c.b16 %v1748, %v1747
      %v1767 = vpack.c.b16 %v1750, %v1749
      %v1768 = vpack.c.b16 %v1752, %v1751
      %v1769 = vpack.c.b16 %v1754, %v1753
      %v1770 = vpack.c.b16 %v1756, %v1755
      %v1771 = vpack.c.b16 %v1758, %v1757
      %v1772 = vpack.c.b16 %v1760, %v1759
      %v1785 = vsel %vm172, %v661, 0
      %v1787 = vsel %vm172, %v665, 0
      %v1789 = vsel %vm172, %v669, 0
      %v1791 = vsel %vm172, %v673, 0
      %v1793 = vsel %vm172, %v677, 0
      %v1795 = vsel %vm172, %v681, 0
      %v1797 = vsel %vm172, %v685, 0
      %v1799 = vsel %vm172, %v689, 0
      %v1801 = vsel %vm172, %v693, 0
      %v1803 = vsel %vm172, %v697, 0
      %v1805 = vsel %vm172, %v701, 0
      %v1807 = vsel %vm172, %v705, 0
      %v1809 = vsel %vm172, %v709, 0
      %v1811 = vsel %vm172, %v713, 0
      %v1813 = vsel %vm172, %v717, 0
      %v1815 = vsel %vm172, %v721, 0
      %1817 = vmatprep.subr.bf16.mxu0 0
      %1818 = vmatpush1.bf16.msra.mxu0 %v1761
      %1819 = vmatprep.subr.bf16.mxu0 0
      %1820 = vmatpush1.bf16.msra.mxu0 %v1762
      %1821 = vmatprep.subr.bf16.mxu0 0
      %1822 = vmatpush1.bf16.msra.mxu0 %v1763
      %1823 = vmatprep.subr.bf16.mxu0 0
      %1824 = vmatpush1.bf16.msra.mxu0 %v1764
      %1825 = vmatprep.subr.bf16.mxu0 0
      %1826 = vmatpush1.bf16.msra.mxu0 %v1765
      %1827 = vmatprep.subr.bf16.mxu0 0
      %1828 = vmatpush1.bf16.msra.mxu0 %v1766
      %1829 = vmatprep.subr.bf16.mxu0 0
      %1830 = vmatpush1.bf16.msra.mxu0 %v1767
      %1831 = vmatprep.subr.bf16.mxu0 0
      %1832 = vmatpush1.bf16.msra.mxu0 %v1768
      %1833 = vmatprep.subr.bf16.mxu0 0
      %1834 = vmatpush1.bf16.msra.mxu0 %v1769
      %1835 = vmatprep.subr.bf16.mxu0 0
      %1836 = vmatpush1.bf16.msra.mxu0 %v1770
      %1837 = vmatprep.subr.bf16.mxu0 0
      %1838 = vmatpush1.bf16.msra.mxu0 %v1771
      %1839 = vmatprep.subr.bf16.mxu0 0
      %1840 = vmatpush1.bf16.msra.mxu0 %v1772
      %1841 = vmatprep.subr.bf16.mxu0 0
      %1842 = vmatpush1.bf16.msra.mxu0 0
      %1843 = vmatprep.subr.bf16.mxu0 0
      %1844 = vmatpush1.bf16.msra.mxu0 0
      %1845 = vmatprep.subr.bf16.mxu0 0
      %1846 = vmatpush1.bf16.msra.mxu0 0
      %1847 = vmatprep.subr.bf16.mxu0 0
      %1848 = vmatpush1.bf16.msra.mxu0 0
      %1849 = vmatprep.mubr.bf16.mxu0 %v1785
      %1850 = vmatmul.mubr.bf16.gmra.mrb[0].mxu0 %v660
      %v1851 = vpop.f32.mrb[0].mxu0
      %v1852 = vadd.f32 %v1587, %v1851
      %v1853 = vpop.f32.mrb[0].mxu0
      %v1854 = vpop.f32.mrb[0].mxu0
      %v1855 = vadd.f32 %v1590, %v1854
      %v1856 = vpop.f32.mrb[0].mxu0
      %1857 = vmatprep.mubr.bf16.mxu0 %v1787
      %1858 = vmatmul.mubr.bf16.gmra.mrb[0].mxu0 %v664
      %v1859 = vpop.f32.mrb[0].mxu0
      %v1860 = vadd.f32 %v1595, %v1859
      %v1861 = vpop.f32.mrb[0].mxu0
      %v1862 = vpop.f32.mrb[0].mxu0
      %v1863 = vadd.f32 %v1598, %v1862
      %v1864 = vpop.f32.mrb[0].mxu0
      %1865 = vmatprep.mubr.bf16.mxu0 %v1789
      %1866 = vmatmul.mubr.bf16.gmra.mrb[0].mxu0 %v668
      %v1867 = vpop.f32.mrb[0].mxu0
      %v1868 = vadd.f32 %v1603, %v1867
      %v1869 = vpop.f32.mrb[0].mxu0
      %v1870 = vpop.f32.mrb[0].mxu0
      %v1871 = vadd.f32 %v1606, %v1870
      %v1872 = vpop.f32.mrb[0].mxu0
      %1873 = vmatprep.mubr.bf16.mxu0 %v1791
      %1874 = vmatmul.mubr.bf16.gmra.mrb[0].mxu0 %v672
      %v1875 = vpop.f32.mrb[0].mxu0
      %v1876 = vadd.f32 %v1611, %v1875
      %v1877 = vpop.f32.mrb[0].mxu0
      %v1878 = vpop.f32.mrb[0].mxu0
      %v1879 = vadd.f32 %v1614, %v1878
      %v1880 = vpop.f32.mrb[0].mxu0
      %1881 = vmatprep.mubr.bf16.mxu0 %v1793
      %1882 = vmatmul.mubr.bf16.gmra.mrb[0].mxu0 %v676
      %v1883 = vpop.f32.mrb[0].mxu0
      %v1884 = vadd.f32 %v1619, %v1883
      %v1885 = vpop.f32.mrb[0].mxu0
      %v1886 = vpop.f32.mrb[0].mxu0
      %v1887 = vadd.f32 %v1622, %v1886
      %v1888 = vpop.f32.mrb[0].mxu0
      %1889 = vmatprep.mubr.bf16.mxu0 %v1795
      %1890 = vmatmul.mubr.bf16.gmra.mrb[0].mxu0 %v680
      %v1891 = vpop.f32.mrb[0].mxu0
      %v1892 = vadd.f32 %v1627, %v1891
      %v1893 = vpop.f32.mrb[0].mxu0
      %v1894 = vpop.f32.mrb[0].mxu0
      %v1895 = vadd.f32 %v1630, %v1894
      %v1896 = vpop.f32.mrb[0].mxu0
      %1897 = vmatprep.mubr.bf16.mxu0 %v1797
      %1898 = vmatmul.mubr.bf16.gmra.mrb[0].mxu0 %v684
      %v1899 = vpop.f32.mrb[0].mxu0
      %v1900 = vadd.f32 %v1635, %v1899
      %v1901 = vpop.f32.mrb[0].mxu0
      %v1902 = vpop.f32.mrb[0].mxu0
      %v1903 = vadd.f32 %v1638, %v1902
      %v1904 = vpop.f32.mrb[0].mxu0
      %1905 = vmatprep.mubr.bf16.mxu0 %v1799
      %1906 = vmatmul.mubr.bf16.gmra.mrb[0].mxu0 %v688
      %v1907 = vpop.f32.mrb[0].mxu0
      %v1908 = vadd.f32 %v1643, %v1907
      %v1909 = vpop.f32.mrb[0].mxu0
      %v1910 = vpop.f32.mrb[0].mxu0
      %v1911 = vadd.f32 %v1646, %v1910
      %v1912 = vpop.f32.mrb[0].mxu0
      %1913 = vmatprep.mubr.bf16.mxu0 %v1801
      %1914 = vmatmul.mubr.bf16.gmra.mrb[0].mxu0 %v692
      %v1915 = vpop.f32.mrb[0].mxu0
      %v1916 = vadd.f32 %v1651, %v1915
      %v1917 = vpop.f32.mrb[0].mxu0
      %v1918 = vpop.f32.mrb[0].mxu0
      %v1919 = vadd.f32 %v1654, %v1918
      %v1920 = vpop.f32.mrb[0].mxu0
      %1921 = vmatprep.mubr.bf16.mxu0 %v1803
      %1922 = vmatmul.mubr.bf16.gmra.mrb[0].mxu0 %v696
      %v1923 = vpop.f32.mrb[0].mxu0
      %v1924 = vadd.f32 %v1659, %v1923
      %v1925 = vpop.f32.mrb[0].mxu0
      %v1926 = vpop.f32.mrb[0].mxu0
      %v1927 = vadd.f32 %v1662, %v1926
      %v1928 = vpop.f32.mrb[0].mxu0
      %1929 = vmatprep.mubr.bf16.mxu0 %v1805
      %1930 = vmatmul.mubr.bf16.gmra.mrb[0].mxu0 %v700
      %v1931 = vpop.f32.mrb[0].mxu0
      %v1932 = vadd.f32 %v1667, %v1931
      %v1933 = vpop.f32.mrb[0].mxu0
      %v1934 = vpop.f32.mrb[0].mxu0
      %v1935 = vadd.f32 %v1670, %v1934
      %v1936 = vpop.f32.mrb[0].mxu0
      %1937 = vmatprep.mubr.bf16.mxu0 %v1807
      %1938 = vmatmul.mubr.bf16.gmra.mrb[0].mxu0 %v704
      %v1939 = vpop.f32.mrb[0].mxu0
      %v1940 = vadd.f32 %v1675, %v1939
      %v1941 = vpop.f32.mrb[0].mxu0
      %v1942 = vpop.f32.mrb[0].mxu0
      %v1943 = vadd.f32 %v1678, %v1942
      %v1944 = vpop.f32.mrb[0].mxu0
      %1945 = vmatprep.mubr.bf16.mxu0 %v1809
      %1946 = vmatmul.mubr.bf16.gmra.mrb[0].mxu0 %v708
      %v1947 = vpop.f32.mrb[0].mxu0
      %v1948 = vadd.f32 %v1683, %v1947
      %v1949 = vpop.f32.mrb[0].mxu0
      %v1950 = vpop.f32.mrb[0].mxu0
      %v1951 = vadd.f32 %v1686, %v1950
      %v1952 = vpop.f32.mrb[0].mxu0
      %1953 = vmatprep.mubr.bf16.mxu0 %v1811
      %1954 = vmatmul.mubr.bf16.gmra.mrb[0].mxu0 %v712
      %v1955 = vpop.f32.mrb[0].mxu0
      %v1956 = vadd.f32 %v1691, %v1955
      %v1957 = vpop.f32.mrb[0].mxu0
      %v1958 = vpop.f32.mrb[0].mxu0
      %v1959 = vadd.f32 %v1694, %v1958
      %v1960 = vpop.f32.mrb[0].mxu0
      %1961 = vmatprep.mubr.bf16.mxu0 %v1813
      %1962 = vmatmul.mubr.bf16.gmra.mrb[0].mxu0 %v716
      %v1963 = vpop.f32.mrb[0].mxu0
      %v1964 = vadd.f32 %v1699, %v1963
      %v1965 = vpop.f32.mrb[0].mxu0
      %v1966 = vpop.f32.mrb[0].mxu0
      %v1967 = vadd.f32 %v1702, %v1966
      %v1968 = vpop.f32.mrb[0].mxu0
      %1969 = vmatprep.mubr.bf16.mxu0 %v1815
      %1970 = vmatmul.mubr.bf16.gmra.mrb[0].mxu0 %v720
      %v1971 = vpop.f32.mrb[0].mxu0
      %v1972 = vadd.f32 %v1707, %v1971
      %v1973 = vpop.f32.mrb[0].mxu0
      %v1974 = vpop.f32.mrb[0].mxu0
      %v1975 = vadd.f32 %v1710, %v1974
      %v1976 = vpop.f32.mrb[0].mxu0
      %1977 = vdwg.mxu0
      %s1978 = scalar_lea.vmem %s1, 192
      %v1979 = vld [vmem:[%s1978] sm:$0xf]
      %v1980 = vld [vmem:[%s1978 + $0x4] sm:$0xf]
      %v1981 = vld [vmem:[%s1978 + $0x8] sm:$0xf]
      %v1982 = vld [vmem:[%s1978 + $0xc] sm:$0xf]
      %v1983 = vld [vmem:[%s1978 + $0x10] sm:$0xf]
      %v1984 = vld [vmem:[%s1978 + $0x14] sm:$0xf]
      %v1985 = vld [vmem:[%s1978 + $0x18] sm:$0xf]
      %v1986 = vld [vmem:[%s1978 + $0x1c] sm:$0xf]
      %v1987 = vld [vmem:[%s1978 + $0x20] sm:$0xf]
      %v1988 = vld [vmem:[%s1978 + $0x24] sm:$0xf]
      %v1989 = vld [vmem:[%s1978 + $0x28] sm:$0xf]
      %v1990 = vld [vmem:[%s1978 + $0x2c] sm:$0xf]
      %v1991 = vld [vmem:[%s1978 + $0x30] sm:$0xf]
      %v1992 = vld [vmem:[%s1978 + $0x34] sm:$0xf]
      %v1993 = vld [vmem:[%s1978 + $0x38] sm:$0xf]
      %v1994 = vld [vmem:[%s1978 + $0x3c] sm:$0xf]
      %v1995 = vld [vmem:[%s1978 + $0x40] sm:$0xf]
      %v1996 = vld [vmem:[%s1978 + $0x44] sm:$0xf]
      %v1997 = vld [vmem:[%s1978 + $0x48] sm:$0xf]
      %v1998 = vld [vmem:[%s1978 + $0x4c] sm:$0xf]
      %v1999 = vld [vmem:[%s1978 + $0x50] sm:$0xf]
      %v2000 = vld [vmem:[%s1978 + $0x54] sm:$0xf]
      %v2001 = vld [vmem:[%s1978 + $0x58] sm:$0xf]
      %v2002 = vld [vmem:[%s1978 + $0x5c] sm:$0xf]
      %v2027 = vunpack.c.l.b16 %v1979
      %v2028 = vunpack.c.l.b16 %v1980
      %v2029 = vunpack.c.l.b16 %v1981
      %v2030 = vunpack.c.l.b16 %v1982
      %v2031 = vunpack.c.l.b16 %v1983
      %v2032 = vunpack.c.l.b16 %v1984
      %v2033 = vunpack.c.l.b16 %v1985
      %v2034 = vunpack.c.l.b16 %v1986
      %v2035 = vunpack.c.l.b16 %v1987
      %v2036 = vunpack.c.l.b16 %v1988
      %v2037 = vunpack.c.l.b16 %v1989
      %v2038 = vunpack.c.l.b16 %v1990
      %v2039 = vunpack.c.l.b16 %v1991
      %v2040 = vunpack.c.l.b16 %v1992
      %v2041 = vunpack.c.l.b16 %v1993
      %v2042 = vunpack.c.l.b16 %v1994
      %v2043 = vunpack.c.l.b16 %v1995
      %v2044 = vunpack.c.l.b16 %v1996
      %v2045 = vunpack.c.l.b16 %v1997
      %v2046 = vunpack.c.l.b16 %v1998
      %v2047 = vunpack.c.l.b16 %v1999
      %v2048 = vunpack.c.l.b16 %v2000
      %v2049 = vunpack.c.l.b16 %v2001
      %v2050 = vunpack.c.l.b16 %v2002
      %v2051 = vpack.c.b16 %v2028, %v2027
      %v2052 = vpack.c.b16 %v2030, %v2029
      %v2053 = vpack.c.b16 %v2032, %v2031
      %v2054 = vpack.c.b16 %v2034, %v2033
      %v2055 = vpack.c.b16 %v2036, %v2035
      %v2056 = vpack.c.b16 %v2038, %v2037
      %v2057 = vpack.c.b16 %v2040, %v2039
      %v2058 = vpack.c.b16 %v2042, %v2041
      %v2059 = vpack.c.b16 %v2044, %v2043
      %v2060 = vpack.c.b16 %v2046, %v2045
      %v2061 = vpack.c.b16 %v2048, %v2047
      %v2062 = vpack.c.b16 %v2050, %v2049
      %v2076 = vsel %vm172, %v1261, 0
      %v2079 = vsel %vm172, %v1267, 0
      %v2082 = vsel %vm172, %v1273, 0
      %v2085 = vsel %vm172, %v1279, 0
      %v2088 = vsel %vm172, %v1285, 0
      %v2091 = vsel %vm172, %v1291, 0
      %v2094 = vsel %vm172, %v1297, 0
      %v2097 = vsel %vm172, %v1303, 0
      %v2100 = vsel %vm172, %v1309, 0
      %v2103 = vsel %vm172, %v1315, 0
      %v2106 = vsel %vm172, %v1321, 0
      %v2109 = vsel %vm172, %v1327, 0
      %v2112 = vsel %vm172, %v1333, 0
      %v2115 = vsel %vm172, %v1339, 0
      %v2118 = vsel %vm172, %v1345, 0
      %v2121 = vsel %vm172, %v1351, 0
      %2123 = vmatprep.subr.bf16.mxu0 0
      %2124 = vmatpush1.bf16.msra.mxu0 %v2051
      %2125 = vmatprep.subr.bf16.mxu0 0
      %2126 = vmatpush1.bf16.msra.mxu0 %v2052
      %2127 = vmatprep.subr.bf16.mxu0 0
      %2128 = vmatpush1.bf16.msra.mxu0 %v2053
      %2129 = vmatprep.subr.bf16.mxu0 0
      %2130 = vmatpush1.bf16.msra.mxu0 %v2054
      %2131 = vmatprep.subr.bf16.mxu0 0
      %2132 = vmatpush1.bf16.msra.mxu0 %v2055
      %2133 = vmatprep.subr.bf16.mxu0 0
      %2134 = vmatpush1.bf16.msra.mxu0 %v2056
      %2135 = vmatprep.subr.bf16.mxu0 0
      %2136 = vmatpush1.bf16.msra.mxu0 %v2057
      %2137 = vmatprep.subr.bf16.mxu0 0
      %2138 = vmatpush1.bf16.msra.mxu0 %v2058
      %2139 = vmatprep.subr.bf16.mxu0 0
      %2140 = vmatpush1.bf16.msra.mxu0 %v2059
      %2141 = vmatprep.subr.bf16.mxu0 0
      %2142 = vmatpush1.bf16.msra.mxu0 %v2060
      %2143 = vmatprep.subr.bf16.mxu0 0
      %2144 = vmatpush1.bf16.msra.mxu0 %v2061
      %2145 = vmatprep.subr.bf16.mxu0 0
      %2146 = vmatpush1.bf16.msra.mxu0 %v2062
      %2147 = vmatprep.subr.bf16.mxu0 0
      %2148 = vmatpush1.bf16.msra.mxu0 0
      %2149 = vmatprep.subr.bf16.mxu0 0
      %2150 = vmatpush1.bf16.msra.mxu0 0
      %2151 = vmatprep.subr.bf16.mxu0 0
      %2152 = vmatpush1.bf16.msra.mxu0 0
      %2153 = vmatprep.subr.bf16.mxu0 0
      %2154 = vmatpush1.bf16.msra.mxu0 0
      %2155 = vmatprep.mubr.bf16.mxu0 %v2076
      %2156 = vmatmul.mubr.bf16.gmra.mrb[0].mxu0 %v1258
      %v2157 = vpop.f32.mrb[0].mxu0
      %v2158 = vadd.f32 0.0, %v2157
      %v2159 = vpop.f32.mrb[0].mxu0
      %v2160 = vpop.f32.mrb[0].mxu0
      %v2161 = vadd.f32 0.0, %v2160
      %v2162 = vpop.f32.mrb[0].mxu0
      %2163 = vmatprep.mubr.bf16.mxu0 %v2079
      %2164 = vmatmul.mubr.bf16.gmra.mrb[0].mxu0 %v1264
      %v2165 = vpop.f32.mrb[0].mxu0
      %v2166 = vadd.f32 0.0, %v2165
      %v2167 = vpop.f32.mrb[0].mxu0
      %v2168 = vpop.f32.mrb[0].mxu0
      %v2169 = vadd.f32 0.0, %v2168
      %v2170 = vpop.f32.mrb[0].mxu0
      %2171 = vmatprep.mubr.bf16.mxu0 %v2082
      %2172 = vmatmul.mubr.bf16.gmra.mrb[0].mxu0 %v1270
      %v2173 = vpop.f32.mrb[0].mxu0
      %v2174 = vadd.f32 0.0, %v2173
      %v2175 = vpop.f32.mrb[0].mxu0
      %v2176 = vpop.f32.mrb[0].mxu0
      %v2177 = vadd.f32 0.0, %v2176
      %v2178 = vpop.f32.mrb[0].mxu0
      %2179 = vmatprep.mubr.bf16.mxu0 %v2085
      %2180 = vmatmul.mubr.bf16.gmra.mrb[0].mxu0 %v1276
      %v2181 = vpop.f32.mrb[0].mxu0
      %v2182 = vadd.f32 0.0, %v2181
      %v2183 = vpop.f32.mrb[0].mxu0
      %v2184 = vpop.f32.mrb[0].mxu0
      %v2185 = vadd.f32 0.0, %v2184
      %v2186 = vpop.f32.mrb[0].mxu0
      %2187 = vmatprep.mubr.bf16.mxu0 %v2088
      %2188 = vmatmul.mubr.bf16.gmra.mrb[0].mxu0 %v1282
      %v2189 = vpop.f32.mrb[0].mxu0
      %v2190 = vadd.f32 0.0, %v2189
      %v2191 = vpop.f32.mrb[0].mxu0
      %v2192 = vpop.f32.mrb[0].mxu0
      %v2193 = vadd.f32 0.0, %v2192
      %v2194 = vpop.f32.mrb[0].mxu0
      %2195 = vmatprep.mubr.bf16.mxu0 %v2091
      %2196 = vmatmul.mubr.bf16.gmra.mrb[0].mxu0 %v1288
      %v2197 = vpop.f32.mrb[0].mxu0
      %v2198 = vadd.f32 0.0, %v2197
      %v2199 = vpop.f32.mrb[0].mxu0
      %v2200 = vpop.f32.mrb[0].mxu0
      %v2201 = vadd.f32 0.0, %v2200
      %v2202 = vpop.f32.mrb[0].mxu0
      %2203 = vmatprep.mubr.bf16.mxu0 %v2094
      %2204 = vmatmul.mubr.bf16.gmra.mrb[0].mxu0 %v1294
      %v2205 = vpop.f32.mrb[0].mxu0
      %v2206 = vadd.f32 0.0, %v2205
      %v2207 = vpop.f32.mrb[0].mxu0
      %v2208 = vpop.f32.mrb[0].mxu0
      %v2209 = vadd.f32 0.0, %v2208
      %v2210 = vpop.f32.mrb[0].mxu0
      %2211 = vmatprep.mubr.bf16.mxu0 %v2097
      %2212 = vmatmul.mubr.bf16.gmra.mrb[0].mxu0 %v1300
      %v2213 = vpop.f32.mrb[0].mxu0
      %v2214 = vadd.f32 0.0, %v2213
      %v2215 = vpop.f32.mrb[0].mxu0
      %v2216 = vpop.f32.mrb[0].mxu0
      %v2217 = vadd.f32 0.0, %v2216
      %v2218 = vpop.f32.mrb[0].mxu0
      %2219 = vmatprep.mubr.bf16.mxu0 %v2100
      %2220 = vmatmul.mubr.bf16.gmra.mrb[0].mxu0 %v1306
      %v2221 = vpop.f32.mrb[0].mxu0
      %v2222 = vadd.f32 0.0, %v2221
      %v2223 = vpop.f32.mrb[0].mxu0
      %v2224 = vpop.f32.mrb[0].mxu0
      %v2225 = vadd.f32 0.0, %v2224
      %v2226 = vpop.f32.mrb[0].mxu0
      %2227 = vmatprep.mubr.bf16.mxu0 %v2103
      %2228 = vmatmul.mubr.bf16.gmra.mrb[0].mxu0 %v1312
      %v2229 = vpop.f32.mrb[0].mxu0
      %v2230 = vadd.f32 0.0, %v2229
      %v2231 = vpop.f32.mrb[0].mxu0
      %v2232 = vpop.f32.mrb[0].mxu0
      %v2233 = vadd.f32 0.0, %v2232
      %v2234 = vpop.f32.mrb[0].mxu0
      %2235 = vmatprep.mubr.bf16.mxu0 %v2106
      %2236 = vmatmul.mubr.bf16.gmra.mrb[0].mxu0 %v1318
      %v2237 = vpop.f32.mrb[0].mxu0
      %v2238 = vadd.f32 0.0, %v2237
      %v2239 = vpop.f32.mrb[0].mxu0
      %v2240 = vpop.f32.mrb[0].mxu0
      %v2241 = vadd.f32 0.0, %v2240
      %v2242 = vpop.f32.mrb[0].mxu0
      %2243 = vmatprep.mubr.bf16.mxu0 %v2109
      %2244 = vmatmul.mubr.bf16.gmra.mrb[0].mxu0 %v1324
      %v2245 = vpop.f32.mrb[0].mxu0
      %v2246 = vadd.f32 0.0, %v2245
      %v2247 = vpop.f32.mrb[0].mxu0
      %v2248 = vpop.f32.mrb[0].mxu0
      %v2249 = vadd.f32 0.0, %v2248
      %v2250 = vpop.f32.mrb[0].mxu0
      %2251 = vmatprep.mubr.bf16.mxu0 %v2112
      %2252 = vmatmul.mubr.bf16.gmra.mrb[0].mxu0 %v1330
      %v2253 = vpop.f32.mrb[0].mxu0
      %v2254 = vadd.f32 0.0, %v2253
      %v2255 = vpop.f32.mrb[0].mxu0
      %v2256 = vpop.f32.mrb[0].mxu0
      %v2257 = vadd.f32 0.0, %v2256
      %v2258 = vpop.f32.mrb[0].mxu0
      %2259 = vmatprep.mubr.bf16.mxu0 %v2115
      %2260 = vmatmul.mubr.bf16.gmra.mrb[0].mxu0 %v1336
      %v2261 = vpop.f32.mrb[0].mxu0
      %v2262 = vadd.f32 0.0, %v2261
      %v2263 = vpop.f32.mrb[0].mxu0
      %v2264 = vpop.f32.mrb[0].mxu0
      %v2265 = vadd.f32 0.0, %v2264
      %v2266 = vpop.f32.mrb[0].mxu0
      %2267 = vmatprep.mubr.bf16.mxu0 %v2118
      %2268 = vmatmul.mubr.bf16.gmra.mrb[0].mxu0 %v1342
      %v2269 = vpop.f32.mrb[0].mxu0
      %v2270 = vadd.f32 0.0, %v2269
      %v2271 = vpop.f32.mrb[0].mxu0
      %v2272 = vpop.f32.mrb[0].mxu0
      %v2273 = vadd.f32 0.0, %v2272
      %v2274 = vpop.f32.mrb[0].mxu0
      %2275 = vmatprep.mubr.bf16.mxu0 %v2121
      %2276 = vmatmul.mubr.bf16.gmra.mrb[0].mxu0 %v1348
      %v2277 = vpop.f32.mrb[0].mxu0
      %v2278 = vadd.f32 0.0, %v2277
      %v2279 = vpop.f32.mrb[0].mxu0
      %v2280 = vpop.f32.mrb[0].mxu0
      %v2281 = vadd.f32 0.0, %v2280
      %v2282 = vpop.f32.mrb[0].mxu0
      %2283 = vdwg.mxu0
      %v2284 = vadd.f32 %v1852, %v2158
      %v2285 = vadd.f32 %v1855, %v2161
      %v2286 = vadd.f32 %v1860, %v2166
      %v2287 = vadd.f32 %v1863, %v2169
      %v2288 = vadd.f32 %v1868, %v2174
      %v2289 = vadd.f32 %v1871, %v2177
      %v2290 = vadd.f32 %v1876, %v2182
      %v2291 = vadd.f32 %v1879, %v2185
      %v2292 = vadd.f32 %v1884, %v2190
      %v2293 = vadd.f32 %v1887, %v2193
      %v2294 = vadd.f32 %v1892, %v2198
      %v2295 = vadd.f32 %v1895, %v2201
      %v2296 = vadd.f32 %v1900, %v2206
      %v2297 = vadd.f32 %v1903, %v2209
      %v2298 = vadd.f32 %v1908, %v2214
      %v2299 = vadd.f32 %v1911, %v2217
      %v2300 = vadd.f32 %v1916, %v2222
      %v2301 = vadd.f32 %v1919, %v2225
      %v2302 = vadd.f32 %v1924, %v2230
      %v2303 = vadd.f32 %v1927, %v2233
      %v2304 = vadd.f32 %v1932, %v2238
      %v2305 = vadd.f32 %v1935, %v2241
      %v2306 = vadd.f32 %v1940, %v2246
      %v2307 = vadd.f32 %v1943, %v2249
      %v2308 = vadd.f32 %v1948, %v2254
      %v2309 = vadd.f32 %v1951, %v2257
      %v2310 = vadd.f32 %v1956, %v2262
      %v2311 = vadd.f32 %v1959, %v2265
      %v2312 = vadd.f32 %v1964, %v2270
      %v2313 = vadd.f32 %v1967, %v2273
      %v2314 = vadd.f32 %v1972, %v2278
      %v2315 = vadd.f32 %v1975, %v2281
      %s2316 = scalar_lea.vmem %s1, 288
      %v2317 = vld [vmem:[%s2316] sm:$0xf]
      %v2318 = vld [vmem:[%s2316 + $0x4] sm:$0xf]
      %v2319 = vld [vmem:[%s2316 + $0x8] sm:$0xf]
      %v2320 = vld [vmem:[%s2316 + $0xc] sm:$0xf]
      %v2321 = vld [vmem:[%s2316 + $0x10] sm:$0xf]
      %v2322 = vld [vmem:[%s2316 + $0x14] sm:$0xf]
      %v2323 = vld [vmem:[%s2316 + $0x18] sm:$0xf]
      %v2324 = vld [vmem:[%s2316 + $0x1c] sm:$0xf]
      %v2325 = vld [vmem:[%s2316 + $0x20] sm:$0xf]
      %v2326 = vld [vmem:[%s2316 + $0x24] sm:$0xf]
      %v2327 = vld [vmem:[%s2316 + $0x28] sm:$0xf]
      %v2328 = vld [vmem:[%s2316 + $0x2c] sm:$0xf]
      %v2329 = vld [vmem:[%s2316 + $0x30] sm:$0xf]
      %v2330 = vld [vmem:[%s2316 + $0x34] sm:$0xf]
      %v2331 = vld [vmem:[%s2316 + $0x38] sm:$0xf]
      %v2332 = vld [vmem:[%s2316 + $0x3c] sm:$0xf]
      %v2333 = vld [vmem:[%s2316 + $0x40] sm:$0xf]
      %v2334 = vld [vmem:[%s2316 + $0x44] sm:$0xf]
      %v2335 = vld [vmem:[%s2316 + $0x48] sm:$0xf]
      %v2336 = vld [vmem:[%s2316 + $0x4c] sm:$0xf]
      %v2337 = vld [vmem:[%s2316 + $0x50] sm:$0xf]
      %v2338 = vld [vmem:[%s2316 + $0x54] sm:$0xf]
      %v2339 = vld [vmem:[%s2316 + $0x58] sm:$0xf]
      %v2340 = vld [vmem:[%s2316 + $0x5c] sm:$0xf]
      %v2365 = vunpack.c.l.b16 %v2317
      %v2366 = vunpack.c.l.b16 %v2318
      %v2367 = vunpack.c.l.b16 %v2319
      %v2368 = vunpack.c.l.b16 %v2320
      %v2369 = vunpack.c.l.b16 %v2321
      %v2370 = vunpack.c.l.b16 %v2322
      %v2371 = vunpack.c.l.b16 %v2323
      %v2372 = vunpack.c.l.b16 %v2324
      %v2373 = vunpack.c.l.b16 %v2325
      %v2374 = vunpack.c.l.b16 %v2326
      %v2375 = vunpack.c.l.b16 %v2327
      %v2376 = vunpack.c.l.b16 %v2328
      %v2377 = vunpack.c.l.b16 %v2329
      %v2378 = vunpack.c.l.b16 %v2330
      %v2379 = vunpack.c.l.b16 %v2331
      %v2380 = vunpack.c.l.b16 %v2332
      %v2381 = vunpack.c.l.b16 %v2333
      %v2382 = vunpack.c.l.b16 %v2334
      %v2383 = vunpack.c.l.b16 %v2335
      %v2384 = vunpack.c.l.b16 %v2336
      %v2385 = vunpack.c.l.b16 %v2337
      %v2386 = vunpack.c.l.b16 %v2338
      %v2387 = vunpack.c.l.b16 %v2339
      %v2388 = vunpack.c.l.b16 %v2340
      %v2389 = vpack.c.b16 %v2366, %v2365
      %v2390 = vpack.c.b16 %v2368, %v2367
      %v2391 = vpack.c.b16 %v2370, %v2369
      %v2392 = vpack.c.b16 %v2372, %v2371
      %v2393 = vpack.c.b16 %v2374, %v2373
      %v2394 = vpack.c.b16 %v2376, %v2375
      %v2395 = vpack.c.b16 %v2378, %v2377
      %v2396 = vpack.c.b16 %v2380, %v2379
      %v2397 = vpack.c.b16 %v2382, %v2381
      %v2398 = vpack.c.b16 %v2384, %v2383
      %v2399 = vpack.c.b16 %v2386, %v2385
      %v2400 = vpack.c.b16 %v2388, %v2387
      %v2413 = vsel %vm172, %v725, 0
      %2415 = vmatprep.subr.bf16.mxu0 0
      %2416 = vmatpush1.bf16.msra.mxu0 %v2389
      %2417 = vmatprep.subr.bf16.mxu0 0
      %2418 = vmatpush1.bf16.msra.mxu0 %v2390
      %2419 = vmatprep.subr.bf16.mxu0 0
      %2420 = vmatpush1.bf16.msra.mxu0 %v2391
      %2421 = vmatprep.subr.bf16.mxu0 0
      %2422 = vmatpush1.bf16.msra.mxu0 %v2392
      %2423 = vmatprep.subr.bf16.mxu0 0
      %2424 = vmatpush1.bf16.msra.mxu0 %v2393
      %2425 = vmatprep.subr.bf16.mxu0 0
      %2426 = vmatpush1.bf16.msra.mxu0 %v2394
      %2427 = vmatprep.subr.bf16.mxu0 0
      %2428 = vmatpush1.bf16.msra.mxu0 %v2395
      %2429 = vmatprep.subr.bf16.mxu0 0
      %2430 = vmatpush1.bf16.msra.mxu0 %v2396
      %2431 = vmatprep.subr.bf16.mxu0 0
      %2432 = vmatpush1.bf16.msra.mxu0 %v2397
      %2433 = vmatprep.subr.bf16.mxu0 0
      %2434 = vmatpush1.bf16.msra.mxu0 %v2398
      %2435 = vmatprep.subr.bf16.mxu0 0
      %2436 = vmatpush1.bf16.msra.mxu0 %v2399
      %2437 = vmatprep.subr.bf16.mxu0 0
      %2438 = vmatpush1.bf16.msra.mxu0 %v2400
      %2439 = vmatprep.subr.bf16.mxu0 0
      %2440 = vmatpush1.bf16.msra.mxu0 0
      %2441 = vmatprep.subr.bf16.mxu0 0
      %2442 = vmatpush1.bf16.msra.mxu0 0
      %2443 = vmatprep.subr.bf16.mxu0 0
      %2444 = vmatpush1.bf16.msra.mxu0 0
      %2445 = vmatprep.subr.bf16.mxu0 0
      %2446 = vmatpush1.bf16.msra.mxu0 0
      %2447 = vmatprep.mubr.bf16.mxu0 %v1787
      %2448 = vmatmul.mubr.bf16.gmra.mrb[0].mxu0 %v664
      %v2449 = vpop.f32.mrb[0].mxu0
      %v2450 = vadd.f32 0.0, %v2449
      %v2451 = vpop.f32.mrb[0].mxu0
      %v2452 = vpop.f32.mrb[0].mxu0
      %v2453 = vadd.f32 0.0, %v2452
      %v2454 = vpop.f32.mrb[0].mxu0
      %2455 = vmatprep.mubr.bf16.mxu0 %v1789
      %2456 = vmatmul.mubr.bf16.gmra.mrb[0].mxu0 %v668
      %v2457 = vpop.f32.mrb[0].mxu0
      %v2458 = vadd.f32 0.0, %v2457
      %v2459 = vpop.f32.mrb[0].mxu0
      %v2460 = vpop.f32.mrb[0].mxu0
      %v2461 = vadd.f32 0.0, %v2460
      %v2462 = vpop.f32.mrb[0].mxu0
      %2463 = vmatprep.mubr.bf16.mxu0 %v1791
      %2464 = vmatmul.mubr.bf16.gmra.mrb[0].mxu0 %v672
      %v2465 = vpop.f32.mrb[0].mxu0
      %v2466 = vadd.f32 0.0, %v2465
      %v2467 = vpop.f32.mrb[0].mxu0
      %v2468 = vpop.f32.mrb[0].mxu0
      %v2469 = vadd.f32 0.0, %v2468
      %v2470 = vpop.f32.mrb[0].mxu0
      %2471 = vmatprep.mubr.bf16.mxu0 %v1793
      %2472 = vmatmul.mubr.bf16.gmra.mrb[0].mxu0 %v676
      %v2473 = vpop.f32.mrb[0].mxu0
      %v2474 = vadd.f32 0.0, %v2473
      %v2475 = vpop.f32.mrb[0].mxu0
      %v2476 = vpop.f32.mrb[0].mxu0
      %v2477 = vadd.f32 0.0, %v2476
      %v2478 = vpop.f32.mrb[0].mxu0
      %2479 = vmatprep.mubr.bf16.mxu0 %v1795
      %2480 = vmatmul.mubr.bf16.gmra.mrb[0].mxu0 %v680
      %v2481 = vpop.f32.mrb[0].mxu0
      %v2482 = vadd.f32 0.0, %v2481
      %v2483 = vpop.f32.mrb[0].mxu0
      %v2484 = vpop.f32.mrb[0].mxu0
      %v2485 = vadd.f32 0.0, %v2484
      %v2486 = vpop.f32.mrb[0].mxu0
      %2487 = vmatprep.mubr.bf16.mxu0 %v1797
      %2488 = vmatmul.mubr.bf16.gmra.mrb[0].mxu0 %v684
      %v2489 = vpop.f32.mrb[0].mxu0
      %v2490 = vadd.f32 0.0, %v2489
      %v2491 = vpop.f32.mrb[0].mxu0
      %v2492 = vpop.f32.mrb[0].mxu0
      %v2493 = vadd.f32 0.0, %v2492
      %v2494 = vpop.f32.mrb[0].mxu0
      %2495 = vmatprep.mubr.bf16.mxu0 %v1799
      %2496 = vmatmul.mubr.bf16.gmra.mrb[0].mxu0 %v688
      %v2497 = vpop.f32.mrb[0].mxu0
      %v2498 = vadd.f32 0.0, %v2497
      %v2499 = vpop.f32.mrb[0].mxu0
      %v2500 = vpop.f32.mrb[0].mxu0
      %v2501 = vadd.f32 0.0, %v2500
      %v2502 = vpop.f32.mrb[0].mxu0
      %2503 = vmatprep.mubr.bf16.mxu0 %v1801
      %2504 = vmatmul.mubr.bf16.gmra.mrb[0].mxu0 %v692
      %v2505 = vpop.f32.mrb[0].mxu0
      %v2506 = vadd.f32 0.0, %v2505
      %v2507 = vpop.f32.mrb[0].mxu0
      %v2508 = vpop.f32.mrb[0].mxu0
      %v2509 = vadd.f32 0.0, %v2508
      %v2510 = vpop.f32.mrb[0].mxu0
      %2511 = vmatprep.mubr.bf16.mxu0 %v1803
      %2512 = vmatmul.mubr.bf16.gmra.mrb[0].mxu0 %v696
      %v2513 = vpop.f32.mrb[0].mxu0
      %v2514 = vadd.f32 0.0, %v2513
      %v2515 = vpop.f32.mrb[0].mxu0
      %v2516 = vpop.f32.mrb[0].mxu0
      %v2517 = vadd.f32 0.0, %v2516
      %v2518 = vpop.f32.mrb[0].mxu0
      %2519 = vmatprep.mubr.bf16.mxu0 %v1805
      %2520 = vmatmul.mubr.bf16.gmra.mrb[0].mxu0 %v700
      %v2521 = vpop.f32.mrb[0].mxu0
      %v2522 = vadd.f32 0.0, %v2521
      %v2523 = vpop.f32.mrb[0].mxu0
      %v2524 = vpop.f32.mrb[0].mxu0
      %v2525 = vadd.f32 0.0, %v2524
      %v2526 = vpop.f32.mrb[0].mxu0
      %2527 = vmatprep.mubr.bf16.mxu0 %v1807
      %2528 = vmatmul.mubr.bf16.gmra.mrb[0].mxu0 %v704
      %v2529 = vpop.f32.mrb[0].mxu0
      %v2530 = vadd.f32 0.0, %v2529
      %v2531 = vpop.f32.mrb[0].mxu0
      %v2532 = vpop.f32.mrb[0].mxu0
      %v2533 = vadd.f32 0.0, %v2532
      %v2534 = vpop.f32.mrb[0].mxu0
      %2535 = vmatprep.mubr.bf16.mxu0 %v1809
      %2536 = vmatmul.mubr.bf16.gmra.mrb[0].mxu0 %v708
      %v2537 = vpop.f32.mrb[0].mxu0
      %v2538 = vadd.f32 0.0, %v2537
      %v2539 = vpop.f32.mrb[0].mxu0
      %v2540 = vpop.f32.mrb[0].mxu0
      %v2541 = vadd.f32 0.0, %v2540
      %v2542 = vpop.f32.mrb[0].mxu0
      %2543 = vmatprep.mubr.bf16.mxu0 %v1811
      %2544 = vmatmul.mubr.bf16.gmra.mrb[0].mxu0 %v712
      %v2545 = vpop.f32.mrb[0].mxu0
      %v2546 = vadd.f32 0.0, %v2545
      %v2547 = vpop.f32.mrb[0].mxu0
      %v2548 = vpop.f32.mrb[0].mxu0
      %v2549 = vadd.f32 0.0, %v2548
      %v2550 = vpop.f32.mrb[0].mxu0
      %2551 = vmatprep.mubr.bf16.mxu0 %v1813
      %2552 = vmatmul.mubr.bf16.gmra.mrb[0].mxu0 %v716
      %v2553 = vpop.f32.mrb[0].mxu0
      %v2554 = vadd.f32 0.0, %v2553
      %v2555 = vpop.f32.mrb[0].mxu0
      %v2556 = vpop.f32.mrb[0].mxu0
      %v2557 = vadd.f32 0.0, %v2556
      %v2558 = vpop.f32.mrb[0].mxu0
      %2559 = vmatprep.mubr.bf16.mxu0 %v1815
      %2560 = vmatmul.mubr.bf16.gmra.mrb[0].mxu0 %v720
      %v2561 = vpop.f32.mrb[0].mxu0
      %v2562 = vadd.f32 0.0, %v2561
      %v2563 = vpop.f32.mrb[0].mxu0
      %v2564 = vpop.f32.mrb[0].mxu0
      %v2565 = vadd.f32 0.0, %v2564
      %v2566 = vpop.f32.mrb[0].mxu0
      %2567 = vmatprep.mubr.bf16.mxu0 %v2413
      %2568 = vmatmul.mubr.bf16.gmra.mrb[0].mxu0 %v724
      %v2569 = vpop.f32.mrb[0].mxu0
      %v2570 = vadd.f32 0.0, %v2569
      %v2571 = vpop.f32.mrb[0].mxu0
      %v2572 = vpop.f32.mrb[0].mxu0
      %v2573 = vadd.f32 0.0, %v2572
      %v2574 = vpop.f32.mrb[0].mxu0
      %2575 = vdwg.mxu0
      %v2576 = vadd.f32 %v2284, %v2450
      %v2577 = vadd.f32 %v2285, %v2453
      %v2578 = vadd.f32 %v2286, %v2458
      %v2579 = vadd.f32 %v2287, %v2461
      %v2580 = vadd.f32 %v2288, %v2466
      %v2581 = vadd.f32 %v2289, %v2469
      %v2582 = vadd.f32 %v2290, %v2474
      %v2583 = vadd.f32 %v2291, %v2477
      %v2584 = vadd.f32 %v2292, %v2482
      %v2585 = vadd.f32 %v2293, %v2485
      %v2586 = vadd.f32 %v2294, %v2490
      %v2587 = vadd.f32 %v2295, %v2493
      %v2588 = vadd.f32 %v2296, %v2498
      %v2589 = vadd.f32 %v2297, %v2501
      %v2590 = vadd.f32 %v2298, %v2506
      %v2591 = vadd.f32 %v2299, %v2509
      %v2592 = vadd.f32 %v2300, %v2514
      %v2593 = vadd.f32 %v2301, %v2517
      %v2594 = vadd.f32 %v2302, %v2522
      %v2595 = vadd.f32 %v2303, %v2525
      %v2596 = vadd.f32 %v2304, %v2530
      %v2597 = vadd.f32 %v2305, %v2533
      %v2598 = vadd.f32 %v2306, %v2538
      %v2599 = vadd.f32 %v2307, %v2541
      %v2600 = vadd.f32 %v2308, %v2546
      %v2601 = vadd.f32 %v2309, %v2549
      %v2602 = vadd.f32 %v2310, %v2554
      %v2603 = vadd.f32 %v2311, %v2557
      %v2604 = vadd.f32 %v2312, %v2562
      %v2605 = vadd.f32 %v2313, %v2565
      %v2606 = vadd.f32 %v2314, %v2570
      %v2607 = vadd.f32 %v2315, %v2573
      %s2608 = scalar_lea.vmem %s1, 384
      %v2609 = vld [vmem:[%s2608] sm:$0xf]
      %v2610 = vld [vmem:[%s2608 + $0x4] sm:$0xf]
      %v2611 = vld [vmem:[%s2608 + $0x8] sm:$0xf]
      %v2612 = vld [vmem:[%s2608 + $0xc] sm:$0xf]
      %v2613 = vld [vmem:[%s2608 + $0x10] sm:$0xf]
      %v2614 = vld [vmem:[%s2608 + $0x14] sm:$0xf]
      %v2615 = vld [vmem:[%s2608 + $0x18] sm:$0xf]
      %v2616 = vld [vmem:[%s2608 + $0x1c] sm:$0xf]
      %v2617 = vld [vmem:[%s2608 + $0x20] sm:$0xf]
      %v2618 = vld [vmem:[%s2608 + $0x24] sm:$0xf]
      %v2619 = vld [vmem:[%s2608 + $0x28] sm:$0xf]
      %v2620 = vld [vmem:[%s2608 + $0x2c] sm:$0xf]
      %v2621 = vld [vmem:[%s2608 + $0x30] sm:$0xf]
      %v2622 = vld [vmem:[%s2608 + $0x34] sm:$0xf]
      %v2623 = vld [vmem:[%s2608 + $0x38] sm:$0xf]
      %v2624 = vld [vmem:[%s2608 + $0x3c] sm:$0xf]
      %v2625 = vld [vmem:[%s2608 + $0x40] sm:$0xf]
      %v2626 = vld [vmem:[%s2608 + $0x44] sm:$0xf]
      %v2627 = vld [vmem:[%s2608 + $0x48] sm:$0xf]
      %v2628 = vld [vmem:[%s2608 + $0x4c] sm:$0xf]
      %v2629 = vld [vmem:[%s2608 + $0x50] sm:$0xf]
      %v2630 = vld [vmem:[%s2608 + $0x54] sm:$0xf]
      %v2631 = vld [vmem:[%s2608 + $0x58] sm:$0xf]
      %v2632 = vld [vmem:[%s2608 + $0x5c] sm:$0xf]
      %v2657 = vunpack.c.l.b16 %v2609
      %v2658 = vunpack.c.l.b16 %v2610
      %v2659 = vunpack.c.l.b16 %v2611
      %v2660 = vunpack.c.l.b16 %v2612
      %v2661 = vunpack.c.l.b16 %v2613
      %v2662 = vunpack.c.l.b16 %v2614
      %v2663 = vunpack.c.l.b16 %v2615
      %v2664 = vunpack.c.l.b16 %v2616
      %v2665 = vunpack.c.l.b16 %v2617
      %v2666 = vunpack.c.l.b16 %v2618
      %v2667 = vunpack.c.l.b16 %v2619
      %v2668 = vunpack.c.l.b16 %v2620
      %v2669 = vunpack.c.l.b16 %v2621
      %v2670 = vunpack.c.l.b16 %v2622
      %v2671 = vunpack.c.l.b16 %v2623
      %v2672 = vunpack.c.l.b16 %v2624
      %v2673 = vunpack.c.l.b16 %v2625
      %v2674 = vunpack.c.l.b16 %v2626
      %v2675 = vunpack.c.l.b16 %v2627
      %v2676 = vunpack.c.l.b16 %v2628
      %v2677 = vunpack.c.l.b16 %v2629
      %v2678 = vunpack.c.l.b16 %v2630
      %v2679 = vunpack.c.l.b16 %v2631
      %v2680 = vunpack.c.l.b16 %v2632
      %v2681 = vpack.c.b16 %v2658, %v2657
      %v2682 = vpack.c.b16 %v2660, %v2659
      %v2683 = vpack.c.b16 %v2662, %v2661
      %v2684 = vpack.c.b16 %v2664, %v2663
      %v2685 = vpack.c.b16 %v2666, %v2665
      %v2686 = vpack.c.b16 %v2668, %v2667
      %v2687 = vpack.c.b16 %v2670, %v2669
      %v2688 = vpack.c.b16 %v2672, %v2671
      %v2689 = vpack.c.b16 %v2674, %v2673
      %v2690 = vpack.c.b16 %v2676, %v2675
      %v2691 = vpack.c.b16 %v2678, %v2677
      %v2692 = vpack.c.b16 %v2680, %v2679
      %v2706 = vsel %vm172, %v1140, 0
      %2708 = vmatprep.subr.bf16.mxu0 0
      %2709 = vmatpush1.bf16.msra.mxu0 %v2681
      %2710 = vmatprep.subr.bf16.mxu0 0
      %2711 = vmatpush1.bf16.msra.mxu0 %v2682
      %2712 = vmatprep.subr.bf16.mxu0 0
      %2713 = vmatpush1.bf16.msra.mxu0 %v2683
      %2714 = vmatprep.subr.bf16.mxu0 0
      %2715 = vmatpush1.bf16.msra.mxu0 %v2684
      %2716 = vmatprep.subr.bf16.mxu0 0
      %2717 = vmatpush1.bf16.msra.mxu0 %v2685
      %2718 = vmatprep.subr.bf16.mxu0 0
      %2719 = vmatpush1.bf16.msra.mxu0 %v2686
      %2720 = vmatprep.subr.bf16.mxu0 0
      %2721 = vmatpush1.bf16.msra.mxu0 %v2687
      %2722 = vmatprep.subr.bf16.mxu0 0
      %2723 = vmatpush1.bf16.msra.mxu0 %v2688
      %2724 = vmatprep.subr.bf16.mxu0 0
      %2725 = vmatpush1.bf16.msra.mxu0 %v2689
      %2726 = vmatprep.subr.bf16.mxu0 0
      %2727 = vmatpush1.bf16.msra.mxu0 %v2690
      %2728 = vmatprep.subr.bf16.mxu0 0
      %2729 = vmatpush1.bf16.msra.mxu0 %v2691
      %2730 = vmatprep.subr.bf16.mxu0 0
      %2731 = vmatpush1.bf16.msra.mxu0 %v2692
      %2732 = vmatprep.subr.bf16.mxu0 0
      %2733 = vmatpush1.bf16.msra.mxu0 0
      %2734 = vmatprep.subr.bf16.mxu0 0
      %2735 = vmatpush1.bf16.msra.mxu0 0
      %2736 = vmatprep.subr.bf16.mxu0 0
      %2737 = vmatpush1.bf16.msra.mxu0 0
      %2738 = vmatprep.subr.bf16.mxu0 0
      %2739 = vmatpush1.bf16.msra.mxu0 0
      %2740 = vmatprep.mubr.bf16.mxu0 %v1508
      %2741 = vmatmul.mubr.bf16.gmra.mrb[0].mxu0 %v768
      %v2742 = vpop.f32.mrb[0].mxu0
      %v2743 = vadd.f32 0.0, %v2742
      %v2744 = vpop.f32.mrb[0].mxu0
      %v2745 = vpop.f32.mrb[0].mxu0
      %v2746 = vadd.f32 0.0, %v2745
      %v2747 = vpop.f32.mrb[0].mxu0
      %2748 = vmatprep.mubr.bf16.mxu0 %v1511
      %2749 = vmatmul.mubr.bf16.gmra.mrb[0].mxu0 %v792
      %v2750 = vpop.f32.mrb[0].mxu0
      %v2751 = vadd.f32 0.0, %v2750
      %v2752 = vpop.f32.mrb[0].mxu0
      %v2753 = vpop.f32.mrb[0].mxu0
      %v2754 = vadd.f32 0.0, %v2753
      %v2755 = vpop.f32.mrb[0].mxu0
      %2756 = vmatprep.mubr.bf16.mxu0 %v1514
      %2757 = vmatmul.mubr.bf16.gmra.mrb[0].mxu0 %v816
      %v2758 = vpop.f32.mrb[0].mxu0
      %v2759 = vadd.f32 0.0, %v2758
      %v2760 = vpop.f32.mrb[0].mxu0
      %v2761 = vpop.f32.mrb[0].mxu0
      %v2762 = vadd.f32 0.0, %v2761
      %v2763 = vpop.f32.mrb[0].mxu0
      %2764 = vmatprep.mubr.bf16.mxu0 %v1517
      %2765 = vmatmul.mubr.bf16.gmra.mrb[0].mxu0 %v840
      %v2766 = vpop.f32.mrb[0].mxu0
      %v2767 = vadd.f32 0.0, %v2766
      %v2768 = vpop.f32.mrb[0].mxu0
      %v2769 = vpop.f32.mrb[0].mxu0
      %v2770 = vadd.f32 0.0, %v2769
      %v2771 = vpop.f32.mrb[0].mxu0
      %2772 = vmatprep.mubr.bf16.mxu0 %v1520
      %2773 = vmatmul.mubr.bf16.gmra.mrb[0].mxu0 %v864
      %v2774 = vpop.f32.mrb[0].mxu0
      %v2775 = vadd.f32 0.0, %v2774
      %v2776 = vpop.f32.mrb[0].mxu0
      %v2777 = vpop.f32.mrb[0].mxu0
      %v2778 = vadd.f32 0.0, %v2777
      %v2779 = vpop.f32.mrb[0].mxu0
      %2780 = vmatprep.mubr.bf16.mxu0 %v1523
      %2781 = vmatmul.mubr.bf16.gmra.mrb[0].mxu0 %v888
      %v2782 = vpop.f32.mrb[0].mxu0
      %v2783 = vadd.f32 0.0, %v2782
      %v2784 = vpop.f32.mrb[0].mxu0
      %v2785 = vpop.f32.mrb[0].mxu0
      %v2786 = vadd.f32 0.0, %v2785
      %v2787 = vpop.f32.mrb[0].mxu0
      %2788 = vmatprep.mubr.bf16.mxu0 %v1526
      %2789 = vmatmul.mubr.bf16.gmra.mrb[0].mxu0 %v912
      %v2790 = vpop.f32.mrb[0].mxu0
      %v2791 = vadd.f32 0.0, %v2790
      %v2792 = vpop.f32.mrb[0].mxu0
      %v2793 = vpop.f32.mrb[0].mxu0
      %v2794 = vadd.f32 0.0, %v2793
      %v2795 = vpop.f32.mrb[0].mxu0
      %2796 = vmatprep.mubr.bf16.mxu0 %v1529
      %2797 = vmatmul.mubr.bf16.gmra.mrb[0].mxu0 %v936
      %v2798 = vpop.f32.mrb[0].mxu0
      %v2799 = vadd.f32 0.0, %v2798
      %v2800 = vpop.f32.mrb[0].mxu0
      %v2801 = vpop.f32.mrb[0].mxu0
      %v2802 = vadd.f32 0.0, %v2801
      %v2803 = vpop.f32.mrb[0].mxu0
      %2804 = vmatprep.mubr.bf16.mxu0 %v1532
      %2805 = vmatmul.mubr.bf16.gmra.mrb[0].mxu0 %v960
      %v2806 = vpop.f32.mrb[0].mxu0
      %v2807 = vadd.f32 0.0, %v2806
      %v2808 = vpop.f32.mrb[0].mxu0
      %v2809 = vpop.f32.mrb[0].mxu0
      %v2810 = vadd.f32 0.0, %v2809
      %v2811 = vpop.f32.mrb[0].mxu0
      %2812 = vmatprep.mubr.bf16.mxu0 %v1535
      %2813 = vmatmul.mubr.bf16.gmra.mrb[0].mxu0 %v984
      %v2814 = vpop.f32.mrb[0].mxu0
      %v2815 = vadd.f32 0.0, %v2814
      %v2816 = vpop.f32.mrb[0].mxu0
      %v2817 = vpop.f32.mrb[0].mxu0
      %v2818 = vadd.f32 0.0, %v2817
      %v2819 = vpop.f32.mrb[0].mxu0
      %2820 = vmatprep.mubr.bf16.mxu0 %v1538
      %2821 = vmatmul.mubr.bf16.gmra.mrb[0].mxu0 %v1008
      %v2822 = vpop.f32.mrb[0].mxu0
      %v2823 = vadd.f32 0.0, %v2822
      %v2824 = vpop.f32.mrb[0].mxu0
      %v2825 = vpop.f32.mrb[0].mxu0
      %v2826 = vadd.f32 0.0, %v2825
      %v2827 = vpop.f32.mrb[0].mxu0
      %2828 = vmatprep.mubr.bf16.mxu0 %v1541
      %2829 = vmatmul.mubr.bf16.gmra.mrb[0].mxu0 %v1032
      %v2830 = vpop.f32.mrb[0].mxu0
      %v2831 = vadd.f32 0.0, %v2830
      %v2832 = vpop.f32.mrb[0].mxu0
      %v2833 = vpop.f32.mrb[0].mxu0
      %v2834 = vadd.f32 0.0, %v2833
      %v2835 = vpop.f32.mrb[0].mxu0
      %2836 = vmatprep.mubr.bf16.mxu0 %v1544
      %2837 = vmatmul.mubr.bf16.gmra.mrb[0].mxu0 %v1056
      %v2838 = vpop.f32.mrb[0].mxu0
      %v2839 = vadd.f32 0.0, %v2838
      %v2840 = vpop.f32.mrb[0].mxu0
      %v2841 = vpop.f32.mrb[0].mxu0
      %v2842 = vadd.f32 0.0, %v2841
      %v2843 = vpop.f32.mrb[0].mxu0
      %2844 = vmatprep.mubr.bf16.mxu0 %v1547
      %2845 = vmatmul.mubr.bf16.gmra.mrb[0].mxu0 %v1080
      %v2846 = vpop.f32.mrb[0].mxu0
      %v2847 = vadd.f32 0.0, %v2846
      %v2848 = vpop.f32.mrb[0].mxu0
      %v2849 = vpop.f32.mrb[0].mxu0
      %v2850 = vadd.f32 0.0, %v2849
      %v2851 = vpop.f32.mrb[0].mxu0
      %2852 = vmatprep.mubr.bf16.mxu0 %v1550
      %2853 = vmatmul.mubr.bf16.gmra.mrb[0].mxu0 %v1104
      %v2854 = vpop.f32.mrb[0].mxu0
      %v2855 = vadd.f32 0.0, %v2854
      %v2856 = vpop.f32.mrb[0].mxu0
      %v2857 = vpop.f32.mrb[0].mxu0
      %v2858 = vadd.f32 0.0, %v2857
      %v2859 = vpop.f32.mrb[0].mxu0
      %2860 = vmatprep.mubr.bf16.mxu0 %v2706
      %2861 = vmatmul.mubr.bf16.gmra.mrb[0].mxu0 %v1128
      %v2862 = vpop.f32.mrb[0].mxu0
      %v2863 = vadd.f32 0.0, %v2862
      %v2864 = vpop.f32.mrb[0].mxu0
      %v2865 = vpop.f32.mrb[0].mxu0
      %v2866 = vadd.f32 0.0, %v2865
      %v2867 = vpop.f32.mrb[0].mxu0
      %2868 = vdwg.mxu0
      %v2869 = vadd.f32 %v2576, %v2743
      %v2870 = vadd.f32 %v2577, %v2746
      %v2871 = vadd.f32 %v2578, %v2751
      %v2872 = vadd.f32 %v2579, %v2754
      %v2873 = vadd.f32 %v2580, %v2759
      %v2874 = vadd.f32 %v2581, %v2762
      %v2875 = vadd.f32 %v2582, %v2767
      %v2876 = vadd.f32 %v2583, %v2770
      %v2877 = vadd.f32 %v2584, %v2775
      %v2878 = vadd.f32 %v2585, %v2778
      %v2879 = vadd.f32 %v2586, %v2783
      %v2880 = vadd.f32 %v2587, %v2786
      %v2881 = vadd.f32 %v2588, %v2791
      %v2882 = vadd.f32 %v2589, %v2794
      %v2883 = vadd.f32 %v2590, %v2799
      %v2884 = vadd.f32 %v2591, %v2802
      %v2885 = vadd.f32 %v2592, %v2807
      %v2886 = vadd.f32 %v2593, %v2810
      %v2887 = vadd.f32 %v2594, %v2815
      %v2888 = vadd.f32 %v2595, %v2818
      %v2889 = vadd.f32 %v2596, %v2823
      %v2890 = vadd.f32 %v2597, %v2826
      %v2891 = vadd.f32 %v2598, %v2831
      %v2892 = vadd.f32 %v2599, %v2834
      %v2893 = vadd.f32 %v2600, %v2839
      %v2894 = vadd.f32 %v2601, %v2842
      %v2895 = vadd.f32 %v2602, %v2847
      %v2896 = vadd.f32 %v2603, %v2850
      %v2897 = vadd.f32 %v2604, %v2855
      %v2898 = vadd.f32 %v2605, %v2858
      %v2899 = vadd.f32 %v2606, %v2863
      %v2900 = vadd.f32 %v2607, %v2866
      %s2901 = scalar_lea.vmem %s1, 480
      %v2902 = vld [vmem:[%s2901] sm:$0xf]
      %v2903 = vld [vmem:[%s2901 + $0x4] sm:$0xf]
      %v2904 = vld [vmem:[%s2901 + $0x8] sm:$0xf]
      %v2905 = vld [vmem:[%s2901 + $0xc] sm:$0xf]
      %v2906 = vld [vmem:[%s2901 + $0x10] sm:$0xf]
      %v2907 = vld [vmem:[%s2901 + $0x14] sm:$0xf]
      %v2908 = vld [vmem:[%s2901 + $0x18] sm:$0xf]
      %v2909 = vld [vmem:[%s2901 + $0x1c] sm:$0xf]
      %v2910 = vld [vmem:[%s2901 + $0x20] sm:$0xf]
      %v2911 = vld [vmem:[%s2901 + $0x24] sm:$0xf]
      %v2912 = vld [vmem:[%s2901 + $0x28] sm:$0xf]
      %v2913 = vld [vmem:[%s2901 + $0x2c] sm:$0xf]
      %v2914 = vld [vmem:[%s2901 + $0x30] sm:$0xf]
      %v2915 = vld [vmem:[%s2901 + $0x34] sm:$0xf]
      %v2916 = vld [vmem:[%s2901 + $0x38] sm:$0xf]
      %v2917 = vld [vmem:[%s2901 + $0x3c] sm:$0xf]
      %v2918 = vld [vmem:[%s2901 + $0x40] sm:$0xf]
      %v2919 = vld [vmem:[%s2901 + $0x44] sm:$0xf]
      %v2920 = vld [vmem:[%s2901 + $0x48] sm:$0xf]
      %v2921 = vld [vmem:[%s2901 + $0x4c] sm:$0xf]
      %v2922 = vld [vmem:[%s2901 + $0x50] sm:$0xf]
      %v2923 = vld [vmem:[%s2901 + $0x54] sm:$0xf]
      %v2924 = vld [vmem:[%s2901 + $0x58] sm:$0xf]
      %v2925 = vld [vmem:[%s2901 + $0x5c] sm:$0xf]
      %v2950 = vunpack.c.l.b16 %v2902
      %v2951 = vunpack.c.l.b16 %v2903
      %v2952 = vunpack.c.l.b16 %v2904
      %v2953 = vunpack.c.l.b16 %v2905
      %v2954 = vunpack.c.l.b16 %v2906
      %v2955 = vunpack.c.l.b16 %v2907
      %v2956 = vunpack.c.l.b16 %v2908
      %v2957 = vunpack.c.l.b16 %v2909
      %v2958 = vunpack.c.l.b16 %v2910
      %v2959 = vunpack.c.l.b16 %v2911
      %v2960 = vunpack.c.l.b16 %v2912
      %v2961 = vunpack.c.l.b16 %v2913
      %v2962 = vunpack.c.l.b16 %v2914
      %v2963 = vunpack.c.l.b16 %v2915
      %v2964 = vunpack.c.l.b16 %v2916
      %v2965 = vunpack.c.l.b16 %v2917
      %v2966 = vunpack.c.l.b16 %v2918
      %v2967 = vunpack.c.l.b16 %v2919
      %v2968 = vunpack.c.l.b16 %v2920
      %v2969 = vunpack.c.l.b16 %v2921
      %v2970 = vunpack.c.l.b16 %v2922
      %v2971 = vunpack.c.l.b16 %v2923
      %v2972 = vunpack.c.l.b16 %v2924
      %v2973 = vunpack.c.l.b16 %v2925
      %v2974 = vpack.c.b16 %v2951, %v2950
      %v2975 = vpack.c.b16 %v2953, %v2952
      %v2976 = vpack.c.b16 %v2955, %v2954
      %v2977 = vpack.c.b16 %v2957, %v2956
      %v2978 = vpack.c.b16 %v2959, %v2958
      %v2979 = vpack.c.b16 %v2961, %v2960
      %v2980 = vpack.c.b16 %v2963, %v2962
      %v2981 = vpack.c.b16 %v2965, %v2964
      %v2982 = vpack.c.b16 %v2967, %v2966
      %v2983 = vpack.c.b16 %v2969, %v2968
      %v2984 = vpack.c.b16 %v2971, %v2970
      %v2985 = vpack.c.b16 %v2973, %v2972
      %v2999 = vsel %vm172, %v1357, 0
      %3001 = vmatprep.subr.bf16.mxu0 0
      %3002 = vmatpush1.bf16.msra.mxu0 %v2974
      %3003 = vmatprep.subr.bf16.mxu0 0
      %3004 = vmatpush1.bf16.msra.mxu0 %v2975
      %3005 = vmatprep.subr.bf16.mxu0 0
      %3006 = vmatpush1.bf16.msra.mxu0 %v2976
      %3007 = vmatprep.subr.bf16.mxu0 0
      %3008 = vmatpush1.bf16.msra.mxu0 %v2977
      %3009 = vmatprep.subr.bf16.mxu0 0
      %3010 = vmatpush1.bf16.msra.mxu0 %v2978
      %3011 = vmatprep.subr.bf16.mxu0 0
      %3012 = vmatpush1.bf16.msra.mxu0 %v2979
      %3013 = vmatprep.subr.bf16.mxu0 0
      %3014 = vmatpush1.bf16.msra.mxu0 %v2980
      %3015 = vmatprep.subr.bf16.mxu0 0
      %3016 = vmatpush1.bf16.msra.mxu0 %v2981
      %3017 = vmatprep.subr.bf16.mxu0 0
      %3018 = vmatpush1.bf16.msra.mxu0 %v2982
      %3019 = vmatprep.subr.bf16.mxu0 0
      %3020 = vmatpush1.bf16.msra.mxu0 %v2983
      %3021 = vmatprep.subr.bf16.mxu0 0
      %3022 = vmatpush1.bf16.msra.mxu0 %v2984
      %3023 = vmatprep.subr.bf16.mxu0 0
      %3024 = vmatpush1.bf16.msra.mxu0 %v2985
      %3025 = vmatprep.subr.bf16.mxu0 0
      %3026 = vmatpush1.bf16.msra.mxu0 0
      %3027 = vmatprep.subr.bf16.mxu0 0
      %3028 = vmatpush1.bf16.msra.mxu0 0
      %3029 = vmatprep.subr.bf16.mxu0 0
      %3030 = vmatpush1.bf16.msra.mxu0 0
      %3031 = vmatprep.subr.bf16.mxu0 0
      %3032 = vmatpush1.bf16.msra.mxu0 0
      %3033 = vmatprep.mubr.bf16.mxu0 %v2079
      %3034 = vmatmul.mubr.bf16.gmra.mrb[0].mxu0 %v1264
      %v3035 = vpop.f32.mrb[0].mxu0
      %v3036 = vadd.f32 0.0, %v3035
      %v3037 = vpop.f32.mrb[0].mxu0
      %v3038 = vpop.f32.mrb[0].mxu0
      %v3039 = vadd.f32 0.0, %v3038
      %v3040 = vpop.f32.mrb[0].mxu0
      %3041 = vmatprep.mubr.bf16.mxu0 %v2082
      %3042 = vmatmul.mubr.bf16.gmra.mrb[0].mxu0 %v1270
      %v3043 = vpop.f32.mrb[0].mxu0
      %v3044 = vadd.f32 0.0, %v3043
      %v3045 = vpop.f32.mrb[0].mxu0
      %v3046 = vpop.f32.mrb[0].mxu0
      %v3047 = vadd.f32 0.0, %v3046
      %v3048 = vpop.f32.mrb[0].mxu0
      %3049 = vmatprep.mubr.bf16.mxu0 %v2085
      %3050 = vmatmul.mubr.bf16.gmra.mrb[0].mxu0 %v1276
      %v3051 = vpop.f32.mrb[0].mxu0
      %v3052 = vadd.f32 0.0, %v3051
      %v3053 = vpop.f32.mrb[0].mxu0
      %v3054 = vpop.f32.mrb[0].mxu0
      %v3055 = vadd.f32 0.0, %v3054
      %v3056 = vpop.f32.mrb[0].mxu0
      %3057 = vmatprep.mubr.bf16.mxu0 %v2088
      %3058 = vmatmul.mubr.bf16.gmra.mrb[0].mxu0 %v1282
      %v3059 = vpop.f32.mrb[0].mxu0
      %v3060 = vadd.f32 0.0, %v3059
      %v3061 = vpop.f32.mrb[0].mxu0
      %v3062 = vpop.f32.mrb[0].mxu0
      %v3063 = vadd.f32 0.0, %v3062
      %v3064 = vpop.f32.mrb[0].mxu0
      %3065 = vmatprep.mubr.bf16.mxu0 %v2091
      %3066 = vmatmul.mubr.bf16.gmra.mrb[0].mxu0 %v1288
      %v3067 = vpop.f32.mrb[0].mxu0
      %v3068 = vadd.f32 0.0, %v3067
      %v3069 = vpop.f32.mrb[0].mxu0
      %v3070 = vpop.f32.mrb[0].mxu0
      %v3071 = vadd.f32 0.0, %v3070
      %v3072 = vpop.f32.mrb[0].mxu0
      %3073 = vmatprep.mubr.bf16.mxu0 %v2094
      %3074 = vmatmul.mubr.bf16.gmra.mrb[0].mxu0 %v1294
      %v3075 = vpop.f32.mrb[0].mxu0
      %v3076 = vadd.f32 0.0, %v3075
      %v3077 = vpop.f32.mrb[0].mxu0
      %v3078 = vpop.f32.mrb[0].mxu0
      %v3079 = vadd.f32 0.0, %v3078
      %v3080 = vpop.f32.mrb[0].mxu0
      %3081 = vmatprep.mubr.bf16.mxu0 %v2097
      %3082 = vmatmul.mubr.bf16.gmra.mrb[0].mxu0 %v1300
      %v3083 = vpop.f32.mrb[0].mxu0
      %v3084 = vadd.f32 0.0, %v3083
      %v3085 = vpop.f32.mrb[0].mxu0
      %v3086 = vpop.f32.mrb[0].mxu0
      %v3087 = vadd.f32 0.0, %v3086
      %v3088 = vpop.f32.mrb[0].mxu0
      %3089 = vmatprep.mubr.bf16.mxu0 %v2100
      %3090 = vmatmul.mubr.bf16.gmra.mrb[0].mxu0 %v1306
      %v3091 = vpop.f32.mrb[0].mxu0
      %v3092 = vadd.f32 0.0, %v3091
      %v3093 = vpop.f32.mrb[0].mxu0
      %v3094 = vpop.f32.mrb[0].mxu0
      %v3095 = vadd.f32 0.0, %v3094
      %v3096 = vpop.f32.mrb[0].mxu0
      %3097 = vmatprep.mubr.bf16.mxu0 %v2103
      %3098 = vmatmul.mubr.bf16.gmra.mrb[0].mxu0 %v1312
      %v3099 = vpop.f32.mrb[0].mxu0
      %v3100 = vadd.f32 0.0, %v3099
      %v3101 = vpop.f32.mrb[0].mxu0
      %v3102 = vpop.f32.mrb[0].mxu0
      %v3103 = vadd.f32 0.0, %v3102
      %v3104 = vpop.f32.mrb[0].mxu0
      %3105 = vmatprep.mubr.bf16.mxu0 %v2106
      %3106 = vmatmul.mubr.bf16.gmra.mrb[0].mxu0 %v1318
      %v3107 = vpop.f32.mrb[0].mxu0
      %v3108 = vadd.f32 0.0, %v3107
      %v3109 = vpop.f32.mrb[0].mxu0
      %v3110 = vpop.f32.mrb[0].mxu0
      %v3111 = vadd.f32 0.0, %v3110
      %v3112 = vpop.f32.mrb[0].mxu0
      %3113 = vmatprep.mubr.bf16.mxu0 %v2109
      %3114 = vmatmul.mubr.bf16.gmra.mrb[0].mxu0 %v1324
      %v3115 = vpop.f32.mrb[0].mxu0
      %v3116 = vadd.f32 0.0, %v3115
      %v3117 = vpop.f32.mrb[0].mxu0
      %v3118 = vpop.f32.mrb[0].mxu0
      %v3119 = vadd.f32 0.0, %v3118
      %v3120 = vpop.f32.mrb[0].mxu0
      %3121 = vmatprep.mubr.bf16.mxu0 %v2112
      %3122 = vmatmul.mubr.bf16.gmra.mrb[0].mxu0 %v1330
      %v3123 = vpop.f32.mrb[0].mxu0
      %v3124 = vadd.f32 0.0, %v3123
      %v3125 = vpop.f32.mrb[0].mxu0
      %v3126 = vpop.f32.mrb[0].mxu0
      %v3127 = vadd.f32 0.0, %v3126
      %v3128 = vpop.f32.mrb[0].mxu0
      %3129 = vmatprep.mubr.bf16.mxu0 %v2115
      %3130 = vmatmul.mubr.bf16.gmra.mrb[0].mxu0 %v1336
      %v3131 = vpop.f32.mrb[0].mxu0
      %v3132 = vadd.f32 0.0, %v3131
      %v3133 = vpop.f32.mrb[0].mxu0
      %v3134 = vpop.f32.mrb[0].mxu0
      %v3135 = vadd.f32 0.0, %v3134
      %v3136 = vpop.f32.mrb[0].mxu0
      %3137 = vmatprep.mubr.bf16.mxu0 %v2118
      %3138 = vmatmul.mubr.bf16.gmra.mrb[0].mxu0 %v1342
      %v3139 = vpop.f32.mrb[0].mxu0
      %v3140 = vadd.f32 0.0, %v3139
      %v3141 = vpop.f32.mrb[0].mxu0
      %v3142 = vpop.f32.mrb[0].mxu0
      %v3143 = vadd.f32 0.0, %v3142
      %v3144 = vpop.f32.mrb[0].mxu0
      %3145 = vmatprep.mubr.bf16.mxu0 %v2121
      %3146 = vmatmul.mubr.bf16.gmra.mrb[0].mxu0 %v1348
      %v3147 = vpop.f32.mrb[0].mxu0
      %v3148 = vadd.f32 0.0, %v3147
      %v3149 = vpop.f32.mrb[0].mxu0
      %v3150 = vpop.f32.mrb[0].mxu0
      %v3151 = vadd.f32 0.0, %v3150
      %v3152 = vpop.f32.mrb[0].mxu0
      %3153 = vmatprep.mubr.bf16.mxu0 %v2999
      %3154 = vmatmul.mubr.bf16.gmra.mrb[0].mxu0 %v1354
      %v3155 = vpop.f32.mrb[0].mxu0
      %v3156 = vadd.f32 0.0, %v3155
      %v3157 = vpop.f32.mrb[0].mxu0
      %v3158 = vpop.f32.mrb[0].mxu0
      %v3159 = vadd.f32 0.0, %v3158
      %v3160 = vpop.f32.mrb[0].mxu0
      %3161 = vdwg.mxu0
      %v3162 = vadd.f32 %v2869, %v3036
      %v3163 = vadd.f32 %v2870, %v3039
      %v3164 = vadd.f32 %v2871, %v3044
      %v3165 = vadd.f32 %v2872, %v3047
      %v3166 = vadd.f32 %v2873, %v3052
      %v3167 = vadd.f32 %v2874, %v3055
      %v3168 = vadd.f32 %v2875, %v3060
      %v3169 = vadd.f32 %v2876, %v3063
      %v3170 = vadd.f32 %v2877, %v3068
      %v3171 = vadd.f32 %v2878, %v3071
      %v3172 = vadd.f32 %v2879, %v3076
      %v3173 = vadd.f32 %v2880, %v3079
      %v3174 = vadd.f32 %v2881, %v3084
      %v3175 = vadd.f32 %v2882, %v3087
      %v3176 = vadd.f32 %v2883, %v3092
      %v3177 = vadd.f32 %v2884, %v3095
      %v3178 = vadd.f32 %v2885, %v3100
      %v3179 = vadd.f32 %v2886, %v3103
      %v3180 = vadd.f32 %v2887, %v3108
      %v3181 = vadd.f32 %v2888, %v3111
      %v3182 = vadd.f32 %v2889, %v3116
      %v3183 = vadd.f32 %v2890, %v3119
      %v3184 = vadd.f32 %v2891, %v3124
      %v3185 = vadd.f32 %v2892, %v3127
      %v3186 = vadd.f32 %v2893, %v3132
      %v3187 = vadd.f32 %v2894, %v3135
      %v3188 = vadd.f32 %v2895, %v3140
      %v3189 = vadd.f32 %v2896, %v3143
      %v3190 = vadd.f32 %v2897, %v3148
      %v3191 = vadd.f32 %v2898, %v3151
      %v3192 = vadd.f32 %v2899, %v3156
      %v3193 = vadd.f32 %v2900, %v3159
      %s3194 = scalar_lea.vmem %s1, 576
      %v3195 = vld [vmem:[%s3194] sm:$0xf]
      %v3196 = vld [vmem:[%s3194 + $0x4] sm:$0xf]
      %v3197 = vld [vmem:[%s3194 + $0x8] sm:$0xf]
      %v3198 = vld [vmem:[%s3194 + $0xc] sm:$0xf]
      %v3199 = vld [vmem:[%s3194 + $0x10] sm:$0xf]
      %v3200 = vld [vmem:[%s3194 + $0x14] sm:$0xf]
      %v3201 = vld [vmem:[%s3194 + $0x18] sm:$0xf]
      %v3202 = vld [vmem:[%s3194 + $0x1c] sm:$0xf]
      %v3203 = vld [vmem:[%s3194 + $0x20] sm:$0xf]
      %v3204 = vld [vmem:[%s3194 + $0x24] sm:$0xf]
      %v3205 = vld [vmem:[%s3194 + $0x28] sm:$0xf]
      %v3206 = vld [vmem:[%s3194 + $0x2c] sm:$0xf]
      %v3207 = vld [vmem:[%s3194 + $0x30] sm:$0xf]
      %v3208 = vld [vmem:[%s3194 + $0x34] sm:$0xf]
      %v3209 = vld [vmem:[%s3194 + $0x38] sm:$0xf]
      %v3210 = vld [vmem:[%s3194 + $0x3c] sm:$0xf]
      %v3211 = vld [vmem:[%s3194 + $0x40] sm:$0xf]
      %v3212 = vld [vmem:[%s3194 + $0x44] sm:$0xf]
      %v3213 = vld [vmem:[%s3194 + $0x48] sm:$0xf]
      %v3214 = vld [vmem:[%s3194 + $0x4c] sm:$0xf]
      %v3215 = vld [vmem:[%s3194 + $0x50] sm:$0xf]
      %v3216 = vld [vmem:[%s3194 + $0x54] sm:$0xf]
      %v3217 = vld [vmem:[%s3194 + $0x58] sm:$0xf]
      %v3218 = vld [vmem:[%s3194 + $0x5c] sm:$0xf]
      %v3243 = vunpack.c.l.b16 %v3195
      %v3244 = vunpack.c.l.b16 %v3196
      %v3245 = vunpack.c.l.b16 %v3197
      %v3246 = vunpack.c.l.b16 %v3198
      %v3247 = vunpack.c.l.b16 %v3199
      %v3248 = vunpack.c.l.b16 %v3200
      %v3249 = vunpack.c.l.b16 %v3201
      %v3250 = vunpack.c.l.b16 %v3202
      %v3251 = vunpack.c.l.b16 %v3203
      %v3252 = vunpack.c.l.b16 %v3204
      %v3253 = vunpack.c.l.b16 %v3205
      %v3254 = vunpack.c.l.b16 %v3206
      %v3255 = vunpack.c.l.b16 %v3207
      %v3256 = vunpack.c.l.b16 %v3208
      %v3257 = vunpack.c.l.b16 %v3209
      %v3258 = vunpack.c.l.b16 %v3210
      %v3259 = vunpack.c.l.b16 %v3211
      %v3260 = vunpack.c.l.b16 %v3212
      %v3261 = vunpack.c.l.b16 %v3213
      %v3262 = vunpack.c.l.b16 %v3214
      %v3263 = vunpack.c.l.b16 %v3215
      %v3264 = vunpack.c.l.b16 %v3216
      %v3265 = vunpack.c.l.b16 %v3217
      %v3266 = vunpack.c.l.b16 %v3218
      %v3267 = vpack.c.b16 %v3244, %v3243
      %v3268 = vpack.c.b16 %v3246, %v3245
      %v3269 = vpack.c.b16 %v3248, %v3247
      %v3270 = vpack.c.b16 %v3250, %v3249
      %v3271 = vpack.c.b16 %v3252, %v3251
      %v3272 = vpack.c.b16 %v3254, %v3253
      %v3273 = vpack.c.b16 %v3256, %v3255
      %v3274 = vpack.c.b16 %v3258, %v3257
      %v3275 = vpack.c.b16 %v3260, %v3259
      %v3276 = vpack.c.b16 %v3262, %v3261
      %v3277 = vpack.c.b16 %v3264, %v3263
      %v3278 = vpack.c.b16 %v3266, %v3265
      %v3291 = vsel %vm172, %v729, 0
      %3293 = vmatprep.subr.bf16.mxu0 0
      %3294 = vmatpush1.bf16.msra.mxu0 %v3267
      %3295 = vmatprep.subr.bf16.mxu0 0
      %3296 = vmatpush1.bf16.msra.mxu0 %v3268
      %3297 = vmatprep.subr.bf16.mxu0 0
      %3298 = vmatpush1.bf16.msra.mxu0 %v3269
      %3299 = vmatprep.subr.bf16.mxu0 0
      %3300 = vmatpush1.bf16.msra.mxu0 %v3270
      %3301 = vmatprep.subr.bf16.mxu0 0
      %3302 = vmatpush1.bf16.msra.mxu0 %v3271
      %3303 = vmatprep.subr.bf16.mxu0 0
      %3304 = vmatpush1.bf16.msra.mxu0 %v3272
      %3305 = vmatprep.subr.bf16.mxu0 0
      %3306 = vmatpush1.bf16.msra.mxu0 %v3273
      %3307 = vmatprep.subr.bf16.mxu0 0
      %3308 = vmatpush1.bf16.msra.mxu0 %v3274
      %3309 = vmatprep.subr.bf16.mxu0 0
      %3310 = vmatpush1.bf16.msra.mxu0 %v3275
      %3311 = vmatprep.subr.bf16.mxu0 0
      %3312 = vmatpush1.bf16.msra.mxu0 %v3276
      %3313 = vmatprep.subr.bf16.mxu0 0
      %3314 = vmatpush1.bf16.msra.mxu0 %v3277
      %3315 = vmatprep.subr.bf16.mxu0 0
      %3316 = vmatpush1.bf16.msra.mxu0 %v3278
      %3317 = vmatprep.subr.bf16.mxu0 0
      %3318 = vmatpush1.bf16.msra.mxu0 0
      %3319 = vmatprep.subr.bf16.mxu0 0
      %3320 = vmatpush1.bf16.msra.mxu0 0
      %3321 = vmatprep.subr.bf16.mxu0 0
      %3322 = vmatpush1.bf16.msra.mxu0 0
      %3323 = vmatprep.subr.bf16.mxu0 0
      %3324 = vmatpush1.bf16.msra.mxu0 0
      %3325 = vmatprep.mubr.bf16.mxu0 %v1789
      %3326 = vmatmul.mubr.bf16.gmra.mrb[0].mxu0 %v668
      %v3327 = vpop.f32.mrb[0].mxu0
      %v3328 = vadd.f32 0.0, %v3327
      %v3329 = vpop.f32.mrb[0].mxu0
      %v3330 = vpop.f32.mrb[0].mxu0
      %v3331 = vadd.f32 0.0, %v3330
      %v3332 = vpop.f32.mrb[0].mxu0
      %3333 = vmatprep.mubr.bf16.mxu0 %v1791
      %3334 = vmatmul.mubr.bf16.gmra.mrb[0].mxu0 %v672
      %v3335 = vpop.f32.mrb[0].mxu0
      %v3336 = vadd.f32 0.0, %v3335
      %v3337 = vpop.f32.mrb[0].mxu0
      %v3338 = vpop.f32.mrb[0].mxu0
      %v3339 = vadd.f32 0.0, %v3338
      %v3340 = vpop.f32.mrb[0].mxu0
      %3341 = vmatprep.mubr.bf16.mxu0 %v1793
      %3342 = vmatmul.mubr.bf16.gmra.mrb[0].mxu0 %v676
      %v3343 = vpop.f32.mrb[0].mxu0
      %v3344 = vadd.f32 0.0, %v3343
      %v3345 = vpop.f32.mrb[0].mxu0
      %v3346 = vpop.f32.mrb[0].mxu0
      %v3347 = vadd.f32 0.0, %v3346
      %v3348 = vpop.f32.mrb[0].mxu0
      %3349 = vmatprep.mubr.bf16.mxu0 %v1795
      %3350 = vmatmul.mubr.bf16.gmra.mrb[0].mxu0 %v680
      %v3351 = vpop.f32.mrb[0].mxu0
      %v3352 = vadd.f32 0.0, %v3351
      %v3353 = vpop.f32.mrb[0].mxu0
      %v3354 = vpop.f32.mrb[0].mxu0
      %v3355 = vadd.f32 0.0, %v3354
      %v3356 = vpop.f32.mrb[0].mxu0
      %3357 = vmatprep.mubr.bf16.mxu0 %v1797
      %3358 = vmatmul.mubr.bf16.gmra.mrb[0].mxu0 %v684
      %v3359 = vpop.f32.mrb[0].mxu0
      %v3360 = vadd.f32 0.0, %v3359
      %v3361 = vpop.f32.mrb[0].mxu0
      %v3362 = vpop.f32.mrb[0].mxu0
      %v3363 = vadd.f32 0.0, %v3362
      %v3364 = vpop.f32.mrb[0].mxu0
      %3365 = vmatprep.mubr.bf16.mxu0 %v1799
      %3366 = vmatmul.mubr.bf16.gmra.mrb[0].mxu0 %v688
      %v3367 = vpop.f32.mrb[0].mxu0
      %v3368 = vadd.f32 0.0, %v3367
      %v3369 = vpop.f32.mrb[0].mxu0
      %v3370 = vpop.f32.mrb[0].mxu0
      %v3371 = vadd.f32 0.0, %v3370
      %v3372 = vpop.f32.mrb[0].mxu0
      %3373 = vmatprep.mubr.bf16.mxu0 %v1801
      %3374 = vmatmul.mubr.bf16.gmra.mrb[0].mxu0 %v692
      %v3375 = vpop.f32.mrb[0].mxu0
      %v3376 = vadd.f32 0.0, %v3375
      %v3377 = vpop.f32.mrb[0].mxu0
      %v3378 = vpop.f32.mrb[0].mxu0
      %v3379 = vadd.f32 0.0, %v3378
      %v3380 = vpop.f32.mrb[0].mxu0
      %3381 = vmatprep.mubr.bf16.mxu0 %v1803
      %3382 = vmatmul.mubr.bf16.gmra.mrb[0].mxu0 %v696
      %v3383 = vpop.f32.mrb[0].mxu0
      %v3384 = vadd.f32 0.0, %v3383
      %v3385 = vpop.f32.mrb[0].mxu0
      %v3386 = vpop.f32.mrb[0].mxu0
      %v3387 = vadd.f32 0.0, %v3386
      %v3388 = vpop.f32.mrb[0].mxu0
      %3389 = vmatprep.mubr.bf16.mxu0 %v1805
      %3390 = vmatmul.mubr.bf16.gmra.mrb[0].mxu0 %v700
      %v3391 = vpop.f32.mrb[0].mxu0
      %v3392 = vadd.f32 0.0, %v3391
      %v3393 = vpop.f32.mrb[0].mxu0
      %v3394 = vpop.f32.mrb[0].mxu0
      %v3395 = vadd.f32 0.0, %v3394
      %v3396 = vpop.f32.mrb[0].mxu0
      %3397 = vmatprep.mubr.bf16.mxu0 %v1807
      %3398 = vmatmul.mubr.bf16.gmra.mrb[0].mxu0 %v704
      %v3399 = vpop.f32.mrb[0].mxu0
      %v3400 = vadd.f32 0.0, %v3399
      %v3401 = vpop.f32.mrb[0].mxu0
      %v3402 = vpop.f32.mrb[0].mxu0
      %v3403 = vadd.f32 0.0, %v3402
      %v3404 = vpop.f32.mrb[0].mxu0
      %3405 = vmatprep.mubr.bf16.mxu0 %v1809
      %3406 = vmatmul.mubr.bf16.gmra.mrb[0].mxu0 %v708
      %v3407 = vpop.f32.mrb[0].mxu0
      %v3408 = vadd.f32 0.0, %v3407
      %v3409 = vpop.f32.mrb[0].mxu0
      %v3410 = vpop.f32.mrb[0].mxu0
      %v3411 = vadd.f32 0.0, %v3410
      %v3412 = vpop.f32.mrb[0].mxu0
      %3413 = vmatprep.mubr.bf16.mxu0 %v1811
      %3414 = vmatmul.mubr.bf16.gmra.mrb[0].mxu0 %v712
      %v3415 = vpop.f32.mrb[0].mxu0
      %v3416 = vadd.f32 0.0, %v3415
      %v3417 = vpop.f32.mrb[0].mxu0
      %v3418 = vpop.f32.mrb[0].mxu0
      %v3419 = vadd.f32 0.0, %v3418
      %v3420 = vpop.f32.mrb[0].mxu0
      %3421 = vmatprep.mubr.bf16.mxu0 %v1813
      %3422 = vmatmul.mubr.bf16.gmra.mrb[0].mxu0 %v716
      %v3423 = vpop.f32.mrb[0].mxu0
      %v3424 = vadd.f32 0.0, %v3423
      %v3425 = vpop.f32.mrb[0].mxu0
      %v3426 = vpop.f32.mrb[0].mxu0
      %v3427 = vadd.f32 0.0, %v3426
      %v3428 = vpop.f32.mrb[0].mxu0
      %3429 = vmatprep.mubr.bf16.mxu0 %v1815
      %3430 = vmatmul.mubr.bf16.gmra.mrb[0].mxu0 %v720
      %v3431 = vpop.f32.mrb[0].mxu0
      %v3432 = vadd.f32 0.0, %v3431
      %v3433 = vpop.f32.mrb[0].mxu0
      %v3434 = vpop.f32.mrb[0].mxu0
      %v3435 = vadd.f32 0.0, %v3434
      %v3436 = vpop.f32.mrb[0].mxu0
      %3437 = vmatprep.mubr.bf16.mxu0 %v2413
      %3438 = vmatmul.mubr.bf16.gmra.mrb[0].mxu0 %v724
      %v3439 = vpop.f32.mrb[0].mxu0
      %v3440 = vadd.f32 0.0, %v3439
      %v3441 = vpop.f32.mrb[0].mxu0
      %v3442 = vpop.f32.mrb[0].mxu0
      %v3443 = vadd.f32 0.0, %v3442
      %v3444 = vpop.f32.mrb[0].mxu0
      %3445 = vmatprep.mubr.bf16.mxu0 %v3291
      %3446 = vmatmul.mubr.bf16.gmra.mrb[0].mxu0 %v728
      %v3447 = vpop.f32.mrb[0].mxu0
      %v3448 = vadd.f32 0.0, %v3447
      %v3449 = vpop.f32.mrb[0].mxu0
      %v3450 = vpop.f32.mrb[0].mxu0
      %v3451 = vadd.f32 0.0, %v3450
      %v3452 = vpop.f32.mrb[0].mxu0
      %3453 = vdwg.mxu0
      %v3454 = vadd.f32 %v3162, %v3328
      %v3455 = vadd.f32 %v3163, %v3331
      %v3456 = vadd.f32 %v3164, %v3336
      %v3457 = vadd.f32 %v3165, %v3339
      %v3458 = vadd.f32 %v3166, %v3344
      %v3459 = vadd.f32 %v3167, %v3347
      %v3460 = vadd.f32 %v3168, %v3352
      %v3461 = vadd.f32 %v3169, %v3355
      %v3462 = vadd.f32 %v3170, %v3360
      %v3463 = vadd.f32 %v3171, %v3363
      %v3464 = vadd.f32 %v3172, %v3368
      %v3465 = vadd.f32 %v3173, %v3371
      %v3466 = vadd.f32 %v3174, %v3376
      %v3467 = vadd.f32 %v3175, %v3379
      %v3468 = vadd.f32 %v3176, %v3384
      %v3469 = vadd.f32 %v3177, %v3387
      %v3470 = vadd.f32 %v3178, %v3392
      %v3471 = vadd.f32 %v3179, %v3395
      %v3472 = vadd.f32 %v3180, %v3400
      %v3473 = vadd.f32 %v3181, %v3403
      %v3474 = vadd.f32 %v3182, %v3408
      %v3475 = vadd.f32 %v3183, %v3411
      %v3476 = vadd.f32 %v3184, %v3416
      %v3477 = vadd.f32 %v3185, %v3419
      %v3478 = vadd.f32 %v3186, %v3424
      %v3479 = vadd.f32 %v3187, %v3427
      %v3480 = vadd.f32 %v3188, %v3432
      %v3481 = vadd.f32 %v3189, %v3435
      %v3482 = vadd.f32 %v3190, %v3440
      %v3483 = vadd.f32 %v3191, %v3443
      %v3484 = vadd.f32 %v3192, %v3448
      %v3485 = vadd.f32 %v3193, %v3451
      %s3486 = scalar_lea.vmem %s1, 672
      %v3487 = vld [vmem:[%s3486] sm:$0xf]
      %v3488 = vld [vmem:[%s3486 + $0x4] sm:$0xf]
      %v3489 = vld [vmem:[%s3486 + $0x8] sm:$0xf]
      %v3490 = vld [vmem:[%s3486 + $0xc] sm:$0xf]
      %v3491 = vld [vmem:[%s3486 + $0x10] sm:$0xf]
      %v3492 = vld [vmem:[%s3486 + $0x14] sm:$0xf]
      %v3493 = vld [vmem:[%s3486 + $0x18] sm:$0xf]
      %v3494 = vld [vmem:[%s3486 + $0x1c] sm:$0xf]
      %v3495 = vld [vmem:[%s3486 + $0x20] sm:$0xf]
      %v3496 = vld [vmem:[%s3486 + $0x24] sm:$0xf]
      %v3497 = vld [vmem:[%s3486 + $0x28] sm:$0xf]
      %v3498 = vld [vmem:[%s3486 + $0x2c] sm:$0xf]
      %v3499 = vld [vmem:[%s3486 + $0x30] sm:$0xf]
      %v3500 = vld [vmem:[%s3486 + $0x34] sm:$0xf]
      %v3501 = vld [vmem:[%s3486 + $0x38] sm:$0xf]
      %v3502 = vld [vmem:[%s3486 + $0x3c] sm:$0xf]
      %v3503 = vld [vmem:[%s3486 + $0x40] sm:$0xf]
      %v3504 = vld [vmem:[%s3486 + $0x44] sm:$0xf]
      %v3505 = vld [vmem:[%s3486 + $0x48] sm:$0xf]
      %v3506 = vld [vmem:[%s3486 + $0x4c] sm:$0xf]
      %v3507 = vld [vmem:[%s3486 + $0x50] sm:$0xf]
      %v3508 = vld [vmem:[%s3486 + $0x54] sm:$0xf]
      %v3509 = vld [vmem:[%s3486 + $0x58] sm:$0xf]
      %v3510 = vld [vmem:[%s3486 + $0x5c] sm:$0xf]
      %v3535 = vunpack.c.l.b16 %v3487
      %v3536 = vunpack.c.l.b16 %v3488
      %v3537 = vunpack.c.l.b16 %v3489
      %v3538 = vunpack.c.l.b16 %v3490
      %v3539 = vunpack.c.l.b16 %v3491
      %v3540 = vunpack.c.l.b16 %v3492
      %v3541 = vunpack.c.l.b16 %v3493
      %v3542 = vunpack.c.l.b16 %v3494
      %v3543 = vunpack.c.l.b16 %v3495
      %v3544 = vunpack.c.l.b16 %v3496
      %v3545 = vunpack.c.l.b16 %v3497
      %v3546 = vunpack.c.l.b16 %v3498
      %v3547 = vunpack.c.l.b16 %v3499
      %v3548 = vunpack.c.l.b16 %v3500
      %v3549 = vunpack.c.l.b16 %v3501
      %v3550 = vunpack.c.l.b16 %v3502
      %v3551 = vunpack.c.l.b16 %v3503
      %v3552 = vunpack.c.l.b16 %v3504
      %v3553 = vunpack.c.l.b16 %v3505
      %v3554 = vunpack.c.l.b16 %v3506
      %v3555 = vunpack.c.l.b16 %v3507
      %v3556 = vunpack.c.l.b16 %v3508
      %v3557 = vunpack.c.l.b16 %v3509
      %v3558 = vunpack.c.l.b16 %v3510
      %v3559 = vpack.c.b16 %v3536, %v3535
      %v3560 = vpack.c.b16 %v3538, %v3537
      %v3561 = vpack.c.b16 %v3540, %v3539
      %v3562 = vpack.c.b16 %v3542, %v3541
      %v3563 = vpack.c.b16 %v3544, %v3543
      %v3564 = vpack.c.b16 %v3546, %v3545
      %v3565 = vpack.c.b16 %v3548, %v3547
      %v3566 = vpack.c.b16 %v3550, %v3549
      %v3567 = vpack.c.b16 %v3552, %v3551
      %v3568 = vpack.c.b16 %v3554, %v3553
      %v3569 = vpack.c.b16 %v3556, %v3555
      %v3570 = vpack.c.b16 %v3558, %v3557
      %v3584 = vsel %vm172, %v1164, 0
      %3586 = vmatprep.subr.bf16.mxu0 0
      %3587 = vmatpush1.bf16.msra.mxu0 %v3559
      %3588 = vmatprep.subr.bf16.mxu0 0
      %3589 = vmatpush1.bf16.msra.mxu0 %v3560
      %3590 = vmatprep.subr.bf16.mxu0 0
      %3591 = vmatpush1.bf16.msra.mxu0 %v3561
      %3592 = vmatprep.subr.bf16.mxu0 0
      %3593 = vmatpush1.bf16.msra.mxu0 %v3562
      %3594 = vmatprep.subr.bf16.mxu0 0
      %3595 = vmatpush1.bf16.msra.mxu0 %v3563
      %3596 = vmatprep.subr.bf16.mxu0 0
      %3597 = vmatpush1.bf16.msra.mxu0 %v3564
      %3598 = vmatprep.subr.bf16.mxu0 0
      %3599 = vmatpush1.bf16.msra.mxu0 %v3565
      %3600 = vmatprep.subr.bf16.mxu0 0
      %3601 = vmatpush1.bf16.msra.mxu0 %v3566
      %3602 = vmatprep.subr.bf16.mxu0 0
      %3603 = vmatpush1.bf16.msra.mxu0 %v3567
      %3604 = vmatprep.subr.bf16.mxu0 0
      %3605 = vmatpush1.bf16.msra.mxu0 %v3568
      %3606 = vmatprep.subr.bf16.mxu0 0
      %3607 = vmatpush1.bf16.msra.mxu0 %v3569
      %3608 = vmatprep.subr.bf16.mxu0 0
      %3609 = vmatpush1.bf16.msra.mxu0 %v3570
      %3610 = vmatprep.subr.bf16.mxu0 0
      %3611 = vmatpush1.bf16.msra.mxu0 0
      %3612 = vmatprep.subr.bf16.mxu0 0
      %3613 = vmatpush1.bf16.msra.mxu0 0
      %3614 = vmatprep.subr.bf16.mxu0 0
      %3615 = vmatpush1.bf16.msra.mxu0 0
      %3616 = vmatprep.subr.bf16.mxu0 0
      %3617 = vmatpush1.bf16.msra.mxu0 0
      %3618 = vmatprep.mubr.bf16.mxu0 %v1511
      %3619 = vmatmul.mubr.bf16.gmra.mrb[0].mxu0 %v792
      %v3620 = vpop.f32.mrb[0].mxu0
      %v3621 = vadd.f32 0.0, %v3620
      %v3622 = vpop.f32.mrb[0].mxu0
      %v3623 = vpop.f32.mrb[0].mxu0
      %v3624 = vadd.f32 0.0, %v3623
      %v3625 = vpop.f32.mrb[0].mxu0
      %3626 = vmatprep.mubr.bf16.mxu0 %v1514
      %3627 = vmatmul.mubr.bf16.gmra.mrb[0].mxu0 %v816
      %v3628 = vpop.f32.mrb[0].mxu0
      %v3629 = vadd.f32 0.0, %v3628
      %v3630 = vpop.f32.mrb[0].mxu0
      %v3631 = vpop.f32.mrb[0].mxu0
      %v3632 = vadd.f32 0.0, %v3631
      %v3633 = vpop.f32.mrb[0].mxu0
      %3634 = vmatprep.mubr.bf16.mxu0 %v1517
      %3635 = vmatmul.mubr.bf16.gmra.mrb[0].mxu0 %v840
      %v3636 = vpop.f32.mrb[0].mxu0
      %v3637 = vadd.f32 0.0, %v3636
      %v3638 = vpop.f32.mrb[0].mxu0
      %v3639 = vpop.f32.mrb[0].mxu0
      %v3640 = vadd.f32 0.0, %v3639
      %v3641 = vpop.f32.mrb[0].mxu0
      %3642 = vmatprep.mubr.bf16.mxu0 %v1520
      %3643 = vmatmul.mubr.bf16.gmra.mrb[0].mxu0 %v864
      %v3644 = vpop.f32.mrb[0].mxu0
      %v3645 = vadd.f32 0.0, %v3644
      %v3646 = vpop.f32.mrb[0].mxu0
      %v3647 = vpop.f32.mrb[0].mxu0
      %v3648 = vadd.f32 0.0, %v3647
      %v3649 = vpop.f32.mrb[0].mxu0
      %3650 = vmatprep.mubr.bf16.mxu0 %v1523
      %3651 = vmatmul.mubr.bf16.gmra.mrb[0].mxu0 %v888
      %v3652 = vpop.f32.mrb[0].mxu0
      %v3653 = vadd.f32 0.0, %v3652
      %v3654 = vpop.f32.mrb[0].mxu0
      %v3655 = vpop.f32.mrb[0].mxu0
      %v3656 = vadd.f32 0.0, %v3655
      %v3657 = vpop.f32.mrb[0].mxu0
      %3658 = vmatprep.mubr.bf16.mxu0 %v1526
      %3659 = vmatmul.mubr.bf16.gmra.mrb[0].mxu0 %v912
      %v3660 = vpop.f32.mrb[0].mxu0
      %v3661 = vadd.f32 0.0, %v3660
      %v3662 = vpop.f32.mrb[0].mxu0
      %v3663 = vpop.f32.mrb[0].mxu0
      %v3664 = vadd.f32 0.0, %v3663
      %v3665 = vpop.f32.mrb[0].mxu0
      %3666 = vmatprep.mubr.bf16.mxu0 %v1529
      %3667 = vmatmul.mubr.bf16.gmra.mrb[0].mxu0 %v936
      %v3668 = vpop.f32.mrb[0].mxu0
      %v3669 = vadd.f32 0.0, %v3668
      %v3670 = vpop.f32.mrb[0].mxu0
      %v3671 = vpop.f32.mrb[0].mxu0
      %v3672 = vadd.f32 0.0, %v3671
      %v3673 = vpop.f32.mrb[0].mxu0
      %3674 = vmatprep.mubr.bf16.mxu0 %v1532
      %3675 = vmatmul.mubr.bf16.gmra.mrb[0].mxu0 %v960
      %v3676 = vpop.f32.mrb[0].mxu0
      %v3677 = vadd.f32 0.0, %v3676
      %v3678 = vpop.f32.mrb[0].mxu0
      %v3679 = vpop.f32.mrb[0].mxu0
      %v3680 = vadd.f32 0.0, %v3679
      %v3681 = vpop.f32.mrb[0].mxu0
      %3682 = vmatprep.mubr.bf16.mxu0 %v1535
      %3683 = vmatmul.mubr.bf16.gmra.mrb[0].mxu0 %v984
      %v3684 = vpop.f32.mrb[0].mxu0
      %v3685 = vadd.f32 0.0, %v3684
      %v3686 = vpop.f32.mrb[0].mxu0
      %v3687 = vpop.f32.mrb[0].mxu0
      %v3688 = vadd.f32 0.0, %v3687
      %v3689 = vpop.f32.mrb[0].mxu0
      %3690 = vmatprep.mubr.bf16.mxu0 %v1538
      %3691 = vmatmul.mubr.bf16.gmra.mrb[0].mxu0 %v1008
      %v3692 = vpop.f32.mrb[0].mxu0
      %v3693 = vadd.f32 0.0, %v3692
      %v3694 = vpop.f32.mrb[0].mxu0
      %v3695 = vpop.f32.mrb[0].mxu0
      %v3696 = vadd.f32 0.0, %v3695
      %v3697 = vpop.f32.mrb[0].mxu0
      %3698 = vmatprep.mubr.bf16.mxu0 %v1541
      %3699 = vmatmul.mubr.bf16.gmra.mrb[0].mxu0 %v1032
      %v3700 = vpop.f32.mrb[0].mxu0
      %v3701 = vadd.f32 0.0, %v3700
      %v3702 = vpop.f32.mrb[0].mxu0
      %v3703 = vpop.f32.mrb[0].mxu0
      %v3704 = vadd.f32 0.0, %v3703
      %v3705 = vpop.f32.mrb[0].mxu0
      %3706 = vmatprep.mubr.bf16.mxu0 %v1544
      %3707 = vmatmul.mubr.bf16.gmra.mrb[0].mxu0 %v1056
      %v3708 = vpop.f32.mrb[0].mxu0
      %v3709 = vadd.f32 0.0, %v3708
      %v3710 = vpop.f32.mrb[0].mxu0
      %v3711 = vpop.f32.mrb[0].mxu0
      %v3712 = vadd.f32 0.0, %v3711
      %v3713 = vpop.f32.mrb[0].mxu0
      %3714 = vmatprep.mubr.bf16.mxu0 %v1547
      %3715 = vmatmul.mubr.bf16.gmra.mrb[0].mxu0 %v1080
      %v3716 = vpop.f32.mrb[0].mxu0
      %v3717 = vadd.f32 0.0, %v3716
      %v3718 = vpop.f32.mrb[0].mxu0
      %v3719 = vpop.f32.mrb[0].mxu0
      %v3720 = vadd.f32 0.0, %v3719
      %v3721 = vpop.f32.mrb[0].mxu0
      %3722 = vmatprep.mubr.bf16.mxu0 %v1550
      %3723 = vmatmul.mubr.bf16.gmra.mrb[0].mxu0 %v1104
      %v3724 = vpop.f32.mrb[0].mxu0
      %v3725 = vadd.f32 0.0, %v3724
      %v3726 = vpop.f32.mrb[0].mxu0
      %v3727 = vpop.f32.mrb[0].mxu0
      %v3728 = vadd.f32 0.0, %v3727
      %v3729 = vpop.f32.mrb[0].mxu0
      %3730 = vmatprep.mubr.bf16.mxu0 %v2706
      %3731 = vmatmul.mubr.bf16.gmra.mrb[0].mxu0 %v1128
      %v3732 = vpop.f32.mrb[0].mxu0
      %v3733 = vadd.f32 0.0, %v3732
      %v3734 = vpop.f32.mrb[0].mxu0
      %v3735 = vpop.f32.mrb[0].mxu0
      %v3736 = vadd.f32 0.0, %v3735
      %v3737 = vpop.f32.mrb[0].mxu0
      %3738 = vmatprep.mubr.bf16.mxu0 %v3584
      %3739 = vmatmul.mubr.bf16.gmra.mrb[0].mxu0 %v1152
      %v3740 = vpop.f32.mrb[0].mxu0
      %v3741 = vadd.f32 0.0, %v3740
      %v3742 = vpop.f32.mrb[0].mxu0
      %v3743 = vpop.f32.mrb[0].mxu0
      %v3744 = vadd.f32 0.0, %v3743
      %v3745 = vpop.f32.mrb[0].mxu0
      %3746 = vdwg.mxu0
      %v3747 = vadd.f32 %v3454, %v3621
      %v3748 = vadd.f32 %v3455, %v3624
      %v3749 = vadd.f32 %v3456, %v3629
      %v3750 = vadd.f32 %v3457, %v3632
      %v3751 = vadd.f32 %v3458, %v3637
      %v3752 = vadd.f32 %v3459, %v3640
      %v3753 = vadd.f32 %v3460, %v3645
      %v3754 = vadd.f32 %v3461, %v3648
      %v3755 = vadd.f32 %v3462, %v3653
      %v3756 = vadd.f32 %v3463, %v3656
      %v3757 = vadd.f32 %v3464, %v3661
      %v3758 = vadd.f32 %v3465, %v3664
      %v3759 = vadd.f32 %v3466, %v3669
      %v3760 = vadd.f32 %v3467, %v3672
      %v3761 = vadd.f32 %v3468, %v3677
      %v3762 = vadd.f32 %v3469, %v3680
      %v3763 = vadd.f32 %v3470, %v3685
      %v3764 = vadd.f32 %v3471, %v3688
      %v3765 = vadd.f32 %v3472, %v3693
      %v3766 = vadd.f32 %v3473, %v3696
      %v3767 = vadd.f32 %v3474, %v3701
      %v3768 = vadd.f32 %v3475, %v3704
      %v3769 = vadd.f32 %v3476, %v3709
      %v3770 = vadd.f32 %v3477, %v3712
      %v3771 = vadd.f32 %v3478, %v3717
      %v3772 = vadd.f32 %v3479, %v3720
      %v3773 = vadd.f32 %v3480, %v3725
      %v3774 = vadd.f32 %v3481, %v3728
      %v3775 = vadd.f32 %v3482, %v3733
      %v3776 = vadd.f32 %v3483, %v3736
      %v3777 = vadd.f32 %v3484, %v3741
      %v3778 = vadd.f32 %v3485, %v3744
      %s3779 = scalar_lea.vmem %s1, 768
      %v3780 = vld [vmem:[%s3779] sm:$0xf]
      %v3781 = vld [vmem:[%s3779 + $0x4] sm:$0xf]
      %v3782 = vld [vmem:[%s3779 + $0x8] sm:$0xf]
      %v3783 = vld [vmem:[%s3779 + $0xc] sm:$0xf]
      %v3784 = vld [vmem:[%s3779 + $0x10] sm:$0xf]
      %v3785 = vld [vmem:[%s3779 + $0x14] sm:$0xf]
      %v3786 = vld [vmem:[%s3779 + $0x18] sm:$0xf]
      %v3787 = vld [vmem:[%s3779 + $0x1c] sm:$0xf]
      %v3788 = vld [vmem:[%s3779 + $0x20] sm:$0xf]
      %v3789 = vld [vmem:[%s3779 + $0x24] sm:$0xf]
      %v3790 = vld [vmem:[%s3779 + $0x28] sm:$0xf]
      %v3791 = vld [vmem:[%s3779 + $0x2c] sm:$0xf]
      %v3792 = vld [vmem:[%s3779 + $0x30] sm:$0xf]
      %v3793 = vld [vmem:[%s3779 + $0x34] sm:$0xf]
      %v3794 = vld [vmem:[%s3779 + $0x38] sm:$0xf]
      %v3795 = vld [vmem:[%s3779 + $0x3c] sm:$0xf]
      %v3796 = vld [vmem:[%s3779 + $0x40] sm:$0xf]
      %v3797 = vld [vmem:[%s3779 + $0x44] sm:$0xf]
      %v3798 = vld [vmem:[%s3779 + $0x48] sm:$0xf]
      %v3799 = vld [vmem:[%s3779 + $0x4c] sm:$0xf]
      %v3800 = vld [vmem:[%s3779 + $0x50] sm:$0xf]
      %v3801 = vld [vmem:[%s3779 + $0x54] sm:$0xf]
      %v3802 = vld [vmem:[%s3779 + $0x58] sm:$0xf]
      %v3803 = vld [vmem:[%s3779 + $0x5c] sm:$0xf]
      %v3828 = vunpack.c.l.b16 %v3780
      %v3829 = vunpack.c.l.b16 %v3781
      %v3830 = vunpack.c.l.b16 %v3782
      %v3831 = vunpack.c.l.b16 %v3783
      %v3832 = vunpack.c.l.b16 %v3784
      %v3833 = vunpack.c.l.b16 %v3785
      %v3834 = vunpack.c.l.b16 %v3786
      %v3835 = vunpack.c.l.b16 %v3787
      %v3836 = vunpack.c.l.b16 %v3788
      %v3837 = vunpack.c.l.b16 %v3789
      %v3838 = vunpack.c.l.b16 %v3790
      %v3839 = vunpack.c.l.b16 %v3791
      %v3840 = vunpack.c.l.b16 %v3792
      %v3841 = vunpack.c.l.b16 %v3793
      %v3842 = vunpack.c.l.b16 %v3794
      %v3843 = vunpack.c.l.b16 %v3795
      %v3844 = vunpack.c.l.b16 %v3796
      %v3845 = vunpack.c.l.b16 %v3797
      %v3846 = vunpack.c.l.b16 %v3798
      %v3847 = vunpack.c.l.b16 %v3799
      %v3848 = vunpack.c.l.b16 %v3800
      %v3849 = vunpack.c.l.b16 %v3801
      %v3850 = vunpack.c.l.b16 %v3802
      %v3851 = vunpack.c.l.b16 %v3803
      %v3852 = vpack.c.b16 %v3829, %v3828
      %v3853 = vpack.c.b16 %v3831, %v3830
      %v3854 = vpack.c.b16 %v3833, %v3832
      %v3855 = vpack.c.b16 %v3835, %v3834
      %v3856 = vpack.c.b16 %v3837, %v3836
      %v3857 = vpack.c.b16 %v3839, %v3838
      %v3858 = vpack.c.b16 %v3841, %v3840
      %v3859 = vpack.c.b16 %v3843, %v3842
      %v3860 = vpack.c.b16 %v3845, %v3844
      %v3861 = vpack.c.b16 %v3847, %v3846
      %v3862 = vpack.c.b16 %v3849, %v3848
      %v3863 = vpack.c.b16 %v3851, %v3850
      %v3877 = vsel %vm172, %v1363, 0
      %3879 = vmatprep.subr.bf16.mxu0 0
      %3880 = vmatpush1.bf16.msra.mxu0 %v3852
      %3881 = vmatprep.subr.bf16.mxu0 0
      %3882 = vmatpush1.bf16.msra.mxu0 %v3853
      %3883 = vmatprep.subr.bf16.mxu0 0
      %3884 = vmatpush1.bf16.msra.mxu0 %v3854
      %3885 = vmatprep.subr.bf16.mxu0 0
      %3886 = vmatpush1.bf16.msra.mxu0 %v3855
      %3887 = vmatprep.subr.bf16.mxu0 0
      %3888 = vmatpush1.bf16.msra.mxu0 %v3856
      %3889 = vmatprep.subr.bf16.mxu0 0
      %3890 = vmatpush1.bf16.msra.mxu0 %v3857
      %3891 = vmatprep.subr.bf16.mxu0 0
      %3892 = vmatpush1.bf16.msra.mxu0 %v3858
      %3893 = vmatprep.subr.bf16.mxu0 0
      %3894 = vmatpush1.bf16.msra.mxu0 %v3859
      %3895 = vmatprep.subr.bf16.mxu0 0
      %3896 = vmatpush1.bf16.msra.mxu0 %v3860
      %3897 = vmatprep.subr.bf16.mxu0 0
      %3898 = vmatpush1.bf16.msra.mxu0 %v3861
      %3899 = vmatprep.subr.bf16.mxu0 0
      %3900 = vmatpush1.bf16.msra.mxu0 %v3862
      %3901 = vmatprep.subr.bf16.mxu0 0
      %3902 = vmatpush1.bf16.msra.mxu0 %v3863
      %3903 = vmatprep.subr.bf16.mxu0 0
      %3904 = vmatpush1.bf16.msra.mxu0 0
      %3905 = vmatprep.subr.bf16.mxu0 0
      %3906 = vmatpush1.bf16.msra.mxu0 0
      %3907 = vmatprep.subr.bf16.mxu0 0
      %3908 = vmatpush1.bf16.msra.mxu0 0
      %3909 = vmatprep.subr.bf16.mxu0 0
      %3910 = vmatpush1.bf16.msra.mxu0 0
      %3911 = vmatprep.mubr.bf16.mxu0 %v2082
      %3912 = vmatmul.mubr.bf16.gmra.mrb[0].mxu0 %v1270
      %v3913 = vpop.f32.mrb[0].mxu0
      %v3914 = vadd.f32 0.0, %v3913
      %v3915 = vpop.f32.mrb[0].mxu0
      %v3916 = vpop.f32.mrb[0].mxu0
      %v3917 = vadd.f32 0.0, %v3916
      %v3918 = vpop.f32.mrb[0].mxu0
      %3919 = vmatprep.mubr.bf16.mxu0 %v2085
      %3920 = vmatmul.mubr.bf16.gmra.mrb[0].mxu0 %v1276
      %v3921 = vpop.f32.mrb[0].mxu0
      %v3922 = vadd.f32 0.0, %v3921
      %v3923 = vpop.f32.mrb[0].mxu0
      %v3924 = vpop.f32.mrb[0].mxu0
      %v3925 = vadd.f32 0.0, %v3924
      %v3926 = vpop.f32.mrb[0].mxu0
      %3927 = vmatprep.mubr.bf16.mxu0 %v2088
      %3928 = vmatmul.mubr.bf16.gmra.mrb[0].mxu0 %v1282
      %v3929 = vpop.f32.mrb[0].mxu0
      %v3930 = vadd.f32 0.0, %v3929
      %v3931 = vpop.f32.mrb[0].mxu0
      %v3932 = vpop.f32.mrb[0].mxu0
      %v3933 = vadd.f32 0.0, %v3932
      %v3934 = vpop.f32.mrb[0].mxu0
      %3935 = vmatprep.mubr.bf16.mxu0 %v2091
      %3936 = vmatmul.mubr.bf16.gmra.mrb[0].mxu0 %v1288
      %v3937 = vpop.f32.mrb[0].mxu0
      %v3938 = vadd.f32 0.0, %v3937
      %v3939 = vpop.f32.mrb[0].mxu0
      %v3940 = vpop.f32.mrb[0].mxu0
      %v3941 = vadd.f32 0.0, %v3940
      %v3942 = vpop.f32.mrb[0].mxu0
      %3943 = vmatprep.mubr.bf16.mxu0 %v2094
      %3944 = vmatmul.mubr.bf16.gmra.mrb[0].mxu0 %v1294
      %v3945 = vpop.f32.mrb[0].mxu0
      %v3946 = vadd.f32 0.0, %v3945
      %v3947 = vpop.f32.mrb[0].mxu0
      %v3948 = vpop.f32.mrb[0].mxu0
      %v3949 = vadd.f32 0.0, %v3948
      %v3950 = vpop.f32.mrb[0].mxu0
      %3951 = vmatprep.mubr.bf16.mxu0 %v2097
      %3952 = vmatmul.mubr.bf16.gmra.mrb[0].mxu0 %v1300
      %v3953 = vpop.f32.mrb[0].mxu0
      %v3954 = vadd.f32 0.0, %v3953
      %v3955 = vpop.f32.mrb[0].mxu0
      %v3956 = vpop.f32.mrb[0].mxu0
      %v3957 = vadd.f32 0.0, %v3956
      %v3958 = vpop.f32.mrb[0].mxu0
      %3959 = vmatprep.mubr.bf16.mxu0 %v2100
      %3960 = vmatmul.mubr.bf16.gmra.mrb[0].mxu0 %v1306
      %v3961 = vpop.f32.mrb[0].mxu0
      %v3962 = vadd.f32 0.0, %v3961
      %v3963 = vpop.f32.mrb[0].mxu0
      %v3964 = vpop.f32.mrb[0].mxu0
      %v3965 = vadd.f32 0.0, %v3964
      %v3966 = vpop.f32.mrb[0].mxu0
      %3967 = vmatprep.mubr.bf16.mxu0 %v2103
      %3968 = vmatmul.mubr.bf16.gmra.mrb[0].mxu0 %v1312
      %v3969 = vpop.f32.mrb[0].mxu0
      %v3970 = vadd.f32 0.0, %v3969
      %v3971 = vpop.f32.mrb[0].mxu0
      %v3972 = vpop.f32.mrb[0].mxu0
      %v3973 = vadd.f32 0.0, %v3972
      %v3974 = vpop.f32.mrb[0].mxu0
      %3975 = vmatprep.mubr.bf16.mxu0 %v2106
      %3976 = vmatmul.mubr.bf16.gmra.mrb[0].mxu0 %v1318
      %v3977 = vpop.f32.mrb[0].mxu0
      %v3978 = vadd.f32 0.0, %v3977
      %v3979 = vpop.f32.mrb[0].mxu0
      %v3980 = vpop.f32.mrb[0].mxu0
      %v3981 = vadd.f32 0.0, %v3980
      %v3982 = vpop.f32.mrb[0].mxu0
      %3983 = vmatprep.mubr.bf16.mxu0 %v2109
      %3984 = vmatmul.mubr.bf16.gmra.mrb[0].mxu0 %v1324
      %v3985 = vpop.f32.mrb[0].mxu0
      %v3986 = vadd.f32 0.0, %v3985
      %v3987 = vpop.f32.mrb[0].mxu0
      %v3988 = vpop.f32.mrb[0].mxu0
      %v3989 = vadd.f32 0.0, %v3988
      %v3990 = vpop.f32.mrb[0].mxu0
      %3991 = vmatprep.mubr.bf16.mxu0 %v2112
      %3992 = vmatmul.mubr.bf16.gmra.mrb[0].mxu0 %v1330
      %v3993 = vpop.f32.mrb[0].mxu0
      %v3994 = vadd.f32 0.0, %v3993
      %v3995 = vpop.f32.mrb[0].mxu0
      %v3996 = vpop.f32.mrb[0].mxu0
      %v3997 = vadd.f32 0.0, %v3996
      %v3998 = vpop.f32.mrb[0].mxu0
      %3999 = vmatprep.mubr.bf16.mxu0 %v2115
      %4000 = vmatmul.mubr.bf16.gmra.mrb[0].mxu0 %v1336
      %v4001 = vpop.f32.mrb[0].mxu0
      %v4002 = vadd.f32 0.0, %v4001
      %v4003 = vpop.f32.mrb[0].mxu0
      %v4004 = vpop.f32.mrb[0].mxu0
      %v4005 = vadd.f32 0.0, %v4004
      %v4006 = vpop.f32.mrb[0].mxu0
      %4007 = vmatprep.mubr.bf16.mxu0 %v2118
      %4008 = vmatmul.mubr.bf16.gmra.mrb[0].mxu0 %v1342
      %v4009 = vpop.f32.mrb[0].mxu0
      %v4010 = vadd.f32 0.0, %v4009
      %v4011 = vpop.f32.mrb[0].mxu0
      %v4012 = vpop.f32.mrb[0].mxu0
      %v4013 = vadd.f32 0.0, %v4012
      %v4014 = vpop.f32.mrb[0].mxu0
      %4015 = vmatprep.mubr.bf16.mxu0 %v2121
      %4016 = vmatmul.mubr.bf16.gmra.mrb[0].mxu0 %v1348
      %v4017 = vpop.f32.mrb[0].mxu0
      %v4018 = vadd.f32 0.0, %v4017
      %v4019 = vpop.f32.mrb[0].mxu0
      %v4020 = vpop.f32.mrb[0].mxu0
      %v4021 = vadd.f32 0.0, %v4020
      %v4022 = vpop.f32.mrb[0].mxu0
      %4023 = vmatprep.mubr.bf16.mxu0 %v2999
      %4024 = vmatmul.mubr.bf16.gmra.mrb[0].mxu0 %v1354
      %v4025 = vpop.f32.mrb[0].mxu0
      %v4026 = vadd.f32 0.0, %v4025
      %v4027 = vpop.f32.mrb[0].mxu0
      %v4028 = vpop.f32.mrb[0].mxu0
      %v4029 = vadd.f32 0.0, %v4028
      %v4030 = vpop.f32.mrb[0].mxu0
      %4031 = vmatprep.mubr.bf16.mxu0 %v3877
      %4032 = vmatmul.mubr.bf16.gmra.mrb[0].mxu0 %v1360
      %v4033 = vpop.f32.mrb[0].mxu0
      %v4034 = vadd.f32 0.0, %v4033
      %v4035 = vpop.f32.mrb[0].mxu0
      %v4036 = vpop.f32.mrb[0].mxu0
      %v4037 = vadd.f32 0.0, %v4036
      %v4038 = vpop.f32.mrb[0].mxu0
      %4039 = vdwg.mxu0
      %v4040 = vadd.f32 %v3747, %v3914
      %v4041 = vadd.f32 %v3748, %v3917
      %v4042 = vadd.f32 %v3749, %v3922
      %v4043 = vadd.f32 %v3750, %v3925
      %v4044 = vadd.f32 %v3751, %v3930
      %v4045 = vadd.f32 %v3752, %v3933
      %v4046 = vadd.f32 %v3753, %v3938
      %v4047 = vadd.f32 %v3754, %v3941
      %v4048 = vadd.f32 %v3755, %v3946
      %v4049 = vadd.f32 %v3756, %v3949
      %v4050 = vadd.f32 %v3757, %v3954
      %v4051 = vadd.f32 %v3758, %v3957
      %v4052 = vadd.f32 %v3759, %v3962
      %v4053 = vadd.f32 %v3760, %v3965
      %v4054 = vadd.f32 %v3761, %v3970
      %v4055 = vadd.f32 %v3762, %v3973
      %v4056 = vadd.f32 %v3763, %v3978
      %v4057 = vadd.f32 %v3764, %v3981
      %v4058 = vadd.f32 %v3765, %v3986
      %v4059 = vadd.f32 %v3766, %v3989
      %v4060 = vadd.f32 %v3767, %v3994
      %v4061 = vadd.f32 %v3768, %v3997
      %v4062 = vadd.f32 %v3769, %v4002
      %v4063 = vadd.f32 %v3770, %v4005
      %v4064 = vadd.f32 %v3771, %v4010
      %v4065 = vadd.f32 %v3772, %v4013
      %v4066 = vadd.f32 %v3773, %v4018
      %v4067 = vadd.f32 %v3774, %v4021
      %v4068 = vadd.f32 %v3775, %v4026
      %v4069 = vadd.f32 %v3776, %v4029
      %v4070 = vadd.f32 %v3777, %v4034
      %v4071 = vadd.f32 %v3778, %v4037
      %v4073 = vlaneseq
      %v4074 = vshrl.u32 %v4073, 7
      %v4075 = vsub.s32 0, %v4074
      %v4076 = vrot.slane %v1382, %v4075
      %v4078 = vadd.f32 %v4040, %v4076
      %v4079 = vadd.f32 %v4041, %v4076
      %v4080 = vadd.f32 %v4042, %v4076
      %v4081 = vadd.f32 %v4043, %v4076
      %v4082 = vadd.f32 %v4044, %v4076
      %v4083 = vadd.f32 %v4045, %v4076
      %v4084 = vadd.f32 %v4046, %v4076
      %v4085 = vadd.f32 %v4047, %v4076
      %v4086 = vadd.f32 %v4048, %v4076
      %v4087 = vadd.f32 %v4049, %v4076
      %v4088 = vadd.f32 %v4050, %v4076
      %v4089 = vadd.f32 %v4051, %v4076
      %v4090 = vadd.f32 %v4052, %v4076
      %v4091 = vadd.f32 %v4053, %v4076
      %v4092 = vadd.f32 %v4054, %v4076
      %v4093 = vadd.f32 %v4055, %v4076
      %v4094 = vadd.f32 %v4056, %v4076
      %v4095 = vadd.f32 %v4057, %v4076
      %v4096 = vadd.f32 %v4058, %v4076
      %v4097 = vadd.f32 %v4059, %v4076
      %v4098 = vadd.f32 %v4060, %v4076
      %v4099 = vadd.f32 %v4061, %v4076
      %v4100 = vadd.f32 %v4062, %v4076
      %v4101 = vadd.f32 %v4063, %v4076
      %v4102 = vadd.f32 %v4064, %v4076
      %v4103 = vadd.f32 %v4065, %v4076
      %v4104 = vadd.f32 %v4066, %v4076
      %v4105 = vadd.f32 %v4067, %v4076
      %v4106 = vadd.f32 %v4068, %v4076
      %v4107 = vadd.f32 %v4069, %v4076
      %v4108 = vadd.f32 %v4070, %v4076
      %v4109 = vadd.f32 %v4071, %v4076
      %v4110 = vtanh.pop %v4078
      %v4111 = vtanh.pop %v4079
      %v4112 = vtanh.pop %v4080
      %v4113 = vtanh.pop %v4081
      %v4114 = vtanh.pop %v4082
      %v4115 = vtanh.pop %v4083
      %v4116 = vtanh.pop %v4084
      %v4117 = vtanh.pop %v4085
      %v4118 = vtanh.pop %v4086
      %v4119 = vtanh.pop %v4087
      %v4120 = vtanh.pop %v4088
      %v4121 = vtanh.pop %v4089
      %v4122 = vtanh.pop %v4090
      %v4123 = vtanh.pop %v4091
      %v4124 = vtanh.pop %v4092
      %v4125 = vtanh.pop %v4093
      %v4126 = vtanh.pop %v4094
      %v4127 = vtanh.pop %v4095
      %v4128 = vtanh.pop %v4096
      %v4129 = vtanh.pop %v4097
      %v4130 = vtanh.pop %v4098
      %v4131 = vtanh.pop %v4099
      %v4132 = vtanh.pop %v4100
      %v4133 = vtanh.pop %v4101
      %v4134 = vtanh.pop %v4102
      %v4135 = vtanh.pop %v4103
      %v4136 = vtanh.pop %v4104
      %v4137 = vtanh.pop %v4105
      %v4138 = vtanh.pop %v4106
      %v4139 = vtanh.pop %v4107
      %v4140 = vtanh.pop %v4108
      %v4141 = vtanh.pop %v4109
      %s4142 = scalar_lea.vmem %s170, 24
      %4143 = vst.msk [vmem:[%s4142 + $0x1] sm:$0xff] %vm172, %v4110
      %4144 = vst.msk [vmem:[%s4142 + $0x9] sm:$0xff] %vm172, %v4111
      %4145 = vst.msk [vmem:[%s4142 + $0x19] sm:$0xff] %vm172, %v4112
      %4146 = vst.msk [vmem:[%s4142 + $0x21] sm:$0xff] %vm172, %v4113
      %4147 = vst.msk [vmem:[%s4142 + $0x31] sm:$0xff] %vm172, %v4114
      %4148 = vst.msk [vmem:[%s4142 + $0x39] sm:$0xff] %vm172, %v4115
      %4149 = vst.msk [vmem:[%s4142 + $0x49] sm:$0xff] %vm172, %v4116
      %4150 = vst.msk [vmem:[%s4142 + $0x51] sm:$0xff] %vm172, %v4117
      %4151 = vst.msk [vmem:[%s4142 + $0x61] sm:$0xff] %vm172, %v4118
      %4152 = vst.msk [vmem:[%s4142 + $0x69] sm:$0xff] %vm172, %v4119
      %4153 = vst.msk [vmem:[%s4142 + $0x79] sm:$0xff] %vm172, %v4120
      %4154 = vst.msk [vmem:[%s4142 + $0x81] sm:$0xff] %vm172, %v4121
      %4155 = vst.msk [vmem:[%s4142 + $0x91] sm:$0xff] %vm172, %v4122
      %4156 = vst.msk [vmem:[%s4142 + $0x99] sm:$0xff] %vm172, %v4123
      %4157 = vst.msk [vmem:[%s4142 + $0xa9] sm:$0xff] %vm172, %v4124
      %4158 = vst.msk [vmem:[%s4142 + $0xb1] sm:$0xff] %vm172, %v4125
      %4159 = vst.msk [vmem:[%s4142 + $0xc1] sm:$0xff] %vm172, %v4126
      %4160 = vst.msk [vmem:[%s4142 + $0xc9] sm:$0xff] %vm172, %v4127
      %4161 = vst.msk [vmem:[%s4142 + $0xd9] sm:$0xff] %vm172, %v4128
      %4162 = vst.msk [vmem:[%s4142 + $0xe1] sm:$0xff] %vm172, %v4129
      %4163 = vst.msk [vmem:[%s4142 + $0xf1] sm:$0xff] %vm172, %v4130
      %4164 = vst.msk [vmem:[%s4142 + $0xf9] sm:$0xff] %vm172, %v4131
      %4165 = vst.msk [vmem:[%s4142 + $0x109] sm:$0xff] %vm172, %v4132
      %4166 = vst.msk [vmem:[%s4142 + $0x111] sm:$0xff] %vm172, %v4133
      %4167 = vst.msk [vmem:[%s4142 + $0x121] sm:$0xff] %vm172, %v4134
      %4168 = vst.msk [vmem:[%s4142 + $0x129] sm:$0xff] %vm172, %v4135
      %4169 = vst.msk [vmem:[%s4142 + $0x139] sm:$0xff] %vm172, %v4136
      %4170 = vst.msk [vmem:[%s4142 + $0x141] sm:$0xff] %vm172, %v4137
      %4171 = vst.msk [vmem:[%s4142 + $0x151] sm:$0xff] %vm172, %v4138
      %4172 = vst.msk [vmem:[%s4142 + $0x159] sm:$0xff] %vm172, %v4139
      %4173 = vst.msk [vmem:[%s4142 + $0x169] sm:$0xff] %vm172, %v4140
      %4174 = vst.msk [vmem:[%s4142 + $0x171] sm:$0xff] %vm172, %v4141
      %p4175 = scmp.lt.s32.totalorder %s14, 1
      %s4176 = scalar_select %p4175, %s14, 1
      %s4177 = smul.addr %s4176, 54
      %s4178 = smul.addr %s4177, 8
      %s4179 = scalar_lea.vmem %s3, %s4178
      // Predicated region
      $region33: #{self_dncnn_forward.6} parent=31 // pred_check
        %p4180 = pneg %p100
      $region34: #{self_dncnn_forward.6} parent=31 // pred_check_branch
        %4182 = sbr.rel (%p4180) target = $region36
      $region35: #{self_dncnn_forward.6} parent=31 // pred_region
        _
      $region36: #{self_dncnn_forward.6} parent=31 // pred_fallthru
        _
    $region32: #{self_dncnn_forward.6} parent=5 // pred_fallthru
      _
    %p4183 = scmp.le.s32.totalorder 2, %s9
    // Predicated region
    $region37: #{self_dncnn_forward.6} parent=5 // pred_check
      %p4184 = pneg %p4183
    $region38: #{self_dncnn_forward.6} parent=5 // pred_check_branch
      %4186 = sbr.rel (%p4184) target = $region40
    $region39: #{self_dncnn_forward.6} parent=5 // pred_region
      %s4187 = ssub.s32 %s9, 2
      // Predicated region
      $region41: #{self_dncnn_forward.6} parent=39 // pred_check
        %p4188 = pneg %p106
      $region42: #{self_dncnn_forward.6} parent=39 // pred_check_branch
        %4190 = sbr.rel (%p4188) target = $region44
      $region43: #{self_dncnn_forward.6} parent=39 // pred_region
        %p4191 = scmp.lt.s32.totalorder %s15, 1
        %s4192 = scalar_select %p4191, %s15, 1
        %s4193 = smul.addr %s4192, 54
        %s4194 = smul.addr %s4193, 8
        %s4195 = scalar_lea.vmem %s3, %s4194
      $region44: #{self_dncnn_forward.6} parent=39 // pred_fallthru
        _
    $region40: #{self_dncnn_forward.6} parent=5 // pred_fallthru
      _
  $region6: #{self_dncnn_forward.6} parent=0 // loop_footer
    %s13 = sadd.s32 1, %s9
  $region7: #{self_dncnn_forward.6} parent=0 // loop_footer_branch
    %8 = sbr.rel target = $region3
  $region8: #{self_dncnn_forward.6} parent=0 // loop_exit
    _

// kernel: self_dncnn_forward.9
$region0: #{self_dncnn_forward.9}
  #allocation0 [shape = 'u32[]', space=smem, size = 0x4, offset = 0x4, fixed_abs, tag = 'smem constant byte address 0x4 - core index']
  #allocation1 [shape = 'u32[144,128]{1,0:T(1,128)}', space=vmem, size = 0x12000, scoped, tag = 'internal scratch']
  %s0 = inlined_call_operand.vmem [shape: f32[2,18,18,64], index: 0, kind: input, shape index: {}]
  %s1 = inlined_call_operand.vmem [shape: bf16[9,192,8], index: 1, kind: input, shape index: {}]
  %s2 = inlined_call_operand.vmem [shape: f32[1,8], index: 2, kind: input, shape index: {}]
  %s3 = inlined_call_operand.vmem [shape: f32[2,16,16,8], index: 3, kind: input, shape index: {}]
  %s4 = inlined_call_operand.vmem [shape: f32[2,16,16,8], index: 4, kind: output, shape index: {}]
  %s5 = sld [smem:[#allocation0]]
  $region49: #{self_dncnn_forward.9} parent=0
    _
  %s7 = ssub.s32 1, %s5
  %s8 = scalar_select 0, %s7, %s5
  loop: start=0, step=1, limit=4
  $region2: #{self_dncnn_forward.9} parent=0 // loop_pre_header
    _
  $region3: #{self_dncnn_forward.9} parent=0 // loop_header
    %s10 = sphi 0, %s14
    %p11 = scmp.ge.s32.totalorder %s10, 4
    %s20 = sphi 0, %s22
    %s23 = sphi 0, %s20
    %s24 = sphi 0, %s23
    %s40 = sphi 0, %s24
    %s44 = sphi 0, %s44
    %s46 = sphi 0, %s44
    %s47 = sphi 0, %s46
    %s61 = sphi 0, %s47
    %s65 = sphi 0, %s65
    %s67 = sphi 0, %s65
    %s68 = sphi 0, %s67
    %s82 = sphi 0, %s68
    %s88 = sphi 0, %s90
    %s91 = sphi 0, %s88
    %s92 = sphi 0, %s91
    %s108 = sphi 0, %s92
    %s114 = sphi 0, %s116
    %s117 = sphi 0, %s114
    %s118 = sphi 0, %s117
    %s134 = sphi 0, %s118
  $region4: #{self_dncnn_forward.9} parent=0 // loop_header_branch
    %13 = sbr.rel (%p11) target = $region8
  $region5: #{self_dncnn_forward.9} parent=0 // loop_body
    %s15 = ssub.s32 %s10, 1
    %s16 = ssub.s32 %s10, 2
    %s17 = sadd.s32 %s10, 1
    %s18 = ssub.s32 %s10, %s17
    %p19 = scmp.eq.s32.totalorder %s18, 0
    %s21 = sadd.s32 %s20, 1
    %s22 = scalar_select %p19, %s20, %s21
    %p25 = pneg %p19
    %p26 = scmp.eq.s32.totalorder %s10, 1
    %p27 = por %p25, %p26
    %p28 = scmp.ne.s32.totalorder %s20, %s23
    %p29 = scmp.eq.s32.totalorder %s10, 0
    %p30 = por %p28, %p29
    %p31 = scmp.ne.s32.totalorder %s20, %s23
    %p32 = scmp.eq.s32.totalorder %s15, 1
    %p33 = por %p31, %p32
    %p34 = scmp.ne.s32.totalorder %s23, %s24
    %p35 = scmp.eq.s32.totalorder %s15, 0
    %p36 = por %p34, %p35
    %p37 = scmp.ne.s32.totalorder %s23, %s24
    %p38 = scmp.eq.s32.totalorder %s16, 1
    %p39 = por %p37, %p38
    %p41 = scmp.ne.s32.totalorder %s24, %s40
    %p42 = scmp.eq.s32.totalorder %s16, 0
    %p43 = por %p41, %p42
    %s45 = sadd.s32 %s44, 1
    %p48 = scmp.eq.s32.totalorder %s10, 1
    %p49 = scmp.ne.s32.totalorder %s44, %s46
    %p50 = scmp.eq.s32.totalorder %s10, 0
    %p51 = por %p49, %p50
    %p52 = scmp.ne.s32.totalorder %s44, %s46
    %p53 = scmp.eq.s32.totalorder %s15, 1
    %p54 = por %p52, %p53
    %p55 = scmp.ne.s32.totalorder %s46, %s47
    %p56 = scmp.eq.s32.totalorder %s15, 0
    %p57 = por %p55, %p56
    %p58 = scmp.ne.s32.totalorder %s46, %s47
    %p59 = scmp.eq.s32.totalorder %s16, 1
    %p60 = por %p58, %p59
    %p62 = scmp.ne.s32.totalorder %s47, %s61
    %p63 = scmp.eq.s32.totalorder %s16, 0
    %p64 = por %p62, %p63
    %s66 = sadd.s32 %s65, 1
    %p69 = scmp.eq.s32.totalorder %s10, 1
    %p70 = scmp.ne.s32.totalorder %s65, %s67
    %p71 = scmp.eq.s32.totalorder %s10, 0
    %p72 = por %p70, %p71
    %p73 = scmp.ne.s32.totalorder %s65, %s67
    %p74 = scmp.eq.s32.totalorder %s15, 1
    %p75 = por %p73, %p74
    %p76 = scmp.ne.s32.totalorder %s67, %s68
    %p77 = scmp.eq.s32.totalorder %s15, 0
    %p78 = por %p76, %p77
    %p79 = scmp.ne.s32.totalorder %s67, %s68
    %p80 = scmp.eq.s32.totalorder %s16, 1
    %p81 = por %p79, %p80
    %p83 = scmp.ne.s32.totalorder %s68, %s82
    %p84 = scmp.eq.s32.totalorder %s16, 0
    %p85 = por %p83, %p84
    %s86 = ssub.s32 %s10, %s17
    %p87 = scmp.eq.s32.totalorder %s86, 0
    %s89 = sadd.s32 %s88, 1
    %s90 = scalar_select %p87, %s88, %s89
    %p93 = pneg %p87
    %p94 = scmp.eq.s32.totalorder %s10, 1
    %p95 = por %p93, %p94
    %p96 = scmp.ne.s32.totalorder %s88, %s91
    %p97 = scmp.eq.s32.totalorder %s10, 0
    %p98 = por %p96, %p97
    %p99 = scmp.ne.s32.totalorder %s88, %s91
    %p100 = scmp.eq.s32.totalorder %s15, 1
    %p101 = por %p99, %p100
    %p102 = scmp.ne.s32.totalorder %s91, %s92
    %p103 = scmp.eq.s32.totalorder %s15, 0
    %p104 = por %p102, %p103
    %p105 = scmp.ne.s32.totalorder %s91, %s92
    %p106 = scmp.eq.s32.totalorder %s16, 1
    %p107 = por %p105, %p106
    %p109 = scmp.ne.s32.totalorder %s92, %s108
    %p110 = scmp.eq.s32.totalorder %s16, 0
    %p111 = por %p109, %p110
    %s112 = ssub.s32 %s10, %s17
    %p113 = scmp.eq.s32.totalorder %s112, 0
    %s115 = sadd.s32 %s114, 1
    %s116 = scalar_select %p113, %s114, %s115
    %p119 = pneg %p113
    %p120 = scmp.eq.s32.totalorder %s10, 1
    %p121 = por %p119, %p120
    %p122 = scmp.ne.s32.totalorder %s114, %s117
    %p123 = scmp.eq.s32.totalorder %s10, 0
    %p124 = por %p122, %p123
    %p125 = scmp.ne.s32.totalorder %s114, %s117
    %p126 = scmp.eq.s32.totalorder %s15, 1
    %p127 = por %p125, %p126
    %p128 = scmp.ne.s32.totalorder %s117, %s118
    %p129 = scmp.eq.s32.totalorder %s15, 0
    %p130 = por %p128, %p129
    %p131 = scmp.ne.s32.totalorder %s117, %s118
    %p132 = scmp.eq.s32.totalorder %s16, 1
    %p133 = por %p131, %p132
    %p135 = scmp.ne.s32.totalorder %s118, %s134
    %p136 = scmp.eq.s32.totalorder %s16, 0
    %p137 = por %p135, %p136
    %p138 = scmp.le.s32.totalorder 1, %s10
    %p139 = scmp.lt.s32.totalorder %s10, 3
    %p140 = pnand %p138, %p139
    %p141 = pneg %p140
    // Predicated region
    $region9: #{self_dncnn_forward.9} parent=5 // pred_check
      _
    $region10: #{self_dncnn_forward.9} parent=5 // pred_check_branch
      %143 = sbr.rel (%p140) target = $region12
    $region11: #{self_dncnn_forward.9} parent=5 // pred_region
      %s144 = ssub.s32 %s10, 1
      // Predicated region
      $region13: #{self_dncnn_forward.9} parent=11 // pred_check
        %p145 = pneg %p57
      $region14: #{self_dncnn_forward.9} parent=11 // pred_check_branch
        %147 = sbr.rel (%p145) target = $region16
      $region15: #{self_dncnn_forward.9} parent=11 // pred_region
        _
      $region16: #{self_dncnn_forward.9} parent=11 // pred_fallthru
        _
      // Predicated region
      $region17: #{self_dncnn_forward.9} parent=11 // pred_check
        %p148 = pneg %p78
      $region18: #{self_dncnn_forward.9} parent=11 // pred_check_branch
        %150 = sbr.rel (%p148) target = $region20
      $region19: #{self_dncnn_forward.9} parent=11 // pred_region
        _
      $region20: #{self_dncnn_forward.9} parent=11 // pred_fallthru
        _
    $region12: #{self_dncnn_forward.9} parent=5 // pred_fallthru
      _
    %p151 = scmp.lt.s32.totalorder %s10, 2
    // Predicated region
    $region21: #{self_dncnn_forward.9} parent=5 // pred_check
      %p152 = pneg %p151
    $region22: #{self_dncnn_forward.9} parent=5 // pred_check_branch
      %154 = sbr.rel (%p152) target = $region24
    $region23: #{self_dncnn_forward.9} parent=5 // pred_region
      // Predicated region
      $region25: #{self_dncnn_forward.9} parent=23 // pred_check
        %p155 = pneg %p30
      $region26: #{self_dncnn_forward.9} parent=23 // pred_check_branch
        %157 = sbr.rel (%p155) target = $region28
      $region27: #{self_dncnn_forward.9} parent=23 // pred_region
        %p158 = scmp.lt.s32.totalorder %s10, 1
        %s159 = scalar_select %p158, %s10, 1
        %s160 = smul.addr %s159, 54
        %s161 = smul.addr %s160, 8
        %s162 = scalar_lea.vmem %s0, %s161
      $region28: #{self_dncnn_forward.9} parent=23 // pred_fallthru
        _
      // Predicated region
      $region29: #{self_dncnn_forward.9} parent=23 // pred_check
        %p163 = pneg %p98
      $region30: #{self_dncnn_forward.9} parent=23 // pred_check_branch
        %165 = sbr.rel (%p163) target = $region32
      $region31: #{self_dncnn_forward.9} parent=23 // pred_region
        %p166 = scmp.lt.s32.totalorder %s10, 1
        %s167 = scalar_select %p166, %s10, 1
        %s168 = smul.addr %s167, 32
        %s169 = smul.addr %s168, 8
        %s170 = scalar_lea.vmem %s3, %s169
      $region32: #{self_dncnn_forward.9} parent=23 // pred_fallthru
        _
    $region24: #{self_dncnn_forward.9} parent=5 // pred_fallthru
      _
    %p171 = scmp.le.s32.totalorder 1, %s10
    %p172 = scmp.lt.s32.totalorder %s10, 3
    %p173 = pnand %p171, %p172
    %p174 = pneg %p173
    // Predicated region
    $region33: #{self_dncnn_forward.9} parent=5 // pred_check
      _
    $region34: #{self_dncnn_forward.9} parent=5 // pred_check_branch
      %176 = sbr.rel (%p173) target = $region36
    $region35: #{self_dncnn_forward.9} parent=5 // pred_region
      %s177 = ssub.s32 %s10, 1
      %p178 = scmp.lt.s32.totalorder %s15, 1
      %s179 = scalar_select %p178, %s15, 1
      %s180 = smul.addr %s179, 54
      %s181 = smul.addr %s180, 8
      %s182 = scalar_lea.vmem %s0, %s181
      %p183 = pneg %p36
      %p184 = pneg %p33
      %p185 = pneg %p57
      %p186 = pneg %p54
      %p187 = pneg %p78
      %p188 = pneg %p75
      %p189 = scmp.lt.s32.totalorder %s15, 1
      %s190 = scalar_select %p189, %s15, 1
      %s191 = smul.addr %s190, 32
      %s192 = smul.addr %s191, 8
      %s193 = scalar_lea.vmem %s3, %s192
      %p194 = pneg %p104
      %p195 = pneg %p101
      %p196 = pneg %p130
      %p197 = pneg %p127
      %p198 = scmp.lt.s32.totalorder %s15, 1
      %s199 = scalar_select %p198, %s15, 1
      %s200 = smul.addr %s199, 32
      %s201 = smul.addr %s200, 8
      %s202 = scalar_lea.vmem %s4, %s201
      %p203 = scmp.lt.s32.totalorder %s15, 1
      %s204 = scalar_select %p203, %s15, 1
      %s205 = smul.addr %s204, 54
      %s206 = smul.addr %s205, 8
      %s207 = scalar_lea.vmem %s0, %s206
      %p208 = scmp.lt.s32.totalorder %s15, 1
      %s209 = scalar_select %p208, %s15, 1
      %s210 = smul.addr %s209, 32
      %s211 = smul.addr %s210, 8
      %s212 = scalar_lea.vmem %s3, %s211
      %p213 = scmp.lt.s32.totalorder %s15, 1
      %s214 = scalar_select %p213, %s15, 1
      %s215 = smul.addr %s214, 32
      %s216 = smul.addr %s215, 8
      %s217 = scalar_lea.vmem %s4, %s216
      %v219 = vld [vmem:[%s207] sm:$0xff]
      %v220 = vld [vmem:[%s207 + $0x8] sm:$0xff]
      %v221 = vld [vmem:[%s207 + $0x10] sm:$0x3]
      %v222 = vld [vmem:[%s207 + $0x18] sm:$0xff]
      %v223 = vld [vmem:[%s207 + $0x20] sm:$0xff]
      %v224 = vld [vmem:[%s207 + $0x28] sm:$0x3]
      %v225 = vld [vmem:[%s207 + $0x30] sm:$0xff]
      %v226 = vld [vmem:[%s207 + $0x38] sm:$0xff]
      %v227 = vld [vmem:[%s207 + $0x40] sm:$0x3]
      %v228 = vld [vmem:[%s207 + $0x48] sm:$0xff]
      %v229 = vld [vmem:[%s207 + $0x50] sm:$0xff]
      %v230 = vld [vmem:[%s207 + $0x58] sm:$0x3]
      %v231 = vld [vmem:[%s207 + $0x60] sm:$0xff]
      %v232 = vld [vmem:[%s207 + $0x68] sm:$0xff]
      %v233 = vld [vmem:[%s207 + $0x70] sm:$0x3]
      %v234 = vld [vmem:[%s207 + $0x78] sm:$0xff]
      %v235 = vld [vmem:[%s207 + $0x80] sm:$0xff]
      %v236 = vld [vmem:[%s207 + $0x88] sm:$0x3]
      %v237 = vld [vmem:[%s207 + $0x90] sm:$0xff]
      %v238 = vld [vmem:[%s207 + $0x98] sm:$0xff]
      %v239 = vld [vmem:[%s207 + $0xa0] sm:$0x3]
      %v240 = vld [vmem:[%s207 + $0xa8] sm:$0xff]
      %v241 = vld [vmem:[%s207 + $0xb0] sm:$0xff]
      %v242 = vld [vmem:[%s207 + $0xb8] sm:$0x3]
      %v243 = vld [vmem:[%s207 + $0xc0] sm:$0xff]
      %v244 = vld [vmem:[%s207 + $0xc8] sm:$0xff]
      %v245 = vld [vmem:[%s207 + $0xd0] sm:$0x3]
      %v246 = vld [vmem:[%s207 + $0xd8] sm:$0xff]
      %v247 = vld [vmem:[%s207 + $0xe0] sm:$0xff]
      %v248 = vld [vmem:[%s207 + $0xe8] sm:$0x3]
      %v249 = vld [vmem:[%s207 + $0xf0] sm:$0xff]
      %v250 = vld [vmem:[%s207 + $0xf8] sm:$0xff]
      %v251 = vld [vmem:[%s207 + $0x100] sm:$0x3]
      %v252 = vld [vmem:[%s207 + $0x108] sm:$0xff]
      %v253 = vld [vmem:[%s207 + $0x110] sm:$0xff]
      %v254 = vld [vmem:[%s207 + $0x118] sm:$0x3]
      %v255 = vld [vmem:[%s207 + $0x120] sm:$0xff]
      %v256 = vld [vmem:[%s207 + $0x128] sm:$0xff]
      %v257 = vld [vmem:[%s207 + $0x130] sm:$0x3]
      %v258 = vld [vmem:[%s207 + $0x138] sm:$0xff]
      %v259 = vld [vmem:[%s207 + $0x140] sm:$0xff]
      %v260 = vld [vmem:[%s207 + $0x148] sm:$0x3]
      %v261 = vld [vmem:[%s207 + $0x150] sm:$0xff]
      %v262 = vld [vmem:[%s207 + $0x158] sm:$0xff]
      %v263 = vld [vmem:[%s207 + $0x160] sm:$0x3]
      %v264 = vld [vmem:[%s207 + $0x168] sm:$0xff]
      %v265 = vld [vmem:[%s207 + $0x170] sm:$0xff]
      %v266 = vld [vmem:[%s207 + $0x178] sm:$0x3]
      %v267 = vld [vmem:[%s207 + $0x180] sm:$0xff]
      %v268 = vld [vmem:[%s207 + $0x188] sm:$0xff]
      %v269 = vld [vmem:[%s207 + $0x190] sm:$0x3]
      %v270 = vld [vmem:[%s207 + $0x198] sm:$0xff]
      %v271 = vld [vmem:[%s207 + $0x1a0] sm:$0xff]
      %v272 = vld [vmem:[%s207 + $0x1a8] sm:$0x3]
      %v273 = vmul.f32 %v219, %v219
      %v274 = vmul.f32 %v220, %v220
      %v275 = vmul.f32 %v221, %v221
      %v276 = vmul.f32 %v222, %v222
      %v277 = vmul.f32 %v223, %v223
      %v278 = vmul.f32 %v224, %v224
      %v279 = vmul.f32 %v225, %v225
      %v280 = vmul.f32 %v226, %v226
      %v281 = vmul.f32 %v227, %v227
      %v282 = vmul.f32 %v228, %v228
      %v283 = vmul.f32 %v229, %v229
      %v284 = vmul.f32 %v230, %v230
      %v285 = vmul.f32 %v231, %v231
      %v286 = vmul.f32 %v232, %v232
      %v287 = vmul.f32 %v233, %v233
      %v288 = vmul.f32 %v234, %v234
      %v289 = vmul.f32 %v235, %v235
      %v290 = vmul.f32 %v236, %v236
      %v291 = vmul.f32 %v237, %v237
      %v292 = vmul.f32 %v238, %v238
      %v293 = vmul.f32 %v239, %v239
      %v294 = vmul.f32 %v240, %v240
      %v295 = vmul.f32 %v241, %v241
      %v296 = vmul.f32 %v242, %v242
      %v297 = vmul.f32 %v243, %v243
      %v298 = vmul.f32 %v244, %v244
      %v299 = vmul.f32 %v245, %v245
      %v300 = vmul.f32 %v246, %v246
      %v301 = vmul.f32 %v247, %v247
      %v302 = vmul.f32 %v248, %v248
      %v303 = vmul.f32 %v249, %v249
      %v304 = vmul.f32 %v250, %v250
      %v305 = vmul.f32 %v251, %v251
      %v306 = vmul.f32 %v252, %v252
      %v307 = vmul.f32 %v253, %v253
      %v308 = vmul.f32 %v254, %v254
      %v309 = vmul.f32 %v255, %v255
      %v310 = vmul.f32 %v256, %v256
      %v311 = vmul.f32 %v257, %v257
      %v312 = vmul.f32 %v258, %v258
      %v313 = vmul.f32 %v259, %v259
      %v314 = vmul.f32 %v260, %v260
      %v315 = vmul.f32 %v261, %v261
      %v316 = vmul.f32 %v262, %v262
      %v317 = vmul.f32 %v263, %v263
      %v318 = vmul.f32 %v264, %v264
      %v319 = vmul.f32 %v265, %v265
      %v320 = vmul.f32 %v266, %v266
      %v321 = vmul.f32 %v267, %v267
      %v322 = vmul.f32 %v268, %v268
      %v323 = vmul.f32 %v269, %v269
      %v324 = vmul.f32 %v270, %v270
      %v325 = vmul.f32 %v271, %v271
      %v326 = vmul.f32 %v272, %v272
      %v327 = vmul.f32 %v273, %v219
      %v328 = vmul.f32 %v274, %v220
      %v329 = vmul.f32 %v275, %v221
      %v330 = vmul.f32 %v276, %v222
      %v331 = vmul.f32 %v277, %v223
      %v332 = vmul.f32 %v278, %v224
      %v333 = vmul.f32 %v279, %v225
      %v334 = vmul.f32 %v280, %v226
      %v335 = vmul.f32 %v281, %v227
      %v336 = vmul.f32 %v282, %v228
      %v337 = vmul.f32 %v283, %v229
      %v338 = vmul.f32 %v284, %v230
      %v339 = vmul.f32 %v285, %v231
      %v340 = vmul.f32 %v286, %v232
      %v341 = vmul.f32 %v287, %v233
      %v342 = vmul.f32 %v288, %v234
      %v343 = vmul.f32 %v289, %v235
      %v344 = vmul.f32 %v290, %v236
      %v345 = vmul.f32 %v291, %v237
      %v346 = vmul.f32 %v292, %v238
      %v347 = vmul.f32 %v293, %v239
      %v348 = vmul.f32 %v294, %v240
      %v349 = vmul.f32 %v295, %v241
      %v350 = vmul.f32 %v296, %v242
      %v351 = vmul.f32 %v297, %v243
      %v352 = vmul.f32 %v298, %v244
      %v353 = vmul.f32 %v299, %v245
      %v354 = vmul.f32 %v300, %v246
      %v355 = vmul.f32 %v301, %v247
      %v356 = vmul.f32 %v302, %v248
      %v357 = vmul.f32 %v303, %v249
      %v358 = vmul.f32 %v304, %v250
      %v359 = vmul.f32 %v305, %v251
      %v360 = vmul.f32 %v306, %v252
      %v361 = vmul.f32 %v307, %v253
      %v362 = vmul.f32 %v308, %v254
      %v363 = vmul.f32 %v309, %v255
      %v364 = vmul.f32 %v310, %v256
      %v365 = vmul.f32 %v311, %v257
      %v366 = vmul.f32 %v312, %v258
      %v367 = vmul.f32 %v313, %v259
      %v368 = vmul.f32 %v314, %v260
      %v369 = vmul.f32 %v315, %v261
      %v370 = vmul.f32 %v316, %v262
      %v371 = vmul.f32 %v317, %v263
      %v372 = vmul.f32 %v318, %v264
      %v373 = vmul.f32 %v319, %v265
      %v374 = vmul.f32 %v320, %v266
      %v375 = vmul.f32 %v321, %v267
      %v376 = vmul.f32 %v322, %v268
      %v377 = vmul.f32 %v323, %v269
      %v378 = vmul.f32 %v324, %v270
      %v379 = vmul.f32 %v325, %v271
      %v380 = vmul.f32 %v326, %v272
      %435 = vrot.lane.b32.xlu0 %v273, 64
      %v436 = vpop.permute.xlu0 %435
      %437 = vrot.lane.b32.xlu0 %v274, 64
      %v438 = vpop.permute.xlu0 %437
      %439 = vrot.lane.b32.xlu0 %v275, 64
      %v440 = vpop.permute.xlu0 %439
      %441 = vrot.lane.b32.xlu0 %v276, 64
      %v442 = vpop.permute.xlu0 %441
      %443 = vrot.lane.b32.xlu0 %v277, 64
      %v444 = vpop.permute.xlu0 %443
      %445 = vrot.lane.b32.xlu0 %v278, 64
      %v446 = vpop.permute.xlu0 %445
      %447 = vrot.lane.b32.xlu0 %v279, 64
      %v448 = vpop.permute.xlu0 %447
      %449 = vrot.lane.b32.xlu0 %v280, 64
      %v450 = vpop.permute.xlu0 %449
      %451 = vrot.lane.b32.xlu0 %v281, 64
      %v452 = vpop.permute.xlu0 %451
      %453 = vrot.lane.b32.xlu0 %v282, 64
      %v454 = vpop.permute.xlu0 %453
      %455 = vrot.lane.b32.xlu0 %v283, 64
      %v456 = vpop.permute.xlu0 %455
      %457 = vrot.lane.b32.xlu0 %v284, 64
      %v458 = vpop.permute.xlu0 %457
      %459 = vrot.lane.b32.xlu0 %v285, 64
      %v460 = vpop.permute.xlu0 %459
      %461 = vrot.lane.b32.xlu0 %v286, 64
      %v462 = vpop.permute.xlu0 %461
      %463 = vrot.lane.b32.xlu0 %v287, 64
      %v464 = vpop.permute.xlu0 %463
      %465 = vrot.lane.b32.xlu0 %v288, 64
      %v466 = vpop.permute.xlu0 %465
      %467 = vrot.lane.b32.xlu0 %v289, 64
      %v468 = vpop.permute.xlu0 %467
      %469 = vrot.lane.b32.xlu0 %v290, 64
      %v470 = vpop.permute.xlu0 %469
      %471 = vrot.lane.b32.xlu0 %v291, 64
      %v472 = vpop.permute.xlu0 %471
      %473 = vrot.lane.b32.xlu0 %v292, 64
      %v474 = vpop.permute.xlu0 %473
      %475 = vrot.lane.b32.xlu0 %v293, 64
      %v476 = vpop.permute.xlu0 %475
      %477 = vrot.lane.b32.xlu0 %v294, 64
      %v478 = vpop.permute.xlu0 %477
      %479 = vrot.lane.b32.xlu0 %v295, 64
      %v480 = vpop.permute.xlu0 %479
      %481 = vrot.lane.b32.xlu0 %v296, 64
      %v482 = vpop.permute.xlu0 %481
      %483 = vrot.lane.b32.xlu0 %v297, 64
      %v484 = vpop.permute.xlu0 %483
      %485 = vrot.lane.b32.xlu0 %v298, 64
      %v486 = vpop.permute.xlu0 %485
      %487 = vrot.lane.b32.xlu0 %v299, 64
      %v488 = vpop.permute.xlu0 %487
      %489 = vrot.lane.b32.xlu0 %v300, 64
      %v490 = vpop.permute.xlu0 %489
      %491 = vrot.lane.b32.xlu0 %v301, 64
      %v492 = vpop.permute.xlu0 %491
      %493 = vrot.lane.b32.xlu0 %v302, 64
      %v494 = vpop.permute.xlu0 %493
      %495 = vrot.lane.b32.xlu0 %v303, 64
      %v496 = vpop.permute.xlu0 %495
      %497 = vrot.lane.b32.xlu0 %v304, 64
      %v498 = vpop.permute.xlu0 %497
      %499 = vrot.lane.b32.xlu0 %v305, 64
      %v500 = vpop.permute.xlu0 %499
      %501 = vrot.lane.b32.xlu0 %v306, 64
      %v502 = vpop.permute.xlu0 %501
      %503 = vrot.lane.b32.xlu0 %v307, 64
      %v504 = vpop.permute.xlu0 %503
      %505 = vrot.lane.b32.xlu0 %v308, 64
      %v506 = vpop.permute.xlu0 %505
      %507 = vrot.lane.b32.xlu0 %v309, 64
      %v508 = vpop.permute.xlu0 %507
      %509 = vrot.lane.b32.xlu0 %v310, 64
      %v510 = vpop.permute.xlu0 %509
      %511 = vrot.lane.b32.xlu0 %v311, 64
      %v512 = vpop.permute.xlu0 %511
      %513 = vrot.lane.b32.xlu0 %v312, 64
      %v514 = vpop.permute.xlu0 %513
      %515 = vrot.lane.b32.xlu0 %v313, 64
      %v516 = vpop.permute.xlu0 %515
      %517 = vrot.lane.b32.xlu0 %v314, 64
      %v518 = vpop.permute.xlu0 %517
      %519 = vrot.lane.b32.xlu0 %v315, 64
      %v520 = vpop.permute.xlu0 %519
      %521 = vrot.lane.b32.xlu0 %v316, 64
      %v522 = vpop.permute.xlu0 %521
      %523 = vrot.lane.b32.xlu0 %v317, 64
      %v524 = vpop.permute.xlu0 %523
      %525 = vrot.lane.b32.xlu0 %v318, 64
      %v526 = vpop.permute.xlu0 %525
      %527 = vrot.lane.b32.xlu0 %v319, 64
      %v528 = vpop.permute.xlu0 %527
      %529 = vrot.lane.b32.xlu0 %v320, 64
      %v530 = vpop.permute.xlu0 %529
      %531 = vrot.lane.b32.xlu0 %v321, 64
      %v532 = vpop.permute.xlu0 %531
      %533 = vrot.lane.b32.xlu0 %v322, 64
      %v534 = vpop.permute.xlu0 %533
      %535 = vrot.lane.b32.xlu0 %v323, 64
      %v536 = vpop.permute.xlu0 %535
      %537 = vrot.lane.b32.xlu0 %v324, 64
      %v538 = vpop.permute.xlu0 %537
      %539 = vrot.lane.b32.xlu0 %v325, 64
      %v540 = vpop.permute.xlu0 %539
      %541 = vrot.lane.b32.xlu0 %v326, 64
      %v542 = vpop.permute.xlu0 %541
      %vm597 = vcmask 523264
      %v598 = vsel %vm597, %v219, %v436
      %v599 = vsel %vm597, %v220, %v438
      %v600 = vsel %vm597, %v221, %v440
      %v601 = vsel %vm597, %v222, %v442
      %v602 = vsel %vm597, %v223, %v444
      %v603 = vsel %vm597, %v224, %v446
      %v604 = vsel %vm597, %v225, %v448
      %v605 = vsel %vm597, %v226, %v450
      %v606 = vsel %vm597, %v227, %v452
      %v607 = vsel %vm597, %v228, %v454
      %v608 = vsel %vm597, %v229, %v456
      %v609 = vsel %vm597, %v230, %v458
      %v610 = vsel %vm597, %v231, %v460
      %v611 = vsel %vm597, %v232, %v462
      %v612 = vsel %vm597, %v233, %v464
      %v613 = vsel %vm597, %v234, %v466
      %v614 = vsel %vm597, %v235, %v468
      %v615 = vsel %vm597, %v236, %v470
      %v616 = vsel %vm597, %v237, %v472
      %v617 = vsel %vm597, %v238, %v474
      %v618 = vsel %vm597, %v239, %v476
      %v619 = vsel %vm597, %v240, %v478
      %v620 = vsel %vm597, %v241, %v480
      %v621 = vsel %vm597, %v242, %v482
      %v622 = vsel %vm597, %v243, %v484
      %v623 = vsel %vm597, %v244, %v486
      %v624 = vsel %vm597, %v245, %v488
      %v625 = vsel %vm597, %v246, %v490
      %v626 = vsel %vm597, %v247, %v492
      %v627 = vsel %vm597, %v248, %v494
      %v628 = vsel %vm597, %v249, %v496
      %v629 = vsel %vm597, %v250, %v498
      %v630 = vsel %vm597, %v251, %v500
      %v631 = vsel %vm597, %v252, %v502
      %v632 = vsel %vm597, %v253, %v504
      %v633 = vsel %vm597, %v254, %v506
      %v634 = vsel %vm597, %v255, %v508
      %v635 = vsel %vm597, %v256, %v510
      %v636 = vsel %vm597, %v257, %v512
      %v637 = vsel %vm597, %v258, %v514
      %v638 = vsel %vm597, %v259, %v516
      %v639 = vsel %vm597, %v260, %v518
      %v640 = vsel %vm597, %v261, %v520
      %v641 = vsel %vm597, %v262, %v522
      %v642 = vsel %vm597, %v263, %v524
      %v643 = vsel %vm597, %v264, %v526
      %v644 = vsel %vm597, %v265, %v528
      %v645 = vsel %vm597, %v266, %v530
      %v646 = vsel %vm597, %v267, %v532
      %v647 = vsel %vm597, %v268, %v534
      %v648 = vsel %vm597, %v269, %v536
      %v649 = vsel %vm597, %v270, %v538
      %v650 = vsel %vm597, %v271, %v540
      %v651 = vsel %vm597, %v272, %v542
      %v652 = vpack.c.bf16 %v599, %v598
      %v653 = vpack.c.bf16 %v328, %v327
      %v654 = vpack.c.bf16 %v600, %v600
      %v655 = vpack.c.bf16 %v329, %v329
      %v656 = vpack.c.bf16 %v602, %v601
      %v657 = vpack.c.bf16 %v331, %v330
      %v658 = vpack.c.bf16 %v603, %v603
      %v659 = vpack.c.bf16 %v332, %v332
      %v660 = vpack.c.bf16 %v605, %v604
      %v661 = vpack.c.bf16 %v334, %v333
      %v662 = vpack.c.bf16 %v606, %v606
      %v663 = vpack.c.bf16 %v335, %v335
      %v664 = vpack.c.bf16 %v608, %v607
      %v665 = vpack.c.bf16 %v337, %v336
      %v666 = vpack.c.bf16 %v609, %v609
      %v667 = vpack.c.bf16 %v338, %v338
      %v668 = vpack.c.bf16 %v611, %v610
      %v669 = vpack.c.bf16 %v340, %v339
      %v670 = vpack.c.bf16 %v612, %v612
      %v671 = vpack.c.bf16 %v341, %v341
      %v672 = vpack.c.bf16 %v614, %v613
      %v673 = vpack.c.bf16 %v343, %v342
      %v674 = vpack.c.bf16 %v615, %v615
      %v675 = vpack.c.bf16 %v344, %v344
      %v676 = vpack.c.bf16 %v617, %v616
      %v677 = vpack.c.bf16 %v346, %v345
      %v678 = vpack.c.bf16 %v618, %v618
      %v679 = vpack.c.bf16 %v347, %v347
      %v680 = vpack.c.bf16 %v620, %v619
      %v681 = vpack.c.bf16 %v349, %v348
      %v682 = vpack.c.bf16 %v621, %v621
      %v683 = vpack.c.bf16 %v350, %v350
      %v684 = vpack.c.bf16 %v623, %v622
      %v685 = vpack.c.bf16 %v352, %v351
      %v686 = vpack.c.bf16 %v624, %v624
      %v687 = vpack.c.bf16 %v353, %v353
      %v688 = vpack.c.bf16 %v626, %v625
      %v689 = vpack.c.bf16 %v355, %v354
      %v690 = vpack.c.bf16 %v627, %v627
      %v691 = vpack.c.bf16 %v356, %v356
      %v692 = vpack.c.bf16 %v629, %v628
      %v693 = vpack.c.bf16 %v358, %v357
      %v694 = vpack.c.bf16 %v630, %v630
      %v695 = vpack.c.bf16 %v359, %v359
      %v696 = vpack.c.bf16 %v632, %v631
      %v697 = vpack.c.bf16 %v361, %v360
      %v698 = vpack.c.bf16 %v633, %v633
      %v699 = vpack.c.bf16 %v362, %v362
      %v700 = vpack.c.bf16 %v635, %v634
      %v701 = vpack.c.bf16 %v364, %v363
      %v702 = vpack.c.bf16 %v636, %v636
      %v703 = vpack.c.bf16 %v365, %v365
      %v704 = vpack.c.bf16 %v638, %v637
      %v705 = vpack.c.bf16 %v367, %v366
      %v706 = vpack.c.bf16 %v639, %v639
      %v707 = vpack.c.bf16 %v368, %v368
      %v708 = vpack.c.bf16 %v641, %v640
      %v709 = vpack.c.bf16 %v370, %v369
      %v710 = vpack.c.bf16 %v642, %v642
      %v711 = vpack.c.bf16 %v371, %v371
      %v712 = vpack.c.bf16 %v644, %v643
      %v713 = vpack.c.bf16 %v373, %v372
      %v714 = vpack.c.bf16 %v645, %v645
      %v715 = vpack.c.bf16 %v374, %v374
      %v716 = vpack.c.bf16 %v647, %v646
      %v717 = vpack.c.bf16 %v376, %v375
      %v718 = vpack.c.bf16 %v648, %v648
      %v719 = vpack.c.bf16 %v377, %v377
      %v720 = vpack.c.bf16 %v650, %v649
      %v721 = vpack.c.bf16 %v379, %v378
      %v722 = vpack.c.bf16 %v651, %v651
      %v723 = vpack.c.bf16 %v380, %v380
      %vm724 = vsmask.f32 7424
      %v726 = vshrl.u32 %v652, 16
      %v728 = vshll.u32 %v652, 16
      %v730 = vrot.slane %v728, 1
      %v731 = vor.u32 %v726, %v730
      %v733 = vshll.u32 %v654, 16
      %v735 = vrot.slane %v733, 1
      %v736 = vsel %vm724, %v731, %v735
      %v738 = vshrl.u32 %v653, 16
      %v740 = vshll.u32 %v653, 16
      %v742 = vrot.slane %v740, 1
      %v743 = vor.u32 %v738, %v742
      %v745 = vshll.u32 %v655, 16
      %v747 = vrot.slane %v745, 1
      %v748 = vsel %vm724, %v743, %v747
      %v750 = vshrl.u32 %v656, 16
      %v752 = vshll.u32 %v656, 16
      %v754 = vrot.slane %v752, 1
      %v755 = vor.u32 %v750, %v754
      %v757 = vshll.u32 %v658, 16
      %v759 = vrot.slane %v757, 1
      %v760 = vsel %vm724, %v755, %v759
      %v762 = vshrl.u32 %v657, 16
      %v764 = vshll.u32 %v657, 16
      %v766 = vrot.slane %v764, 1
      %v767 = vor.u32 %v762, %v766
      %v769 = vshll.u32 %v659, 16
      %v771 = vrot.slane %v769, 1
      %v772 = vsel %vm724, %v767, %v771
      %v774 = vshrl.u32 %v660, 16
      %v776 = vshll.u32 %v660, 16
      %v778 = vrot.slane %v776, 1
      %v779 = vor.u32 %v774, %v778
      %v781 = vshll.u32 %v662, 16
      %v783 = vrot.slane %v781, 1
      %v784 = vsel %vm724, %v779, %v783
      %v786 = vshrl.u32 %v661, 16
      %v788 = vshll.u32 %v661, 16
      %v790 = vrot.slane %v788, 1
      %v791 = vor.u32 %v786, %v790
      %v793 = vshll.u32 %v663, 16
      %v795 = vrot.slane %v793, 1
      %v796 = vsel %vm724, %v791, %v795
      %v798 = vshrl.u32 %v664, 16
      %v800 = vshll.u32 %v664, 16
      %v802 = vrot.slane %v800, 1
      %v803 = vor.u32 %v798, %v802
      %v805 = vshll.u32 %v666, 16
      %v807 = vrot.slane %v805, 1
      %v808 = vsel %vm724, %v803, %v807
      %v810 = vshrl.u32 %v665, 16
      %v812 = vshll.u32 %v665, 16
      %v814 = vrot.slane %v812, 1
      %v815 = vor.u32 %v810, %v814
      %v817 = vshll.u32 %v667, 16
      %v819 = vrot.slane %v817, 1
      %v820 = vsel %vm724, %v815, %v819
      %v822 = vshrl.u32 %v668, 16
      %v824 = vshll.u32 %v668, 16
      %v826 = vrot.slane %v824, 1
      %v827 = vor.u32 %v822, %v826
      %v829 = vshll.u32 %v670, 16
      %v831 = vrot.slane %v829, 1
      %v832 = vsel %vm724, %v827, %v831
      %v834 = vshrl.u32 %v669, 16
      %v836 = vshll.u32 %v669, 16
      %v838 = vrot.slane %v836, 1
      %v839 = vor.u32 %v834, %v838
      %v841 = vshll.u32 %v671, 16
      %v843 = vrot.slane %v841, 1
      %v844 = vsel %vm724, %v839, %v843
      %v846 = vshrl.u32 %v672, 16
      %v848 = vshll.u32 %v672, 16
      %v850 = vrot.slane %v848, 1
      %v851 = vor.u32 %v846, %v850
      %v853 = vshll.u32 %v674, 16
      %v855 = vrot.slane %v853, 1
      %v856 = vsel %vm724, %v851, %v855
      %v858 = vshrl.u32 %v673, 16
      %v860 = vshll.u32 %v673, 16
      %v862 = vrot.slane %v860, 1
      %v863 = vor.u32 %v858, %v862
      %v865 = vshll.u32 %v675, 16
      %v867 = vrot.slane %v865, 1
      %v868 = vsel %vm724, %v863, %v867
      %v870 = vshrl.u32 %v676, 16
      %v872 = vshll.u32 %v676, 16
      %v874 = vrot.slane %v872, 1
      %v875 = vor.u32 %v870, %v874
      %v877 = vshll.u32 %v678, 16
      %v879 = vrot.slane %v877, 1
      %v880 = vsel %vm724, %v875, %v879
      %v882 = vshrl.u32 %v677, 16
      %v884 = vshll.u32 %v677, 16
      %v886 = vrot.slane %v884, 1
      %v887 = vor.u32 %v882, %v886
      %v889 = vshll.u32 %v679, 16
      %v891 = vrot.slane %v889, 1
      %v892 = vsel %vm724, %v887, %v891
      %v894 = vshrl.u32 %v680, 16
      %v896 = vshll.u32 %v680, 16
      %v898 = vrot.slane %v896, 1
      %v899 = vor.u32 %v894, %v898
      %v901 = vshll.u32 %v682, 16
      %v903 = vrot.slane %v901, 1
      %v904 = vsel %vm724, %v899, %v903
      %v906 = vshrl.u32 %v681, 16
      %v908 = vshll.u32 %v681, 16
      %v910 = vrot.slane %v908, 1
      %v911 = vor.u32 %v906, %v910
      %v913 = vshll.u32 %v683, 16
      %v915 = vrot.slane %v913, 1
      %v916 = vsel %vm724, %v911, %v915
      %v918 = vshrl.u32 %v684, 16
      %v920 = vshll.u32 %v684, 16
      %v922 = vrot.slane %v920, 1
      %v923 = vor.u32 %v918, %v922
      %v925 = vshll.u32 %v686, 16
      %v927 = vrot.slane %v925, 1
      %v928 = vsel %vm724, %v923, %v927
      %v930 = vshrl.u32 %v685, 16
      %v932 = vshll.u32 %v685, 16
      %v934 = vrot.slane %v932, 1
      %v935 = vor.u32 %v930, %v934
      %v937 = vshll.u32 %v687, 16
      %v939 = vrot.slane %v937, 1
      %v940 = vsel %vm724, %v935, %v939
      %v942 = vshrl.u32 %v688, 16
      %v944 = vshll.u32 %v688, 16
      %v946 = vrot.slane %v944, 1
      %v947 = vor.u32 %v942, %v946
      %v949 = vshll.u32 %v690, 16
      %v951 = vrot.slane %v949, 1
      %v952 = vsel %vm724, %v947, %v951
      %v954 = vshrl.u32 %v689, 16
      %v956 = vshll.u32 %v689, 16
      %v958 = vrot.slane %v956, 1
      %v959 = vor.u32 %v954, %v958
      %v961 = vshll.u32 %v691, 16
      %v963 = vrot.slane %v961, 1
      %v964 = vsel %vm724, %v959, %v963
      %v966 = vshrl.u32 %v692, 16
      %v968 = vshll.u32 %v692, 16
      %v970 = vrot.slane %v968, 1
      %v971 = vor.u32 %v966, %v970
      %v973 = vshll.u32 %v694, 16
      %v975 = vrot.slane %v973, 1
      %v976 = vsel %vm724, %v971, %v975
      %v978 = vshrl.u32 %v693, 16
      %v980 = vshll.u32 %v693, 16
      %v982 = vrot.slane %v980, 1
      %v983 = vor.u32 %v978, %v982
      %v985 = vshll.u32 %v695, 16
      %v987 = vrot.slane %v985, 1
      %v988 = vsel %vm724, %v983, %v987
      %v990 = vshrl.u32 %v696, 16
      %v992 = vshll.u32 %v696, 16
      %v994 = vrot.slane %v992, 1
      %v995 = vor.u32 %v990, %v994
      %v997 = vshll.u32 %v698, 16
      %v999 = vrot.slane %v997, 1
      %v1000 = vsel %vm724, %v995, %v999
      %v1002 = vshrl.u32 %v697, 16
      %v1004 = vshll.u32 %v697, 16
      %v1006 = vrot.slane %v1004, 1
      %v1007 = vor.u32 %v1002, %v1006
      %v1009 = vshll.u32 %v699, 16
      %v1011 = vrot.slane %v1009, 1
      %v1012 = vsel %vm724, %v1007, %v1011
      %v1014 = vshrl.u32 %v700, 16
      %v1016 = vshll.u32 %v700, 16
      %v1018 = vrot.slane %v1016, 1
      %v1019 = vor.u32 %v1014, %v1018
      %v1021 = vshll.u32 %v702, 16
      %v1023 = vrot.slane %v1021, 1
      %v1024 = vsel %vm724, %v1019, %v1023
      %v1026 = vshrl.u32 %v701, 16
      %v1028 = vshll.u32 %v701, 16
      %v1030 = vrot.slane %v1028, 1
      %v1031 = vor.u32 %v1026, %v1030
      %v1033 = vshll.u32 %v703, 16
      %v1035 = vrot.slane %v1033, 1
      %v1036 = vsel %vm724, %v1031, %v1035
      %v1038 = vshrl.u32 %v704, 16
      %v1040 = vshll.u32 %v704, 16
      %v1042 = vrot.slane %v1040, 1
      %v1043 = vor.u32 %v1038, %v1042
      %v1045 = vshll.u32 %v706, 16
      %v1047 = vrot.slane %v1045, 1
      %v1048 = vsel %vm724, %v1043, %v1047
      %v1050 = vshrl.u32 %v705, 16
      %v1052 = vshll.u32 %v705, 16
      %v1054 = vrot.slane %v1052, 1
      %v1055 = vor.u32 %v1050, %v1054
      %v1057 = vshll.u32 %v707, 16
      %v1059 = vrot.slane %v1057, 1
      %v1060 = vsel %vm724, %v1055, %v1059
      %v1062 = vshrl.u32 %v708, 16
      %v1064 = vshll.u32 %v708, 16
      %v1066 = vrot.slane %v1064, 1
      %v1067 = vor.u32 %v1062, %v1066
      %v1069 = vshll.u32 %v710, 16
      %v1071 = vrot.slane %v1069, 1
      %v1072 = vsel %vm724, %v1067, %v1071
      %v1074 = vshrl.u32 %v709, 16
      %v1076 = vshll.u32 %v709, 16
      %v1078 = vrot.slane %v1076, 1
      %v1079 = vor.u32 %v1074, %v1078
      %v1081 = vshll.u32 %v711, 16
      %v1083 = vrot.slane %v1081, 1
      %v1084 = vsel %vm724, %v1079, %v1083
      %v1086 = vshrl.u32 %v712, 16
      %v1088 = vshll.u32 %v712, 16
      %v1090 = vrot.slane %v1088, 1
      %v1091 = vor.u32 %v1086, %v1090
      %v1093 = vshll.u32 %v714, 16
      %v1095 = vrot.slane %v1093, 1
      %v1096 = vsel %vm724, %v1091, %v1095
      %v1098 = vshrl.u32 %v713, 16
      %v1100 = vshll.u32 %v713, 16
      %v1102 = vrot.slane %v1100, 1
      %v1103 = vor.u32 %v1098, %v1102
      %v1105 = vshll.u32 %v715, 16
      %v1107 = vrot.slane %v1105, 1
      %v1108 = vsel %vm724, %v1103, %v1107
      %v1110 = vshrl.u32 %v716, 16
      %v1112 = vshll.u32 %v716, 16
      %v1114 = vrot.slane %v1112, 1
      %v1115 = vor.u32 %v1110, %v1114
      %v1117 = vshll.u32 %v718, 16
      %v1119 = vrot.slane %v1117, 1
      %v1120 = vsel %vm724, %v1115, %v1119
      %v1122 = vshrl.u32 %v717, 16
      %v1124 = vshll.u32 %v717, 16
      %v1126 = vrot.slane %v1124, 1
      %v1127 = vor.u32 %v1122, %v1126
      %v1129 = vshll.u32 %v719, 16
      %v1131 = vrot.slane %v1129, 1
      %v1132 = vsel %vm724, %v1127, %v1131
      %v1134 = vshrl.u32 %v720, 16
      %v1136 = vshll.u32 %v720, 16
      %v1138 = vrot.slane %v1136, 1
      %v1139 = vor.u32 %v1134, %v1138
      %v1141 = vshll.u32 %v722, 16
      %v1143 = vrot.slane %v1141, 1
      %v1144 = vsel %vm724, %v1139, %v1143
      %v1146 = vshrl.u32 %v721, 16
      %v1148 = vshll.u32 %v721, 16
      %v1150 = vrot.slane %v1148, 1
      %v1151 = vor.u32 %v1146, %v1150
      %v1153 = vshll.u32 %v723, 16
      %v1155 = vrot.slane %v1153, 1
      %v1156 = vsel %vm724, %v1151, %v1155
      %vm1247 = vcmask 1046528
      %v1248 = vrot.slane %v652, 1
      %v1249 = vrot.slane %v654, 1
      %v1250 = vsel %vm1247, %v1248, %v1249
      %v1251 = vrot.slane %v653, 1
      %v1252 = vrot.slane %v655, 1
      %v1253 = vsel %vm1247, %v1251, %v1252
      %v1254 = vrot.slane %v656, 1
      %v1255 = vrot.slane %v658, 1
      %v1256 = vsel %vm1247, %v1254, %v1255
      %v1257 = vrot.slane %v657, 1
      %v1258 = vrot.slane %v659, 1
      %v1259 = vsel %vm1247, %v1257, %v1258
      %v1260 = vrot.slane %v660, 1
      %v1261 = vrot.slane %v662, 1
      %v1262 = vsel %vm1247, %v1260, %v1261
      %v1263 = vrot.slane %v661, 1
      %v1264 = vrot.slane %v663, 1
      %v1265 = vsel %vm1247, %v1263, %v1264
      %v1266 = vrot.slane %v664, 1
      %v1267 = vrot.slane %v666, 1
      %v1268 = vsel %vm1247, %v1266, %v1267
      %v1269 = vrot.slane %v665, 1
      %v1270 = vrot.slane %v667, 1
      %v1271 = vsel %vm1247, %v1269, %v1270
      %v1272 = vrot.slane %v668, 1
      %v1273 = vrot.slane %v670, 1
      %v1274 = vsel %vm1247, %v1272, %v1273
      %v1275 = vrot.slane %v669, 1
      %v1276 = vrot.slane %v671, 1
      %v1277 = vsel %vm1247, %v1275, %v1276
      %v1278 = vrot.slane %v672, 1
      %v1279 = vrot.slane %v674, 1
      %v1280 = vsel %vm1247, %v1278, %v1279
      %v1281 = vrot.slane %v673, 1
      %v1282 = vrot.slane %v675, 1
      %v1283 = vsel %vm1247, %v1281, %v1282
      %v1284 = vrot.slane %v676, 1
      %v1285 = vrot.slane %v678, 1
      %v1286 = vsel %vm1247, %v1284, %v1285
      %v1287 = vrot.slane %v677, 1
      %v1288 = vrot.slane %v679, 1
      %v1289 = vsel %vm1247, %v1287, %v1288
      %v1290 = vrot.slane %v680, 1
      %v1291 = vrot.slane %v682, 1
      %v1292 = vsel %vm1247, %v1290, %v1291
      %v1293 = vrot.slane %v681, 1
      %v1294 = vrot.slane %v683, 1
      %v1295 = vsel %vm1247, %v1293, %v1294
      %v1296 = vrot.slane %v684, 1
      %v1297 = vrot.slane %v686, 1
      %v1298 = vsel %vm1247, %v1296, %v1297
      %v1299 = vrot.slane %v685, 1
      %v1300 = vrot.slane %v687, 1
      %v1301 = vsel %vm1247, %v1299, %v1300
      %v1302 = vrot.slane %v688, 1
      %v1303 = vrot.slane %v690, 1
      %v1304 = vsel %vm1247, %v1302, %v1303
      %v1305 = vrot.slane %v689, 1
      %v1306 = vrot.slane %v691, 1
      %v1307 = vsel %vm1247, %v1305, %v1306
      %v1308 = vrot.slane %v692, 1
      %v1309 = vrot.slane %v694, 1
      %v1310 = vsel %vm1247, %v1308, %v1309
      %v1311 = vrot.slane %v693, 1
      %v1312 = vrot.slane %v695, 1
      %v1313 = vsel %vm1247, %v1311, %v1312
      %v1314 = vrot.slane %v696, 1
      %v1315 = vrot.slane %v698, 1
      %v1316 = vsel %vm1247, %v1314, %v1315
      %v1317 = vrot.slane %v697, 1
      %v1318 = vrot.slane %v699, 1
      %v1319 = vsel %vm1247, %v1317, %v1318
      %v1320 = vrot.slane %v700, 1
      %v1321 = vrot.slane %v702, 1
      %v1322 = vsel %vm1247, %v1320, %v1321
      %v1323 = vrot.slane %v701, 1
      %v1324 = vrot.slane %v703, 1
      %v1325 = vsel %vm1247, %v1323, %v1324
      %v1326 = vrot.slane %v704, 1
      %v1327 = vrot.slane %v706, 1
      %v1328 = vsel %vm1247, %v1326, %v1327
      %v1329 = vrot.slane %v705, 1
      %v1330 = vrot.slane %v707, 1
      %v1331 = vsel %vm1247, %v1329, %v1330
      %v1332 = vrot.slane %v708, 1
      %v1333 = vrot.slane %v710, 1
      %v1334 = vsel %vm1247, %v1332, %v1333
      %v1335 = vrot.slane %v709, 1
      %v1336 = vrot.slane %v711, 1
      %v1337 = vsel %vm1247, %v1335, %v1336
      %v1338 = vrot.slane %v712, 1
      %v1339 = vrot.slane %v714, 1
      %v1340 = vsel %vm1247, %v1338, %v1339
      %v1341 = vrot.slane %v713, 1
      %v1342 = vrot.slane %v715, 1
      %v1343 = vsel %vm1247, %v1341, %v1342
      %v1344 = vrot.slane %v716, 1
      %v1345 = vrot.slane %v718, 1
      %v1346 = vsel %vm1247, %v1344, %v1345
      %v1347 = vrot.slane %v717, 1
      %v1348 = vrot.slane %v719, 1
      %v1349 = vsel %vm1247, %v1347, %v1348
      %v1350 = vrot.slane %v720, 1
      %v1351 = vrot.slane %v722, 1
      %v1352 = vsel %vm1247, %v1350, %v1351
      %v1353 = vrot.slane %v721, 1
      %v1354 = vrot.slane %v723, 1
      %v1355 = vsel %vm1247, %v1353, %v1354
      %v1374 = vld [vmem:[%s2] sm:$0x1]
      %v1375 = vld [vmem:[%s1] sm:$0xf]
      %v1376 = vld [vmem:[%s1 + $0x4] sm:$0xf]
      %v1377 = vld [vmem:[%s1 + $0x8] sm:$0xf]
      %v1378 = vld [vmem:[%s1 + $0xc] sm:$0xf]
      %v1379 = vld [vmem:[%s1 + $0x10] sm:$0xf]
      %v1380 = vld [vmem:[%s1 + $0x14] sm:$0xf]
      %v1381 = vld [vmem:[%s1 + $0x18] sm:$0xf]
      %v1382 = vld [vmem:[%s1 + $0x1c] sm:$0xf]
      %v1383 = vld [vmem:[%s1 + $0x20] sm:$0xf]
      %v1384 = vld [vmem:[%s1 + $0x24] sm:$0xf]
      %v1385 = vld [vmem:[%s1 + $0x28] sm:$0xf]
      %v1386 = vld [vmem:[%s1 + $0x2c] sm:$0xf]
      %v1387 = vld [vmem:[%s1 + $0x30] sm:$0xf]
      %v1388 = vld [vmem:[%s1 + $0x34] sm:$0xf]
      %v1389 = vld [vmem:[%s1 + $0x38] sm:$0xf]
      %v1390 = vld [vmem:[%s1 + $0x3c] sm:$0xf]
      %v1391 = vld [vmem:[%s1 + $0x40] sm:$0xf]
      %v1392 = vld [vmem:[%s1 + $0x44] sm:$0xf]
      %v1393 = vld [vmem:[%s1 + $0x48] sm:$0xf]
      %v1394 = vld [vmem:[%s1 + $0x4c] sm:$0xf]
      %v1395 = vld [vmem:[%s1 + $0x50] sm:$0xf]
      %v1396 = vld [vmem:[%s1 + $0x54] sm:$0xf]
      %v1397 = vld [vmem:[%s1 + $0x58] sm:$0xf]
      %v1398 = vld [vmem:[%s1 + $0x5c] sm:$0xf]
      %s1399 = scalar_lea.vmem %s1, 96
      %v1400 = vld [vmem:[%s1399] sm:$0xf]
      %v1401 = vld [vmem:[%s1399 + $0x4] sm:$0xf]
      %v1402 = vld [vmem:[%s1399 + $0x8] sm:$0xf]
      %v1403 = vld [vmem:[%s1399 + $0xc] sm:$0xf]
      %v1404 = vld [vmem:[%s1399 + $0x10] sm:$0xf]
      %v1405 = vld [vmem:[%s1399 + $0x14] sm:$0xf]
      %v1406 = vld [vmem:[%s1399 + $0x18] sm:$0xf]
      %v1407 = vld [vmem:[%s1399 + $0x1c] sm:$0xf]
      %v1408 = vld [vmem:[%s1399 + $0x20] sm:$0xf]
      %v1409 = vld [vmem:[%s1399 + $0x24] sm:$0xf]
      %v1410 = vld [vmem:[%s1399 + $0x28] sm:$0xf]
      %v1411 = vld [vmem:[%s1399 + $0x2c] sm:$0xf]
      %v1412 = vld [vmem:[%s1399 + $0x30] sm:$0xf]
      %v1413 = vld [vmem:[%s1399 + $0x34] sm:$0xf]
      %v1414 = vld [vmem:[%s1399 + $0x38] sm:$0xf]
      %v1415 = vld [vmem:[%s1399 + $0x3c] sm:$0xf]
      %v1416 = vld [vmem:[%s1399 + $0x40] sm:$0xf]
      %v1417 = vld [vmem:[%s1399 + $0x44] sm:$0xf]
      %v1418 = vld [vmem:[%s1399 + $0x48] sm:$0xf]
      %v1419 = vld [vmem:[%s1399 + $0x4c] sm:$0xf]
      %v1420 = vld [vmem:[%s1399 + $0x50] sm:$0xf]
      %v1421 = vld [vmem:[%s1399 + $0x54] sm:$0xf]
      %v1422 = vld [vmem:[%s1399 + $0x58] sm:$0xf]
      %v1423 = vld [vmem:[%s1399 + $0x5c] sm:$0xf]
      %v1448 = vunpack.c.l.b16 %v1400
      %v1449 = vunpack.c.l.b16 %v1401
      %v1450 = vunpack.c.l.b16 %v1402
      %v1451 = vunpack.c.l.b16 %v1403
      %v1452 = vunpack.c.l.b16 %v1404
      %v1453 = vunpack.c.l.b16 %v1405
      %v1454 = vunpack.c.l.b16 %v1406
      %v1455 = vunpack.c.l.b16 %v1407
      %v1456 = vunpack.c.l.b16 %v1408
      %v1457 = vunpack.c.l.b16 %v1409
      %v1458 = vunpack.c.l.b16 %v1410
      %v1459 = vunpack.c.l.b16 %v1411
      %v1460 = vunpack.c.l.b16 %v1412
      %v1461 = vunpack.c.l.b16 %v1413
      %v1462 = vunpack.c.l.b16 %v1414
      %v1463 = vunpack.c.l.b16 %v1415
      %v1464 = vunpack.c.l.b16 %v1416
      %v1465 = vunpack.c.l.b16 %v1417
      %v1466 = vunpack.c.l.b16 %v1418
      %v1467 = vunpack.c.l.b16 %v1419
      %v1468 = vunpack.c.l.b16 %v1420
      %v1469 = vunpack.c.l.b16 %v1421
      %v1470 = vunpack.c.l.b16 %v1422
      %v1471 = vunpack.c.l.b16 %v1423
      %v1472 = vpack.c.b16 %v1449, %v1448
      %v1473 = vpack.c.b16 %v1451, %v1450
      %v1474 = vpack.c.b16 %v1453, %v1452
      %v1475 = vpack.c.b16 %v1455, %v1454
      %v1476 = vpack.c.b16 %v1457, %v1456
      %v1477 = vpack.c.b16 %v1459, %v1458
      %v1478 = vpack.c.b16 %v1461, %v1460
      %v1479 = vpack.c.b16 %v1463, %v1462
      %v1480 = vpack.c.b16 %v1465, %v1464
      %v1481 = vpack.c.b16 %v1467, %v1466
      %v1482 = vpack.c.b16 %v1469, %v1468
      %v1483 = vpack.c.b16 %v1471, %v1470
      %v1497 = vsel %vm597, %v748, 0
      %v1500 = vsel %vm597, %v772, 0
      %v1503 = vsel %vm597, %v796, 0
      %v1506 = vsel %vm597, %v820, 0
      %v1509 = vsel %vm597, %v844, 0
      %v1512 = vsel %vm597, %v868, 0
      %v1515 = vsel %vm597, %v892, 0
      %v1518 = vsel %vm597, %v916, 0
      %v1521 = vsel %vm597, %v940, 0
      %v1524 = vsel %vm597, %v964, 0
      %v1527 = vsel %vm597, %v988, 0
      %v1530 = vsel %vm597, %v1012, 0
      %v1533 = vsel %vm597, %v1036, 0
      %v1536 = vsel %vm597, %v1060, 0
      %v1539 = vsel %vm597, %v1084, 0
      %v1542 = vsel %vm597, %v1108, 0
      %1544 = vmatprep.subr.bf16.mxu0 0
      %1545 = vmatpush1.bf16.msra.mxu0 %v1472
      %1546 = vmatprep.subr.bf16.mxu0 0
      %1547 = vmatpush1.bf16.msra.mxu0 %v1473
      %1548 = vmatprep.subr.bf16.mxu0 0
      %1549 = vmatpush1.bf16.msra.mxu0 %v1474
      %1550 = vmatprep.subr.bf16.mxu0 0
      %1551 = vmatpush1.bf16.msra.mxu0 %v1475
      %1552 = vmatprep.subr.bf16.mxu0 0
      %1553 = vmatpush1.bf16.msra.mxu0 %v1476
      %1554 = vmatprep.subr.bf16.mxu0 0
      %1555 = vmatpush1.bf16.msra.mxu0 %v1477
      %1556 = vmatprep.subr.bf16.mxu0 0
      %1557 = vmatpush1.bf16.msra.mxu0 %v1478
      %1558 = vmatprep.subr.bf16.mxu0 0
      %1559 = vmatpush1.bf16.msra.mxu0 %v1479
      %1560 = vmatprep.subr.bf16.mxu0 0
      %1561 = vmatpush1.bf16.msra.mxu0 %v1480
      %1562 = vmatprep.subr.bf16.mxu0 0
      %1563 = vmatpush1.bf16.msra.mxu0 %v1481
      %1564 = vmatprep.subr.bf16.mxu0 0
      %1565 = vmatpush1.bf16.msra.mxu0 %v1482
      %1566 = vmatprep.subr.bf16.mxu0 0
      %1567 = vmatpush1.bf16.msra.mxu0 %v1483
      %1568 = vmatprep.subr.bf16.mxu0 0
      %1569 = vmatpush1.bf16.msra.mxu0 0
      %1570 = vmatprep.subr.bf16.mxu0 0
      %1571 = vmatpush1.bf16.msra.mxu0 0
      %1572 = vmatprep.subr.bf16.mxu0 0
      %1573 = vmatpush1.bf16.msra.mxu0 0
      %1574 = vmatprep.subr.bf16.mxu0 0
      %1575 = vmatpush1.bf16.msra.mxu0 0
      %1576 = vmatprep.mubr.bf16.mxu0 %v1497
      %1577 = vmatmul.mubr.bf16.gmra.mrb[0].mxu0 %v736
      %v1578 = vpop.f32.mrb[0].mxu0
      %v1579 = vadd.f32 0.0, %v1578
      %v1580 = vpop.f32.mrb[0].mxu0
      %v1581 = vpop.f32.mrb[0].mxu0
      %v1582 = vadd.f32 0.0, %v1581
      %v1583 = vpop.f32.mrb[0].mxu0
      %1584 = vmatprep.mubr.bf16.mxu0 %v1500
      %1585 = vmatmul.mubr.bf16.gmra.mrb[0].mxu0 %v760
      %v1586 = vpop.f32.mrb[0].mxu0
      %v1587 = vadd.f32 0.0, %v1586
      %v1588 = vpop.f32.mrb[0].mxu0
      %v1589 = vpop.f32.mrb[0].mxu0
      %v1590 = vadd.f32 0.0, %v1589
      %v1591 = vpop.f32.mrb[0].mxu0
      %1592 = vmatprep.mubr.bf16.mxu0 %v1503
      %1593 = vmatmul.mubr.bf16.gmra.mrb[0].mxu0 %v784
      %v1594 = vpop.f32.mrb[0].mxu0
      %v1595 = vadd.f32 0.0, %v1594
      %v1596 = vpop.f32.mrb[0].mxu0
      %v1597 = vpop.f32.mrb[0].mxu0
      %v1598 = vadd.f32 0.0, %v1597
      %v1599 = vpop.f32.mrb[0].mxu0
      %1600 = vmatprep.mubr.bf16.mxu0 %v1506
      %1601 = vmatmul.mubr.bf16.gmra.mrb[0].mxu0 %v808
      %v1602 = vpop.f32.mrb[0].mxu0
      %v1603 = vadd.f32 0.0, %v1602
      %v1604 = vpop.f32.mrb[0].mxu0
      %v1605 = vpop.f32.mrb[0].mxu0
      %v1606 = vadd.f32 0.0, %v1605
      %v1607 = vpop.f32.mrb[0].mxu0
      %1608 = vmatprep.mubr.bf16.mxu0 %v1509
      %1609 = vmatmul.mubr.bf16.gmra.mrb[0].mxu0 %v832
      %v1610 = vpop.f32.mrb[0].mxu0
      %v1611 = vadd.f32 0.0, %v1610
      %v1612 = vpop.f32.mrb[0].mxu0
      %v1613 = vpop.f32.mrb[0].mxu0
      %v1614 = vadd.f32 0.0, %v1613
      %v1615 = vpop.f32.mrb[0].mxu0
      %1616 = vmatprep.mubr.bf16.mxu0 %v1512
      %1617 = vmatmul.mubr.bf16.gmra.mrb[0].mxu0 %v856
      %v1618 = vpop.f32.mrb[0].mxu0
      %v1619 = vadd.f32 0.0, %v1618
      %v1620 = vpop.f32.mrb[0].mxu0
      %v1621 = vpop.f32.mrb[0].mxu0
      %v1622 = vadd.f32 0.0, %v1621
      %v1623 = vpop.f32.mrb[0].mxu0
      %1624 = vmatprep.mubr.bf16.mxu0 %v1515
      %1625 = vmatmul.mubr.bf16.gmra.mrb[0].mxu0 %v880
      %v1626 = vpop.f32.mrb[0].mxu0
      %v1627 = vadd.f32 0.0, %v1626
      %v1628 = vpop.f32.mrb[0].mxu0
      %v1629 = vpop.f32.mrb[0].mxu0
      %v1630 = vadd.f32 0.0, %v1629
      %v1631 = vpop.f32.mrb[0].mxu0
      %1632 = vmatprep.mubr.bf16.mxu0 %v1518
      %1633 = vmatmul.mubr.bf16.gmra.mrb[0].mxu0 %v904
      %v1634 = vpop.f32.mrb[0].mxu0
      %v1635 = vadd.f32 0.0, %v1634
      %v1636 = vpop.f32.mrb[0].mxu0
      %v1637 = vpop.f32.mrb[0].mxu0
      %v1638 = vadd.f32 0.0, %v1637
      %v1639 = vpop.f32.mrb[0].mxu0
      %1640 = vmatprep.mubr.bf16.mxu0 %v1521
      %1641 = vmatmul.mubr.bf16.gmra.mrb[0].mxu0 %v928
      %v1642 = vpop.f32.mrb[0].mxu0
      %v1643 = vadd.f32 0.0, %v1642
      %v1644 = vpop.f32.mrb[0].mxu0
      %v1645 = vpop.f32.mrb[0].mxu0
      %v1646 = vadd.f32 0.0, %v1645
      %v1647 = vpop.f32.mrb[0].mxu0
      %1648 = vmatprep.mubr.bf16.mxu0 %v1524
      %1649 = vmatmul.mubr.bf16.gmra.mrb[0].mxu0 %v952
      %v1650 = vpop.f32.mrb[0].mxu0
      %v1651 = vadd.f32 0.0, %v1650
      %v1652 = vpop.f32.mrb[0].mxu0
      %v1653 = vpop.f32.mrb[0].mxu0
      %v1654 = vadd.f32 0.0, %v1653
      %v1655 = vpop.f32.mrb[0].mxu0
      %1656 = vmatprep.mubr.bf16.mxu0 %v1527
      %1657 = vmatmul.mubr.bf16.gmra.mrb[0].mxu0 %v976
      %v1658 = vpop.f32.mrb[0].mxu0
      %v1659 = vadd.f32 0.0, %v1658
      %v1660 = vpop.f32.mrb[0].mxu0
      %v1661 = vpop.f32.mrb[0].mxu0
      %v1662 = vadd.f32 0.0, %v1661
      %v1663 = vpop.f32.mrb[0].mxu0
      %1664 = vmatprep.mubr.bf16.mxu0 %v1530
      %1665 = vmatmul.mubr.bf16.gmra.mrb[0].mxu0 %v1000
      %v1666 = vpop.f32.mrb[0].mxu0
      %v1667 = vadd.f32 0.0, %v1666
      %v1668 = vpop.f32.mrb[0].mxu0
      %v1669 = vpop.f32.mrb[0].mxu0
      %v1670 = vadd.f32 0.0, %v1669
      %v1671 = vpop.f32.mrb[0].mxu0
      %1672 = vmatprep.mubr.bf16.mxu0 %v1533
      %1673 = vmatmul.mubr.bf16.gmra.mrb[0].mxu0 %v1024
      %v1674 = vpop.f32.mrb[0].mxu0
      %v1675 = vadd.f32 0.0, %v1674
      %v1676 = vpop.f32.mrb[0].mxu0
      %v1677 = vpop.f32.mrb[0].mxu0
      %v1678 = vadd.f32 0.0, %v1677
      %v1679 = vpop.f32.mrb[0].mxu0
      %1680 = vmatprep.mubr.bf16.mxu0 %v1536
      %1681 = vmatmul.mubr.bf16.gmra.mrb[0].mxu0 %v1048
      %v1682 = vpop.f32.mrb[0].mxu0
      %v1683 = vadd.f32 0.0, %v1682
      %v1684 = vpop.f32.mrb[0].mxu0
      %v1685 = vpop.f32.mrb[0].mxu0
      %v1686 = vadd.f32 0.0, %v1685
      %v1687 = vpop.f32.mrb[0].mxu0
      %1688 = vmatprep.mubr.bf16.mxu0 %v1539
      %1689 = vmatmul.mubr.bf16.gmra.mrb[0].mxu0 %v1072
      %v1690 = vpop.f32.mrb[0].mxu0
      %v1691 = vadd.f32 0.0, %v1690
      %v1692 = vpop.f32.mrb[0].mxu0
      %v1693 = vpop.f32.mrb[0].mxu0
      %v1694 = vadd.f32 0.0, %v1693
      %v1695 = vpop.f32.mrb[0].mxu0
      %1696 = vmatprep.mubr.bf16.mxu0 %v1542
      %1697 = vmatmul.mubr.bf16.gmra.mrb[0].mxu0 %v1096
      %v1698 = vpop.f32.mrb[0].mxu0
      %v1699 = vadd.f32 0.0, %v1698
      %v1700 = vpop.f32.mrb[0].mxu0
      %v1701 = vpop.f32.mrb[0].mxu0
      %v1702 = vadd.f32 0.0, %v1701
      %v1703 = vpop.f32.mrb[0].mxu0
      %1704 = vdwg.mxu0
      %v1729 = vunpack.c.l.b16 %v1375
      %v1730 = vunpack.c.l.b16 %v1376
      %v1731 = vunpack.c.l.b16 %v1377
      %v1732 = vunpack.c.l.b16 %v1378
      %v1733 = vunpack.c.l.b16 %v1379
      %v1734 = vunpack.c.l.b16 %v1380
      %v1735 = vunpack.c.l.b16 %v1381
      %v1736 = vunpack.c.l.b16 %v1382
      %v1737 = vunpack.c.l.b16 %v1383
      %v1738 = vunpack.c.l.b16 %v1384
      %v1739 = vunpack.c.l.b16 %v1385
      %v1740 = vunpack.c.l.b16 %v1386
      %v1741 = vunpack.c.l.b16 %v1387
      %v1742 = vunpack.c.l.b16 %v1388
      %v1743 = vunpack.c.l.b16 %v1389
      %v1744 = vunpack.c.l.b16 %v1390
      %v1745 = vunpack.c.l.b16 %v1391
      %v1746 = vunpack.c.l.b16 %v1392
      %v1747 = vunpack.c.l.b16 %v1393
      %v1748 = vunpack.c.l.b16 %v1394
      %v1749 = vunpack.c.l.b16 %v1395
      %v1750 = vunpack.c.l.b16 %v1396
      %v1751 = vunpack.c.l.b16 %v1397
      %v1752 = vunpack.c.l.b16 %v1398
      %v1753 = vpack.c.b16 %v1730, %v1729
      %v1754 = vpack.c.b16 %v1732, %v1731
      %v1755 = vpack.c.b16 %v1734, %v1733
      %v1756 = vpack.c.b16 %v1736, %v1735
      %v1757 = vpack.c.b16 %v1738, %v1737
      %v1758 = vpack.c.b16 %v1740, %v1739
      %v1759 = vpack.c.b16 %v1742, %v1741
      %v1760 = vpack.c.b16 %v1744, %v1743
      %v1761 = vpack.c.b16 %v1746, %v1745
      %v1762 = vpack.c.b16 %v1748, %v1747
      %v1763 = vpack.c.b16 %v1750, %v1749
      %v1764 = vpack.c.b16 %v1752, %v1751
      %v1777 = vsel %vm597, %v653, 0
      %v1779 = vsel %vm597, %v657, 0
      %v1781 = vsel %vm597, %v661, 0
      %v1783 = vsel %vm597, %v665, 0
      %v1785 = vsel %vm597, %v669, 0
      %v1787 = vsel %vm597, %v673, 0
      %v1789 = vsel %vm597, %v677, 0
      %v1791 = vsel %vm597, %v681, 0
      %v1793 = vsel %vm597, %v685, 0
      %v1795 = vsel %vm597, %v689, 0
      %v1797 = vsel %vm597, %v693, 0
      %v1799 = vsel %vm597, %v697, 0
      %v1801 = vsel %vm597, %v701, 0
      %v1803 = vsel %vm597, %v705, 0
      %v1805 = vsel %vm597, %v709, 0
      %v1807 = vsel %vm597, %v713, 0
      %1809 = vmatprep.subr.bf16.mxu0 0
      %1810 = vmatpush1.bf16.msra.mxu0 %v1753
      %1811 = vmatprep.subr.bf16.mxu0 0
      %1812 = vmatpush1.bf16.msra.mxu0 %v1754
      %1813 = vmatprep.subr.bf16.mxu0 0
      %1814 = vmatpush1.bf16.msra.mxu0 %v1755
      %1815 = vmatprep.subr.bf16.mxu0 0
      %1816 = vmatpush1.bf16.msra.mxu0 %v1756
      %1817 = vmatprep.subr.bf16.mxu0 0
      %1818 = vmatpush1.bf16.msra.mxu0 %v1757
      %1819 = vmatprep.subr.bf16.mxu0 0
      %1820 = vmatpush1.bf16.msra.mxu0 %v1758
      %1821 = vmatprep.subr.bf16.mxu0 0
      %1822 = vmatpush1.bf16.msra.mxu0 %v1759
      %1823 = vmatprep.subr.bf16.mxu0 0
      %1824 = vmatpush1.bf16.msra.mxu0 %v1760
      %1825 = vmatprep.subr.bf16.mxu0 0
      %1826 = vmatpush1.bf16.msra.mxu0 %v1761
      %1827 = vmatprep.subr.bf16.mxu0 0
      %1828 = vmatpush1.bf16.msra.mxu0 %v1762
      %1829 = vmatprep.subr.bf16.mxu0 0
      %1830 = vmatpush1.bf16.msra.mxu0 %v1763
      %1831 = vmatprep.subr.bf16.mxu0 0
      %1832 = vmatpush1.bf16.msra.mxu0 %v1764
      %1833 = vmatprep.subr.bf16.mxu0 0
      %1834 = vmatpush1.bf16.msra.mxu0 0
      %1835 = vmatprep.subr.bf16.mxu0 0
      %1836 = vmatpush1.bf16.msra.mxu0 0
      %1837 = vmatprep.subr.bf16.mxu0 0
      %1838 = vmatpush1.bf16.msra.mxu0 0
      %1839 = vmatprep.subr.bf16.mxu0 0
      %1840 = vmatpush1.bf16.msra.mxu0 0
      %1841 = vmatprep.mubr.bf16.mxu0 %v1777
      %1842 = vmatmul.mubr.bf16.gmra.mrb[0].mxu0 %v652
      %v1843 = vpop.f32.mrb[0].mxu0
      %v1844 = vadd.f32 %v1579, %v1843
      %v1845 = vpop.f32.mrb[0].mxu0
      %v1846 = vpop.f32.mrb[0].mxu0
      %v1847 = vadd.f32 %v1582, %v1846
      %v1848 = vpop.f32.mrb[0].mxu0
      %1849 = vmatprep.mubr.bf16.mxu0 %v1779
      %1850 = vmatmul.mubr.bf16.gmra.mrb[0].mxu0 %v656
      %v1851 = vpop.f32.mrb[0].mxu0
      %v1852 = vadd.f32 %v1587, %v1851
      %v1853 = vpop.f32.mrb[0].mxu0
      %v1854 = vpop.f32.mrb[0].mxu0
      %v1855 = vadd.f32 %v1590, %v1854
      %v1856 = vpop.f32.mrb[0].mxu0
      %1857 = vmatprep.mubr.bf16.mxu0 %v1781
      %1858 = vmatmul.mubr.bf16.gmra.mrb[0].mxu0 %v660
      %v1859 = vpop.f32.mrb[0].mxu0
      %v1860 = vadd.f32 %v1595, %v1859
      %v1861 = vpop.f32.mrb[0].mxu0
      %v1862 = vpop.f32.mrb[0].mxu0
      %v1863 = vadd.f32 %v1598, %v1862
      %v1864 = vpop.f32.mrb[0].mxu0
      %1865 = vmatprep.mubr.bf16.mxu0 %v1783
      %1866 = vmatmul.mubr.bf16.gmra.mrb[0].mxu0 %v664
      %v1867 = vpop.f32.mrb[0].mxu0
      %v1868 = vadd.f32 %v1603, %v1867
      %v1869 = vpop.f32.mrb[0].mxu0
      %v1870 = vpop.f32.mrb[0].mxu0
      %v1871 = vadd.f32 %v1606, %v1870
      %v1872 = vpop.f32.mrb[0].mxu0
      %1873 = vmatprep.mubr.bf16.mxu0 %v1785
      %1874 = vmatmul.mubr.bf16.gmra.mrb[0].mxu0 %v668
      %v1875 = vpop.f32.mrb[0].mxu0
      %v1876 = vadd.f32 %v1611, %v1875
      %v1877 = vpop.f32.mrb[0].mxu0
      %v1878 = vpop.f32.mrb[0].mxu0
      %v1879 = vadd.f32 %v1614, %v1878
      %v1880 = vpop.f32.mrb[0].mxu0
      %1881 = vmatprep.mubr.bf16.mxu0 %v1787
      %1882 = vmatmul.mubr.bf16.gmra.mrb[0].mxu0 %v672
      %v1883 = vpop.f32.mrb[0].mxu0
      %v1884 = vadd.f32 %v1619, %v1883
      %v1885 = vpop.f32.mrb[0].mxu0
      %v1886 = vpop.f32.mrb[0].mxu0
      %v1887 = vadd.f32 %v1622, %v1886
      %v1888 = vpop.f32.mrb[0].mxu0
      %1889 = vmatprep.mubr.bf16.mxu0 %v1789
      %1890 = vmatmul.mubr.bf16.gmra.mrb[0].mxu0 %v676
      %v1891 = vpop.f32.mrb[0].mxu0
      %v1892 = vadd.f32 %v1627, %v1891
      %v1893 = vpop.f32.mrb[0].mxu0
      %v1894 = vpop.f32.mrb[0].mxu0
      %v1895 = vadd.f32 %v1630, %v1894
      %v1896 = vpop.f32.mrb[0].mxu0
      %1897 = vmatprep.mubr.bf16.mxu0 %v1791
      %1898 = vmatmul.mubr.bf16.gmra.mrb[0].mxu0 %v680
      %v1899 = vpop.f32.mrb[0].mxu0
      %v1900 = vadd.f32 %v1635, %v1899
      %v1901 = vpop.f32.mrb[0].mxu0
      %v1902 = vpop.f32.mrb[0].mxu0
      %v1903 = vadd.f32 %v1638, %v1902
      %v1904 = vpop.f32.mrb[0].mxu0
      %1905 = vmatprep.mubr.bf16.mxu0 %v1793
      %1906 = vmatmul.mubr.bf16.gmra.mrb[0].mxu0 %v684
      %v1907 = vpop.f32.mrb[0].mxu0
      %v1908 = vadd.f32 %v1643, %v1907
      %v1909 = vpop.f32.mrb[0].mxu0
      %v1910 = vpop.f32.mrb[0].mxu0
      %v1911 = vadd.f32 %v1646, %v1910
      %v1912 = vpop.f32.mrb[0].mxu0
      %1913 = vmatprep.mubr.bf16.mxu0 %v1795
      %1914 = vmatmul.mubr.bf16.gmra.mrb[0].mxu0 %v688
      %v1915 = vpop.f32.mrb[0].mxu0
      %v1916 = vadd.f32 %v1651, %v1915
      %v1917 = vpop.f32.mrb[0].mxu0
      %v1918 = vpop.f32.mrb[0].mxu0
      %v1919 = vadd.f32 %v1654, %v1918
      %v1920 = vpop.f32.mrb[0].mxu0
      %1921 = vmatprep.mubr.bf16.mxu0 %v1797
      %1922 = vmatmul.mubr.bf16.gmra.mrb[0].mxu0 %v692
      %v1923 = vpop.f32.mrb[0].mxu0
      %v1924 = vadd.f32 %v1659, %v1923
      %v1925 = vpop.f32.mrb[0].mxu0
      %v1926 = vpop.f32.mrb[0].mxu0
      %v1927 = vadd.f32 %v1662, %v1926
      %v1928 = vpop.f32.mrb[0].mxu0
      %1929 = vmatprep.mubr.bf16.mxu0 %v1799
      %1930 = vmatmul.mubr.bf16.gmra.mrb[0].mxu0 %v696
      %v1931 = vpop.f32.mrb[0].mxu0
      %v1932 = vadd.f32 %v1667, %v1931
      %v1933 = vpop.f32.mrb[0].mxu0
      %v1934 = vpop.f32.mrb[0].mxu0
      %v1935 = vadd.f32 %v1670, %v1934
      %v1936 = vpop.f32.mrb[0].mxu0
      %1937 = vmatprep.mubr.bf16.mxu0 %v1801
      %1938 = vmatmul.mubr.bf16.gmra.mrb[0].mxu0 %v700
      %v1939 = vpop.f32.mrb[0].mxu0
      %v1940 = vadd.f32 %v1675, %v1939
      %v1941 = vpop.f32.mrb[0].mxu0
      %v1942 = vpop.f32.mrb[0].mxu0
      %v1943 = vadd.f32 %v1678, %v1942
      %v1944 = vpop.f32.mrb[0].mxu0
      %1945 = vmatprep.mubr.bf16.mxu0 %v1803
      %1946 = vmatmul.mubr.bf16.gmra.mrb[0].mxu0 %v704
      %v1947 = vpop.f32.mrb[0].mxu0
      %v1948 = vadd.f32 %v1683, %v1947
      %v1949 = vpop.f32.mrb[0].mxu0
      %v1950 = vpop.f32.mrb[0].mxu0
      %v1951 = vadd.f32 %v1686, %v1950
      %v1952 = vpop.f32.mrb[0].mxu0
      %1953 = vmatprep.mubr.bf16.mxu0 %v1805
      %1954 = vmatmul.mubr.bf16.gmra.mrb[0].mxu0 %v708
      %v1955 = vpop.f32.mrb[0].mxu0
      %v1956 = vadd.f32 %v1691, %v1955
      %v1957 = vpop.f32.mrb[0].mxu0
      %v1958 = vpop.f32.mrb[0].mxu0
      %v1959 = vadd.f32 %v1694, %v1958
      %v1960 = vpop.f32.mrb[0].mxu0
      %1961 = vmatprep.mubr.bf16.mxu0 %v1807
      %1962 = vmatmul.mubr.bf16.gmra.mrb[0].mxu0 %v712
      %v1963 = vpop.f32.mrb[0].mxu0
      %v1964 = vadd.f32 %v1699, %v1963
      %v1965 = vpop.f32.mrb[0].mxu0
      %v1966 = vpop.f32.mrb[0].mxu0
      %v1967 = vadd.f32 %v1702, %v1966
      %v1968 = vpop.f32.mrb[0].mxu0
      %1969 = vdwg.mxu0
      %s1970 = scalar_lea.vmem %s1, 192
      %v1971 = vld [vmem:[%s1970] sm:$0xf]
      %v1972 = vld [vmem:[%s1970 + $0x4] sm:$0xf]
      %v1973 = vld [vmem:[%s1970 + $0x8] sm:$0xf]
      %v1974 = vld [vmem:[%s1970 + $0xc] sm:$0xf]
      %v1975 = vld [vmem:[%s1970 + $0x10] sm:$0xf]
      %v1976 = vld [vmem:[%s1970 + $0x14] sm:$0xf]
      %v1977 = vld [vmem:[%s1970 + $0x18] sm:$0xf]
      %v1978 = vld [vmem:[%s1970 + $0x1c] sm:$0xf]
      %v1979 = vld [vmem:[%s1970 + $0x20] sm:$0xf]
      %v1980 = vld [vmem:[%s1970 + $0x24] sm:$0xf]
      %v1981 = vld [vmem:[%s1970 + $0x28] sm:$0xf]
      %v1982 = vld [vmem:[%s1970 + $0x2c] sm:$0xf]
      %v1983 = vld [vmem:[%s1970 + $0x30] sm:$0xf]
      %v1984 = vld [vmem:[%s1970 + $0x34] sm:$0xf]
      %v1985 = vld [vmem:[%s1970 + $0x38] sm:$0xf]
      %v1986 = vld [vmem:[%s1970 + $0x3c] sm:$0xf]
      %v1987 = vld [vmem:[%s1970 + $0x40] sm:$0xf]
      %v1988 = vld [vmem:[%s1970 + $0x44] sm:$0xf]
      %v1989 = vld [vmem:[%s1970 + $0x48] sm:$0xf]
      %v1990 = vld [vmem:[%s1970 + $0x4c] sm:$0xf]
      %v1991 = vld [vmem:[%s1970 + $0x50] sm:$0xf]
      %v1992 = vld [vmem:[%s1970 + $0x54] sm:$0xf]
      %v1993 = vld [vmem:[%s1970 + $0x58] sm:$0xf]
      %v1994 = vld [vmem:[%s1970 + $0x5c] sm:$0xf]
      %v2019 = vunpack.c.l.b16 %v1971
      %v2020 = vunpack.c.l.b16 %v1972
      %v2021 = vunpack.c.l.b16 %v1973
      %v2022 = vunpack.c.l.b16 %v1974
      %v2023 = vunpack.c.l.b16 %v1975
      %v2024 = vunpack.c.l.b16 %v1976
      %v2025 = vunpack.c.l.b16 %v1977
      %v2026 = vunpack.c.l.b16 %v1978
      %v2027 = vunpack.c.l.b16 %v1979
      %v2028 = vunpack.c.l.b16 %v1980
      %v2029 = vunpack.c.l.b16 %v1981
      %v2030 = vunpack.c.l.b16 %v1982
      %v2031 = vunpack.c.l.b16 %v1983
      %v2032 = vunpack.c.l.b16 %v1984
      %v2033 = vunpack.c.l.b16 %v1985
      %v2034 = vunpack.c.l.b16 %v1986
      %v2035 = vunpack.c.l.b16 %v1987
      %v2036 = vunpack.c.l.b16 %v1988
      %v2037 = vunpack.c.l.b16 %v1989
      %v2038 = vunpack.c.l.b16 %v1990
      %v2039 = vunpack.c.l.b16 %v1991
      %v2040 = vunpack.c.l.b16 %v1992
      %v2041 = vunpack.c.l.b16 %v1993
      %v2042 = vunpack.c.l.b16 %v1994
      %v2043 = vpack.c.b16 %v2020, %v2019
      %v2044 = vpack.c.b16 %v2022, %v2021
      %v2045 = vpack.c.b16 %v2024, %v2023
      %v2046 = vpack.c.b16 %v2026, %v2025
      %v2047 = vpack.c.b16 %v2028, %v2027
      %v2048 = vpack.c.b16 %v2030, %v2029
      %v2049 = vpack.c.b16 %v2032, %v2031
      %v2050 = vpack.c.b16 %v2034, %v2033
      %v2051 = vpack.c.b16 %v2036, %v2035
      %v2052 = vpack.c.b16 %v2038, %v2037
      %v2053 = vpack.c.b16 %v2040, %v2039
      %v2054 = vpack.c.b16 %v2042, %v2041
      %v2068 = vsel %vm597, %v1253, 0
      %v2071 = vsel %vm597, %v1259, 0
      %v2074 = vsel %vm597, %v1265, 0
      %v2077 = vsel %vm597, %v1271, 0
      %v2080 = vsel %vm597, %v1277, 0
      %v2083 = vsel %vm597, %v1283, 0
      %v2086 = vsel %vm597, %v1289, 0
      %v2089 = vsel %vm597, %v1295, 0
      %v2092 = vsel %vm597, %v1301, 0
      %v2095 = vsel %vm597, %v1307, 0
      %v2098 = vsel %vm597, %v1313, 0
      %v2101 = vsel %vm597, %v1319, 0
      %v2104 = vsel %vm597, %v1325, 0
      %v2107 = vsel %vm597, %v1331, 0
      %v2110 = vsel %vm597, %v1337, 0
      %v2113 = vsel %vm597, %v1343, 0
      %2115 = vmatprep.subr.bf16.mxu0 0
      %2116 = vmatpush1.bf16.msra.mxu0 %v2043
      %2117 = vmatprep.subr.bf16.mxu0 0
      %2118 = vmatpush1.bf16.msra.mxu0 %v2044
      %2119 = vmatprep.subr.bf16.mxu0 0
      %2120 = vmatpush1.bf16.msra.mxu0 %v2045
      %2121 = vmatprep.subr.bf16.mxu0 0
      %2122 = vmatpush1.bf16.msra.mxu0 %v2046
      %2123 = vmatprep.subr.bf16.mxu0 0
      %2124 = vmatpush1.bf16.msra.mxu0 %v2047
      %2125 = vmatprep.subr.bf16.mxu0 0
      %2126 = vmatpush1.bf16.msra.mxu0 %v2048
      %2127 = vmatprep.subr.bf16.mxu0 0
      %2128 = vmatpush1.bf16.msra.mxu0 %v2049
      %2129 = vmatprep.subr.bf16.mxu0 0
      %2130 = vmatpush1.bf16.msra.mxu0 %v2050
      %2131 = vmatprep.subr.bf16.mxu0 0
      %2132 = vmatpush1.bf16.msra.mxu0 %v2051
      %2133 = vmatprep.subr.bf16.mxu0 0
      %2134 = vmatpush1.bf16.msra.mxu0 %v2052
      %2135 = vmatprep.subr.bf16.mxu0 0
      %2136 = vmatpush1.bf16.msra.mxu0 %v2053
      %2137 = vmatprep.subr.bf16.mxu0 0
      %2138 = vmatpush1.bf16.msra.mxu0 %v2054
      %2139 = vmatprep.subr.bf16.mxu0 0
      %2140 = vmatpush1.bf16.msra.mxu0 0
      %2141 = vmatprep.subr.bf16.mxu0 0
      %2142 = vmatpush1.bf16.msra.mxu0 0
      %2143 = vmatprep.subr.bf16.mxu0 0
      %2144 = vmatpush1.bf16.msra.mxu0 0
      %2145 = vmatprep.subr.bf16.mxu0 0
      %2146 = vmatpush1.bf16.msra.mxu0 0
      %2147 = vmatprep.mubr.bf16.mxu0 %v2068
      %2148 = vmatmul.mubr.bf16.gmra.mrb[0].mxu0 %v1250
      %v2149 = vpop.f32.mrb[0].mxu0
      %v2150 = vadd.f32 0.0, %v2149
      %v2151 = vpop.f32.mrb[0].mxu0
      %v2152 = vpop.f32.mrb[0].mxu0
      %v2153 = vadd.f32 0.0, %v2152
      %v2154 = vpop.f32.mrb[0].mxu0
      %2155 = vmatprep.mubr.bf16.mxu0 %v2071
      %2156 = vmatmul.mubr.bf16.gmra.mrb[0].mxu0 %v1256
      %v2157 = vpop.f32.mrb[0].mxu0
      %v2158 = vadd.f32 0.0, %v2157
      %v2159 = vpop.f32.mrb[0].mxu0
      %v2160 = vpop.f32.mrb[0].mxu0
      %v2161 = vadd.f32 0.0, %v2160
      %v2162 = vpop.f32.mrb[0].mxu0
      %2163 = vmatprep.mubr.bf16.mxu0 %v2074
      %2164 = vmatmul.mubr.bf16.gmra.mrb[0].mxu0 %v1262
      %v2165 = vpop.f32.mrb[0].mxu0
      %v2166 = vadd.f32 0.0, %v2165
      %v2167 = vpop.f32.mrb[0].mxu0
      %v2168 = vpop.f32.mrb[0].mxu0
      %v2169 = vadd.f32 0.0, %v2168
      %v2170 = vpop.f32.mrb[0].mxu0
      %2171 = vmatprep.mubr.bf16.mxu0 %v2077
      %2172 = vmatmul.mubr.bf16.gmra.mrb[0].mxu0 %v1268
      %v2173 = vpop.f32.mrb[0].mxu0
      %v2174 = vadd.f32 0.0, %v2173
      %v2175 = vpop.f32.mrb[0].mxu0
      %v2176 = vpop.f32.mrb[0].mxu0
      %v2177 = vadd.f32 0.0, %v2176
      %v2178 = vpop.f32.mrb[0].mxu0
      %2179 = vmatprep.mubr.bf16.mxu0 %v2080
      %2180 = vmatmul.mubr.bf16.gmra.mrb[0].mxu0 %v1274
      %v2181 = vpop.f32.mrb[0].mxu0
      %v2182 = vadd.f32 0.0, %v2181
      %v2183 = vpop.f32.mrb[0].mxu0
      %v2184 = vpop.f32.mrb[0].mxu0
      %v2185 = vadd.f32 0.0, %v2184
      %v2186 = vpop.f32.mrb[0].mxu0
      %2187 = vmatprep.mubr.bf16.mxu0 %v2083
      %2188 = vmatmul.mubr.bf16.gmra.mrb[0].mxu0 %v1280
      %v2189 = vpop.f32.mrb[0].mxu0
      %v2190 = vadd.f32 0.0, %v2189
      %v2191 = vpop.f32.mrb[0].mxu0
      %v2192 = vpop.f32.mrb[0].mxu0
      %v2193 = vadd.f32 0.0, %v2192
      %v2194 = vpop.f32.mrb[0].mxu0
      %2195 = vmatprep.mubr.bf16.mxu0 %v2086
      %2196 = vmatmul.mubr.bf16.gmra.mrb[0].mxu0 %v1286
      %v2197 = vpop.f32.mrb[0].mxu0
      %v2198 = vadd.f32 0.0, %v2197
      %v2199 = vpop.f32.mrb[0].mxu0
      %v2200 = vpop.f32.mrb[0].mxu0
      %v2201 = vadd.f32 0.0, %v2200
      %v2202 = vpop.f32.mrb[0].mxu0
      %2203 = vmatprep.mubr.bf16.mxu0 %v2089
      %2204 = vmatmul.mubr.bf16.gmra.mrb[0].mxu0 %v1292
      %v2205 = vpop.f32.mrb[0].mxu0
      %v2206 = vadd.f32 0.0, %v2205
      %v2207 = vpop.f32.mrb[0].mxu0
      %v2208 = vpop.f32.mrb[0].mxu0
      %v2209 = vadd.f32 0.0, %v2208
      %v2210 = vpop.f32.mrb[0].mxu0
      %2211 = vmatprep.mubr.bf16.mxu0 %v2092
      %2212 = vmatmul.mubr.bf16.gmra.mrb[0].mxu0 %v1298
      %v2213 = vpop.f32.mrb[0].mxu0
      %v2214 = vadd.f32 0.0, %v2213
      %v2215 = vpop.f32.mrb[0].mxu0
      %v2216 = vpop.f32.mrb[0].mxu0
      %v2217 = vadd.f32 0.0, %v2216
      %v2218 = vpop.f32.mrb[0].mxu0
      %2219 = vmatprep.mubr.bf16.mxu0 %v2095
      %2220 = vmatmul.mubr.bf16.gmra.mrb[0].mxu0 %v1304
      %v2221 = vpop.f32.mrb[0].mxu0
      %v2222 = vadd.f32 0.0, %v2221
      %v2223 = vpop.f32.mrb[0].mxu0
      %v2224 = vpop.f32.mrb[0].mxu0
      %v2225 = vadd.f32 0.0, %v2224
      %v2226 = vpop.f32.mrb[0].mxu0
      %2227 = vmatprep.mubr.bf16.mxu0 %v2098
      %2228 = vmatmul.mubr.bf16.gmra.mrb[0].mxu0 %v1310
      %v2229 = vpop.f32.mrb[0].mxu0
      %v2230 = vadd.f32 0.0, %v2229
      %v2231 = vpop.f32.mrb[0].mxu0
      %v2232 = vpop.f32.mrb[0].mxu0
      %v2233 = vadd.f32 0.0, %v2232
      %v2234 = vpop.f32.mrb[0].mxu0
      %2235 = vmatprep.mubr.bf16.mxu0 %v2101
      %2236 = vmatmul.mubr.bf16.gmra.mrb[0].mxu0 %v1316
      %v2237 = vpop.f32.mrb[0].mxu0
      %v2238 = vadd.f32 0.0, %v2237
      %v2239 = vpop.f32.mrb[0].mxu0
      %v2240 = vpop.f32.mrb[0].mxu0
      %v2241 = vadd.f32 0.0, %v2240
      %v2242 = vpop.f32.mrb[0].mxu0
      %2243 = vmatprep.mubr.bf16.mxu0 %v2104
      %2244 = vmatmul.mubr.bf16.gmra.mrb[0].mxu0 %v1322
      %v2245 = vpop.f32.mrb[0].mxu0
      %v2246 = vadd.f32 0.0, %v2245
      %v2247 = vpop.f32.mrb[0].mxu0
      %v2248 = vpop.f32.mrb[0].mxu0
      %v2249 = vadd.f32 0.0, %v2248
      %v2250 = vpop.f32.mrb[0].mxu0
      %2251 = vmatprep.mubr.bf16.mxu0 %v2107
      %2252 = vmatmul.mubr.bf16.gmra.mrb[0].mxu0 %v1328
      %v2253 = vpop.f32.mrb[0].mxu0
      %v2254 = vadd.f32 0.0, %v2253
      %v2255 = vpop.f32.mrb[0].mxu0
      %v2256 = vpop.f32.mrb[0].mxu0
      %v2257 = vadd.f32 0.0, %v2256
      %v2258 = vpop.f32.mrb[0].mxu0
      %2259 = vmatprep.mubr.bf16.mxu0 %v2110
      %2260 = vmatmul.mubr.bf16.gmra.mrb[0].mxu0 %v1334
      %v2261 = vpop.f32.mrb[0].mxu0
      %v2262 = vadd.f32 0.0, %v2261
      %v2263 = vpop.f32.mrb[0].mxu0
      %v2264 = vpop.f32.mrb[0].mxu0
      %v2265 = vadd.f32 0.0, %v2264
      %v2266 = vpop.f32.mrb[0].mxu0
      %2267 = vmatprep.mubr.bf16.mxu0 %v2113
      %2268 = vmatmul.mubr.bf16.gmra.mrb[0].mxu0 %v1340
      %v2269 = vpop.f32.mrb[0].mxu0
      %v2270 = vadd.f32 0.0, %v2269
      %v2271 = vpop.f32.mrb[0].mxu0
      %v2272 = vpop.f32.mrb[0].mxu0
      %v2273 = vadd.f32 0.0, %v2272
      %v2274 = vpop.f32.mrb[0].mxu0
      %2275 = vdwg.mxu0
      %v2276 = vadd.f32 %v1844, %v2150
      %v2277 = vadd.f32 %v1847, %v2153
      %v2278 = vadd.f32 %v1852, %v2158
      %v2279 = vadd.f32 %v1855, %v2161
      %v2280 = vadd.f32 %v1860, %v2166
      %v2281 = vadd.f32 %v1863, %v2169
      %v2282 = vadd.f32 %v1868, %v2174
      %v2283 = vadd.f32 %v1871, %v2177
      %v2284 = vadd.f32 %v1876, %v2182
      %v2285 = vadd.f32 %v1879, %v2185
      %v2286 = vadd.f32 %v1884, %v2190
      %v2287 = vadd.f32 %v1887, %v2193
      %v2288 = vadd.f32 %v1892, %v2198
      %v2289 = vadd.f32 %v1895, %v2201
      %v2290 = vadd.f32 %v1900, %v2206
      %v2291 = vadd.f32 %v1903, %v2209
      %v2292 = vadd.f32 %v1908, %v2214
      %v2293 = vadd.f32 %v1911, %v2217
      %v2294 = vadd.f32 %v1916, %v2222
      %v2295 = vadd.f32 %v1919, %v2225
      %v2296 = vadd.f32 %v1924, %v2230
      %v2297 = vadd.f32 %v1927, %v2233
      %v2298 = vadd.f32 %v1932, %v2238
      %v2299 = vadd.f32 %v1935, %v2241
      %v2300 = vadd.f32 %v1940, %v2246
      %v2301 = vadd.f32 %v1943, %v2249
      %v2302 = vadd.f32 %v1948, %v2254
      %v2303 = vadd.f32 %v1951, %v2257
      %v2304 = vadd.f32 %v1956, %v2262
      %v2305 = vadd.f32 %v1959, %v2265
      %v2306 = vadd.f32 %v1964, %v2270
      %v2307 = vadd.f32 %v1967, %v2273
      %s2308 = scalar_lea.vmem %s1, 288
      %v2309 = vld [vmem:[%s2308] sm:$0xf]
      %v2310 = vld [vmem:[%s2308 + $0x4] sm:$0xf]
      %v2311 = vld [vmem:[%s2308 + $0x8] sm:$0xf]
      %v2312 = vld [vmem:[%s2308 + $0xc] sm:$0xf]
      %v2313 = vld [vmem:[%s2308 + $0x10] sm:$0xf]
      %v2314 = vld [vmem:[%s2308 + $0x14] sm:$0xf]
      %v2315 = vld [vmem:[%s2308 + $0x18] sm:$0xf]
      %v2316 = vld [vmem:[%s2308 + $0x1c] sm:$0xf]
      %v2317 = vld [vmem:[%s2308 + $0x20] sm:$0xf]
      %v2318 = vld [vmem:[%s2308 + $0x24] sm:$0xf]
      %v2319 = vld [vmem:[%s2308 + $0x28] sm:$0xf]
      %v2320 = vld [vmem:[%s2308 + $0x2c] sm:$0xf]
      %v2321 = vld [vmem:[%s2308 + $0x30] sm:$0xf]
      %v2322 = vld [vmem:[%s2308 + $0x34] sm:$0xf]
      %v2323 = vld [vmem:[%s2308 + $0x38] sm:$0xf]
      %v2324 = vld [vmem:[%s2308 + $0x3c] sm:$0xf]
      %v2325 = vld [vmem:[%s2308 + $0x40] sm:$0xf]
      %v2326 = vld [vmem:[%s2308 + $0x44] sm:$0xf]
      %v2327 = vld [vmem:[%s2308 + $0x48] sm:$0xf]
      %v2328 = vld [vmem:[%s2308 + $0x4c] sm:$0xf]
      %v2329 = vld [vmem:[%s2308 + $0x50] sm:$0xf]
      %v2330 = vld [vmem:[%s2308 + $0x54] sm:$0xf]
      %v2331 = vld [vmem:[%s2308 + $0x58] sm:$0xf]
      %v2332 = vld [vmem:[%s2308 + $0x5c] sm:$0xf]
      %v2357 = vunpack.c.l.b16 %v2309
      %v2358 = vunpack.c.l.b16 %v2310
      %v2359 = vunpack.c.l.b16 %v2311
      %v2360 = vunpack.c.l.b16 %v2312
      %v2361 = vunpack.c.l.b16 %v2313
      %v2362 = vunpack.c.l.b16 %v2314
      %v2363 = vunpack.c.l.b16 %v2315
      %v2364 = vunpack.c.l.b16 %v2316
      %v2365 = vunpack.c.l.b16 %v2317
      %v2366 = vunpack.c.l.b16 %v2318
      %v2367 = vunpack.c.l.b16 %v2319
      %v2368 = vunpack.c.l.b16 %v2320
      %v2369 = vunpack.c.l.b16 %v2321
      %v2370 = vunpack.c.l.b16 %v2322
      %v2371 = vunpack.c.l.b16 %v2323
      %v2372 = vunpack.c.l.b16 %v2324
      %v2373 = vunpack.c.l.b16 %v2325
      %v2374 = vunpack.c.l.b16 %v2326
      %v2375 = vunpack.c.l.b16 %v2327
      %v2376 = vunpack.c.l.b16 %v2328
      %v2377 = vunpack.c.l.b16 %v2329
      %v2378 = vunpack.c.l.b16 %v2330
      %v2379 = vunpack.c.l.b16 %v2331
      %v2380 = vunpack.c.l.b16 %v2332
      %v2381 = vpack.c.b16 %v2358, %v2357
      %v2382 = vpack.c.b16 %v2360, %v2359
      %v2383 = vpack.c.b16 %v2362, %v2361
      %v2384 = vpack.c.b16 %v2364, %v2363
      %v2385 = vpack.c.b16 %v2366, %v2365
      %v2386 = vpack.c.b16 %v2368, %v2367
      %v2387 = vpack.c.b16 %v2370, %v2369
      %v2388 = vpack.c.b16 %v2372, %v2371
      %v2389 = vpack.c.b16 %v2374, %v2373
      %v2390 = vpack.c.b16 %v2376, %v2375
      %v2391 = vpack.c.b16 %v2378, %v2377
      %v2392 = vpack.c.b16 %v2380, %v2379
      %v2405 = vsel %vm597, %v717, 0
      %2407 = vmatprep.subr.bf16.mxu0 0
      %2408 = vmatpush1.bf16.msra.mxu0 %v2381
      %2409 = vmatprep.subr.bf16.mxu0 0
      %2410 = vmatpush1.bf16.msra.mxu0 %v2382
      %2411 = vmatprep.subr.bf16.mxu0 0
      %2412 = vmatpush1.bf16.msra.mxu0 %v2383
      %2413 = vmatprep.subr.bf16.mxu0 0
      %2414 = vmatpush1.bf16.msra.mxu0 %v2384
      %2415 = vmatprep.subr.bf16.mxu0 0
      %2416 = vmatpush1.bf16.msra.mxu0 %v2385
      %2417 = vmatprep.subr.bf16.mxu0 0
      %2418 = vmatpush1.bf16.msra.mxu0 %v2386
      %2419 = vmatprep.subr.bf16.mxu0 0
      %2420 = vmatpush1.bf16.msra.mxu0 %v2387
      %2421 = vmatprep.subr.bf16.mxu0 0
      %2422 = vmatpush1.bf16.msra.mxu0 %v2388
      %2423 = vmatprep.subr.bf16.mxu0 0
      %2424 = vmatpush1.bf16.msra.mxu0 %v2389
      %2425 = vmatprep.subr.bf16.mxu0 0
      %2426 = vmatpush1.bf16.msra.mxu0 %v2390
      %2427 = vmatprep.subr.bf16.mxu0 0
      %2428 = vmatpush1.bf16.msra.mxu0 %v2391
      %2429 = vmatprep.subr.bf16.mxu0 0
      %2430 = vmatpush1.bf16.msra.mxu0 %v2392
      %2431 = vmatprep.subr.bf16.mxu0 0
      %2432 = vmatpush1.bf16.msra.mxu0 0
      %2433 = vmatprep.subr.bf16.mxu0 0
      %2434 = vmatpush1.bf16.msra.mxu0 0
      %2435 = vmatprep.subr.bf16.mxu0 0
      %2436 = vmatpush1.bf16.msra.mxu0 0
      %2437 = vmatprep.subr.bf16.mxu0 0
      %2438 = vmatpush1.bf16.msra.mxu0 0
      %2439 = vmatprep.mubr.bf16.mxu0 %v1779
      %2440 = vmatmul.mubr.bf16.gmra.mrb[0].mxu0 %v656
      %v2441 = vpop.f32.mrb[0].mxu0
      %v2442 = vadd.f32 0.0, %v2441
      %v2443 = vpop.f32.mrb[0].mxu0
      %v2444 = vpop.f32.mrb[0].mxu0
      %v2445 = vadd.f32 0.0, %v2444
      %v2446 = vpop.f32.mrb[0].mxu0
      %2447 = vmatprep.mubr.bf16.mxu0 %v1781
      %2448 = vmatmul.mubr.bf16.gmra.mrb[0].mxu0 %v660
      %v2449 = vpop.f32.mrb[0].mxu0
      %v2450 = vadd.f32 0.0, %v2449
      %v2451 = vpop.f32.mrb[0].mxu0
      %v2452 = vpop.f32.mrb[0].mxu0
      %v2453 = vadd.f32 0.0, %v2452
      %v2454 = vpop.f32.mrb[0].mxu0
      %2455 = vmatprep.mubr.bf16.mxu0 %v1783
      %2456 = vmatmul.mubr.bf16.gmra.mrb[0].mxu0 %v664
      %v2457 = vpop.f32.mrb[0].mxu0
      %v2458 = vadd.f32 0.0, %v2457
      %v2459 = vpop.f32.mrb[0].mxu0
      %v2460 = vpop.f32.mrb[0].mxu0
      %v2461 = vadd.f32 0.0, %v2460
      %v2462 = vpop.f32.mrb[0].mxu0
      %2463 = vmatprep.mubr.bf16.mxu0 %v1785
      %2464 = vmatmul.mubr.bf16.gmra.mrb[0].mxu0 %v668
      %v2465 = vpop.f32.mrb[0].mxu0
      %v2466 = vadd.f32 0.0, %v2465
      %v2467 = vpop.f32.mrb[0].mxu0
      %v2468 = vpop.f32.mrb[0].mxu0
      %v2469 = vadd.f32 0.0, %v2468
      %v2470 = vpop.f32.mrb[0].mxu0
      %2471 = vmatprep.mubr.bf16.mxu0 %v1787
      %2472 = vmatmul.mubr.bf16.gmra.mrb[0].mxu0 %v672
      %v2473 = vpop.f32.mrb[0].mxu0
      %v2474 = vadd.f32 0.0, %v2473
      %v2475 = vpop.f32.mrb[0].mxu0
      %v2476 = vpop.f32.mrb[0].mxu0
      %v2477 = vadd.f32 0.0, %v2476
      %v2478 = vpop.f32.mrb[0].mxu0
      %2479 = vmatprep.mubr.bf16.mxu0 %v1789
      %2480 = vmatmul.mubr.bf16.gmra.mrb[0].mxu0 %v676
      %v2481 = vpop.f32.mrb[0].mxu0
      %v2482 = vadd.f32 0.0, %v2481
      %v2483 = vpop.f32.mrb[0].mxu0
      %v2484 = vpop.f32.mrb[0].mxu0
      %v2485 = vadd.f32 0.0, %v2484
      %v2486 = vpop.f32.mrb[0].mxu0
      %2487 = vmatprep.mubr.bf16.mxu0 %v1791
      %2488 = vmatmul.mubr.bf16.gmra.mrb[0].mxu0 %v680
      %v2489 = vpop.f32.mrb[0].mxu0
      %v2490 = vadd.f32 0.0, %v2489
      %v2491 = vpop.f32.mrb[0].mxu0
      %v2492 = vpop.f32.mrb[0].mxu0
      %v2493 = vadd.f32 0.0, %v2492
      %v2494 = vpop.f32.mrb[0].mxu0
      %2495 = vmatprep.mubr.bf16.mxu0 %v1793
      %2496 = vmatmul.mubr.bf16.gmra.mrb[0].mxu0 %v684
      %v2497 = vpop.f32.mrb[0].mxu0
      %v2498 = vadd.f32 0.0, %v2497
      %v2499 = vpop.f32.mrb[0].mxu0
      %v2500 = vpop.f32.mrb[0].mxu0
      %v2501 = vadd.f32 0.0, %v2500
      %v2502 = vpop.f32.mrb[0].mxu0
      %2503 = vmatprep.mubr.bf16.mxu0 %v1795
      %2504 = vmatmul.mubr.bf16.gmra.mrb[0].mxu0 %v688
      %v2505 = vpop.f32.mrb[0].mxu0
      %v2506 = vadd.f32 0.0, %v2505
      %v2507 = vpop.f32.mrb[0].mxu0
      %v2508 = vpop.f32.mrb[0].mxu0
      %v2509 = vadd.f32 0.0, %v2508
      %v2510 = vpop.f32.mrb[0].mxu0
      %2511 = vmatprep.mubr.bf16.mxu0 %v1797
      %2512 = vmatmul.mubr.bf16.gmra.mrb[0].mxu0 %v692
      %v2513 = vpop.f32.mrb[0].mxu0
      %v2514 = vadd.f32 0.0, %v2513
      %v2515 = vpop.f32.mrb[0].mxu0
      %v2516 = vpop.f32.mrb[0].mxu0
      %v2517 = vadd.f32 0.0, %v2516
      %v2518 = vpop.f32.mrb[0].mxu0
      %2519 = vmatprep.mubr.bf16.mxu0 %v1799
      %2520 = vmatmul.mubr.bf16.gmra.mrb[0].mxu0 %v696
      %v2521 = vpop.f32.mrb[0].mxu0
      %v2522 = vadd.f32 0.0, %v2521
      %v2523 = vpop.f32.mrb[0].mxu0
      %v2524 = vpop.f32.mrb[0].mxu0
      %v2525 = vadd.f32 0.0, %v2524
      %v2526 = vpop.f32.mrb[0].mxu0
      %2527 = vmatprep.mubr.bf16.mxu0 %v1801
      %2528 = vmatmul.mubr.bf16.gmra.mrb[0].mxu0 %v700
      %v2529 = vpop.f32.mrb[0].mxu0
      %v2530 = vadd.f32 0.0, %v2529
      %v2531 = vpop.f32.mrb[0].mxu0
      %v2532 = vpop.f32.mrb[0].mxu0
      %v2533 = vadd.f32 0.0, %v2532
      %v2534 = vpop.f32.mrb[0].mxu0
      %2535 = vmatprep.mubr.bf16.mxu0 %v1803
      %2536 = vmatmul.mubr.bf16.gmra.mrb[0].mxu0 %v704
      %v2537 = vpop.f32.mrb[0].mxu0
      %v2538 = vadd.f32 0.0, %v2537
      %v2539 = vpop.f32.mrb[0].mxu0
      %v2540 = vpop.f32.mrb[0].mxu0
      %v2541 = vadd.f32 0.0, %v2540
      %v2542 = vpop.f32.mrb[0].mxu0
      %2543 = vmatprep.mubr.bf16.mxu0 %v1805
      %2544 = vmatmul.mubr.bf16.gmra.mrb[0].mxu0 %v708
      %v2545 = vpop.f32.mrb[0].mxu0
      %v2546 = vadd.f32 0.0, %v2545
      %v2547 = vpop.f32.mrb[0].mxu0
      %v2548 = vpop.f32.mrb[0].mxu0
      %v2549 = vadd.f32 0.0, %v2548
      %v2550 = vpop.f32.mrb[0].mxu0
      %2551 = vmatprep.mubr.bf16.mxu0 %v1807
      %2552 = vmatmul.mubr.bf16.gmra.mrb[0].mxu0 %v712
      %v2553 = vpop.f32.mrb[0].mxu0
      %v2554 = vadd.f32 0.0, %v2553
      %v2555 = vpop.f32.mrb[0].mxu0
      %v2556 = vpop.f32.mrb[0].mxu0
      %v2557 = vadd.f32 0.0, %v2556
      %v2558 = vpop.f32.mrb[0].mxu0
      %2559 = vmatprep.mubr.bf16.mxu0 %v2405
      %2560 = vmatmul.mubr.bf16.gmra.mrb[0].mxu0 %v716
      %v2561 = vpop.f32.mrb[0].mxu0
      %v2562 = vadd.f32 0.0, %v2561
      %v2563 = vpop.f32.mrb[0].mxu0
      %v2564 = vpop.f32.mrb[0].mxu0
      %v2565 = vadd.f32 0.0, %v2564
      %v2566 = vpop.f32.mrb[0].mxu0
      %2567 = vdwg.mxu0
      %v2568 = vadd.f32 %v2276, %v2442
      %v2569 = vadd.f32 %v2277, %v2445
      %v2570 = vadd.f32 %v2278, %v2450
      %v2571 = vadd.f32 %v2279, %v2453
      %v2572 = vadd.f32 %v2280, %v2458
      %v2573 = vadd.f32 %v2281, %v2461
      %v2574 = vadd.f32 %v2282, %v2466
      %v2575 = vadd.f32 %v2283, %v2469
      %v2576 = vadd.f32 %v2284, %v2474
      %v2577 = vadd.f32 %v2285, %v2477
      %v2578 = vadd.f32 %v2286, %v2482
      %v2579 = vadd.f32 %v2287, %v2485
      %v2580 = vadd.f32 %v2288, %v2490
      %v2581 = vadd.f32 %v2289, %v2493
      %v2582 = vadd.f32 %v2290, %v2498
      %v2583 = vadd.f32 %v2291, %v2501
      %v2584 = vadd.f32 %v2292, %v2506
      %v2585 = vadd.f32 %v2293, %v2509
      %v2586 = vadd.f32 %v2294, %v2514
      %v2587 = vadd.f32 %v2295, %v2517
      %v2588 = vadd.f32 %v2296, %v2522
      %v2589 = vadd.f32 %v2297, %v2525
      %v2590 = vadd.f32 %v2298, %v2530
      %v2591 = vadd.f32 %v2299, %v2533
      %v2592 = vadd.f32 %v2300, %v2538
      %v2593 = vadd.f32 %v2301, %v2541
      %v2594 = vadd.f32 %v2302, %v2546
      %v2595 = vadd.f32 %v2303, %v2549
      %v2596 = vadd.f32 %v2304, %v2554
      %v2597 = vadd.f32 %v2305, %v2557
      %v2598 = vadd.f32 %v2306, %v2562
      %v2599 = vadd.f32 %v2307, %v2565
      %s2600 = scalar_lea.vmem %s1, 384
      %v2601 = vld [vmem:[%s2600] sm:$0xf]
      %v2602 = vld [vmem:[%s2600 + $0x4] sm:$0xf]
      %v2603 = vld [vmem:[%s2600 + $0x8] sm:$0xf]
      %v2604 = vld [vmem:[%s2600 + $0xc] sm:$0xf]
      %v2605 = vld [vmem:[%s2600 + $0x10] sm:$0xf]
      %v2606 = vld [vmem:[%s2600 + $0x14] sm:$0xf]
      %v2607 = vld [vmem:[%s2600 + $0x18] sm:$0xf]
      %v2608 = vld [vmem:[%s2600 + $0x1c] sm:$0xf]
      %v2609 = vld [vmem:[%s2600 + $0x20] sm:$0xf]
      %v2610 = vld [vmem:[%s2600 + $0x24] sm:$0xf]
      %v2611 = vld [vmem:[%s2600 + $0x28] sm:$0xf]
      %v2612 = vld [vmem:[%s2600 + $0x2c] sm:$0xf]
      %v2613 = vld [vmem:[%s2600 + $0x30] sm:$0xf]
      %v2614 = vld [vmem:[%s2600 + $0x34] sm:$0xf]
      %v2615 = vld [vmem:[%s2600 + $0x38] sm:$0xf]
      %v2616 = vld [vmem:[%s2600 + $0x3c] sm:$0xf]
      %v2617 = vld [vmem:[%s2600 + $0x40] sm:$0xf]
      %v2618 = vld [vmem:[%s2600 + $0x44] sm:$0xf]
      %v2619 = vld [vmem:[%s2600 + $0x48] sm:$0xf]
      %v2620 = vld [vmem:[%s2600 + $0x4c] sm:$0xf]
      %v2621 = vld [vmem:[%s2600 + $0x50] sm:$0xf]
      %v2622 = vld [vmem:[%s2600 + $0x54] sm:$0xf]
      %v2623 = vld [vmem:[%s2600 + $0x58] sm:$0xf]
      %v2624 = vld [vmem:[%s2600 + $0x5c] sm:$0xf]
      %v2649 = vunpack.c.l.b16 %v2601
      %v2650 = vunpack.c.l.b16 %v2602
      %v2651 = vunpack.c.l.b16 %v2603
      %v2652 = vunpack.c.l.b16 %v2604
      %v2653 = vunpack.c.l.b16 %v2605
      %v2654 = vunpack.c.l.b16 %v2606
      %v2655 = vunpack.c.l.b16 %v2607
      %v2656 = vunpack.c.l.b16 %v2608
      %v2657 = vunpack.c.l.b16 %v2609
      %v2658 = vunpack.c.l.b16 %v2610
      %v2659 = vunpack.c.l.b16 %v2611
      %v2660 = vunpack.c.l.b16 %v2612
      %v2661 = vunpack.c.l.b16 %v2613
      %v2662 = vunpack.c.l.b16 %v2614
      %v2663 = vunpack.c.l.b16 %v2615
      %v2664 = vunpack.c.l.b16 %v2616
      %v2665 = vunpack.c.l.b16 %v2617
      %v2666 = vunpack.c.l.b16 %v2618
      %v2667 = vunpack.c.l.b16 %v2619
      %v2668 = vunpack.c.l.b16 %v2620
      %v2669 = vunpack.c.l.b16 %v2621
      %v2670 = vunpack.c.l.b16 %v2622
      %v2671 = vunpack.c.l.b16 %v2623
      %v2672 = vunpack.c.l.b16 %v2624
      %v2673 = vpack.c.b16 %v2650, %v2649
      %v2674 = vpack.c.b16 %v2652, %v2651
      %v2675 = vpack.c.b16 %v2654, %v2653
      %v2676 = vpack.c.b16 %v2656, %v2655
      %v2677 = vpack.c.b16 %v2658, %v2657
      %v2678 = vpack.c.b16 %v2660, %v2659
      %v2679 = vpack.c.b16 %v2662, %v2661
      %v2680 = vpack.c.b16 %v2664, %v2663
      %v2681 = vpack.c.b16 %v2666, %v2665
      %v2682 = vpack.c.b16 %v2668, %v2667
      %v2683 = vpack.c.b16 %v2670, %v2669
      %v2684 = vpack.c.b16 %v2672, %v2671
      %v2698 = vsel %vm597, %v1132, 0
      %2700 = vmatprep.subr.bf16.mxu0 0
      %2701 = vmatpush1.bf16.msra.mxu0 %v2673
      %2702 = vmatprep.subr.bf16.mxu0 0
      %2703 = vmatpush1.bf16.msra.mxu0 %v2674
      %2704 = vmatprep.subr.bf16.mxu0 0
      %2705 = vmatpush1.bf16.msra.mxu0 %v2675
      %2706 = vmatprep.subr.bf16.mxu0 0
      %2707 = vmatpush1.bf16.msra.mxu0 %v2676
      %2708 = vmatprep.subr.bf16.mxu0 0
      %2709 = vmatpush1.bf16.msra.mxu0 %v2677
      %2710 = vmatprep.subr.bf16.mxu0 0
      %2711 = vmatpush1.bf16.msra.mxu0 %v2678
      %2712 = vmatprep.subr.bf16.mxu0 0
      %2713 = vmatpush1.bf16.msra.mxu0 %v2679
      %2714 = vmatprep.subr.bf16.mxu0 0
      %2715 = vmatpush1.bf16.msra.mxu0 %v2680
      %2716 = vmatprep.subr.bf16.mxu0 0
      %2717 = vmatpush1.bf16.msra.mxu0 %v2681
      %2718 = vmatprep.subr.bf16.mxu0 0
      %2719 = vmatpush1.bf16.msra.mxu0 %v2682
      %2720 = vmatprep.subr.bf16.mxu0 0
      %2721 = vmatpush1.bf16.msra.mxu0 %v2683
      %2722 = vmatprep.subr.bf16.mxu0 0
      %2723 = vmatpush1.bf16.msra.mxu0 %v2684
      %2724 = vmatprep.subr.bf16.mxu0 0
      %2725 = vmatpush1.bf16.msra.mxu0 0
      %2726 = vmatprep.subr.bf16.mxu0 0
      %2727 = vmatpush1.bf16.msra.mxu0 0
      %2728 = vmatprep.subr.bf16.mxu0 0
      %2729 = vmatpush1.bf16.msra.mxu0 0
      %2730 = vmatprep.subr.bf16.mxu0 0
      %2731 = vmatpush1.bf16.msra.mxu0 0
      %2732 = vmatprep.mubr.bf16.mxu0 %v1500
      %2733 = vmatmul.mubr.bf16.gmra.mrb[0].mxu0 %v760
      %v2734 = vpop.f32.mrb[0].mxu0
      %v2735 = vadd.f32 0.0, %v2734
      %v2736 = vpop.f32.mrb[0].mxu0
      %v2737 = vpop.f32.mrb[0].mxu0
      %v2738 = vadd.f32 0.0, %v2737
      %v2739 = vpop.f32.mrb[0].mxu0
      %2740 = vmatprep.mubr.bf16.mxu0 %v1503
      %2741 = vmatmul.mubr.bf16.gmra.mrb[0].mxu0 %v784
      %v2742 = vpop.f32.mrb[0].mxu0
      %v2743 = vadd.f32 0.0, %v2742
      %v2744 = vpop.f32.mrb[0].mxu0
      %v2745 = vpop.f32.mrb[0].mxu0
      %v2746 = vadd.f32 0.0, %v2745
      %v2747 = vpop.f32.mrb[0].mxu0
      %2748 = vmatprep.mubr.bf16.mxu0 %v1506
      %2749 = vmatmul.mubr.bf16.gmra.mrb[0].mxu0 %v808
      %v2750 = vpop.f32.mrb[0].mxu0
      %v2751 = vadd.f32 0.0, %v2750
      %v2752 = vpop.f32.mrb[0].mxu0
      %v2753 = vpop.f32.mrb[0].mxu0
      %v2754 = vadd.f32 0.0, %v2753
      %v2755 = vpop.f32.mrb[0].mxu0
      %2756 = vmatprep.mubr.bf16.mxu0 %v1509
      %2757 = vmatmul.mubr.bf16.gmra.mrb[0].mxu0 %v832
      %v2758 = vpop.f32.mrb[0].mxu0
      %v2759 = vadd.f32 0.0, %v2758
      %v2760 = vpop.f32.mrb[0].mxu0
      %v2761 = vpop.f32.mrb[0].mxu0
      %v2762 = vadd.f32 0.0, %v2761
      %v2763 = vpop.f32.mrb[0].mxu0
      %2764 = vmatprep.mubr.bf16.mxu0 %v1512
      %2765 = vmatmul.mubr.bf16.gmra.mrb[0].mxu0 %v856
      %v2766 = vpop.f32.mrb[0].mxu0
      %v2767 = vadd.f32 0.0, %v2766
      %v2768 = vpop.f32.mrb[0].mxu0
      %v2769 = vpop.f32.mrb[0].mxu0
      %v2770 = vadd.f32 0.0, %v2769
      %v2771 = vpop.f32.mrb[0].mxu0
      %2772 = vmatprep.mubr.bf16.mxu0 %v1515
      %2773 = vmatmul.mubr.bf16.gmra.mrb[0].mxu0 %v880
      %v2774 = vpop.f32.mrb[0].mxu0
      %v2775 = vadd.f32 0.0, %v2774
      %v2776 = vpop.f32.mrb[0].mxu0
      %v2777 = vpop.f32.mrb[0].mxu0
      %v2778 = vadd.f32 0.0, %v2777
      %v2779 = vpop.f32.mrb[0].mxu0
      %2780 = vmatprep.mubr.bf16.mxu0 %v1518
      %2781 = vmatmul.mubr.bf16.gmra.mrb[0].mxu0 %v904
      %v2782 = vpop.f32.mrb[0].mxu0
      %v2783 = vadd.f32 0.0, %v2782
      %v2784 = vpop.f32.mrb[0].mxu0
      %v2785 = vpop.f32.mrb[0].mxu0
      %v2786 = vadd.f32 0.0, %v2785
      %v2787 = vpop.f32.mrb[0].mxu0
      %2788 = vmatprep.mubr.bf16.mxu0 %v1521
      %2789 = vmatmul.mubr.bf16.gmra.mrb[0].mxu0 %v928
      %v2790 = vpop.f32.mrb[0].mxu0
      %v2791 = vadd.f32 0.0, %v2790
      %v2792 = vpop.f32.mrb[0].mxu0
      %v2793 = vpop.f32.mrb[0].mxu0
      %v2794 = vadd.f32 0.0, %v2793
      %v2795 = vpop.f32.mrb[0].mxu0
      %2796 = vmatprep.mubr.bf16.mxu0 %v1524
      %2797 = vmatmul.mubr.bf16.gmra.mrb[0].mxu0 %v952
      %v2798 = vpop.f32.mrb[0].mxu0
      %v2799 = vadd.f32 0.0, %v2798
      %v2800 = vpop.f32.mrb[0].mxu0
      %v2801 = vpop.f32.mrb[0].mxu0
      %v2802 = vadd.f32 0.0, %v2801
      %v2803 = vpop.f32.mrb[0].mxu0
      %2804 = vmatprep.mubr.bf16.mxu0 %v1527
      %2805 = vmatmul.mubr.bf16.gmra.mrb[0].mxu0 %v976
      %v2806 = vpop.f32.mrb[0].mxu0
      %v2807 = vadd.f32 0.0, %v2806
      %v2808 = vpop.f32.mrb[0].mxu0
      %v2809 = vpop.f32.mrb[0].mxu0
      %v2810 = vadd.f32 0.0, %v2809
      %v2811 = vpop.f32.mrb[0].mxu0
      %2812 = vmatprep.mubr.bf16.mxu0 %v1530
      %2813 = vmatmul.mubr.bf16.gmra.mrb[0].mxu0 %v1000
      %v2814 = vpop.f32.mrb[0].mxu0
      %v2815 = vadd.f32 0.0, %v2814
      %v2816 = vpop.f32.mrb[0].mxu0
      %v2817 = vpop.f32.mrb[0].mxu0
      %v2818 = vadd.f32 0.0, %v2817
      %v2819 = vpop.f32.mrb[0].mxu0
      %2820 = vmatprep.mubr.bf16.mxu0 %v1533
      %2821 = vmatmul.mubr.bf16.gmra.mrb[0].mxu0 %v1024
      %v2822 = vpop.f32.mrb[0].mxu0
      %v2823 = vadd.f32 0.0, %v2822
      %v2824 = vpop.f32.mrb[0].mxu0
      %v2825 = vpop.f32.mrb[0].mxu0
      %v2826 = vadd.f32 0.0, %v2825
      %v2827 = vpop.f32.mrb[0].mxu0
      %2828 = vmatprep.mubr.bf16.mxu0 %v1536
      %2829 = vmatmul.mubr.bf16.gmra.mrb[0].mxu0 %v1048
      %v2830 = vpop.f32.mrb[0].mxu0
      %v2831 = vadd.f32 0.0, %v2830
      %v2832 = vpop.f32.mrb[0].mxu0
      %v2833 = vpop.f32.mrb[0].mxu0
      %v2834 = vadd.f32 0.0, %v2833
      %v2835 = vpop.f32.mrb[0].mxu0
      %2836 = vmatprep.mubr.bf16.mxu0 %v1539
      %2837 = vmatmul.mubr.bf16.gmra.mrb[0].mxu0 %v1072
      %v2838 = vpop.f32.mrb[0].mxu0
      %v2839 = vadd.f32 0.0, %v2838
      %v2840 = vpop.f32.mrb[0].mxu0
      %v2841 = vpop.f32.mrb[0].mxu0
      %v2842 = vadd.f32 0.0, %v2841
      %v2843 = vpop.f32.mrb[0].mxu0
      %2844 = vmatprep.mubr.bf16.mxu0 %v1542
      %2845 = vmatmul.mubr.bf16.gmra.mrb[0].mxu0 %v1096
      %v2846 = vpop.f32.mrb[0].mxu0
      %v2847 = vadd.f32 0.0, %v2846
      %v2848 = vpop.f32.mrb[0].mxu0
      %v2849 = vpop.f32.mrb[0].mxu0
      %v2850 = vadd.f32 0.0, %v2849
      %v2851 = vpop.f32.mrb[0].mxu0
      %2852 = vmatprep.mubr.bf16.mxu0 %v2698
      %2853 = vmatmul.mubr.bf16.gmra.mrb[0].mxu0 %v1120
      %v2854 = vpop.f32.mrb[0].mxu0
      %v2855 = vadd.f32 0.0, %v2854
      %v2856 = vpop.f32.mrb[0].mxu0
      %v2857 = vpop.f32.mrb[0].mxu0
      %v2858 = vadd.f32 0.0, %v2857
      %v2859 = vpop.f32.mrb[0].mxu0
      %2860 = vdwg.mxu0
      %v2861 = vadd.f32 %v2568, %v2735
      %v2862 = vadd.f32 %v2569, %v2738
      %v2863 = vadd.f32 %v2570, %v2743
      %v2864 = vadd.f32 %v2571, %v2746
      %v2865 = vadd.f32 %v2572, %v2751
      %v2866 = vadd.f32 %v2573, %v2754
      %v2867 = vadd.f32 %v2574, %v2759
      %v2868 = vadd.f32 %v2575, %v2762
      %v2869 = vadd.f32 %v2576, %v2767
      %v2870 = vadd.f32 %v2577, %v2770
      %v2871 = vadd.f32 %v2578, %v2775
      %v2872 = vadd.f32 %v2579, %v2778
      %v2873 = vadd.f32 %v2580, %v2783
      %v2874 = vadd.f32 %v2581, %v2786
      %v2875 = vadd.f32 %v2582, %v2791
      %v2876 = vadd.f32 %v2583, %v2794
      %v2877 = vadd.f32 %v2584, %v2799
      %v2878 = vadd.f32 %v2585, %v2802
      %v2879 = vadd.f32 %v2586, %v2807
      %v2880 = vadd.f32 %v2587, %v2810
      %v2881 = vadd.f32 %v2588, %v2815
      %v2882 = vadd.f32 %v2589, %v2818
      %v2883 = vadd.f32 %v2590, %v2823
      %v2884 = vadd.f32 %v2591, %v2826
      %v2885 = vadd.f32 %v2592, %v2831
      %v2886 = vadd.f32 %v2593, %v2834
      %v2887 = vadd.f32 %v2594, %v2839
      %v2888 = vadd.f32 %v2595, %v2842
      %v2889 = vadd.f32 %v2596, %v2847
      %v2890 = vadd.f32 %v2597, %v2850
      %v2891 = vadd.f32 %v2598, %v2855
      %v2892 = vadd.f32 %v2599, %v2858
      %s2893 = scalar_lea.vmem %s1, 480
      %v2894 = vld [vmem:[%s2893] sm:$0xf]
      %v2895 = vld [vmem:[%s2893 + $0x4] sm:$0xf]
      %v2896 = vld [vmem:[%s2893 + $0x8] sm:$0xf]
      %v2897 = vld [vmem:[%s2893 + $0xc] sm:$0xf]
      %v2898 = vld [vmem:[%s2893 + $0x10] sm:$0xf]
      %v2899 = vld [vmem:[%s2893 + $0x14] sm:$0xf]
      %v2900 = vld [vmem:[%s2893 + $0x18] sm:$0xf]
      %v2901 = vld [vmem:[%s2893 + $0x1c] sm:$0xf]
      %v2902 = vld [vmem:[%s2893 + $0x20] sm:$0xf]
      %v2903 = vld [vmem:[%s2893 + $0x24] sm:$0xf]
      %v2904 = vld [vmem:[%s2893 + $0x28] sm:$0xf]
      %v2905 = vld [vmem:[%s2893 + $0x2c] sm:$0xf]
      %v2906 = vld [vmem:[%s2893 + $0x30] sm:$0xf]
      %v2907 = vld [vmem:[%s2893 + $0x34] sm:$0xf]
      %v2908 = vld [vmem:[%s2893 + $0x38] sm:$0xf]
      %v2909 = vld [vmem:[%s2893 + $0x3c] sm:$0xf]
      %v2910 = vld [vmem:[%s2893 + $0x40] sm:$0xf]
      %v2911 = vld [vmem:[%s2893 + $0x44] sm:$0xf]
      %v2912 = vld [vmem:[%s2893 + $0x48] sm:$0xf]
      %v2913 = vld [vmem:[%s2893 + $0x4c] sm:$0xf]
      %v2914 = vld [vmem:[%s2893 + $0x50] sm:$0xf]
      %v2915 = vld [vmem:[%s2893 + $0x54] sm:$0xf]
      %v2916 = vld [vmem:[%s2893 + $0x58] sm:$0xf]
      %v2917 = vld [vmem:[%s2893 + $0x5c] sm:$0xf]
      %v2942 = vunpack.c.l.b16 %v2894
      %v2943 = vunpack.c.l.b16 %v2895
      %v2944 = vunpack.c.l.b16 %v2896
      %v2945 = vunpack.c.l.b16 %v2897
      %v2946 = vunpack.c.l.b16 %v2898
      %v2947 = vunpack.c.l.b16 %v2899
      %v2948 = vunpack.c.l.b16 %v2900
      %v2949 = vunpack.c.l.b16 %v2901
      %v2950 = vunpack.c.l.b16 %v2902
      %v2951 = vunpack.c.l.b16 %v2903
      %v2952 = vunpack.c.l.b16 %v2904
      %v2953 = vunpack.c.l.b16 %v2905
      %v2954 = vunpack.c.l.b16 %v2906
      %v2955 = vunpack.c.l.b16 %v2907
      %v2956 = vunpack.c.l.b16 %v2908
      %v2957 = vunpack.c.l.b16 %v2909
      %v2958 = vunpack.c.l.b16 %v2910
      %v2959 = vunpack.c.l.b16 %v2911
      %v2960 = vunpack.c.l.b16 %v2912
      %v2961 = vunpack.c.l.b16 %v2913
      %v2962 = vunpack.c.l.b16 %v2914
      %v2963 = vunpack.c.l.b16 %v2915
      %v2964 = vunpack.c.l.b16 %v2916
      %v2965 = vunpack.c.l.b16 %v2917
      %v2966 = vpack.c.b16 %v2943, %v2942
      %v2967 = vpack.c.b16 %v2945, %v2944
      %v2968 = vpack.c.b16 %v2947, %v2946
      %v2969 = vpack.c.b16 %v2949, %v2948
      %v2970 = vpack.c.b16 %v2951, %v2950
      %v2971 = vpack.c.b16 %v2953, %v2952
      %v2972 = vpack.c.b16 %v2955, %v2954
      %v2973 = vpack.c.b16 %v2957, %v2956
      %v2974 = vpack.c.b16 %v2959, %v2958
      %v2975 = vpack.c.b16 %v2961, %v2960
      %v2976 = vpack.c.b16 %v2963, %v2962
      %v2977 = vpack.c.b16 %v2965, %v2964
      %v2991 = vsel %vm597, %v1349, 0
      %2993 = vmatprep.subr.bf16.mxu0 0
      %2994 = vmatpush1.bf16.msra.mxu0 %v2966
      %2995 = vmatprep.subr.bf16.mxu0 0
      %2996 = vmatpush1.bf16.msra.mxu0 %v2967
      %2997 = vmatprep.subr.bf16.mxu0 0
      %2998 = vmatpush1.bf16.msra.mxu0 %v2968
      %2999 = vmatprep.subr.bf16.mxu0 0
      %3000 = vmatpush1.bf16.msra.mxu0 %v2969
      %3001 = vmatprep.subr.bf16.mxu0 0
      %3002 = vmatpush1.bf16.msra.mxu0 %v2970
      %3003 = vmatprep.subr.bf16.mxu0 0
      %3004 = vmatpush1.bf16.msra.mxu0 %v2971
      %3005 = vmatprep.subr.bf16.mxu0 0
      %3006 = vmatpush1.bf16.msra.mxu0 %v2972
      %3007 = vmatprep.subr.bf16.mxu0 0
      %3008 = vmatpush1.bf16.msra.mxu0 %v2973
      %3009 = vmatprep.subr.bf16.mxu0 0
      %3010 = vmatpush1.bf16.msra.mxu0 %v2974
      %3011 = vmatprep.subr.bf16.mxu0 0
      %3012 = vmatpush1.bf16.msra.mxu0 %v2975
      %3013 = vmatprep.subr.bf16.mxu0 0
      %3014 = vmatpush1.bf16.msra.mxu0 %v2976
      %3015 = vmatprep.subr.bf16.mxu0 0
      %3016 = vmatpush1.bf16.msra.mxu0 %v2977
      %3017 = vmatprep.subr.bf16.mxu0 0
      %3018 = vmatpush1.bf16.msra.mxu0 0
      %3019 = vmatprep.subr.bf16.mxu0 0
      %3020 = vmatpush1.bf16.msra.mxu0 0
      %3021 = vmatprep.subr.bf16.mxu0 0
      %3022 = vmatpush1.bf16.msra.mxu0 0
      %3023 = vmatprep.subr.bf16.mxu0 0
      %3024 = vmatpush1.bf16.msra.mxu0 0
      %3025 = vmatprep.mubr.bf16.mxu0 %v2071
      %3026 = vmatmul.mubr.bf16.gmra.mrb[0].mxu0 %v1256
      %v3027 = vpop.f32.mrb[0].mxu0
      %v3028 = vadd.f32 0.0, %v3027
      %v3029 = vpop.f32.mrb[0].mxu0
      %v3030 = vpop.f32.mrb[0].mxu0
      %v3031 = vadd.f32 0.0, %v3030
      %v3032 = vpop.f32.mrb[0].mxu0
      %3033 = vmatprep.mubr.bf16.mxu0 %v2074
      %3034 = vmatmul.mubr.bf16.gmra.mrb[0].mxu0 %v1262
      %v3035 = vpop.f32.mrb[0].mxu0
      %v3036 = vadd.f32 0.0, %v3035
      %v3037 = vpop.f32.mrb[0].mxu0
      %v3038 = vpop.f32.mrb[0].mxu0
      %v3039 = vadd.f32 0.0, %v3038
      %v3040 = vpop.f32.mrb[0].mxu0
      %3041 = vmatprep.mubr.bf16.mxu0 %v2077
      %3042 = vmatmul.mubr.bf16.gmra.mrb[0].mxu0 %v1268
      %v3043 = vpop.f32.mrb[0].mxu0
      %v3044 = vadd.f32 0.0, %v3043
      %v3045 = vpop.f32.mrb[0].mxu0
      %v3046 = vpop.f32.mrb[0].mxu0
      %v3047 = vadd.f32 0.0, %v3046
      %v3048 = vpop.f32.mrb[0].mxu0
      %3049 = vmatprep.mubr.bf16.mxu0 %v2080
      %3050 = vmatmul.mubr.bf16.gmra.mrb[0].mxu0 %v1274
      %v3051 = vpop.f32.mrb[0].mxu0
      %v3052 = vadd.f32 0.0, %v3051
      %v3053 = vpop.f32.mrb[0].mxu0
      %v3054 = vpop.f32.mrb[0].mxu0
      %v3055 = vadd.f32 0.0, %v3054
      %v3056 = vpop.f32.mrb[0].mxu0
      %3057 = vmatprep.mubr.bf16.mxu0 %v2083
      %3058 = vmatmul.mubr.bf16.gmra.mrb[0].mxu0 %v1280
      %v3059 = vpop.f32.mrb[0].mxu0
      %v3060 = vadd.f32 0.0, %v3059
      %v3061 = vpop.f32.mrb[0].mxu0
      %v3062 = vpop.f32.mrb[0].mxu0
      %v3063 = vadd.f32 0.0, %v3062
      %v3064 = vpop.f32.mrb[0].mxu0
      %3065 = vmatprep.mubr.bf16.mxu0 %v2086
      %3066 = vmatmul.mubr.bf16.gmra.mrb[0].mxu0 %v1286
      %v3067 = vpop.f32.mrb[0].mxu0
      %v3068 = vadd.f32 0.0, %v3067
      %v3069 = vpop.f32.mrb[0].mxu0
      %v3070 = vpop.f32.mrb[0].mxu0
      %v3071 = vadd.f32 0.0, %v3070
      %v3072 = vpop.f32.mrb[0].mxu0
      %3073 = vmatprep.mubr.bf16.mxu0 %v2089
      %3074 = vmatmul.mubr.bf16.gmra.mrb[0].mxu0 %v1292
      %v3075 = vpop.f32.mrb[0].mxu0
      %v3076 = vadd.f32 0.0, %v3075
      %v3077 = vpop.f32.mrb[0].mxu0
      %v3078 = vpop.f32.mrb[0].mxu0
      %v3079 = vadd.f32 0.0, %v3078
      %v3080 = vpop.f32.mrb[0].mxu0
      %3081 = vmatprep.mubr.bf16.mxu0 %v2092
      %3082 = vmatmul.mubr.bf16.gmra.mrb[0].mxu0 %v1298
      %v3083 = vpop.f32.mrb[0].mxu0
      %v3084 = vadd.f32 0.0, %v3083
      %v3085 = vpop.f32.mrb[0].mxu0
      %v3086 = vpop.f32.mrb[0].mxu0
      %v3087 = vadd.f32 0.0, %v3086
      %v3088 = vpop.f32.mrb[0].mxu0
      %3089 = vmatprep.mubr.bf16.mxu0 %v2095
      %3090 = vmatmul.mubr.bf16.gmra.mrb[0].mxu0 %v1304
      %v3091 = vpop.f32.mrb[0].mxu0
      %v3092 = vadd.f32 0.0, %v3091
      %v3093 = vpop.f32.mrb[0].mxu0
      %v3094 = vpop.f32.mrb[0].mxu0
      %v3095 = vadd.f32 0.0, %v3094
      %v3096 = vpop.f32.mrb[0].mxu0
      %3097 = vmatprep.mubr.bf16.mxu0 %v2098
      %3098 = vmatmul.mubr.bf16.gmra.mrb[0].mxu0 %v1310
      %v3099 = vpop.f32.mrb[0].mxu0
      %v3100 = vadd.f32 0.0, %v3099
      %v3101 = vpop.f32.mrb[0].mxu0
      %v3102 = vpop.f32.mrb[0].mxu0
      %v3103 = vadd.f32 0.0, %v3102
      %v3104 = vpop.f32.mrb[0].mxu0
      %3105 = vmatprep.mubr.bf16.mxu0 %v2101
      %3106 = vmatmul.mubr.bf16.gmra.mrb[0].mxu0 %v1316
      %v3107 = vpop.f32.mrb[0].mxu0
      %v3108 = vadd.f32 0.0, %v3107
      %v3109 = vpop.f32.mrb[0].mxu0
      %v3110 = vpop.f32.mrb[0].mxu0
      %v3111 = vadd.f32 0.0, %v3110
      %v3112 = vpop.f32.mrb[0].mxu0
      %3113 = vmatprep.mubr.bf16.mxu0 %v2104
      %3114 = vmatmul.mubr.bf16.gmra.mrb[0].mxu0 %v1322
      %v3115 = vpop.f32.mrb[0].mxu0
      %v3116 = vadd.f32 0.0, %v3115
      %v3117 = vpop.f32.mrb[0].mxu0
      %v3118 = vpop.f32.mrb[0].mxu0
      %v3119 = vadd.f32 0.0, %v3118
      %v3120 = vpop.f32.mrb[0].mxu0
      %3121 = vmatprep.mubr.bf16.mxu0 %v2107
      %3122 = vmatmul.mubr.bf16.gmra.mrb[0].mxu0 %v1328
      %v3123 = vpop.f32.mrb[0].mxu0
      %v3124 = vadd.f32 0.0, %v3123
      %v3125 = vpop.f32.mrb[0].mxu0
      %v3126 = vpop.f32.mrb[0].mxu0
      %v3127 = vadd.f32 0.0, %v3126
      %v3128 = vpop.f32.mrb[0].mxu0
      %3129 = vmatprep.mubr.bf16.mxu0 %v2110
      %3130 = vmatmul.mubr.bf16.gmra.mrb[0].mxu0 %v1334
      %v3131 = vpop.f32.mrb[0].mxu0
      %v3132 = vadd.f32 0.0, %v3131
      %v3133 = vpop.f32.mrb[0].mxu0
      %v3134 = vpop.f32.mrb[0].mxu0
      %v3135 = vadd.f32 0.0, %v3134
      %v3136 = vpop.f32.mrb[0].mxu0
      %3137 = vmatprep.mubr.bf16.mxu0 %v2113
      %3138 = vmatmul.mubr.bf16.gmra.mrb[0].mxu0 %v1340
      %v3139 = vpop.f32.mrb[0].mxu0
      %v3140 = vadd.f32 0.0, %v3139
      %v3141 = vpop.f32.mrb[0].mxu0
      %v3142 = vpop.f32.mrb[0].mxu0
      %v3143 = vadd.f32 0.0, %v3142
      %v3144 = vpop.f32.mrb[0].mxu0
      %3145 = vmatprep.mubr.bf16.mxu0 %v2991
      %3146 = vmatmul.mubr.bf16.gmra.mrb[0].mxu0 %v1346
      %v3147 = vpop.f32.mrb[0].mxu0
      %v3148 = vadd.f32 0.0, %v3147
      %v3149 = vpop.f32.mrb[0].mxu0
      %v3150 = vpop.f32.mrb[0].mxu0
      %v3151 = vadd.f32 0.0, %v3150
      %v3152 = vpop.f32.mrb[0].mxu0
      %3153 = vdwg.mxu0
      %v3154 = vadd.f32 %v2861, %v3028
      %v3155 = vadd.f32 %v2862, %v3031
      %v3156 = vadd.f32 %v2863, %v3036
      %v3157 = vadd.f32 %v2864, %v3039
      %v3158 = vadd.f32 %v2865, %v3044
      %v3159 = vadd.f32 %v2866, %v3047
      %v3160 = vadd.f32 %v2867, %v3052
      %v3161 = vadd.f32 %v2868, %v3055
      %v3162 = vadd.f32 %v2869, %v3060
      %v3163 = vadd.f32 %v2870, %v3063
      %v3164 = vadd.f32 %v2871, %v3068
      %v3165 = vadd.f32 %v2872, %v3071
      %v3166 = vadd.f32 %v2873, %v3076
      %v3167 = vadd.f32 %v2874, %v3079
      %v3168 = vadd.f32 %v2875, %v3084
      %v3169 = vadd.f32 %v2876, %v3087
      %v3170 = vadd.f32 %v2877, %v3092
      %v3171 = vadd.f32 %v2878, %v3095
      %v3172 = vadd.f32 %v2879, %v3100
      %v3173 = vadd.f32 %v2880, %v3103
      %v3174 = vadd.f32 %v2881, %v3108
      %v3175 = vadd.f32 %v2882, %v3111
      %v3176 = vadd.f32 %v2883, %v3116
      %v3177 = vadd.f32 %v2884, %v3119
      %v3178 = vadd.f32 %v2885, %v3124
      %v3179 = vadd.f32 %v2886, %v3127
      %v3180 = vadd.f32 %v2887, %v3132
      %v3181 = vadd.f32 %v2888, %v3135
      %v3182 = vadd.f32 %v2889, %v3140
      %v3183 = vadd.f32 %v2890, %v3143
      %v3184 = vadd.f32 %v2891, %v3148
      %v3185 = vadd.f32 %v2892, %v3151
      %s3186 = scalar_lea.vmem %s1, 576
      %v3187 = vld [vmem:[%s3186] sm:$0xf]
      %v3188 = vld [vmem:[%s3186 + $0x4] sm:$0xf]
      %v3189 = vld [vmem:[%s3186 + $0x8] sm:$0xf]
      %v3190 = vld [vmem:[%s3186 + $0xc] sm:$0xf]
      %v3191 = vld [vmem:[%s3186 + $0x10] sm:$0xf]
      %v3192 = vld [vmem:[%s3186 + $0x14] sm:$0xf]
      %v3193 = vld [vmem:[%s3186 + $0x18] sm:$0xf]
      %v3194 = vld [vmem:[%s3186 + $0x1c] sm:$0xf]
      %v3195 = vld [vmem:[%s3186 + $0x20] sm:$0xf]
      %v3196 = vld [vmem:[%s3186 + $0x24] sm:$0xf]
      %v3197 = vld [vmem:[%s3186 + $0x28] sm:$0xf]
      %v3198 = vld [vmem:[%s3186 + $0x2c] sm:$0xf]
      %v3199 = vld [vmem:[%s3186 + $0x30] sm:$0xf]
      %v3200 = vld [vmem:[%s3186 + $0x34] sm:$0xf]
      %v3201 = vld [vmem:[%s3186 + $0x38] sm:$0xf]
      %v3202 = vld [vmem:[%s3186 + $0x3c] sm:$0xf]
      %v3203 = vld [vmem:[%s3186 + $0x40] sm:$0xf]
      %v3204 = vld [vmem:[%s3186 + $0x44] sm:$0xf]
      %v3205 = vld [vmem:[%s3186 + $0x48] sm:$0xf]
      %v3206 = vld [vmem:[%s3186 + $0x4c] sm:$0xf]
      %v3207 = vld [vmem:[%s3186 + $0x50] sm:$0xf]
      %v3208 = vld [vmem:[%s3186 + $0x54] sm:$0xf]
      %v3209 = vld [vmem:[%s3186 + $0x58] sm:$0xf]
      %v3210 = vld [vmem:[%s3186 + $0x5c] sm:$0xf]
      %v3235 = vunpack.c.l.b16 %v3187
      %v3236 = vunpack.c.l.b16 %v3188
      %v3237 = vunpack.c.l.b16 %v3189
      %v3238 = vunpack.c.l.b16 %v3190
      %v3239 = vunpack.c.l.b16 %v3191
      %v3240 = vunpack.c.l.b16 %v3192
      %v3241 = vunpack.c.l.b16 %v3193
      %v3242 = vunpack.c.l.b16 %v3194
      %v3243 = vunpack.c.l.b16 %v3195
      %v3244 = vunpack.c.l.b16 %v3196
      %v3245 = vunpack.c.l.b16 %v3197
      %v3246 = vunpack.c.l.b16 %v3198
      %v3247 = vunpack.c.l.b16 %v3199
      %v3248 = vunpack.c.l.b16 %v3200
      %v3249 = vunpack.c.l.b16 %v3201
      %v3250 = vunpack.c.l.b16 %v3202
      %v3251 = vunpack.c.l.b16 %v3203
      %v3252 = vunpack.c.l.b16 %v3204
      %v3253 = vunpack.c.l.b16 %v3205
      %v3254 = vunpack.c.l.b16 %v3206
      %v3255 = vunpack.c.l.b16 %v3207
      %v3256 = vunpack.c.l.b16 %v3208
      %v3257 = vunpack.c.l.b16 %v3209
      %v3258 = vunpack.c.l.b16 %v3210
      %v3259 = vpack.c.b16 %v3236, %v3235
      %v3260 = vpack.c.b16 %v3238, %v3237
      %v3261 = vpack.c.b16 %v3240, %v3239
      %v3262 = vpack.c.b16 %v3242, %v3241
      %v3263 = vpack.c.b16 %v3244, %v3243
      %v3264 = vpack.c.b16 %v3246, %v3245
      %v3265 = vpack.c.b16 %v3248, %v3247
      %v3266 = vpack.c.b16 %v3250, %v3249
      %v3267 = vpack.c.b16 %v3252, %v3251
      %v3268 = vpack.c.b16 %v3254, %v3253
      %v3269 = vpack.c.b16 %v3256, %v3255
      %v3270 = vpack.c.b16 %v3258, %v3257
      %v3283 = vsel %vm597, %v721, 0
      %3285 = vmatprep.subr.bf16.mxu0 0
      %3286 = vmatpush1.bf16.msra.mxu0 %v3259
      %3287 = vmatprep.subr.bf16.mxu0 0
      %3288 = vmatpush1.bf16.msra.mxu0 %v3260
      %3289 = vmatprep.subr.bf16.mxu0 0
      %3290 = vmatpush1.bf16.msra.mxu0 %v3261
      %3291 = vmatprep.subr.bf16.mxu0 0
      %3292 = vmatpush1.bf16.msra.mxu0 %v3262
      %3293 = vmatprep.subr.bf16.mxu0 0
      %3294 = vmatpush1.bf16.msra.mxu0 %v3263
      %3295 = vmatprep.subr.bf16.mxu0 0
      %3296 = vmatpush1.bf16.msra.mxu0 %v3264
      %3297 = vmatprep.subr.bf16.mxu0 0
      %3298 = vmatpush1.bf16.msra.mxu0 %v3265
      %3299 = vmatprep.subr.bf16.mxu0 0
      %3300 = vmatpush1.bf16.msra.mxu0 %v3266
      %3301 = vmatprep.subr.bf16.mxu0 0
      %3302 = vmatpush1.bf16.msra.mxu0 %v3267
      %3303 = vmatprep.subr.bf16.mxu0 0
      %3304 = vmatpush1.bf16.msra.mxu0 %v3268
      %3305 = vmatprep.subr.bf16.mxu0 0
      %3306 = vmatpush1.bf16.msra.mxu0 %v3269
      %3307 = vmatprep.subr.bf16.mxu0 0
      %3308 = vmatpush1.bf16.msra.mxu0 %v3270
      %3309 = vmatprep.subr.bf16.mxu0 0
      %3310 = vmatpush1.bf16.msra.mxu0 0
      %3311 = vmatprep.subr.bf16.mxu0 0
      %3312 = vmatpush1.bf16.msra.mxu0 0
      %3313 = vmatprep.subr.bf16.mxu0 0
      %3314 = vmatpush1.bf16.msra.mxu0 0
      %3315 = vmatprep.subr.bf16.mxu0 0
      %3316 = vmatpush1.bf16.msra.mxu0 0
      %3317 = vmatprep.mubr.bf16.mxu0 %v1781
      %3318 = vmatmul.mubr.bf16.gmra.mrb[0].mxu0 %v660
      %v3319 = vpop.f32.mrb[0].mxu0
      %v3320 = vadd.f32 0.0, %v3319
      %v3321 = vpop.f32.mrb[0].mxu0
      %v3322 = vpop.f32.mrb[0].mxu0
      %v3323 = vadd.f32 0.0, %v3322
      %v3324 = vpop.f32.mrb[0].mxu0
      %3325 = vmatprep.mubr.bf16.mxu0 %v1783
      %3326 = vmatmul.mubr.bf16.gmra.mrb[0].mxu0 %v664
      %v3327 = vpop.f32.mrb[0].mxu0
      %v3328 = vadd.f32 0.0, %v3327
      %v3329 = vpop.f32.mrb[0].mxu0
      %v3330 = vpop.f32.mrb[0].mxu0
      %v3331 = vadd.f32 0.0, %v3330
      %v3332 = vpop.f32.mrb[0].mxu0
      %3333 = vmatprep.mubr.bf16.mxu0 %v1785
      %3334 = vmatmul.mubr.bf16.gmra.mrb[0].mxu0 %v668
      %v3335 = vpop.f32.mrb[0].mxu0
      %v3336 = vadd.f32 0.0, %v3335
      %v3337 = vpop.f32.mrb[0].mxu0
      %v3338 = vpop.f32.mrb[0].mxu0
      %v3339 = vadd.f32 0.0, %v3338
      %v3340 = vpop.f32.mrb[0].mxu0
      %3341 = vmatprep.mubr.bf16.mxu0 %v1787
      %3342 = vmatmul.mubr.bf16.gmra.mrb[0].mxu0 %v672
      %v3343 = vpop.f32.mrb[0].mxu0
      %v3344 = vadd.f32 0.0, %v3343
      %v3345 = vpop.f32.mrb[0].mxu0
      %v3346 = vpop.f32.mrb[0].mxu0
      %v3347 = vadd.f32 0.0, %v3346
      %v3348 = vpop.f32.mrb[0].mxu0
      %3349 = vmatprep.mubr.bf16.mxu0 %v1789
      %3350 = vmatmul.mubr.bf16.gmra.mrb[0].mxu0 %v676
      %v3351 = vpop.f32.mrb[0].mxu0
      %v3352 = vadd.f32 0.0, %v3351
      %v3353 = vpop.f32.mrb[0].mxu0
      %v3354 = vpop.f32.mrb[0].mxu0
      %v3355 = vadd.f32 0.0, %v3354
      %v3356 = vpop.f32.mrb[0].mxu0
      %3357 = vmatprep.mubr.bf16.mxu0 %v1791
      %3358 = vmatmul.mubr.bf16.gmra.mrb[0].mxu0 %v680
      %v3359 = vpop.f32.mrb[0].mxu0
      %v3360 = vadd.f32 0.0, %v3359
      %v3361 = vpop.f32.mrb[0].mxu0
      %v3362 = vpop.f32.mrb[0].mxu0
      %v3363 = vadd.f32 0.0, %v3362
      %v3364 = vpop.f32.mrb[0].mxu0
      %3365 = vmatprep.mubr.bf16.mxu0 %v1793
      %3366 = vmatmul.mubr.bf16.gmra.mrb[0].mxu0 %v684
      %v3367 = vpop.f32.mrb[0].mxu0
      %v3368 = vadd.f32 0.0, %v3367
      %v3369 = vpop.f32.mrb[0].mxu0
      %v3370 = vpop.f32.mrb[0].mxu0
      %v3371 = vadd.f32 0.0, %v3370
      %v3372 = vpop.f32.mrb[0].mxu0
      %3373 = vmatprep.mubr.bf16.mxu0 %v1795
      %3374 = vmatmul.mubr.bf16.gmra.mrb[0].mxu0 %v688
      %v3375 = vpop.f32.mrb[0].mxu0
      %v3376 = vadd.f32 0.0, %v3375
      %v3377 = vpop.f32.mrb[0].mxu0
      %v3378 = vpop.f32.mrb[0].mxu0
      %v3379 = vadd.f32 0.0, %v3378
      %v3380 = vpop.f32.mrb[0].mxu0
      %3381 = vmatprep.mubr.bf16.mxu0 %v1797
      %3382 = vmatmul.mubr.bf16.gmra.mrb[0].mxu0 %v692
      %v3383 = vpop.f32.mrb[0].mxu0
      %v3384 = vadd.f32 0.0, %v3383
      %v3385 = vpop.f32.mrb[0].mxu0
      %v3386 = vpop.f32.mrb[0].mxu0
      %v3387 = vadd.f32 0.0, %v3386
      %v3388 = vpop.f32.mrb[0].mxu0
      %3389 = vmatprep.mubr.bf16.mxu0 %v1799
      %3390 = vmatmul.mubr.bf16.gmra.mrb[0].mxu0 %v696
      %v3391 = vpop.f32.mrb[0].mxu0
      %v3392 = vadd.f32 0.0, %v3391
      %v3393 = vpop.f32.mrb[0].mxu0
      %v3394 = vpop.f32.mrb[0].mxu0
      %v3395 = vadd.f32 0.0, %v3394
      %v3396 = vpop.f32.mrb[0].mxu0
      %3397 = vmatprep.mubr.bf16.mxu0 %v1801
      %3398 = vmatmul.mubr.bf16.gmra.mrb[0].mxu0 %v700
      %v3399 = vpop.f32.mrb[0].mxu0
      %v3400 = vadd.f32 0.0, %v3399
      %v3401 = vpop.f32.mrb[0].mxu0
      %v3402 = vpop.f32.mrb[0].mxu0
      %v3403 = vadd.f32 0.0, %v3402
      %v3404 = vpop.f32.mrb[0].mxu0
      %3405 = vmatprep.mubr.bf16.mxu0 %v1803
      %3406 = vmatmul.mubr.bf16.gmra.mrb[0].mxu0 %v704
      %v3407 = vpop.f32.mrb[0].mxu0
      %v3408 = vadd.f32 0.0, %v3407
      %v3409 = vpop.f32.mrb[0].mxu0
      %v3410 = vpop.f32.mrb[0].mxu0
      %v3411 = vadd.f32 0.0, %v3410
      %v3412 = vpop.f32.mrb[0].mxu0
      %3413 = vmatprep.mubr.bf16.mxu0 %v1805
      %3414 = vmatmul.mubr.bf16.gmra.mrb[0].mxu0 %v708
      %v3415 = vpop.f32.mrb[0].mxu0
      %v3416 = vadd.f32 0.0, %v3415
      %v3417 = vpop.f32.mrb[0].mxu0
      %v3418 = vpop.f32.mrb[0].mxu0
      %v3419 = vadd.f32 0.0, %v3418
      %v3420 = vpop.f32.mrb[0].mxu0
      %3421 = vmatprep.mubr.bf16.mxu0 %v1807
      %3422 = vmatmul.mubr.bf16.gmra.mrb[0].mxu0 %v712
      %v3423 = vpop.f32.mrb[0].mxu0
      %v3424 = vadd.f32 0.0, %v3423
      %v3425 = vpop.f32.mrb[0].mxu0
      %v3426 = vpop.f32.mrb[0].mxu0
      %v3427 = vadd.f32 0.0, %v3426
      %v3428 = vpop.f32.mrb[0].mxu0
      %3429 = vmatprep.mubr.bf16.mxu0 %v2405
      %3430 = vmatmul.mubr.bf16.gmra.mrb[0].mxu0 %v716
      %v3431 = vpop.f32.mrb[0].mxu0
      %v3432 = vadd.f32 0.0, %v3431
      %v3433 = vpop.f32.mrb[0].mxu0
      %v3434 = vpop.f32.mrb[0].mxu0
      %v3435 = vadd.f32 0.0, %v3434
      %v3436 = vpop.f32.mrb[0].mxu0
      %3437 = vmatprep.mubr.bf16.mxu0 %v3283
      %3438 = vmatmul.mubr.bf16.gmra.mrb[0].mxu0 %v720
      %v3439 = vpop.f32.mrb[0].mxu0
      %v3440 = vadd.f32 0.0, %v3439
      %v3441 = vpop.f32.mrb[0].mxu0
      %v3442 = vpop.f32.mrb[0].mxu0
      %v3443 = vadd.f32 0.0, %v3442
      %v3444 = vpop.f32.mrb[0].mxu0
      %3445 = vdwg.mxu0
      %v3446 = vadd.f32 %v3154, %v3320
      %v3447 = vadd.f32 %v3155, %v3323
      %v3448 = vadd.f32 %v3156, %v3328
      %v3449 = vadd.f32 %v3157, %v3331
      %v3450 = vadd.f32 %v3158, %v3336
      %v3451 = vadd.f32 %v3159, %v3339
      %v3452 = vadd.f32 %v3160, %v3344
      %v3453 = vadd.f32 %v3161, %v3347
      %v3454 = vadd.f32 %v3162, %v3352
      %v3455 = vadd.f32 %v3163, %v3355
      %v3456 = vadd.f32 %v3164, %v3360
      %v3457 = vadd.f32 %v3165, %v3363
      %v3458 = vadd.f32 %v3166, %v3368
      %v3459 = vadd.f32 %v3167, %v3371
      %v3460 = vadd.f32 %v3168, %v3376
      %v3461 = vadd.f32 %v3169, %v3379
      %v3462 = vadd.f32 %v3170, %v3384
      %v3463 = vadd.f32 %v3171, %v3387
      %v3464 = vadd.f32 %v3172, %v3392
      %v3465 = vadd.f32 %v3173, %v3395
      %v3466 = vadd.f32 %v3174, %v3400
      %v3467 = vadd.f32 %v3175, %v3403
      %v3468 = vadd.f32 %v3176, %v3408
      %v3469 = vadd.f32 %v3177, %v3411
      %v3470 = vadd.f32 %v3178, %v3416
      %v3471 = vadd.f32 %v3179, %v3419
      %v3472 = vadd.f32 %v3180, %v3424
      %v3473 = vadd.f32 %v3181, %v3427
      %v3474 = vadd.f32 %v3182, %v3432
      %v3475 = vadd.f32 %v3183, %v3435
      %v3476 = vadd.f32 %v3184, %v3440
      %v3477 = vadd.f32 %v3185, %v3443
      %s3478 = scalar_lea.vmem %s1, 672
      %v3479 = vld [vmem:[%s3478] sm:$0xf]
      %v3480 = vld [vmem:[%s3478 + $0x4] sm:$0xf]
      %v3481 = vld [vmem:[%s3478 + $0x8] sm:$0xf]
      %v3482 = vld [vmem:[%s3478 + $0xc] sm:$0xf]
      %v3483 = vld [vmem:[%s3478 + $0x10] sm:$0xf]
      %v3484 = vld [vmem:[%s3478 + $0x14] sm:$0xf]
      %v3485 = vld [vmem:[%s3478 + $0x18] sm:$0xf]
      %v3486 = vld [vmem:[%s3478 + $0x1c] sm:$0xf]
      %v3487 = vld [vmem:[%s3478 + $0x20] sm:$0xf]
      %v3488 = vld [vmem:[%s3478 + $0x24] sm:$0xf]
      %v3489 = vld [vmem:[%s3478 + $0x28] sm:$0xf]
      %v3490 = vld [vmem:[%s3478 + $0x2c] sm:$0xf]
      %v3491 = vld [vmem:[%s3478 + $0x30] sm:$0xf]
      %v3492 = vld [vmem:[%s3478 + $0x34] sm:$0xf]
      %v3493 = vld [vmem:[%s3478 + $0x38] sm:$0xf]
      %v3494 = vld [vmem:[%s3478 + $0x3c] sm:$0xf]
      %v3495 = vld [vmem:[%s3478 + $0x40] sm:$0xf]
      %v3496 = vld [vmem:[%s3478 + $0x44] sm:$0xf]
      %v3497 = vld [vmem:[%s3478 + $0x48] sm:$0xf]
      %v3498 = vld [vmem:[%s3478 + $0x4c] sm:$0xf]
      %v3499 = vld [vmem:[%s3478 + $0x50] sm:$0xf]
      %v3500 = vld [vmem:[%s3478 + $0x54] sm:$0xf]
      %v3501 = vld [vmem:[%s3478 + $0x58] sm:$0xf]
      %v3502 = vld [vmem:[%s3478 + $0x5c] sm:$0xf]
      %v3527 = vunpack.c.l.b16 %v3479
      %v3528 = vunpack.c.l.b16 %v3480
      %v3529 = vunpack.c.l.b16 %v3481
      %v3530 = vunpack.c.l.b16 %v3482
      %v3531 = vunpack.c.l.b16 %v3483
      %v3532 = vunpack.c.l.b16 %v3484
      %v3533 = vunpack.c.l.b16 %v3485
      %v3534 = vunpack.c.l.b16 %v3486
      %v3535 = vunpack.c.l.b16 %v3487
      %v3536 = vunpack.c.l.b16 %v3488
      %v3537 = vunpack.c.l.b16 %v3489
      %v3538 = vunpack.c.l.b16 %v3490
      %v3539 = vunpack.c.l.b16 %v3491
      %v3540 = vunpack.c.l.b16 %v3492
      %v3541 = vunpack.c.l.b16 %v3493
      %v3542 = vunpack.c.l.b16 %v3494
      %v3543 = vunpack.c.l.b16 %v3495
      %v3544 = vunpack.c.l.b16 %v3496
      %v3545 = vunpack.c.l.b16 %v3497
      %v3546 = vunpack.c.l.b16 %v3498
      %v3547 = vunpack.c.l.b16 %v3499
      %v3548 = vunpack.c.l.b16 %v3500
      %v3549 = vunpack.c.l.b16 %v3501
      %v3550 = vunpack.c.l.b16 %v3502
      %v3551 = vpack.c.b16 %v3528, %v3527
      %v3552 = vpack.c.b16 %v3530, %v3529
      %v3553 = vpack.c.b16 %v3532, %v3531
      %v3554 = vpack.c.b16 %v3534, %v3533
      %v3555 = vpack.c.b16 %v3536, %v3535
      %v3556 = vpack.c.b16 %v3538, %v3537
      %v3557 = vpack.c.b16 %v3540, %v3539
      %v3558 = vpack.c.b16 %v3542, %v3541
      %v3559 = vpack.c.b16 %v3544, %v3543
      %v3560 = vpack.c.b16 %v3546, %v3545
      %v3561 = vpack.c.b16 %v3548, %v3547
      %v3562 = vpack.c.b16 %v3550, %v3549
      %v3576 = vsel %vm597, %v1156, 0
      %3578 = vmatprep.subr.bf16.mxu0 0
      %3579 = vmatpush1.bf16.msra.mxu0 %v3551
      %3580 = vmatprep.subr.bf16.mxu0 0
      %3581 = vmatpush1.bf16.msra.mxu0 %v3552
      %3582 = vmatprep.subr.bf16.mxu0 0
      %3583 = vmatpush1.bf16.msra.mxu0 %v3553
      %3584 = vmatprep.subr.bf16.mxu0 0
      %3585 = vmatpush1.bf16.msra.mxu0 %v3554
      %3586 = vmatprep.subr.bf16.mxu0 0
      %3587 = vmatpush1.bf16.msra.mxu0 %v3555
      %3588 = vmatprep.subr.bf16.mxu0 0
      %3589 = vmatpush1.bf16.msra.mxu0 %v3556
      %3590 = vmatprep.subr.bf16.mxu0 0
      %3591 = vmatpush1.bf16.msra.mxu0 %v3557
      %3592 = vmatprep.subr.bf16.mxu0 0
      %3593 = vmatpush1.bf16.msra.mxu0 %v3558
      %3594 = vmatprep.subr.bf16.mxu0 0
      %3595 = vmatpush1.bf16.msra.mxu0 %v3559
      %3596 = vmatprep.subr.bf16.mxu0 0
      %3597 = vmatpush1.bf16.msra.mxu0 %v3560
      %3598 = vmatprep.subr.bf16.mxu0 0
      %3599 = vmatpush1.bf16.msra.mxu0 %v3561
      %3600 = vmatprep.subr.bf16.mxu0 0
      %3601 = vmatpush1.bf16.msra.mxu0 %v3562
      %3602 = vmatprep.subr.bf16.mxu0 0
      %3603 = vmatpush1.bf16.msra.mxu0 0
      %3604 = vmatprep.subr.bf16.mxu0 0
      %3605 = vmatpush1.bf16.msra.mxu0 0
      %3606 = vmatprep.subr.bf16.mxu0 0
      %3607 = vmatpush1.bf16.msra.mxu0 0
      %3608 = vmatprep.subr.bf16.mxu0 0
      %3609 = vmatpush1.bf16.msra.mxu0 0
      %3610 = vmatprep.mubr.bf16.mxu0 %v1503
      %3611 = vmatmul.mubr.bf16.gmra.mrb[0].mxu0 %v784
      %v3612 = vpop.f32.mrb[0].mxu0
      %v3613 = vadd.f32 0.0, %v3612
      %v3614 = vpop.f32.mrb[0].mxu0
      %v3615 = vpop.f32.mrb[0].mxu0
      %v3616 = vadd.f32 0.0, %v3615
      %v3617 = vpop.f32.mrb[0].mxu0
      %3618 = vmatprep.mubr.bf16.mxu0 %v1506
      %3619 = vmatmul.mubr.bf16.gmra.mrb[0].mxu0 %v808
      %v3620 = vpop.f32.mrb[0].mxu0
      %v3621 = vadd.f32 0.0, %v3620
      %v3622 = vpop.f32.mrb[0].mxu0
      %v3623 = vpop.f32.mrb[0].mxu0
      %v3624 = vadd.f32 0.0, %v3623
      %v3625 = vpop.f32.mrb[0].mxu0
      %3626 = vmatprep.mubr.bf16.mxu0 %v1509
      %3627 = vmatmul.mubr.bf16.gmra.mrb[0].mxu0 %v832
      %v3628 = vpop.f32.mrb[0].mxu0
      %v3629 = vadd.f32 0.0, %v3628
      %v3630 = vpop.f32.mrb[0].mxu0
      %v3631 = vpop.f32.mrb[0].mxu0
      %v3632 = vadd.f32 0.0, %v3631
      %v3633 = vpop.f32.mrb[0].mxu0
      %3634 = vmatprep.mubr.bf16.mxu0 %v1512
      %3635 = vmatmul.mubr.bf16.gmra.mrb[0].mxu0 %v856
      %v3636 = vpop.f32.mrb[0].mxu0
      %v3637 = vadd.f32 0.0, %v3636
      %v3638 = vpop.f32.mrb[0].mxu0
      %v3639 = vpop.f32.mrb[0].mxu0
      %v3640 = vadd.f32 0.0, %v3639
      %v3641 = vpop.f32.mrb[0].mxu0
      %3642 = vmatprep.mubr.bf16.mxu0 %v1515
      %3643 = vmatmul.mubr.bf16.gmra.mrb[0].mxu0 %v880
      %v3644 = vpop.f32.mrb[0].mxu0
      %v3645 = vadd.f32 0.0, %v3644
      %v3646 = vpop.f32.mrb[0].mxu0
      %v3647 = vpop.f32.mrb[0].mxu0
      %v3648 = vadd.f32 0.0, %v3647
      %v3649 = vpop.f32.mrb[0].mxu0
      %3650 = vmatprep.mubr.bf16.mxu0 %v1518
      %3651 = vmatmul.mubr.bf16.gmra.mrb[0].mxu0 %v904
      %v3652 = vpop.f32.mrb[0].mxu0
      %v3653 = vadd.f32 0.0, %v3652
      %v3654 = vpop.f32.mrb[0].mxu0
      %v3655 = vpop.f32.mrb[0].mxu0
      %v3656 = vadd.f32 0.0, %v3655
      %v3657 = vpop.f32.mrb[0].mxu0
      %3658 = vmatprep.mubr.bf16.mxu0 %v1521
      %3659 = vmatmul.mubr.bf16.gmra.mrb[0].mxu0 %v928
      %v3660 = vpop.f32.mrb[0].mxu0
      %v3661 = vadd.f32 0.0, %v3660
      %v3662 = vpop.f32.mrb[0].mxu0
      %v3663 = vpop.f32.mrb[0].mxu0
      %v3664 = vadd.f32 0.0, %v3663
      %v3665 = vpop.f32.mrb[0].mxu0
      %3666 = vmatprep.mubr.bf16.mxu0 %v1524
      %3667 = vmatmul.mubr.bf16.gmra.mrb[0].mxu0 %v952
      %v3668 = vpop.f32.mrb[0].mxu0
      %v3669 = vadd.f32 0.0, %v3668
      %v3670 = vpop.f32.mrb[0].mxu0
      %v3671 = vpop.f32.mrb[0].mxu0
      %v3672 = vadd.f32 0.0, %v3671
      %v3673 = vpop.f32.mrb[0].mxu0
      %3674 = vmatprep.mubr.bf16.mxu0 %v1527
      %3675 = vmatmul.mubr.bf16.gmra.mrb[0].mxu0 %v976
      %v3676 = vpop.f32.mrb[0].mxu0
      %v3677 = vadd.f32 0.0, %v3676
      %v3678 = vpop.f32.mrb[0].mxu0
      %v3679 = vpop.f32.mrb[0].mxu0
      %v3680 = vadd.f32 0.0, %v3679
      %v3681 = vpop.f32.mrb[0].mxu0
      %3682 = vmatprep.mubr.bf16.mxu0 %v1530
      %3683 = vmatmul.mubr.bf16.gmra.mrb[0].mxu0 %v1000
      %v3684 = vpop.f32.mrb[0].mxu0
      %v3685 = vadd.f32 0.0, %v3684
      %v3686 = vpop.f32.mrb[0].mxu0
      %v3687 = vpop.f32.mrb[0].mxu0
      %v3688 = vadd.f32 0.0, %v3687
      %v3689 = vpop.f32.mrb[0].mxu0
      %3690 = vmatprep.mubr.bf16.mxu0 %v1533
      %3691 = vmatmul.mubr.bf16.gmra.mrb[0].mxu0 %v1024
      %v3692 = vpop.f32.mrb[0].mxu0
      %v3693 = vadd.f32 0.0, %v3692
      %v3694 = vpop.f32.mrb[0].mxu0
      %v3695 = vpop.f32.mrb[0].mxu0
      %v3696 = vadd.f32 0.0, %v3695
      %v3697 = vpop.f32.mrb[0].mxu0
      %3698 = vmatprep.mubr.bf16.mxu0 %v1536
      %3699 = vmatmul.mubr.bf16.gmra.mrb[0].mxu0 %v1048
      %v3700 = vpop.f32.mrb[0].mxu0
      %v3701 = vadd.f32 0.0, %v3700
      %v3702 = vpop.f32.mrb[0].mxu0
      %v3703 = vpop.f32.mrb[0].mxu0
      %v3704 = vadd.f32 0.0, %v3703
      %v3705 = vpop.f32.mrb[0].mxu0
      %3706 = vmatprep.mubr.bf16.mxu0 %v1539
      %3707 = vmatmul.mubr.bf16.gmra.mrb[0].mxu0 %v1072
      %v3708 = vpop.f32.mrb[0].mxu0
      %v3709 = vadd.f32 0.0, %v3708
      %v3710 = vpop.f32.mrb[0].mxu0
      %v3711 = vpop.f32.mrb[0].mxu0
      %v3712 = vadd.f32 0.0, %v3711
      %v3713 = vpop.f32.mrb[0].mxu0
      %3714 = vmatprep.mubr.bf16.mxu0 %v1542
      %3715 = vmatmul.mubr.bf16.gmra.mrb[0].mxu0 %v1096
      %v3716 = vpop.f32.mrb[0].mxu0
      %v3717 = vadd.f32 0.0, %v3716
      %v3718 = vpop.f32.mrb[0].mxu0
      %v3719 = vpop.f32.mrb[0].mxu0
      %v3720 = vadd.f32 0.0, %v3719
      %v3721 = vpop.f32.mrb[0].mxu0
      %3722 = vmatprep.mubr.bf16.mxu0 %v2698
      %3723 = vmatmul.mubr.bf16.gmra.mrb[0].mxu0 %v1120
      %v3724 = vpop.f32.mrb[0].mxu0
      %v3725 = vadd.f32 0.0, %v3724
      %v3726 = vpop.f32.mrb[0].mxu0
      %v3727 = vpop.f32.mrb[0].mxu0
      %v3728 = vadd.f32 0.0, %v3727
      %v3729 = vpop.f32.mrb[0].mxu0
      %3730 = vmatprep.mubr.bf16.mxu0 %v3576
      %3731 = vmatmul.mubr.bf16.gmra.mrb[0].mxu0 %v1144
      %v3732 = vpop.f32.mrb[0].mxu0
      %v3733 = vadd.f32 0.0, %v3732
      %v3734 = vpop.f32.mrb[0].mxu0
      %v3735 = vpop.f32.mrb[0].mxu0
      %v3736 = vadd.f32 0.0, %v3735
      %v3737 = vpop.f32.mrb[0].mxu0
      %3738 = vdwg.mxu0
      %v3739 = vadd.f32 %v3446, %v3613
      %v3740 = vadd.f32 %v3447, %v3616
      %v3741 = vadd.f32 %v3448, %v3621
      %v3742 = vadd.f32 %v3449, %v3624
      %v3743 = vadd.f32 %v3450, %v3629
      %v3744 = vadd.f32 %v3451, %v3632
      %v3745 = vadd.f32 %v3452, %v3637
      %v3746 = vadd.f32 %v3453, %v3640
      %v3747 = vadd.f32 %v3454, %v3645
      %v3748 = vadd.f32 %v3455, %v3648
      %v3749 = vadd.f32 %v3456, %v3653
      %v3750 = vadd.f32 %v3457, %v3656
      %v3751 = vadd.f32 %v3458, %v3661
      %v3752 = vadd.f32 %v3459, %v3664
      %v3753 = vadd.f32 %v3460, %v3669
      %v3754 = vadd.f32 %v3461, %v3672
      %v3755 = vadd.f32 %v3462, %v3677
      %v3756 = vadd.f32 %v3463, %v3680
      %v3757 = vadd.f32 %v3464, %v3685
      %v3758 = vadd.f32 %v3465, %v3688
      %v3759 = vadd.f32 %v3466, %v3693
      %v3760 = vadd.f32 %v3467, %v3696
      %v3761 = vadd.f32 %v3468, %v3701
      %v3762 = vadd.f32 %v3469, %v3704
      %v3763 = vadd.f32 %v3470, %v3709
      %v3764 = vadd.f32 %v3471, %v3712
      %v3765 = vadd.f32 %v3472, %v3717
      %v3766 = vadd.f32 %v3473, %v3720
      %v3767 = vadd.f32 %v3474, %v3725
      %v3768 = vadd.f32 %v3475, %v3728
      %v3769 = vadd.f32 %v3476, %v3733
      %v3770 = vadd.f32 %v3477, %v3736
      %s3771 = scalar_lea.vmem %s1, 768
      %v3772 = vld [vmem:[%s3771] sm:$0xf]
      %v3773 = vld [vmem:[%s3771 + $0x4] sm:$0xf]
      %v3774 = vld [vmem:[%s3771 + $0x8] sm:$0xf]
      %v3775 = vld [vmem:[%s3771 + $0xc] sm:$0xf]
      %v3776 = vld [vmem:[%s3771 + $0x10] sm:$0xf]
      %v3777 = vld [vmem:[%s3771 + $0x14] sm:$0xf]
      %v3778 = vld [vmem:[%s3771 + $0x18] sm:$0xf]
      %v3779 = vld [vmem:[%s3771 + $0x1c] sm:$0xf]
      %v3780 = vld [vmem:[%s3771 + $0x20] sm:$0xf]
      %v3781 = vld [vmem:[%s3771 + $0x24] sm:$0xf]
      %v3782 = vld [vmem:[%s3771 + $0x28] sm:$0xf]
      %v3783 = vld [vmem:[%s3771 + $0x2c] sm:$0xf]
      %v3784 = vld [vmem:[%s3771 + $0x30] sm:$0xf]
      %v3785 = vld [vmem:[%s3771 + $0x34] sm:$0xf]
      %v3786 = vld [vmem:[%s3771 + $0x38] sm:$0xf]
      %v3787 = vld [vmem:[%s3771 + $0x3c] sm:$0xf]
      %v3788 = vld [vmem:[%s3771 + $0x40] sm:$0xf]
      %v3789 = vld [vmem:[%s3771 + $0x44] sm:$0xf]
      %v3790 = vld [vmem:[%s3771 + $0x48] sm:$0xf]
      %v3791 = vld [vmem:[%s3771 + $0x4c] sm:$0xf]
      %v3792 = vld [vmem:[%s3771 + $0x50] sm:$0xf]
      %v3793 = vld [vmem:[%s3771 + $0x54] sm:$0xf]
      %v3794 = vld [vmem:[%s3771 + $0x58] sm:$0xf]
      %v3795 = vld [vmem:[%s3771 + $0x5c] sm:$0xf]
      %v3820 = vunpack.c.l.b16 %v3772
      %v3821 = vunpack.c.l.b16 %v3773
      %v3822 = vunpack.c.l.b16 %v3774
      %v3823 = vunpack.c.l.b16 %v3775
      %v3824 = vunpack.c.l.b16 %v3776
      %v3825 = vunpack.c.l.b16 %v3777
      %v3826 = vunpack.c.l.b16 %v3778
      %v3827 = vunpack.c.l.b16 %v3779
      %v3828 = vunpack.c.l.b16 %v3780
      %v3829 = vunpack.c.l.b16 %v3781
      %v3830 = vunpack.c.l.b16 %v3782
      %v3831 = vunpack.c.l.b16 %v3783
      %v3832 = vunpack.c.l.b16 %v3784
      %v3833 = vunpack.c.l.b16 %v3785
      %v3834 = vunpack.c.l.b16 %v3786
      %v3835 = vunpack.c.l.b16 %v3787
      %v3836 = vunpack.c.l.b16 %v3788
      %v3837 = vunpack.c.l.b16 %v3789
      %v3838 = vunpack.c.l.b16 %v3790
      %v3839 = vunpack.c.l.b16 %v3791
      %v3840 = vunpack.c.l.b16 %v3792
      %v3841 = vunpack.c.l.b16 %v3793
      %v3842 = vunpack.c.l.b16 %v3794
      %v3843 = vunpack.c.l.b16 %v3795
      %v3844 = vpack.c.b16 %v3821, %v3820
      %v3845 = vpack.c.b16 %v3823, %v3822
      %v3846 = vpack.c.b16 %v3825, %v3824
      %v3847 = vpack.c.b16 %v3827, %v3826
      %v3848 = vpack.c.b16 %v3829, %v3828
      %v3849 = vpack.c.b16 %v3831, %v3830
      %v3850 = vpack.c.b16 %v3833, %v3832
      %v3851 = vpack.c.b16 %v3835, %v3834
      %v3852 = vpack.c.b16 %v3837, %v3836
      %v3853 = vpack.c.b16 %v3839, %v3838
      %v3854 = vpack.c.b16 %v3841, %v3840
      %v3855 = vpack.c.b16 %v3843, %v3842
      %v3869 = vsel %vm597, %v1355, 0
      %3871 = vmatprep.subr.bf16.mxu0 0
      %3872 = vmatpush1.bf16.msra.mxu0 %v3844
      %3873 = vmatprep.subr.bf16.mxu0 0
      %3874 = vmatpush1.bf16.msra.mxu0 %v3845
      %3875 = vmatprep.subr.bf16.mxu0 0
      %3876 = vmatpush1.bf16.msra.mxu0 %v3846
      %3877 = vmatprep.subr.bf16.mxu0 0
      %3878 = vmatpush1.bf16.msra.mxu0 %v3847
      %3879 = vmatprep.subr.bf16.mxu0 0
      %3880 = vmatpush1.bf16.msra.mxu0 %v3848
      %3881 = vmatprep.subr.bf16.mxu0 0
      %3882 = vmatpush1.bf16.msra.mxu0 %v3849
      %3883 = vmatprep.subr.bf16.mxu0 0
      %3884 = vmatpush1.bf16.msra.mxu0 %v3850
      %3885 = vmatprep.subr.bf16.mxu0 0
      %3886 = vmatpush1.bf16.msra.mxu0 %v3851
      %3887 = vmatprep.subr.bf16.mxu0 0
      %3888 = vmatpush1.bf16.msra.mxu0 %v3852
      %3889 = vmatprep.subr.bf16.mxu0 0
      %3890 = vmatpush1.bf16.msra.mxu0 %v3853
      %3891 = vmatprep.subr.bf16.mxu0 0
      %3892 = vmatpush1.bf16.msra.mxu0 %v3854
      %3893 = vmatprep.subr.bf16.mxu0 0
      %3894 = vmatpush1.bf16.msra.mxu0 %v3855
      %3895 = vmatprep.subr.bf16.mxu0 0
      %3896 = vmatpush1.bf16.msra.mxu0 0
      %3897 = vmatprep.subr.bf16.mxu0 0
      %3898 = vmatpush1.bf16.msra.mxu0 0
      %3899 = vmatprep.subr.bf16.mxu0 0
      %3900 = vmatpush1.bf16.msra.mxu0 0
      %3901 = vmatprep.subr.bf16.mxu0 0
      %3902 = vmatpush1.bf16.msra.mxu0 0
      %3903 = vmatprep.mubr.bf16.mxu0 %v2074
      %3904 = vmatmul.mubr.bf16.gmra.mrb[0].mxu0 %v1262
      %v3905 = vpop.f32.mrb[0].mxu0
      %v3906 = vadd.f32 0.0, %v3905
      %v3907 = vpop.f32.mrb[0].mxu0
      %v3908 = vpop.f32.mrb[0].mxu0
      %v3909 = vadd.f32 0.0, %v3908
      %v3910 = vpop.f32.mrb[0].mxu0
      %3911 = vmatprep.mubr.bf16.mxu0 %v2077
      %3912 = vmatmul.mubr.bf16.gmra.mrb[0].mxu0 %v1268
      %v3913 = vpop.f32.mrb[0].mxu0
      %v3914 = vadd.f32 0.0, %v3913
      %v3915 = vpop.f32.mrb[0].mxu0
      %v3916 = vpop.f32.mrb[0].mxu0
      %v3917 = vadd.f32 0.0, %v3916
      %v3918 = vpop.f32.mrb[0].mxu0
      %3919 = vmatprep.mubr.bf16.mxu0 %v2080
      %3920 = vmatmul.mubr.bf16.gmra.mrb[0].mxu0 %v1274
      %v3921 = vpop.f32.mrb[0].mxu0
      %v3922 = vadd.f32 0.0, %v3921
      %v3923 = vpop.f32.mrb[0].mxu0
      %v3924 = vpop.f32.mrb[0].mxu0
      %v3925 = vadd.f32 0.0, %v3924
      %v3926 = vpop.f32.mrb[0].mxu0
      %3927 = vmatprep.mubr.bf16.mxu0 %v2083
      %3928 = vmatmul.mubr.bf16.gmra.mrb[0].mxu0 %v1280
      %v3929 = vpop.f32.mrb[0].mxu0
      %v3930 = vadd.f32 0.0, %v3929
      %v3931 = vpop.f32.mrb[0].mxu0
      %v3932 = vpop.f32.mrb[0].mxu0
      %v3933 = vadd.f32 0.0, %v3932
      %v3934 = vpop.f32.mrb[0].mxu0
      %3935 = vmatprep.mubr.bf16.mxu0 %v2086
      %3936 = vmatmul.mubr.bf16.gmra.mrb[0].mxu0 %v1286
      %v3937 = vpop.f32.mrb[0].mxu0
      %v3938 = vadd.f32 0.0, %v3937
      %v3939 = vpop.f32.mrb[0].mxu0
      %v3940 = vpop.f32.mrb[0].mxu0
      %v3941 = vadd.f32 0.0, %v3940
      %v3942 = vpop.f32.mrb[0].mxu0
      %3943 = vmatprep.mubr.bf16.mxu0 %v2089
      %3944 = vmatmul.mubr.bf16.gmra.mrb[0].mxu0 %v1292
      %v3945 = vpop.f32.mrb[0].mxu0
      %v3946 = vadd.f32 0.0, %v3945
      %v3947 = vpop.f32.mrb[0].mxu0
      %v3948 = vpop.f32.mrb[0].mxu0
      %v3949 = vadd.f32 0.0, %v3948
      %v3950 = vpop.f32.mrb[0].mxu0
      %3951 = vmatprep.mubr.bf16.mxu0 %v2092
      %3952 = vmatmul.mubr.bf16.gmra.mrb[0].mxu0 %v1298
      %v3953 = vpop.f32.mrb[0].mxu0
      %v3954 = vadd.f32 0.0, %v3953
      %v3955 = vpop.f32.mrb[0].mxu0
      %v3956 = vpop.f32.mrb[0].mxu0
      %v3957 = vadd.f32 0.0, %v3956
      %v3958 = vpop.f32.mrb[0].mxu0
      %3959 = vmatprep.mubr.bf16.mxu0 %v2095
      %3960 = vmatmul.mubr.bf16.gmra.mrb[0].mxu0 %v1304
      %v3961 = vpop.f32.mrb[0].mxu0
      %v3962 = vadd.f32 0.0, %v3961
      %v3963 = vpop.f32.mrb[0].mxu0
      %v3964 = vpop.f32.mrb[0].mxu0
      %v3965 = vadd.f32 0.0, %v3964
      %v3966 = vpop.f32.mrb[0].mxu0
      %3967 = vmatprep.mubr.bf16.mxu0 %v2098
      %3968 = vmatmul.mubr.bf16.gmra.mrb[0].mxu0 %v1310
      %v3969 = vpop.f32.mrb[0].mxu0
      %v3970 = vadd.f32 0.0, %v3969
      %v3971 = vpop.f32.mrb[0].mxu0
      %v3972 = vpop.f32.mrb[0].mxu0
      %v3973 = vadd.f32 0.0, %v3972
      %v3974 = vpop.f32.mrb[0].mxu0
      %3975 = vmatprep.mubr.bf16.mxu0 %v2101
      %3976 = vmatmul.mubr.bf16.gmra.mrb[0].mxu0 %v1316
      %v3977 = vpop.f32.mrb[0].mxu0
      %v3978 = vadd.f32 0.0, %v3977
      %v3979 = vpop.f32.mrb[0].mxu0
      %v3980 = vpop.f32.mrb[0].mxu0
      %v3981 = vadd.f32 0.0, %v3980
      %v3982 = vpop.f32.mrb[0].mxu0
      %3983 = vmatprep.mubr.bf16.mxu0 %v2104
      %3984 = vmatmul.mubr.bf16.gmra.mrb[0].mxu0 %v1322
      %v3985 = vpop.f32.mrb[0].mxu0
      %v3986 = vadd.f32 0.0, %v3985
      %v3987 = vpop.f32.mrb[0].mxu0
      %v3988 = vpop.f32.mrb[0].mxu0
      %v3989 = vadd.f32 0.0, %v3988
      %v3990 = vpop.f32.mrb[0].mxu0
      %3991 = vmatprep.mubr.bf16.mxu0 %v2107
      %3992 = vmatmul.mubr.bf16.gmra.mrb[0].mxu0 %v1328
      %v3993 = vpop.f32.mrb[0].mxu0
      %v3994 = vadd.f32 0.0, %v3993
      %v3995 = vpop.f32.mrb[0].mxu0
      %v3996 = vpop.f32.mrb[0].mxu0
      %v3997 = vadd.f32 0.0, %v3996
      %v3998 = vpop.f32.mrb[0].mxu0
      %3999 = vmatprep.mubr.bf16.mxu0 %v2110
      %4000 = vmatmul.mubr.bf16.gmra.mrb[0].mxu0 %v1334
      %v4001 = vpop.f32.mrb[0].mxu0
      %v4002 = vadd.f32 0.0, %v4001
      %v4003 = vpop.f32.mrb[0].mxu0
      %v4004 = vpop.f32.mrb[0].mxu0
      %v4005 = vadd.f32 0.0, %v4004
      %v4006 = vpop.f32.mrb[0].mxu0
      %4007 = vmatprep.mubr.bf16.mxu0 %v2113
      %4008 = vmatmul.mubr.bf16.gmra.mrb[0].mxu0 %v1340
      %v4009 = vpop.f32.mrb[0].mxu0
      %v4010 = vadd.f32 0.0, %v4009
      %v4011 = vpop.f32.mrb[0].mxu0
      %v4012 = vpop.f32.mrb[0].mxu0
      %v4013 = vadd.f32 0.0, %v4012
      %v4014 = vpop.f32.mrb[0].mxu0
      %4015 = vmatprep.mubr.bf16.mxu0 %v2991
      %4016 = vmatmul.mubr.bf16.gmra.mrb[0].mxu0 %v1346
      %v4017 = vpop.f32.mrb[0].mxu0
      %v4018 = vadd.f32 0.0, %v4017
      %v4019 = vpop.f32.mrb[0].mxu0
      %v4020 = vpop.f32.mrb[0].mxu0
      %v4021 = vadd.f32 0.0, %v4020
      %v4022 = vpop.f32.mrb[0].mxu0
      %4023 = vmatprep.mubr.bf16.mxu0 %v3869
      %4024 = vmatmul.mubr.bf16.gmra.mrb[0].mxu0 %v1352
      %v4025 = vpop.f32.mrb[0].mxu0
      %v4026 = vadd.f32 0.0, %v4025
      %v4027 = vpop.f32.mrb[0].mxu0
      %v4028 = vpop.f32.mrb[0].mxu0
      %v4029 = vadd.f32 0.0, %v4028
      %v4030 = vpop.f32.mrb[0].mxu0
      %4031 = vdwg.mxu0
      %v4032 = vadd.f32 %v3739, %v3906
      %v4033 = vadd.f32 %v3740, %v3909
      %v4034 = vadd.f32 %v3741, %v3914
      %v4035 = vadd.f32 %v3742, %v3917
      %v4036 = vadd.f32 %v3743, %v3922
      %v4037 = vadd.f32 %v3744, %v3925
      %v4038 = vadd.f32 %v3745, %v3930
      %v4039 = vadd.f32 %v3746, %v3933
      %v4040 = vadd.f32 %v3747, %v3938
      %v4041 = vadd.f32 %v3748, %v3941
      %v4042 = vadd.f32 %v3749, %v3946
      %v4043 = vadd.f32 %v3750, %v3949
      %v4044 = vadd.f32 %v3751, %v3954
      %v4045 = vadd.f32 %v3752, %v3957
      %v4046 = vadd.f32 %v3753, %v3962
      %v4047 = vadd.f32 %v3754, %v3965
      %v4048 = vadd.f32 %v3755, %v3970
      %v4049 = vadd.f32 %v3756, %v3973
      %v4050 = vadd.f32 %v3757, %v3978
      %v4051 = vadd.f32 %v3758, %v3981
      %v4052 = vadd.f32 %v3759, %v3986
      %v4053 = vadd.f32 %v3760, %v3989
      %v4054 = vadd.f32 %v3761, %v3994
      %v4055 = vadd.f32 %v3762, %v3997
      %v4056 = vadd.f32 %v3763, %v4002
      %v4057 = vadd.f32 %v3764, %v4005
      %v4058 = vadd.f32 %v3765, %v4010
      %v4059 = vadd.f32 %v3766, %v4013
      %v4060 = vadd.f32 %v3767, %v4018
      %v4061 = vadd.f32 %v3768, %v4021
      %v4062 = vadd.f32 %v3769, %v4026
      %v4063 = vadd.f32 %v3770, %v4029
      %v4065 = vlaneseq
      %v4066 = vshrl.u32 %v4065, 7
      %v4067 = vsub.s32 0, %v4066
      %v4068 = vrot.slane %v1374, %v4067
      %v4070 = vadd.f32 %v4032, %v4068
      %v4071 = vadd.f32 %v4033, %v4068
      %v4072 = vadd.f32 %v4034, %v4068
      %v4073 = vadd.f32 %v4035, %v4068
      %v4074 = vadd.f32 %v4036, %v4068
      %v4075 = vadd.f32 %v4037, %v4068
      %v4076 = vadd.f32 %v4038, %v4068
      %v4077 = vadd.f32 %v4039, %v4068
      %v4078 = vadd.f32 %v4040, %v4068
      %v4079 = vadd.f32 %v4041, %v4068
      %v4080 = vadd.f32 %v4042, %v4068
      %v4081 = vadd.f32 %v4043, %v4068
      %v4082 = vadd.f32 %v4044, %v4068
      %v4083 = vadd.f32 %v4045, %v4068
      %v4084 = vadd.f32 %v4046, %v4068
      %v4085 = vadd.f32 %v4047, %v4068
      %v4086 = vadd.f32 %v4048, %v4068
      %v4087 = vadd.f32 %v4049, %v4068
      %v4088 = vadd.f32 %v4050, %v4068
      %v4089 = vadd.f32 %v4051, %v4068
      %v4090 = vadd.f32 %v4052, %v4068
      %v4091 = vadd.f32 %v4053, %v4068
      %v4092 = vadd.f32 %v4054, %v4068
      %v4093 = vadd.f32 %v4055, %v4068
      %v4094 = vadd.f32 %v4056, %v4068
      %v4095 = vadd.f32 %v4057, %v4068
      %v4096 = vadd.f32 %v4058, %v4068
      %v4097 = vadd.f32 %v4059, %v4068
      %v4098 = vadd.f32 %v4060, %v4068
      %v4099 = vadd.f32 %v4061, %v4068
      %v4100 = vadd.f32 %v4062, %v4068
      %v4101 = vadd.f32 %v4063, %v4068
      %v4102 = vtanh.pop %v4070
      %v4103 = vtanh.pop %v4071
      %v4104 = vtanh.pop %v4072
      %v4105 = vtanh.pop %v4073
      %v4106 = vtanh.pop %v4074
      %v4107 = vtanh.pop %v4075
      %v4108 = vtanh.pop %v4076
      %v4109 = vtanh.pop %v4077
      %v4110 = vtanh.pop %v4078
      %v4111 = vtanh.pop %v4079
      %v4112 = vtanh.pop %v4080
      %v4113 = vtanh.pop %v4081
      %v4114 = vtanh.pop %v4082
      %v4115 = vtanh.pop %v4083
      %v4116 = vtanh.pop %v4084
      %v4117 = vtanh.pop %v4085
      %v4118 = vtanh.pop %v4086
      %v4119 = vtanh.pop %v4087
      %v4120 = vtanh.pop %v4088
      %v4121 = vtanh.pop %v4089
      %v4122 = vtanh.pop %v4090
      %v4123 = vtanh.pop %v4091
      %v4124 = vtanh.pop %v4092
      %v4125 = vtanh.pop %v4093
      %v4126 = vtanh.pop %v4094
      %v4127 = vtanh.pop %v4095
      %v4128 = vtanh.pop %v4096
      %v4129 = vtanh.pop %v4097
      %v4130 = vtanh.pop %v4098
      %v4131 = vtanh.pop %v4099
      %v4132 = vtanh.pop %v4100
      %v4133 = vtanh.pop %v4101
      %v4134 = vld [vmem:[%s212] sm:$0xff]
      %v4135 = vld [vmem:[%s212 + $0x8] sm:$0xff]
      %v4136 = vld [vmem:[%s212 + $0x10] sm:$0xff]
      %v4137 = vld [vmem:[%s212 + $0x18] sm:$0xff]
      %v4138 = vld [vmem:[%s212 + $0x20] sm:$0xff]
      %v4139 = vld [vmem:[%s212 + $0x28] sm:$0xff]
      %v4140 = vld [vmem:[%s212 + $0x30] sm:$0xff]
      %v4141 = vld [vmem:[%s212 + $0x38] sm:$0xff]
      %v4142 = vld [vmem:[%s212 + $0x40] sm:$0xff]
      %v4143 = vld [vmem:[%s212 + $0x48] sm:$0xff]
      %v4144 = vld [vmem:[%s212 + $0x50] sm:$0xff]
      %v4145 = vld [vmem:[%s212 + $0x58] sm:$0xff]
      %v4146 = vld [vmem:[%s212 + $0x60] sm:$0xff]
      %v4147 = vld [vmem:[%s212 + $0x68] sm:$0xff]
      %v4148 = vld [vmem:[%s212 + $0x70] sm:$0xff]
      %v4149 = vld [vmem:[%s212 + $0x78] sm:$0xff]
      %v4150 = vld [vmem:[%s212 + $0x80] sm:$0xff]
      %v4151 = vld [vmem:[%s212 + $0x88] sm:$0xff]
      %v4152 = vld [vmem:[%s212 + $0x90] sm:$0xff]
      %v4153 = vld [vmem:[%s212 + $0x98] sm:$0xff]
      %v4154 = vld [vmem:[%s212 + $0xa0] sm:$0xff]
      %v4155 = vld [vmem:[%s212 + $0xa8] sm:$0xff]
      %v4156 = vld [vmem:[%s212 + $0xb0] sm:$0xff]
      %v4157 = vld [vmem:[%s212 + $0xb8] sm:$0xff]
      %v4158 = vld [vmem:[%s212 + $0xc0] sm:$0xff]
      %v4159 = vld [vmem:[%s212 + $0xc8] sm:$0xff]
      %v4160 = vld [vmem:[%s212 + $0xd0] sm:$0xff]
      %v4161 = vld [vmem:[%s212 + $0xd8] sm:$0xff]
      %v4162 = vld [vmem:[%s212 + $0xe0] sm:$0xff]
      %v4163 = vld [vmem:[%s212 + $0xe8] sm:$0xff]
      %v4164 = vld [vmem:[%s212 + $0xf0] sm:$0xff]
      %v4165 = vld [vmem:[%s212 + $0xf8] sm:$0xff]
      %v4166 = vsub.f32 %v4134, %v4102
      %v4167 = vsub.f32 %v4135, %v4103
      %v4168 = vsub.f32 %v4136, %v4104
      %v4169 = vsub.f32 %v4137, %v4105
      %v4170 = vsub.f32 %v4138, %v4106
      %v4171 = vsub.f32 %v4139, %v4107
      %v4172 = vsub.f32 %v4140, %v4108
      %v4173 = vsub.f32 %v4141, %v4109
      %v4174 = vsub.f32 %v4142, %v4110
      %v4175 = vsub.f32 %v4143, %v4111
      %v4176 = vsub.f32 %v4144, %v4112
      %v4177 = vsub.f32 %v4145, %v4113
      %v4178 = vsub.f32 %v4146, %v4114
      %v4179 = vsub.f32 %v4147, %v4115
      %v4180 = vsub.f32 %v4148, %v4116
      %v4181 = vsub.f32 %v4149, %v4117
      %v4182 = vsub.f32 %v4150, %v4118
      %v4183 = vsub.f32 %v4151, %v4119
      %v4184 = vsub.f32 %v4152, %v4120
      %v4185 = vsub.f32 %v4153, %v4121
      %v4186 = vsub.f32 %v4154, %v4122
      %v4187 = vsub.f32 %v4155, %v4123
      %v4188 = vsub.f32 %v4156, %v4124
      %v4189 = vsub.f32 %v4157, %v4125
      %v4190 = vsub.f32 %v4158, %v4126
      %v4191 = vsub.f32 %v4159, %v4127
      %v4192 = vsub.f32 %v4160, %v4128
      %v4193 = vsub.f32 %v4161, %v4129
      %v4194 = vsub.f32 %v4162, %v4130
      %v4195 = vsub.f32 %v4163, %v4131
      %v4196 = vsub.f32 %v4164, %v4132
      %v4197 = vsub.f32 %v4165, %v4133
      %vm4198 = vcmask 64512
      %4199 = vst.msk [vmem:[%s217] sm:$0xff] %vm4198, %v4166
      %4200 = vst.msk [vmem:[%s217 + $0x8] sm:$0xff] %vm4198, %v4167
      %4201 = vst.msk [vmem:[%s217 + $0x10] sm:$0xff] %vm4198, %v4168
      %4202 = vst.msk [vmem:[%s217 + $0x18] sm:$0xff] %vm4198, %v4169
      %4203 = vst.msk [vmem:[%s217 + $0x20] sm:$0xff] %vm4198, %v4170
      %4204 = vst.msk [vmem:[%s217 + $0x28] sm:$0xff] %vm4198, %v4171
      %4205 = vst.msk [vmem:[%s217 + $0x30] sm:$0xff] %vm4198, %v4172
      %4206 = vst.msk [vmem:[%s217 + $0x38] sm:$0xff] %vm4198, %v4173
      %4207 = vst.msk [vmem:[%s217 + $0x40] sm:$0xff] %vm4198, %v4174
      %4208 = vst.msk [vmem:[%s217 + $0x48] sm:$0xff] %vm4198, %v4175
      %4209 = vst.msk [vmem:[%s217 + $0x50] sm:$0xff] %vm4198, %v4176
      %4210 = vst.msk [vmem:[%s217 + $0x58] sm:$0xff] %vm4198, %v4177
      %4211 = vst.msk [vmem:[%s217 + $0x60] sm:$0xff] %vm4198, %v4178
      %4212 = vst.msk [vmem:[%s217 + $0x68] sm:$0xff] %vm4198, %v4179
      %4213 = vst.msk [vmem:[%s217 + $0x70] sm:$0xff] %vm4198, %v4180
      %4214 = vst.msk [vmem:[%s217 + $0x78] sm:$0xff] %vm4198, %v4181
      %4215 = vst.msk [vmem:[%s217 + $0x80] sm:$0xff] %vm4198, %v4182
      %4216 = vst.msk [vmem:[%s217 + $0x88] sm:$0xff] %vm4198, %v4183
      %4217 = vst.msk [vmem:[%s217 + $0x90] sm:$0xff] %vm4198, %v4184
      %4218 = vst.msk [vmem:[%s217 + $0x98] sm:$0xff] %vm4198, %v4185
      %4219 = vst.msk [vmem:[%s217 + $0xa0] sm:$0xff] %vm4198, %v4186
      %4220 = vst.msk [vmem:[%s217 + $0xa8] sm:$0xff] %vm4198, %v4187
      %4221 = vst.msk [vmem:[%s217 + $0xb0] sm:$0xff] %vm4198, %v4188
      %4222 = vst.msk [vmem:[%s217 + $0xb8] sm:$0xff] %vm4198, %v4189
      %4223 = vst.msk [vmem:[%s217 + $0xc0] sm:$0xff] %vm4198, %v4190
      %4224 = vst.msk [vmem:[%s217 + $0xc8] sm:$0xff] %vm4198, %v4191
      %4225 = vst.msk [vmem:[%s217 + $0xd0] sm:$0xff] %vm4198, %v4192
      %4226 = vst.msk [vmem:[%s217 + $0xd8] sm:$0xff] %vm4198, %v4193
      %4227 = vst.msk [vmem:[%s217 + $0xe0] sm:$0xff] %vm4198, %v4194
      %4228 = vst.msk [vmem:[%s217 + $0xe8] sm:$0xff] %vm4198, %v4195
      %4229 = vst.msk [vmem:[%s217 + $0xf0] sm:$0xff] %vm4198, %v4196
      %4230 = vst.msk [vmem:[%s217 + $0xf8] sm:$0xff] %vm4198, %v4197
      %p4231 = scmp.lt.s32.totalorder %s15, 1
      %s4232 = scalar_select %p4231, %s15, 1
      %s4233 = smul.addr %s4232, 32
      %s4234 = smul.addr %s4233, 8
      %s4235 = scalar_lea.vmem %s4, %s4234
      // Predicated region
      $region37: #{self_dncnn_forward.9} parent=35 // pred_check
        %p4236 = pneg %p127
      $region38: #{self_dncnn_forward.9} parent=35 // pred_check_branch
        %4238 = sbr.rel (%p4236) target = $region40
      $region39: #{self_dncnn_forward.9} parent=35 // pred_region
        _
      $region40: #{self_dncnn_forward.9} parent=35 // pred_fallthru
        _
    $region36: #{self_dncnn_forward.9} parent=5 // pred_fallthru
      _
    %p4239 = scmp.le.s32.totalorder 2, %s10
    // Predicated region
    $region41: #{self_dncnn_forward.9} parent=5 // pred_check
      %p4240 = pneg %p4239
    $region42: #{self_dncnn_forward.9} parent=5 // pred_check_branch
      %4242 = sbr.rel (%p4240) target = $region44
    $region43: #{self_dncnn_forward.9} parent=5 // pred_region
      %s4243 = ssub.s32 %s10, 2
      // Predicated region
      $region45: #{self_dncnn_forward.9} parent=43 // pred_check
        %p4244 = pneg %p133
      $region46: #{self_dncnn_forward.9} parent=43 // pred_check_branch
        %4246 = sbr.rel (%p4244) target = $region48
      $region47: #{self_dncnn_forward.9} parent=43 // pred_region
        %p4247 = scmp.lt.s32.totalorder %s16, 1
        %s4248 = scalar_select %p4247, %s16, 1
        %s4249 = smul.addr %s4248, 32
        %s4250 = smul.addr %s4249, 8
        %s4251 = scalar_lea.vmem %s4, %s4250
      $region48: #{self_dncnn_forward.9} parent=43 // pred_fallthru
        _
    $region44: #{self_dncnn_forward.9} parent=5 // pred_fallthru
      _
  $region6: #{self_dncnn_forward.9} parent=0 // loop_footer
    %s14 = sadd.s32 1, %s10
  $region7: #{self_dncnn_forward.9} parent=0 // loop_footer_branch
    %9 = sbr.rel target = $region3
  $region8: #{self_dncnn_forward.9} parent=0 // loop_exit
    _

</llo_original>
